<compile_context>
chip_gen: v6e
topology: v6e:2x2x1
jax: 0.10.0
libtpu: 0.0.40
codegen_flags: <defaults>
</compile_context>

<pallas_src>
import functools
import math

import jax
import jax.numpy as jnp
from jax.experimental import pallas as pl
from jax.experimental.pallas import tpu as pltpu


# ---------------------------------------------------------------------------
# helpers shared by the Pallas kernels and the pure-JAX reference so that the
# MXU numerics match: bf16 operands, f32 accumulation.
# ---------------------------------------------------------------------------
def _bdot(a, b):
    return jnp.dot(a.astype(jnp.bfloat16), b.astype(jnp.bfloat16),
                   preferred_element_type=jnp.float32)


def _bein(eq, a, b):
    return jnp.einsum(eq, a.astype(jnp.bfloat16), b.astype(jnp.bfloat16),
                      preferred_element_type=jnp.float32)


def _sigmoid(t):
    # exact sigmoid: only ever applied to tiny (1,C)/(H,W) tensors.
    return 1.0 / (1.0 + jnp.exp(-t))


def _cp(sem, vmem_mb):
    return pltpu.CompilerParams(dimension_semantics=sem,
                                vmem_limit_bytes=vmem_mb * 1024 * 1024)


def _sincos_pos_embed(h, w, c):
    """2D sincos position embedding (h, w, c); mirrors S_Module.get_2d_sincos_pos_embed."""
    grid_h = jnp.arange(h, dtype=jnp.float32)
    grid_w = jnp.arange(w, dtype=jnp.float32)
    pos_h = jnp.broadcast_to(grid_h[:, None], (h, w))
    pos_w = jnp.broadcast_to(grid_w[None, :], (h, w))
    dim = c // 2
    div = jnp.exp(jnp.arange(0.0, dim, 2.0, dtype=jnp.float32)
                  * -(math.log(10000.0) / dim))
    sh = jnp.sin(pos_h[:, :, None] * div)
    ch = jnp.cos(pos_h[:, :, None] * div)
    sw = jnp.sin(pos_w[:, :, None] * div)
    cw = jnp.cos(pos_w[:, :, None] * div)
    part_h = jnp.stack([sh, ch], axis=-1).reshape(h, w, dim)
    part_w = jnp.stack([sw, cw], axis=-1).reshape(h, w, dim)
    return jnp.concatenate([part_h, part_w], axis=-1)


def _per_batch_spec(shape):
    nd = len(shape)
    return pl.BlockSpec((1,) + tuple(shape[1:]),
                        lambda b, _n=nd: (b,) + (0,) * (_n - 1))


def _full_spec(shape):
    nd = len(shape)
    return pl.BlockSpec(tuple(shape), lambda b, _n=nd: (0,) * _n)


# ---------------------------------------------------------------------------
# fused 1x1 conv (matmul) + training-mode BatchNorm2d [+ per-column ReLU]
# pass 1: matmul + per-channel sum/sumsq accumulation (resident stats block)
# pass 2: normalization + selective ReLU, streaming
# ---------------------------------------------------------------------------
def _mm_stats_kernel(x_ref, w_ref, b_ref, y_ref, s_ref):
    # x: (TM, Cin)  w: (Cin, Cout)  b: (1, Cout); s: (8, Cout) resident accumulator.
    y = _bdot(x_ref[...], w_ref[...]) + b_ref[...]
    y_ref[...] = y

    @pl.when(pl.program_id(1) == 0)
    def _init():
        s_ref[...] = jnp.zeros_like(s_ref)

    s_ref[0:1, :] += jnp.sum(y, axis=0, keepdims=True)
    s_ref[1:2, :] += jnp.sum(y * y, axis=0, keepdims=True)


def _bn_act_kernel(y_ref, s_ref, g_ref, b_ref, m_ref, o_ref, *, inv_count):
    # NOTE: variance via E[y^2]-E[y]^2 on f32 running sums (adequate at these
    # scales; a centered second pass would be safer for very large M).
    mean = s_ref[0:1, :] * inv_count
    var = s_ref[1:2, :] * inv_count - mean * mean
    y = (y_ref[...] - mean) * (jax.lax.rsqrt(var + 1e-5) * g_ref[...]) + b_ref[...]
    mask = m_ref[...]                          # 1.0 -> ReLU column, 0.0 -> linear
    y = mask * jnp.maximum(y, 0.0) + (1.0 - mask) * y
    o_ref[...] = y.astype(o_ref.dtype)


def _row_tile(m):
    for t in (2048, 1024, 512, 256, 128, 64, 32, 16, 8):
        if m % t == 0:
            return t
    return m


def conv1x1_bn(x2d, w, b, g, beta, relu_mask, out_dtype):
    """x2d (M, Cin) -> (M, Cout); w (Cin, Cout); b/g/beta/relu_mask (1, Cout)."""
    m, cin = x2d.shape
    cout = w.shape[1]
    tm = _row_tile(m)
    nt = m // tm
    # 2-way outer "parallel" split so v7x megacore can share the matmul work;
    # a no-op (sequential) on 1-TensorCore chips.
    splits = 2 if (nt % 2 == 0 and nt >= 2) else 1
    inner = nt // splits

    y, stats = pl.pallas_call(
        _mm_stats_kernel,
        grid=(splits, inner),
        in_specs=[pl.BlockSpec((tm, cin), lambda c, i, _n=inner: (c * _n + i, 0)),
                  pl.BlockSpec((cin, cout), lambda c, i: (0, 0)),
                  pl.BlockSpec((1, cout), lambda c, i: (0, 0))],
        out_specs=(pl.BlockSpec((tm, cout), lambda c, i, _n=inner: (c * _n + i, 0)),
                   pl.BlockSpec((8, cout), lambda c, i: (c, 0))),
        out_shape=(jax.ShapeDtypeStruct((m, cout), jnp.float32),
                   jax.ShapeDtypeStruct((8 * splits, cout), jnp.float32)),
        compiler_params=_cp(("parallel", "arbitrary"), 64),
    )(x2d, w, b)

    stats = stats.reshape(splits, 8, cout).sum(axis=0)   # merge per-core partials

    return pl.pallas_call(
        functools.partial(_bn_act_kernel, inv_count=1.0 / m),
        grid=(nt,),
        in_specs=[pl.BlockSpec((tm, cout), lambda i: (i, 0)),
                  pl.BlockSpec((8, cout), lambda i: (0, 0)),
                  pl.BlockSpec((1, cout), lambda i: (0, 0)),
                  pl.BlockSpec((1, cout), lambda i: (0, 0)),
                  pl.BlockSpec((1, cout), lambda i: (0, 0))],
        out_specs=pl.BlockSpec((tm, cout), lambda i: (i, 0)),
        out_shape=jax.ShapeDtypeStruct((m, cout), out_dtype),
        compiler_params=_cp(("parallel",), 64),
    )(y, stats, g, beta, relu_mask)


# ---------------------------------------------------------------------------
# S_Module pieces: pos-embed + SE, then criss-cross (H+W) attention + LayerNorm
# ---------------------------------------------------------------------------
def _pos_se_kernel(x_ref, pos_ref, w1_ref, w2_ref, o_ref):
    h, w, c = x_ref.shape[1], x_ref.shape[2], x_ref.shape[3]
    xp = x_ref[0] + pos_ref[...]                                 # (H, W, C)
    m = jnp.mean(xp.reshape(h * w, c), axis=0, keepdims=True)    # global avg pool
    t = jnp.maximum(_bdot(m, w1_ref[...]), 0.0)
    s = _sigmoid(_bdot(t, w2_ref[...]))                          # (1, C)
    o_ref[0] = xp * s.reshape(1, 1, c)


def _cc_col_kernel(qkv_ref, oh_ref, ms_ref, *, cq):
    # column branch, everything in (W, H, *) layout so einsums are batch-leading.
    qkv = qkv_ref[0]                                             # (W, H, 2Cq+C) bf16
    q = qkv[:, :, :cq]
    k = qkv[:, :, cq:2 * cq]
    v = qkv[:, :, 2 * cq:]
    w_, h_ = q.shape[0], q.shape[1]
    e = _bein('whc,wgc->whg', q, k)                              # (W, H, H)
    row = jax.lax.broadcasted_iota(jnp.int32, (w_, h_, h_), 1)
    col = jax.lax.broadcasted_iota(jnp.int32, (w_, h_, h_), 2)
    e = jnp.where(row == col, -1e30, e)                          # INF(): -inf diagonal
    m = jnp.max(e, axis=-1, keepdims=True)                       # (W, H, 1)
    p = jnp.exp(e - m)
    s = jnp.sum(p, axis=-1, keepdims=True)
    oh_ref[0] = _bein('whg,wgc->whc', p, v)                      # unnormalized output
    # lane-dense packed side outputs: (2, W, H) -> [0]=row max, [1]=row sum
    ms_ref[0, 0] = m[:, :, 0]
    ms_ref[0, 1] = s[:, :, 0]


def _cc_row_merge_kernel(xs_ref, qkv_ref, oh_ref, ms_ref, gam_ref, o_ref, *, cq):
    xs = xs_ref[0]                                               # (H, W, C) f32
    qkv = qkv_ref[0]                                             # (H, W, 2Cq+C) bf16
    q = qkv[:, :, :cq]
    k = qkv[:, :, cq:2 * cq]
    v = qkv[:, :, 2 * cq:]
    oh = oh_ref[0]                                               # (H, W, C) f32
    mh = ms_ref[0, 0][:, :, None]                                # (H, W, 1)
    sh = ms_ref[0, 1][:, :, None]
    h_, w_, c_ = xs.shape

    e = _bein('hwc,hvc->hwv', q, k)                              # (H, W, W) row branch
    mw = jnp.max(e, axis=-1, keepdims=True)
    m = jnp.maximum(mh, mw)                                      # joint softmax over H+W
    alpha = jnp.exp(mh - m)
    pw = jnp.exp(e - m)
    denom = sh * alpha + jnp.sum(pw, axis=-1, keepdims=True)
    inv = pl.reciprocal(denom, approx=True)                      # EUP
    aw = pw * inv                                                # normalized row weights
    out = oh * (alpha * inv) + _bein('hwv,hvc->hwc', aw, v)
    # TODO(synk): nn.Dropout(0.1) (training-mode stochastic) is applied as identity.
    z = xs + gam_ref[0] * out
    # fresh nn.LayerNorm([C, H, W]): weight=1, bias=0, biased variance, eps=1e-5
    z2 = z.reshape(h_ * w_, c_)
    n = float(h_ * w_ * c_)
    mu = jnp.sum(jnp.sum(z2, axis=1, keepdims=True), axis=0, keepdims=True) / n
    zc = z2 - mu
    var = jnp.sum(jnp.sum(zc * zc, axis=1, keepdims=True), axis=0, keepdims=True) / n
    o_ref[0] = (zc * jax.lax.rsqrt(var + 1e-5)).reshape(h_, w_, c_)


# ---------------------------------------------------------------------------
# CAM channel attention (raw `out`, the residual add is fused downstream)
# ---------------------------------------------------------------------------
def _cam_kernel(fb_ref, o_ref):
    h, w, c = fb_ref.shape[1], fb_ref.shape[2], fb_ref.shape[3]
    f = fb_ref[0].reshape(h * w, c)                              # (S, C)
    energy = _bein('sc,sd->cd', f, f)                            # (C, C)
    e_new = jnp.max(energy, axis=-1, keepdims=True) - energy
    e_new = e_new - jnp.max(e_new, axis=-1, keepdims=True)
    p = jnp.exp(e_new)
    att = p * pl.reciprocal(jnp.sum(p, axis=-1, keepdims=True), approx=True)
    o_ref[0] = _bein('sd,cd->sc', f, att).reshape(h, w, c)


# ---------------------------------------------------------------------------
# final combine (pam + cam) fused with CBAM (channel + 7x7 spatial attention)
# ---------------------------------------------------------------------------
def _combine_cbam_kernel(x_ref, sx_ref, sfb_ref, cam_ref, w1_ref, w2_ref,
                         gam_ref, saw_ref, o_ref, pad_ref):
    h, w, c = x_ref.shape[1], x_ref.shape[2], x_ref.shape[3]
    x = x_ref[0]
    # (x + g_pam*Sx + g_pam2*Sfb) + (x + g_cam*cam_out)
    u = (2.0 * x + gam_ref[0] * sx_ref[0] + gam_ref[1] * sfb_ref[0]
         + gam_ref[2] * cam_ref[0])

    # CBAM channel attention
    u2 = u.reshape(h * w, c)
    avg = jnp.mean(u2, axis=0, keepdims=True)                    # (1, C)
    mx = jnp.max(u2, axis=0, keepdims=True)

    def fc(t):
        return _bdot(jnp.maximum(_bdot(t, w1_ref[...]), 0.0), w2_ref[...])

    ca = _sigmoid(fc(avg) + fc(mx))                              # (1, C)
    u = u * ca.reshape(1, 1, c)

    # CBAM spatial attention: 7x7 conv on [channel-mean, channel-max], zero pad 3.
    # Pooled maps are lane-dense (H, W); taps read from SMEM; 4 interleaved
    # accumulators break the serial dependence chain.
    am = jnp.mean(u, axis=2)                                     # (H, W)
    mm = jnp.max(u, axis=2)
    pad_ref[...] = jnp.zeros_like(pad_ref)
    pad_ref[0, 3:3 + h, 3:3 + w] = am
    pad_ref[1, 3:3 + h, 3:3 + w] = mm
    accs = [jnp.zeros((h, w), dtype=jnp.float32) for _ in range(4)]
    idx = 0
    for ch in range(2):
        for ky in range(7):
            rowblk = pad_ref[ch, ky:ky + h, :]                   # (H, W+6)
            for kx in range(7):
                tap = saw_ref[ch * 49 + ky * 7 + kx]
                accs[idx % 4] = accs[idx % 4] + tap * rowblk[:, kx:kx + w]
                idx += 1
    logit = (accs[0] + accs[1]) + (accs[2] + accs[3])            # (H, W)
    o_ref[0] = u * _sigmoid(logit)[:, :, None]


# ---------------------------------------------------------------------------
# wrappers
# ---------------------------------------------------------------------------
def s_module_pallas(p, inp):
    b, h, w, c = inp.shape
    cq = p['q_w'].shape[0]
    fdim = 2 * cq + c
    pos = _sincos_pos_embed(h, w, c)
    se_w1_t = jnp.transpose(p['se_w1'])            # (C, Cr)
    se_w2_t = jnp.transpose(p['se_w2'])            # (Cr, C)

    xs = pl.pallas_call(
        _pos_se_kernel,
        grid=(b,),
        in_specs=[_per_batch_spec(inp.shape),
                  _full_spec(pos.shape),
                  _full_spec(se_w1_t.shape),
                  _full_spec(se_w2_t.shape)],
        out_specs=_per_batch_spec(inp.shape),
        out_shape=jax.ShapeDtypeStruct(inp.shape, jnp.float32),
        compiler_params=_cp(("parallel",), 48),
    )(inp, pos, se_w1_t, se_w2_t)

    # fused Q/K/V 1x1 conv + BN (+ReLU on q,k columns only); bf16 output since
    # q/k/v only feed bf16 MXU matmuls downstream.
    wq = jnp.transpose(p['q_w'][:, :, 0, 0])
    wk = jnp.transpose(p['k_w'][:, :, 0, 0])
    wv = jnp.transpose(p['v_w'][:, :, 0, 0])
    w_cat = jnp.concatenate([wq, wk, wv], axis=1)                    # (C, 2Cq+C)
    b_cat = jnp.concatenate([p['q_b'], p['k_b'], p['v_b']]).reshape(1, fdim)
    g_cat = jnp.concatenate([p['q_bn']['g'], p['k_bn']['g'],
                             p['v_bn']['g']]).reshape(1, fdim)
    beta_cat = jnp.concatenate([p['q_bn']['b'], p['k_bn']['b'],
                                p['v_bn']['b']]).reshape(1, fdim)
    relu_mask = jnp.concatenate([jnp.ones((2 * cq,), jnp.float32),
                                 jnp.zeros((c,), jnp.float32)]).reshape(1, fdim)
    qkv = conv1x1_bn(xs.reshape(b * h * w, c), w_cat, b_cat, g_cat, beta_cat,
                     relu_mask, jnp.bfloat16).reshape(b, h, w, fdim)

    # column branch in (B, W, H, *) layout; bf16 transpose is XLA layout glue.
    qkv_t = jnp.transpose(qkv, (0, 2, 1, 3))
    oh_t, ms_t = pl.pallas_call(
        functools.partial(_cc_col_kernel, cq=cq),
        grid=(b,),
        in_specs=[_per_batch_spec(qkv_t.shape)],
        out_specs=(_per_batch_spec((b, w, h, c)),
                   _per_batch_spec((b, 2, w, h))),
        out_shape=(jax.ShapeDtypeStruct((b, w, h, c), jnp.float32),
                   jax.ShapeDtypeStruct((b, 2, w, h), jnp.float32)),
        compiler_params=_cp(("parallel",), 48),
    )(qkv_t)
    oh = jnp.transpose(oh_t, (0, 2, 1, 3))         # (B, H, W, C)
    ms = jnp.transpose(ms_t, (0, 1, 3, 2))         # (B, 2, H, W) lane-dense

    gamma = p['gamma'].reshape(1)
    return pl.pallas_call(
        functools.partial(_cc_row_merge_kernel, cq=cq),
        grid=(b,),
        in_specs=[_per_batch_spec(inp.shape),
                  _per_batch_spec(qkv.shape),
                  _per_batch_spec(oh.shape),
                  _per_batch_spec(ms.shape),
                  pl.BlockSpec(memory_space=pltpu.MemorySpace.SMEM)],
        out_specs=_per_batch_spec(inp.shape),
        out_shape=jax.ShapeDtypeStruct(inp.shape, jnp.float32),
        compiler_params=_cp(("parallel",), 48),
    )(xs, qkv, oh, ms, gamma)


def cam_pallas(fbc):
    b = fbc.shape[0]
    return pl.pallas_call(
        _cam_kernel,
        grid=(b,),
        in_specs=[_per_batch_spec(fbc.shape)],
        out_specs=_per_batch_spec(fbc.shape),
        out_shape=jax.ShapeDtypeStruct(fbc.shape, jnp.float32),
        compiler_params=_cp(("parallel",), 48),
    )(fbc)


def combine_cbam_pallas(x, sx, sfb, camo, gammas, ca_w1_t, ca_w2_t, sa_flat):
    b, h, w, c = x.shape
    return pl.pallas_call(
        _combine_cbam_kernel,
        grid=(b,),
        in_specs=[_per_batch_spec(x.shape),
                  _per_batch_spec(x.shape),
                  _per_batch_spec(x.shape),
                  _per_batch_spec(x.shape),
                  _full_spec(ca_w1_t.shape),
                  _full_spec(ca_w2_t.shape),
                  pl.BlockSpec(memory_space=pltpu.MemorySpace.SMEM),
                  pl.BlockSpec(memory_space=pltpu.MemorySpace.SMEM)],
        out_specs=_per_batch_spec(x.shape),
        out_shape=jax.ShapeDtypeStruct(x.shape, jnp.float32),
        scratch_shapes=[pltpu.VMEM((2, h + 6, w + 6), jnp.float32)],
        compiler_params=_cp(("parallel",), 48),
    )(x, sx, sfb, camo, ca_w1_t, ca_w2_t, gammas, sa_flat)


def stage_attention_forward(params, x_nchw, fb_nchw):
    b, c, h, w = x_nchw.shape
    assert h == w, "square spatial assumed (the torch module swaps width/height names)"
    x = jnp.transpose(x_nchw, (0, 2, 3, 1))
    fbf = jnp.transpose(fb_nchw, (0, 2, 3, 1))

    # nn.MaxPool2d(2, 2): windowing/layout glue kept in XLA.
    fbp = jnp.maximum(jnp.maximum(fbf[:, 0::2, 0::2, :], fbf[:, 0::2, 1::2, :]),
                      jnp.maximum(fbf[:, 1::2, 0::2, :], fbf[:, 1::2, 1::2, :]))
    cin = fbp.shape[-1]

    w_one = jnp.transpose(params['oneconv_w'][:, :, 0, 0])
    fbc = conv1x1_bn(fbp.reshape(-1, cin), w_one,
                     params['oneconv_b'].reshape(1, -1),
                     params['oneconv_bn']['g'].reshape(1, -1),
                     params['oneconv_bn']['b'].reshape(1, -1),
                     jnp.ones((1, c), jnp.float32),
                     jnp.float32).reshape(b, h, w, c)

    sx = s_module_pallas(params['pam_x'], x)
    sfb = s_module_pallas(params['pam_fb'], fbc)
    camo = cam_pallas(fbc)

    gammas = jnp.stack([params['pam_gamma'], params['pam_gamma2'],
                        params['cam_gamma']]).astype(jnp.float32)
    ca_w1_t = jnp.transpose(params['ca_w1'][:, :, 0, 0])   # (C, C//16)
    ca_w2_t = jnp.transpose(params['ca_w2'][:, :, 0, 0])   # (C//16, C)
    sa_flat = params['sa_w'][0].reshape(-1)                # (2*7*7,) order [c, ky, kx]
    out = combine_cbam_pallas(x, sx, sfb, camo, gammas, ca_w1_t, ca_w2_t, sa_flat)
    return jnp.transpose(out, (0, 3, 1, 2))


# ---------------------------------------------------------------------------
# pure-JAX reference mirroring the PyTorch module (bf16 MXU contract)
# ---------------------------------------------------------------------------
def _ref_conv_bn(x, w, b, bn, relu):
    y = _bein('bchw,oc->bohw', x, w[:, :, 0, 0]) + b.reshape(1, -1, 1, 1)
    mean = jnp.mean(y, axis=(0, 2, 3), keepdims=True)
    var = jnp.mean((y - mean) ** 2, axis=(0, 2, 3), keepdims=True)
    y = (bn['g'].reshape(1, -1, 1, 1) * (y - mean) * jax.lax.rsqrt(var + 1e-5)
         + bn['b'].reshape(1, -1, 1, 1))
    return jnp.maximum(y, 0.0) if relu else y


def _ref_s_module(p, x):
    bsz, c, h, w = x.shape
    x = x + jnp.transpose(_sincos_pos_embed(h, w, c), (2, 0, 1))[None]
    y = jnp.mean(x, axis=(2, 3))
    y = jnp.maximum(_bein('bc,rc->br', y, p['se_w1']), 0.0)
    y = _sigmoid(_bein('br,cr->bc', y, p['se_w2']))
    x = x * y[:, :, None, None]
    q = _ref_conv_bn(x, p['q_w'], p['q_b'], p['q_bn'], True)
    k = _ref_conv_bn(x, p['k_w'], p['k_b'], p['k_bn'], True)
    v = _ref_conv_bn(x, p['v_w'], p['v_b'], p['v_bn'], False)
    e_h = _bein('bchw,bcgw->bhwg', q, k)
    e_h = jnp.where(jnp.eye(h, dtype=bool)[None, :, None, :], -jnp.inf, e_h)
    e_w = _bein('bchw,bchv->bhwv', q, k)
    att = jax.nn.softmax(jnp.concatenate([e_h, e_w], axis=-1), axis=-1)
    a_h, a_w = att[..., :h], att[..., h:]
    out = _bein('bhwg,bcgw->bchw', a_h, v) + _bein('bhwv,bchv->bchw', a_w, v)
    z = x + p['gamma'] * out            # dropout treated as identity
    mu = jnp.mean(z, axis=(1, 2, 3), keepdims=True)
    var = jnp.mean((z - mu) ** 2, axis=(1, 2, 3), keepdims=True)
    return (z - mu) * jax.lax.rsqrt(var + 1e-5)


def _ref_cbam(x, ca_w1, ca_w2, sa_w):
    bsz, c, h, w = x.shape
    avg = jnp.mean(x, axis=(2, 3))
    mx = jnp.max(x, axis=(2, 3))

    def fc(t):
        hid = jnp.maximum(_bein('bc,rc->br', t, ca_w1[:, :, 0, 0]), 0.0)
        return _bein('br,cr->bc', hid, ca_w2[:, :, 0, 0])

    ca = _sigmoid(fc(avg) + fc(mx))[:, :, None, None]
    x = x * ca
    maps = jnp.stack([jnp.mean(x, axis=1), jnp.max(x, axis=1)], axis=1)  # (B,2,H,W)
    pad = jnp.pad(maps, ((0, 0), (0, 0), (3, 3), (3, 3)))
    logit = jnp.zeros((bsz, h, w), jnp.float32)
    for ch in range(2):
        for ky in range(7):
            for kx in range(7):
                logit = logit + sa_w[0, ch, ky, kx] * pad[:, ch, ky:ky + h, kx:kx + w]
    return x * _sigmoid(logit)[:, None, :, :]


def _reference_forward(params, x, fb):
    fbp = jnp.maximum(jnp.maximum(fb[:, :, 0::2, 0::2], fb[:, :, 0::2, 1::2]),
                      jnp.maximum(fb[:, :, 1::2, 0::2], fb[:, :, 1::2, 1::2]))
    fbc = _ref_conv_bn(fbp, params['oneconv_w'], params['oneconv_b'],
                       params['oneconv_bn'], True)
    sx = _ref_s_module(params['pam_x'], x)
    sfb = _ref_s_module(params['pam_fb'], fbc)
    pam_out = x + params['pam_gamma'] * sx + params['pam_gamma2'] * sfb

    bsz, c, wd, hd = x.shape            # torch: batch, channels, width, height
    f = fbc.reshape(bsz, c, -1)
    energy = _bein('bcs,bds->bcd', f, f)
    e_new = jnp.max(energy, axis=-1, keepdims=True) - energy
    att = jax.nn.softmax(e_new, axis=-1)
    cam = _bein('bcd,bds->bcs', att, f).reshape(bsz, c, hd, wd)
    cam_out = x + params['cam_gamma'] * cam

    out = pam_out + cam_out
    return _ref_cbam(out, params['ca_w1'], params['ca_w2'], params['sa_w'])


# ---------------------------------------------------------------------------
# deterministic example run
# ---------------------------------------------------------------------------
def make_params(key, cin, c):
    ks = iter(jax.random.split(key, 64))

    def nrm(shape, scale=0.3):
        return scale * jax.random.normal(next(ks), shape, dtype=jnp.float32)

    def bn(ch):
        return dict(g=1.0 + 0.1 * jax.random.normal(next(ks), (ch,), dtype=jnp.float32),
                    b=0.1 * jax.random.normal(next(ks), (ch,), dtype=jnp.float32))

    def s_mod(gamma_val):
        cq, cr = c // 8, c // 16
        return dict(q_w=nrm((cq, c, 1, 1)), q_b=nrm((cq,), 0.1), q_bn=bn(cq),
                    k_w=nrm((cq, c, 1, 1)), k_b=nrm((cq,), 0.1), k_bn=bn(cq),
                    v_w=nrm((c, c, 1, 1)), v_b=nrm((c,), 0.1), v_bn=bn(c),
                    gamma=jnp.asarray(gamma_val, jnp.float32),
                    se_w1=nrm((cr, c)), se_w2=nrm((c, cr)))

    return dict(oneconv_w=nrm((c, cin, 1, 1)), oneconv_b=nrm((c,), 0.1),
                oneconv_bn=bn(c),
                pam_x=s_mod(0.5), pam_fb=s_mod(0.4),
                pam_gamma=jnp.asarray(0.6, jnp.float32),
                pam_gamma2=jnp.asarray(0.3, jnp.float32),
                cam_gamma=jnp.asarray(0.2, jnp.float32),
                ca_w1=nrm((c // 16, c, 1, 1)), ca_w2=nrm((c, c // 16, 1, 1)),
                sa_w=nrm((1, 2, 7, 7), 0.2))


if __name__ == "__main__":
    B, IN_CH, OUT_CH, H, W = 2, 16, 32, 8, 8
    key = jax.random.PRNGKey(0)
    kx, kfb, kp = jax.random.split(key, 3)
    x = jax.random.normal(kx, (B, OUT_CH, H, W), dtype=jnp.float32)
    fb = jax.random.normal(kfb, (B, IN_CH, 2 * H, 2 * W), dtype=jnp.float32)
    params = make_params(kp, IN_CH, OUT_CH)

    out = jax.jit(stage_attention_forward)(params, x, fb)
    out = jax.block_until_ready(out)
    assert out.shape == (B, OUT_CH, H, W)

    ref = jax.jit(_reference_forward)(params, x, fb)
    ref = jax.block_until_ready(ref)
    err = float(jnp.max(jnp.abs(out - ref)))
    assert jnp.allclose(out, ref, atol=2e-2, rtol=2e-2), f"max abs diff {err}"
    print("KERNEL_OK")
</pallas_src>

<mosaic_0001>
module attributes {stable_mosaic.version = 11 : i64} {
  func.func @_mm_stats_kernel(%arg0: i32, %arg1: i32, %arg2: memref<128x16xf32, #tpu.memory_space<vmem>>, %arg3: memref<16x32xf32, #tpu.memory_space<vmem>>, %arg4: memref<1x32xf32, #tpu.memory_space<vmem>>, %arg5: memref<128x32xf32, #tpu.memory_space<vmem>>, %arg6: memref<8x32xf32, #tpu.memory_space<vmem>>) attributes {dimension_semantics = [#tpu.dimension_semantics<parallel>, #tpu.dimension_semantics<arbitrary>], iteration_bounds = array<i64: 1, 1>, scalar_prefetch = 0 : i64, scratch_operands = 0 : i64, tpu.core_type = #tpu.core_type<tc>, window_params = [{transform_indices = @transform_0, window_bounds = array<i64: 128, 16>}, {pipeline_mode = #tpu.pipeline_mode<synchronous>, transform_indices = @transform_1, window_bounds = array<i64: 16, 32>}, {pipeline_mode = #tpu.pipeline_mode<synchronous>, transform_indices = @transform_2, window_bounds = array<i64: 1, 32>}, {transform_indices = @transform_3, window_bounds = array<i64: 128, 32>}, {transform_indices = @transform_4, window_bounds = array<i64: 8, 32>}]} {
    %c0 = arith.constant 0 : index
    %c0_0 = arith.constant 0 : index
    %0 = vector.load %arg2[%c0, %c0_0] : memref<128x16xf32, #tpu.memory_space<vmem>>, vector<128x16xf32>
    %c0_1 = arith.constant 0 : index
    %c0_2 = arith.constant 0 : index
    %1 = vector.load %arg3[%c0_1, %c0_2] : memref<16x32xf32, #tpu.memory_space<vmem>>, vector<16x32xf32>
    %2 = arith.truncf %0 : vector<128x16xf32> to vector<128x16xbf16>
    %3 = arith.truncf %1 : vector<16x32xf32> to vector<16x32xbf16>
    %cst = arith.constant dense<0.000000e+00> : vector<128x32xf32>
    %4 = tpu.matmul %2, %3, %cst {dimension_numbers = #tpu.dot_dimension_numbers<[1], [0], [0], [1], [0, 0, 1, 1], [], []>} : vector<128x16xbf16>, vector<16x32xbf16>, vector<128x32xf32> -> vector<128x32xf32>
    %c0_3 = arith.constant 0 : index
    %c0_4 = arith.constant 0 : index
    %5 = vector.load %arg4[%c0_3, %c0_4] : memref<1x32xf32, #tpu.memory_space<vmem>>, vector<1x32xf32>
    %6 = vector.broadcast %5 : vector<1x32xf32> to vector<128x32xf32>
    %7 = arith.addf %4, %6 : vector<128x32xf32>
    %c0_5 = arith.constant 0 : index
    %c0_6 = arith.constant 0 : index
    %8 = vector.load %arg5[%c0_5, %c0_6] : memref<128x32xf32, #tpu.memory_space<vmem>>, vector<128x32xf32>
    tpu.vector_store %arg5[%c0_5, %c0_6], %7 {strides = array<i32>} : memref<128x32xf32, #tpu.memory_space<vmem>>, vector<128x32xf32>,
    %c0_i32 = arith.constant 0 : i32
    %9 = arith.cmpi eq, %arg1, %c0_i32 : i32
    %10 = arith.extui %9 : i1 to i32
    %c0_i32_7 = arith.constant 0 : i32
    %11 = arith.cmpi ne, %10, %c0_i32_7 : i32
    scf.if %11 {
      %cst_17 = arith.constant 0.000000e+00 : f32
      %23 = vector.broadcast %cst_17 : f32 to vector<8x32xf32>
      %c0_18 = arith.constant 0 : index
      %c0_19 = arith.constant 0 : index
      %24 = vector.load %arg6[%c0_18, %c0_19] : memref<8x32xf32, #tpu.memory_space<vmem>>, vector<8x32xf32>
      tpu.vector_store %arg6[%c0_18, %c0_19], %23 {strides = array<i32>} : memref<8x32xf32, #tpu.memory_space<vmem>>, vector<8x32xf32>,
    } else {
    }
    %c0_8 = arith.constant 0 : index
    %c0_9 = arith.constant 0 : index
    %12 = vector.load %arg6[%c0_8, %c0_9] : memref<8x32xf32, #tpu.memory_space<vmem>>, vector<1x32xf32>
    %cst_10 = arith.constant dense<0.000000e+00> : vector<32xf32>
    %13 = vector.multi_reduction <add>, %7, %cst_10 [0] : vector<128x32xf32> to vector<32xf32>
    %14 = vector.shape_cast %13 : vector<32xf32> to vector<1x32xf32>
    %15 = arith.addf %12, %14 : vector<1x32xf32>
    %c0_11 = arith.constant 0 : index
    %c0_12 = arith.constant 0 : index
    %16 = vector.load %arg6[%c0_11, %c0_12] : memref<8x32xf32, #tpu.memory_space<vmem>>, vector<1x32xf32>
    tpu.vector_store %arg6[%c0_11, %c0_12], %15 {strides = array<i32>} : memref<8x32xf32, #tpu.memory_space<vmem>>, vector<1x32xf32>,
    %c1 = arith.constant 1 : index
    %c0_13 = arith.constant 0 : index
    %17 = vector.load %arg6[%c1, %c0_13] : memref<8x32xf32, #tpu.memory_space<vmem>>, vector<1x32xf32>
    %18 = arith.mulf %7, %7 : vector<128x32xf32>
    %cst_14 = arith.constant dense<0.000000e+00> : vector<32xf32>
    %19 = vector.multi_reduction <add>, %18, %cst_14 [0] : vector<128x32xf32> to vector<32xf32>
    %20 = vector.shape_cast %19 : vector<32xf32> to vector<1x32xf32>
    %21 = arith.addf %17, %20 : vector<1x32xf32>
    %c1_15 = arith.constant 1 : index
    %c0_16 = arith.constant 0 : index
    %22 = vector.load %arg6[%c1_15, %c0_16] : memref<8x32xf32, #tpu.memory_space<vmem>>, vector<1x32xf32>
    tpu.vector_store %arg6[%c1_15, %c0_16], %21 {strides = array<i32>} : memref<8x32xf32, #tpu.memory_space<vmem>>, vector<1x32xf32>,
    return
  }
  func.func @transform_0(%arg0: i32, %arg1: i32) -> (i32, i32) {
    %c1_i32 = arith.constant 1 : i32
    %0 = arith.muli %arg0, %c1_i32 : i32
    %1 = arith.addi %0, %arg1 : i32
    %c0_i32 = arith.constant 0 : i32
    %c0_i32_0 = arith.constant 0 : i32
    return %1, %c0_i32 : i32, i32
  }
  func.func @transform_1(%arg0: i32, %arg1: i32) -> (i32, i32) {
    %c0_i32 = arith.constant 0 : i32
    %c0_i32_0 = arith.constant 0 : i32
    %c0_i32_1 = arith.constant 0 : i32
    return %c0_i32, %c0_i32_0 : i32, i32
  }
  func.func @transform_2(%arg0: i32, %arg1: i32) -> (i32, i32) {
    %c0_i32 = arith.constant 0 : i32
    %c0_i32_0 = arith.constant 0 : i32
    %c0_i32_1 = arith.constant 0 : i32
    return %c0_i32, %c0_i32_0 : i32, i32
  }
  func.func @transform_3(%arg0: i32, %arg1: i32) -> (i32, i32) {
    %c1_i32 = arith.constant 1 : i32
    %0 = arith.muli %arg0, %c1_i32 : i32
    %1 = arith.addi %0, %arg1 : i32
    %c0_i32 = arith.constant 0 : i32
    %c0_i32_0 = arith.constant 0 : i32
    return %1, %c0_i32 : i32, i32
  }
  func.func @transform_4(%arg0: i32, %arg1: i32) -> (i32, i32) {
    %c0_i32 = arith.constant 0 : i32
    %c0_i32_0 = arith.constant 0 : i32
    return %arg0, %c0_i32 : i32, i32
  }
}

module attributes {stable_mosaic.version = 11 : i64} {
  func.func @_bn_act_kernel(%arg0: i32, %arg1: memref<128x32xf32, #tpu.memory_space<vmem>>, %arg2: memref<8x32xf32, #tpu.memory_space<vmem>>, %arg3: memref<1x32xf32, #tpu.memory_space<vmem>>, %arg4: memref<1x32xf32, #tpu.memory_space<vmem>>, %arg5: memref<1x32xf32, #tpu.memory_space<vmem>>, %arg6: memref<128x32xf32, #tpu.memory_space<vmem>>) attributes {dimension_semantics = [#tpu.dimension_semantics<parallel>], iteration_bounds = array<i64: 1>, scalar_prefetch = 0 : i64, scratch_operands = 0 : i64, tpu.core_type = #tpu.core_type<tc>, window_params = [{transform_indices = @transform_0, window_bounds = array<i64: 128, 32>}, {pipeline_mode = #tpu.pipeline_mode<synchronous>, transform_indices = @transform_1, window_bounds = array<i64: 8, 32>}, {pipeline_mode = #tpu.pipeline_mode<synchronous>, transform_indices = @transform_2, window_bounds = array<i64: 1, 32>}, {pipeline_mode = #tpu.pipeline_mode<synchronous>, transform_indices = @transform_3, window_bounds = array<i64: 1, 32>}, {pipeline_mode = #tpu.pipeline_mode<synchronous>, transform_indices = @transform_4, window_bounds = array<i64: 1, 32>}, {transform_indices = @transform_5, window_bounds = array<i64: 128, 32>}]} {
    %c0 = arith.constant 0 : index
    %c0_0 = arith.constant 0 : index
    %0 = vector.load %arg2[%c0, %c0_0] : memref<8x32xf32, #tpu.memory_space<vmem>>, vector<1x32xf32>
    %cst = arith.constant 7.812500e-03 : f32
    %1 = vector.broadcast %cst : f32 to vector<1x32xf32>
    %2 = arith.mulf %0, %1 : vector<1x32xf32>
    %c1 = arith.constant 1 : index
    %c0_1 = arith.constant 0 : index
    %3 = vector.load %arg2[%c1, %c0_1] : memref<8x32xf32, #tpu.memory_space<vmem>>, vector<1x32xf32>
    %cst_2 = arith.constant 7.812500e-03 : f32
    %4 = vector.broadcast %cst_2 : f32 to vector<1x32xf32>
    %5 = arith.mulf %3, %4 : vector<1x32xf32>
    %6 = arith.mulf %2, %2 : vector<1x32xf32>
    %7 = arith.subf %5, %6 : vector<1x32xf32>
    %c0_3 = arith.constant 0 : index
    %c0_4 = arith.constant 0 : index
    %8 = vector.load %arg1[%c0_3, %c0_4] : memref<128x32xf32, #tpu.memory_space<vmem>>, vector<128x32xf32>
    %9 = vector.broadcast %2 : vector<1x32xf32> to vector<128x32xf32>
    %10 = arith.subf %8, %9 : vector<128x32xf32>
    %cst_5 = arith.constant 9.99999974E-6 : f32
    %11 = vector.broadcast %cst_5 : f32 to vector<1x32xf32>
    %12 = arith.addf %7, %11 : vector<1x32xf32>
    %13 = math.rsqrt %12 : vector<1x32xf32>
    %c0_6 = arith.constant 0 : index
    %c0_7 = arith.constant 0 : index
    %14 = vector.load %arg3[%c0_6, %c0_7] : memref<1x32xf32, #tpu.memory_space<vmem>>, vector<1x32xf32>
    %15 = arith.mulf %13, %14 : vector<1x32xf32>
    %16 = vector.broadcast %15 : vector<1x32xf32> to vector<128x32xf32>
    %17 = arith.mulf %10, %16 : vector<128x32xf32>
    %c0_8 = arith.constant 0 : index
    %c0_9 = arith.constant 0 : index
    %18 = vector.load %arg4[%c0_8, %c0_9] : memref<1x32xf32, #tpu.memory_space<vmem>>, vector<1x32xf32>
    %19 = vector.broadcast %18 : vector<1x32xf32> to vector<128x32xf32>
    %20 = arith.addf %17, %19 : vector<128x32xf32>
    %c0_10 = arith.constant 0 : index
    %c0_11 = arith.constant 0 : index
    %21 = vector.load %arg5[%c0_10, %c0_11] : memref<1x32xf32, #tpu.memory_space<vmem>>, vector<1x32xf32>
    %cst_12 = arith.constant 0.000000e+00 : f32
    %22 = vector.broadcast %cst_12 : f32 to vector<128x32xf32>
    %23 = arith.maximumf %20, %22 : vector<128x32xf32>
    %24 = vector.broadcast %21 : vector<1x32xf32> to vector<128x32xf32>
    %25 = arith.mulf %24, %23 : vector<128x32xf32>
    %cst_13 = arith.constant 1.000000e+00 : f32
    %26 = vector.broadcast %cst_13 : f32 to vector<1x32xf32>
    %27 = arith.subf %26, %21 : vector<1x32xf32>
    %28 = vector.broadcast %27 : vector<1x32xf32> to vector<128x32xf32>
    %29 = arith.mulf %28, %20 : vector<128x32xf32>
    %30 = arith.addf %25, %29 : vector<128x32xf32>
    %c0_14 = arith.constant 0 : index
    %c0_15 = arith.constant 0 : index
    %31 = vector.load %arg6[%c0_14, %c0_15] : memref<128x32xf32, #tpu.memory_space<vmem>>, vector<128x32xf32>
    tpu.vector_store %arg6[%c0_14, %c0_15], %30 {strides = array<i32>} : memref<128x32xf32, #tpu.memory_space<vmem>>, vector<128x32xf32>,
    return
  }
  func.func @transform_0(%arg0: i32) -> (i32, i32) {
    %c0_i32 = arith.constant 0 : i32
    %c0_i32_0 = arith.constant 0 : i32
    return %arg0, %c0_i32 : i32, i32
  }
  func.func @transform_1(%arg0: i32) -> (i32, i32) {
    %c0_i32 = arith.constant 0 : i32
    %c0_i32_0 = arith.constant 0 : i32
    %c0_i32_1 = arith.constant 0 : i32
    return %c0_i32, %c0_i32_0 : i32, i32
  }
  func.func @transform_2(%arg0: i32) -> (i32, i32) {
    %c0_i32 = arith.constant 0 : i32
    %c0_i32_0 = arith.constant 0 : i32
    %c0_i32_1 = arith.constant 0 : i32
    return %c0_i32, %c0_i32_0 : i32, i32
  }
  func.func @transform_3(%arg0: i32) -> (i32, i32) {
    %c0_i32 = arith.constant 0 : i32
    %c0_i32_0 = arith.constant 0 : i32
    %c0_i32_1 = arith.constant 0 : i32
    return %c0_i32, %c0_i32_0 : i32, i32
  }
  func.func @transform_4(%arg0: i32) -> (i32, i32) {
    %c0_i32 = arith.constant 0 : i32
    %c0_i32_0 = arith.constant 0 : i32
    %c0_i32_1 = arith.constant 0 : i32
    return %c0_i32, %c0_i32_0 : i32, i32
  }
  func.func @transform_5(%arg0: i32) -> (i32, i32) {
    %c0_i32 = arith.constant 0 : i32
    %c0_i32_0 = arith.constant 0 : i32
    return %arg0, %c0_i32 : i32, i32
  }
}

module attributes {stable_mosaic.version = 11 : i64} {
  func.func @_pos_se_kernel(%arg0: i32, %arg1: memref<1x8x8x32xf32, #tpu.memory_space<vmem>>, %arg2: memref<8x8x32xf32, #tpu.memory_space<vmem>>, %arg3: memref<32x2xf32, #tpu.memory_space<vmem>>, %arg4: memref<2x32xf32, #tpu.memory_space<vmem>>, %arg5: memref<1x8x8x32xf32, #tpu.memory_space<vmem>>) attributes {dimension_semantics = [#tpu.dimension_semantics<parallel>], iteration_bounds = array<i64: 2>, scalar_prefetch = 0 : i64, scratch_operands = 0 : i64, tpu.core_type = #tpu.core_type<tc>, window_params = [{transform_indices = @transform_0, window_bounds = array<i64: 1, 8, 8, 32>}, {pipeline_mode = #tpu.pipeline_mode<synchronous>, transform_indices = @transform_1, window_bounds = array<i64: 8, 8, 32>}, {pipeline_mode = #tpu.pipeline_mode<synchronous>, transform_indices = @transform_2, window_bounds = array<i64: 32, 2>}, {pipeline_mode = #tpu.pipeline_mode<synchronous>, transform_indices = @transform_3, window_bounds = array<i64: 2, 32>}, {transform_indices = @transform_4, window_bounds = array<i64: 1, 8, 8, 32>}]} {
    %c0 = arith.constant 0 : index
    %c0_0 = arith.constant 0 : index
    %c0_1 = arith.constant 0 : index
    %c0_2 = arith.constant 0 : index
    %0 = vector.load %arg1[%c0, %c0_0, %c0_1, %c0_2] : memref<1x8x8x32xf32, #tpu.memory_space<vmem>>, vector<1x8x8x32xf32>
    %1 = vector.shape_cast %0 : vector<1x8x8x32xf32> to vector<8x8x32xf32>
    %c0_3 = arith.constant 0 : index
    %c0_4 = arith.constant 0 : index
    %c0_5 = arith.constant 0 : index
    %2 = vector.load %arg2[%c0_3, %c0_4, %c0_5] : memref<8x8x32xf32, #tpu.memory_space<vmem>>, vector<8x8x32xf32>
    %3 = arith.addf %1, %2 : vector<8x8x32xf32>
    %4 = vector.shape_cast %3 : vector<8x8x32xf32> to vector<64x32xf32>
    %cst = arith.constant dense<0.000000e+00> : vector<32xf32>
    %5 = vector.multi_reduction <add>, %4, %cst [0] : vector<64x32xf32> to vector<32xf32>
    %6 = vector.shape_cast %5 : vector<32xf32> to vector<1x32xf32>
    %cst_6 = arith.constant 6.400000e+01 : f32
    %7 = vector.broadcast %cst_6 : f32 to vector<1x32xf32>
    %8 = arith.divf %6, %7 : vector<1x32xf32>
    %c0_7 = arith.constant 0 : index
    %c0_8 = arith.constant 0 : index
    %9 = vector.load %arg3[%c0_7, %c0_8] : memref<32x2xf32, #tpu.memory_space<vmem>>, vector<32x2xf32>
    %10 = arith.truncf %8 : vector<1x32xf32> to vector<1x32xbf16>
    %11 = arith.truncf %9 : vector<32x2xf32> to vector<32x2xbf16>
    %cst_9 = arith.constant dense<0.000000e+00> : vector<1x2xf32>
    %12 = tpu.matmul %10, %11, %cst_9 {dimension_numbers = #tpu.dot_dimension_numbers<[1], [0], [0], [1], [0, 0, 1, 1], [], []>} : vector<1x32xbf16>, vector<32x2xbf16>, vector<1x2xf32> -> vector<1x2xf32>
    %cst_10 = arith.constant 0.000000e+00 : f32
    %13 = vector.broadcast %cst_10 : f32 to vector<1x2xf32>
    %14 = arith.maximumf %12, %13 : vector<1x2xf32>
    %c0_11 = arith.constant 0 : index
    %c0_12 = arith.constant 0 : index
    %15 = vector.load %arg4[%c0_11, %c0_12] : memref<2x32xf32, #tpu.memory_space<vmem>>, vector<2x32xf32>
    %16 = arith.truncf %14 : vector<1x2xf32> to vector<1x2xbf16>
    %17 = arith.truncf %15 : vector<2x32xf32> to vector<2x32xbf16>
    %cst_13 = arith.constant dense<0.000000e+00> : vector<1x32xf32>
    %18 = tpu.matmul %16, %17, %cst_13 {dimension_numbers = #tpu.dot_dimension_numbers<[1], [0], [0], [1], [0, 0, 1, 1], [], []>} : vector<1x2xbf16>, vector<2x32xbf16>, vector<1x32xf32> -> vector<1x32xf32>
    %cst_14 = arith.constant 0.000000e+00 : f32
    %19 = vector.broadcast %cst_14 : f32 to vector<1x32xf32>
    %20 = arith.subf %19, %18 : vector<1x32xf32>
    %21 = math.exp %20 : vector<1x32xf32>
    %cst_15 = arith.constant 1.000000e+00 : f32
    %22 = vector.broadcast %cst_15 : f32 to vector<1x32xf32>
    %23 = arith.addf %22, %21 : vector<1x32xf32>
    %cst_16 = arith.constant 1.000000e+00 : f32
    %24 = vector.broadcast %cst_16 : f32 to vector<1x32xf32>
    %25 = arith.divf %24, %23 : vector<1x32xf32>
    %26 = vector.shape_cast %25 : vector<1x32xf32> to vector<1x1x32xf32>
    %27 = vector.broadcast %26 : vector<1x1x32xf32> to vector<8x8x32xf32>
    %28 = arith.mulf %3, %27 : vector<8x8x32xf32>
    %c0_17 = arith.constant 0 : index
    %c0_18 = arith.constant 0 : index
    %c0_19 = arith.constant 0 : index
    %c0_20 = arith.constant 0 : index
    %29 = vector.load %arg5[%c0_17, %c0_18, %c0_19, %c0_20] : memref<1x8x8x32xf32, #tpu.memory_space<vmem>>, vector<1x8x8x32xf32>
    %30 = vector.shape_cast %29 : vector<1x8x8x32xf32> to vector<8x8x32xf32>
    %31 = vector.shape_cast %28 : vector<8x8x32xf32> to vector<1x8x8x32xf32>
    tpu.vector_store %arg5[%c0_17, %c0_18, %c0_19, %c0_20], %31 {strides = array<i32>} : memref<1x8x8x32xf32, #tpu.memory_space<vmem>>, vector<1x8x8x32xf32>,
    return
  }
  func.func @transform_0(%arg0: i32) -> (i32, i32, i32, i32) {
    %c0_i32 = arith.constant 0 : i32
    %c0_i32_0 = arith.constant 0 : i32
    %c0_i32_1 = arith.constant 0 : i32
    %c0_i32_2 = arith.constant 0 : i32
    return %arg0, %c0_i32, %c0_i32_0, %c0_i32_1 : i32, i32, i32, i32
  }
  func.func @transform_1(%arg0: i32) -> (i32, i32, i32) {
    %c0_i32 = arith.constant 0 : i32
    %c0_i32_0 = arith.constant 0 : i32
    %c0_i32_1 = arith.constant 0 : i32
    %c0_i32_2 = arith.constant 0 : i32
    return %c0_i32, %c0_i32_0, %c0_i32_1 : i32, i32, i32
  }
  func.func @transform_2(%arg0: i32) -> (i32, i32) {
    %c0_i32 = arith.constant 0 : i32
    %c0_i32_0 = arith.constant 0 : i32
    %c0_i32_1 = arith.constant 0 : i32
    return %c0_i32, %c0_i32_0 : i32, i32
  }
  func.func @transform_3(%arg0: i32) -> (i32, i32) {
    %c0_i32 = arith.constant 0 : i32
    %c0_i32_0 = arith.constant 0 : i32
    %c0_i32_1 = arith.constant 0 : i32
    return %c0_i32, %c0_i32_0 : i32, i32
  }
  func.func @transform_4(%arg0: i32) -> (i32, i32, i32, i32) {
    %c0_i32 = arith.constant 0 : i32
    %c0_i32_0 = arith.constant 0 : i32
    %c0_i32_1 = arith.constant 0 : i32
    %c0_i32_2 = arith.constant 0 : i32
    return %arg0, %c0_i32, %c0_i32_0, %c0_i32_1 : i32, i32, i32, i32
  }
}

module attributes {stable_mosaic.version = 11 : i64} {
  func.func @_mm_stats_kernel(%arg0: i32, %arg1: i32, %arg2: memref<128x32xf32, #tpu.memory_space<vmem>>, %arg3: memref<32x40xf32, #tpu.memory_space<vmem>>, %arg4: memref<1x40xf32, #tpu.memory_space<vmem>>, %arg5: memref<128x40xf32, #tpu.memory_space<vmem>>, %arg6: memref<8x40xf32, #tpu.memory_space<vmem>>) attributes {dimension_semantics = [#tpu.dimension_semantics<parallel>, #tpu.dimension_semantics<arbitrary>], iteration_bounds = array<i64: 1, 1>, scalar_prefetch = 0 : i64, scratch_operands = 0 : i64, tpu.core_type = #tpu.core_type<tc>, window_params = [{transform_indices = @transform_0, window_bounds = array<i64: 128, 32>}, {pipeline_mode = #tpu.pipeline_mode<synchronous>, transform_indices = @transform_1, window_bounds = array<i64: 32, 40>}, {pipeline_mode = #tpu.pipeline_mode<synchronous>, transform_indices = @transform_2, window_bounds = array<i64: 1, 40>}, {transform_indices = @transform_3, window_bounds = array<i64: 128, 40>}, {transform_indices = @transform_4, window_bounds = array<i64: 8, 40>}]} {
    %c0 = arith.constant 0 : index
    %c0_0 = arith.constant 0 : index
    %0 = vector.load %arg2[%c0, %c0_0] : memref<128x32xf32, #tpu.memory_space<vmem>>, vector<128x32xf32>
    %c0_1 = arith.constant 0 : index
    %c0_2 = arith.constant 0 : index
    %1 = vector.load %arg3[%c0_1, %c0_2] : memref<32x40xf32, #tpu.memory_space<vmem>>, vector<32x40xf32>
    %2 = arith.truncf %0 : vector<128x32xf32> to vector<128x32xbf16>
    %3 = arith.truncf %1 : vector<32x40xf32> to vector<32x40xbf16>
    %cst = arith.constant dense<0.000000e+00> : vector<128x40xf32>
    %4 = tpu.matmul %2, %3, %cst {dimension_numbers = #tpu.dot_dimension_numbers<[1], [0], [0], [1], [0, 0, 1, 1], [], []>} : vector<128x32xbf16>, vector<32x40xbf16>, vector<128x40xf32> -> vector<128x40xf32>
    %c0_3 = arith.constant 0 : index
    %c0_4 = arith.constant 0 : index
    %5 = vector.load %arg4[%c0_3, %c0_4] : memref<1x40xf32, #tpu.memory_space<vmem>>, vector<1x40xf32>
    %6 = vector.broadcast %5 : vector<1x40xf32> to vector<128x40xf32>
    %7 = arith.addf %4, %6 : vector<128x40xf32>
    %c0_5 = arith.constant 0 : index
    %c0_6 = arith.constant 0 : index
    %8 = vector.load %arg5[%c0_5, %c0_6] : memref<128x40xf32, #tpu.memory_space<vmem>>, vector<128x40xf32>
    tpu.vector_store %arg5[%c0_5, %c0_6], %7 {strides = array<i32>} : memref<128x40xf32, #tpu.memory_space<vmem>>, vector<128x40xf32>,
    %c0_i32 = arith.constant 0 : i32
    %9 = arith.cmpi eq, %arg1, %c0_i32 : i32
    %10 = arith.extui %9 : i1 to i32
    %c0_i32_7 = arith.constant 0 : i32
    %11 = arith.cmpi ne, %10, %c0_i32_7 : i32
    scf.if %11 {
      %cst_17 = arith.constant 0.000000e+00 : f32
      %23 = vector.broadcast %cst_17 : f32 to vector<8x40xf32>
      %c0_18 = arith.constant 0 : index
      %c0_19 = arith.constant 0 : index
      %24 = vector.load %arg6[%c0_18, %c0_19] : memref<8x40xf32, #tpu.memory_space<vmem>>, vector<8x40xf32>
      tpu.vector_store %arg6[%c0_18, %c0_19], %23 {strides = array<i32>} : memref<8x40xf32, #tpu.memory_space<vmem>>, vector<8x40xf32>,
    } else {
    }
    %c0_8 = arith.constant 0 : index
    %c0_9 = arith.constant 0 : index
    %12 = vector.load %arg6[%c0_8, %c0_9] : memref<8x40xf32, #tpu.memory_space<vmem>>, vector<1x40xf32>
    %cst_10 = arith.constant dense<0.000000e+00> : vector<40xf32>
    %13 = vector.multi_reduction <add>, %7, %cst_10 [0] : vector<128x40xf32> to vector<40xf32>
    %14 = vector.shape_cast %13 : vector<40xf32> to vector<1x40xf32>
    %15 = arith.addf %12, %14 : vector<1x40xf32>
    %c0_11 = arith.constant 0 : index
    %c0_12 = arith.constant 0 : index
    %16 = vector.load %arg6[%c0_11, %c0_12] : memref<8x40xf32, #tpu.memory_space<vmem>>, vector<1x40xf32>
    tpu.vector_store %arg6[%c0_11, %c0_12], %15 {strides = array<i32>} : memref<8x40xf32, #tpu.memory_space<vmem>>, vector<1x40xf32>,
    %c1 = arith.constant 1 : index
    %c0_13 = arith.constant 0 : index
    %17 = vector.load %arg6[%c1, %c0_13] : memref<8x40xf32, #tpu.memory_space<vmem>>, vector<1x40xf32>
    %18 = arith.mulf %7, %7 : vector<128x40xf32>
    %cst_14 = arith.constant dense<0.000000e+00> : vector<40xf32>
    %19 = vector.multi_reduction <add>, %18, %cst_14 [0] : vector<128x40xf32> to vector<40xf32>
    %20 = vector.shape_cast %19 : vector<40xf32> to vector<1x40xf32>
    %21 = arith.addf %17, %20 : vector<1x40xf32>
    %c1_15 = arith.constant 1 : index
    %c0_16 = arith.constant 0 : index
    %22 = vector.load %arg6[%c1_15, %c0_16] : memref<8x40xf32, #tpu.memory_space<vmem>>, vector<1x40xf32>
    tpu.vector_store %arg6[%c1_15, %c0_16], %21 {strides = array<i32>} : memref<8x40xf32, #tpu.memory_space<vmem>>, vector<1x40xf32>,
    return
  }
  func.func @transform_0(%arg0: i32, %arg1: i32) -> (i32, i32) {
    %c1_i32 = arith.constant 1 : i32
    %0 = arith.muli %arg0, %c1_i32 : i32
    %1 = arith.addi %0, %arg1 : i32
    %c0_i32 = arith.constant 0 : i32
    %c0_i32_0 = arith.constant 0 : i32
    return %1, %c0_i32 : i32, i32
  }
  func.func @transform_1(%arg0: i32, %arg1: i32) -> (i32, i32) {
    %c0_i32 = arith.constant 0 : i32
    %c0_i32_0 = arith.constant 0 : i32
    %c0_i32_1 = arith.constant 0 : i32
    return %c0_i32, %c0_i32_0 : i32, i32
  }
  func.func @transform_2(%arg0: i32, %arg1: i32) -> (i32, i32) {
    %c0_i32 = arith.constant 0 : i32
    %c0_i32_0 = arith.constant 0 : i32
    %c0_i32_1 = arith.constant 0 : i32
    return %c0_i32, %c0_i32_0 : i32, i32
  }
  func.func @transform_3(%arg0: i32, %arg1: i32) -> (i32, i32) {
    %c1_i32 = arith.constant 1 : i32
    %0 = arith.muli %arg0, %c1_i32 : i32
    %1 = arith.addi %0, %arg1 : i32
    %c0_i32 = arith.constant 0 : i32
    %c0_i32_0 = arith.constant 0 : i32
    return %1, %c0_i32 : i32, i32
  }
  func.func @transform_4(%arg0: i32, %arg1: i32) -> (i32, i32) {
    %c0_i32 = arith.constant 0 : i32
    %c0_i32_0 = arith.constant 0 : i32
    return %arg0, %c0_i32 : i32, i32
  }
}

module attributes {stable_mosaic.version = 11 : i64} {
  func.func @_bn_act_kernel(%arg0: i32, %arg1: memref<128x40xf32, #tpu.memory_space<vmem>>, %arg2: memref<8x40xf32, #tpu.memory_space<vmem>>, %arg3: memref<1x40xf32, #tpu.memory_space<vmem>>, %arg4: memref<1x40xf32, #tpu.memory_space<vmem>>, %arg5: memref<1x40xf32, #tpu.memory_space<vmem>>, %arg6: memref<128x40xbf16, #tpu.memory_space<vmem>>) attributes {dimension_semantics = [#tpu.dimension_semantics<parallel>], iteration_bounds = array<i64: 1>, scalar_prefetch = 0 : i64, scratch_operands = 0 : i64, tpu.core_type = #tpu.core_type<tc>, window_params = [{transform_indices = @transform_0, window_bounds = array<i64: 128, 40>}, {pipeline_mode = #tpu.pipeline_mode<synchronous>, transform_indices = @transform_1, window_bounds = array<i64: 8, 40>}, {pipeline_mode = #tpu.pipeline_mode<synchronous>, transform_indices = @transform_2, window_bounds = array<i64: 1, 40>}, {pipeline_mode = #tpu.pipeline_mode<synchronous>, transform_indices = @transform_3, window_bounds = array<i64: 1, 40>}, {pipeline_mode = #tpu.pipeline_mode<synchronous>, transform_indices = @transform_4, window_bounds = array<i64: 1, 40>}, {transform_indices = @transform_5, window_bounds = array<i64: 128, 40>}]} {
    %c0 = arith.constant 0 : index
    %c0_0 = arith.constant 0 : index
    %0 = vector.load %arg2[%c0, %c0_0] : memref<8x40xf32, #tpu.memory_space<vmem>>, vector<1x40xf32>
    %cst = arith.constant 7.812500e-03 : f32
    %1 = vector.broadcast %cst : f32 to vector<1x40xf32>
    %2 = arith.mulf %0, %1 : vector<1x40xf32>
    %c1 = arith.constant 1 : index
    %c0_1 = arith.constant 0 : index
    %3 = vector.load %arg2[%c1, %c0_1] : memref<8x40xf32, #tpu.memory_space<vmem>>, vector<1x40xf32>
    %cst_2 = arith.constant 7.812500e-03 : f32
    %4 = vector.broadcast %cst_2 : f32 to vector<1x40xf32>
    %5 = arith.mulf %3, %4 : vector<1x40xf32>
    %6 = arith.mulf %2, %2 : vector<1x40xf32>
    %7 = arith.subf %5, %6 : vector<1x40xf32>
    %c0_3 = arith.constant 0 : index
    %c0_4 = arith.constant 0 : index
    %8 = vector.load %arg1[%c0_3, %c0_4] : memref<128x40xf32, #tpu.memory_space<vmem>>, vector<128x40xf32>
    %9 = vector.broadcast %2 : vector<1x40xf32> to vector<128x40xf32>
    %10 = arith.subf %8, %9 : vector<128x40xf32>
    %cst_5 = arith.constant 9.99999974E-6 : f32
    %11 = vector.broadcast %cst_5 : f32 to vector<1x40xf32>
    %12 = arith.addf %7, %11 : vector<1x40xf32>
    %13 = math.rsqrt %12 : vector<1x40xf32>
    %c0_6 = arith.constant 0 : index
    %c0_7 = arith.constant 0 : index
    %14 = vector.load %arg3[%c0_6, %c0_7] : memref<1x40xf32, #tpu.memory_space<vmem>>, vector<1x40xf32>
    %15 = arith.mulf %13, %14 : vector<1x40xf32>
    %16 = vector.broadcast %15 : vector<1x40xf32> to vector<128x40xf32>
    %17 = arith.mulf %10, %16 : vector<128x40xf32>
    %c0_8 = arith.constant 0 : index
    %c0_9 = arith.constant 0 : index
    %18 = vector.load %arg4[%c0_8, %c0_9] : memref<1x40xf32, #tpu.memory_space<vmem>>, vector<1x40xf32>
    %19 = vector.broadcast %18 : vector<1x40xf32> to vector<128x40xf32>
    %20 = arith.addf %17, %19 : vector<128x40xf32>
    %c0_10 = arith.constant 0 : index
    %c0_11 = arith.constant 0 : index
    %21 = vector.load %arg5[%c0_10, %c0_11] : memref<1x40xf32, #tpu.memory_space<vmem>>, vector<1x40xf32>
    %cst_12 = arith.constant 0.000000e+00 : f32
    %22 = vector.broadcast %cst_12 : f32 to vector<128x40xf32>
    %23 = arith.maximumf %20, %22 : vector<128x40xf32>
    %24 = vector.broadcast %21 : vector<1x40xf32> to vector<128x40xf32>
    %25 = arith.mulf %24, %23 : vector<128x40xf32>
    %cst_13 = arith.constant 1.000000e+00 : f32
    %26 = vector.broadcast %cst_13 : f32 to vector<1x40xf32>
    %27 = arith.subf %26, %21 : vector<1x40xf32>
    %28 = vector.broadcast %27 : vector<1x40xf32> to vector<128x40xf32>
    %29 = arith.mulf %28, %20 : vector<128x40xf32>
    %30 = arith.addf %25, %29 : vector<128x40xf32>
    %31 = arith.truncf %30 : vector<128x40xf32> to vector<128x40xbf16>
    %c0_14 = arith.constant 0 : index
    %c0_15 = arith.constant 0 : index
    %32 = vector.load %arg6[%c0_14, %c0_15] : memref<128x40xbf16, #tpu.memory_space<vmem>>, vector<128x40xbf16>
    tpu.vector_store %arg6[%c0_14, %c0_15], %31 {strides = array<i32>} : memref<128x40xbf16, #tpu.memory_space<vmem>>, vector<128x40xbf16>,
    return
  }
  func.func @transform_0(%arg0: i32) -> (i32, i32) {
    %c0_i32 = arith.constant 0 : i32
    %c0_i32_0 = arith.constant 0 : i32
    return %arg0, %c0_i32 : i32, i32
  }
  func.func @transform_1(%arg0: i32) -> (i32, i32) {
    %c0_i32 = arith.constant 0 : i32
    %c0_i32_0 = arith.constant 0 : i32
    %c0_i32_1 = arith.constant 0 : i32
    return %c0_i32, %c0_i32_0 : i32, i32
  }
  func.func @transform_2(%arg0: i32) -> (i32, i32) {
    %c0_i32 = arith.constant 0 : i32
    %c0_i32_0 = arith.constant 0 : i32
    %c0_i32_1 = arith.constant 0 : i32
    return %c0_i32, %c0_i32_0 : i32, i32
  }
  func.func @transform_3(%arg0: i32) -> (i32, i32) {
    %c0_i32 = arith.constant 0 : i32
    %c0_i32_0 = arith.constant 0 : i32
    %c0_i32_1 = arith.constant 0 : i32
    return %c0_i32, %c0_i32_0 : i32, i32
  }
  func.func @transform_4(%arg0: i32) -> (i32, i32) {
    %c0_i32 = arith.constant 0 : i32
    %c0_i32_0 = arith.constant 0 : i32
    %c0_i32_1 = arith.constant 0 : i32
    return %c0_i32, %c0_i32_0 : i32, i32
  }
  func.func @transform_5(%arg0: i32) -> (i32, i32) {
    %c0_i32 = arith.constant 0 : i32
    %c0_i32_0 = arith.constant 0 : i32
    return %arg0, %c0_i32 : i32, i32
  }
}

module attributes {stable_mosaic.version = 11 : i64} {
  func.func @_cc_col_kernel(%arg0: i32, %arg1: memref<1x8x8x40xbf16, #tpu.memory_space<vmem>>, %arg2: memref<1x8x8x32xf32, #tpu.memory_space<vmem>>, %arg3: memref<1x2x8x8xf32, #tpu.memory_space<vmem>>) attributes {dimension_semantics = [#tpu.dimension_semantics<parallel>], iteration_bounds = array<i64: 2>, scalar_prefetch = 0 : i64, scratch_operands = 0 : i64, tpu.core_type = #tpu.core_type<tc>, window_params = [{transform_indices = @transform_0, window_bounds = array<i64: 1, 8, 8, 40>}, {transform_indices = @transform_1, window_bounds = array<i64: 1, 8, 8, 32>}, {transform_indices = @transform_2, window_bounds = array<i64: 1, 2, 8, 8>}]} {
    %c0 = arith.constant 0 : index
    %c0_0 = arith.constant 0 : index
    %c0_1 = arith.constant 0 : index
    %c0_2 = arith.constant 0 : index
    %0 = vector.load %arg1[%c0, %c0_0, %c0_1, %c0_2] : memref<1x8x8x40xbf16, #tpu.memory_space<vmem>>, vector<1x8x8x40xbf16>
    %1 = vector.shape_cast %0 : vector<1x8x8x40xbf16> to vector<8x8x40xbf16>
    %2 = vector.extract_strided_slice %1 {offsets = [0, 0, 0], sizes = [8, 8, 4], strides = [1, 1, 1]} : vector<8x8x40xbf16> to vector<8x8x4xbf16>
    %3 = vector.extract_strided_slice %1 {offsets = [0, 0, 4], sizes = [8, 8, 4], strides = [1, 1, 1]} : vector<8x8x40xbf16> to vector<8x8x4xbf16>
    %4 = vector.extract_strided_slice %1 {offsets = [0, 0, 8], sizes = [8, 8, 32], strides = [1, 1, 1]} : vector<8x8x40xbf16> to vector<8x8x32xbf16>
    "tpu.trace_start"() <{level = 10 : i32, message = "whc,wgc->whg"}> : () -> ()
    %cst = arith.constant dense<0.000000e+00> : vector<8x8x8xf32>
    %5 = tpu.matmul %2, %3, %cst {dimension_numbers = #tpu.dot_dimension_numbers<[2], [2], [1], [1], [0, 0, 0, 1, 1, 1], [0], [0]>} : vector<8x8x4xbf16>, vector<8x8x4xbf16>, vector<8x8x8xf32> -> vector<8x8x8xf32>
    "tpu.trace_stop"() : () -> ()
    %6 = tpu.iota {dimensions = array<i32: 1>} : vector<8x8x8xi32>
    %7 = tpu.iota {dimensions = array<i32: 2>} : vector<8x8x8xi32>
    %8 = arith.cmpi eq, %6, %7 : vector<8x8x8xi32>
    %cst_3 = arith.constant -1.000000e+30 : f32
    %9 = vector.broadcast %cst_3 : f32 to vector<8x8x8xf32>
    %10 = arith.select %8, %9, %5 : vector<8x8x8xi1>, vector<8x8x8xf32>
    %cst_4 = arith.constant dense<0xFF800000> : vector<8x8xf32>
    %11 = vector.multi_reduction <maximumf>, %10, %cst_4 [2] : vector<8x8x8xf32> to vector<8x8xf32>
    %12 = vector.shape_cast %11 : vector<8x8xf32> to vector<8x8x1xf32>
    %13 = vector.broadcast %12 : vector<8x8x1xf32> to vector<8x8x8xf32>
    %14 = arith.subf %10, %13 : vector<8x8x8xf32>
    %15 = math.exp %14 : vector<8x8x8xf32>
    %cst_5 = arith.constant dense<0.000000e+00> : vector<8x8xf32>
    %16 = vector.multi_reduction <add>, %15, %cst_5 [2] : vector<8x8x8xf32> to vector<8x8xf32>
    %17 = vector.shape_cast %16 : vector<8x8xf32> to vector<8x8x1xf32>
    %18 = arith.truncf %15 : vector<8x8x8xf32> to vector<8x8x8xbf16>
    "tpu.trace_start"() <{level = 10 : i32, message = "whg,wgc->whc"}> : () -> ()
    %cst_6 = arith.constant dense<0.000000e+00> : vector<8x8x32xf32>
    %19 = tpu.matmul %18, %4, %cst_6 {dimension_numbers = #tpu.dot_dimension_numbers<[2], [1], [1], [2], [0, 0, 0, 1, 1, 2], [0], [0]>} : vector<8x8x8xbf16>, vector<8x8x32xbf16>, vector<8x8x32xf32> -> vector<8x8x32xf32>
    "tpu.trace_stop"() : () -> ()
    %c0_7 = arith.constant 0 : index
    %c0_8 = arith.constant 0 : index
    %c0_9 = arith.constant 0 : index
    %c0_10 = arith.constant 0 : index
    %20 = vector.load %arg2[%c0_7, %c0_8, %c0_9, %c0_10] : memref<1x8x8x32xf32, #tpu.memory_space<vmem>>, vector<1x8x8x32xf32>
    %21 = vector.shape_cast %20 : vector<1x8x8x32xf32> to vector<8x8x32xf32>
    %22 = vector.shape_cast %19 : vector<8x8x32xf32> to vector<1x8x8x32xf32>
    tpu.vector_store %arg2[%c0_7, %c0_8, %c0_9, %c0_10], %22 {strides = array<i32>} : memref<1x8x8x32xf32, #tpu.memory_space<vmem>>, vector<1x8x8x32xf32>,
    %23 = vector.shape_cast %12 : vector<8x8x1xf32> to vector<8x8xf32>
    %c0_11 = arith.constant 0 : index
    %c0_12 = arith.constant 0 : index
    %c0_13 = arith.constant 0 : index
    %c0_14 = arith.constant 0 : index
    %24 = vector.load %arg3[%c0_11, %c0_12, %c0_13, %c0_14] : memref<1x2x8x8xf32, #tpu.memory_space<vmem>>, vector<1x1x8x8xf32>
    %25 = vector.shape_cast %24 : vector<1x1x8x8xf32> to vector<8x8xf32>
    %26 = vector.shape_cast %23 : vector<8x8xf32> to vector<1x1x8x8xf32>
    tpu.vector_store %arg3[%c0_11, %c0_12, %c0_13, %c0_14], %26 {strides = array<i32>} : memref<1x2x8x8xf32, #tpu.memory_space<vmem>>, vector<1x1x8x8xf32>,
    %27 = vector.shape_cast %17 : vector<8x8x1xf32> to vector<8x8xf32>
    %c0_15 = arith.constant 0 : index
    %c1 = arith.constant 1 : index
    %c0_16 = arith.constant 0 : index
    %c0_17 = arith.constant 0 : index
    %28 = vector.load %arg3[%c0_15, %c1, %c0_16, %c0_17] : memref<1x2x8x8xf32, #tpu.memory_space<vmem>>, vector<1x1x8x8xf32>
    %29 = vector.shape_cast %28 : vector<1x1x8x8xf32> to vector<8x8xf32>
    %30 = vector.shape_cast %27 : vector<8x8xf32> to vector<1x1x8x8xf32>
    tpu.vector_store %arg3[%c0_15, %c1, %c0_16, %c0_17], %30 {strides = array<i32>} : memref<1x2x8x8xf32, #tpu.memory_space<vmem>>, vector<1x1x8x8xf32>,
    return
  }
  func.func @transform_0(%arg0: i32) -> (i32, i32, i32, i32) {
    %c0_i32 = arith.constant 0 : i32
    %c0_i32_0 = arith.constant 0 : i32
    %c0_i32_1 = arith.constant 0 : i32
    %c0_i32_2 = arith.constant 0 : i32
    return %arg0, %c0_i32, %c0_i32_0, %c0_i32_1 : i32, i32, i32, i32
  }
  func.func @transform_1(%arg0: i32) -> (i32, i32, i32, i32) {
    %c0_i32 = arith.constant 0 : i32
    %c0_i32_0 = arith.constant 0 : i32
    %c0_i32_1 = arith.constant 0 : i32
    %c0_i32_2 = arith.constant 0 : i32
    return %arg0, %c0_i32, %c0_i32_0, %c0_i32_1 : i32, i32, i32, i32
  }
  func.func @transform_2(%arg0: i32) -> (i32, i32, i32, i32) {
    %c0_i32 = arith.constant 0 : i32
    %c0_i32_0 = arith.constant 0 : i32
    %c0_i32_1 = arith.constant 0 : i32
    %c0_i32_2 = arith.constant 0 : i32
    return %arg0, %c0_i32, %c0_i32_0, %c0_i32_1 : i32, i32, i32, i32
  }
}

module attributes {stable_mosaic.version = 11 : i64} {
  func.func @_cc_row_merge_kernel(%arg0: i32, %arg1: memref<1x8x8x32xf32, #tpu.memory_space<vmem>>, %arg2: memref<1x8x8x40xbf16, #tpu.memory_space<vmem>>, %arg3: memref<1x8x8x32xf32, #tpu.memory_space<vmem>>, %arg4: memref<1x2x8x8xf32, #tpu.memory_space<vmem>>, %arg5: memref<1xf32, #tpu.memory_space<smem>>, %arg6: memref<1x8x8x32xf32, #tpu.memory_space<vmem>>) attributes {dimension_semantics = [#tpu.dimension_semantics<parallel>], iteration_bounds = array<i64: 2>, scalar_prefetch = 0 : i64, scratch_operands = 0 : i64, tpu.core_type = #tpu.core_type<tc>, window_params = [{transform_indices = @transform_0, window_bounds = array<i64: 1, 8, 8, 32>}, {transform_indices = @transform_1, window_bounds = array<i64: 1, 8, 8, 40>}, {transform_indices = @transform_2, window_bounds = array<i64: 1, 8, 8, 32>}, {transform_indices = @transform_3, window_bounds = array<i64: 1, 2, 8, 8>}, {transform_indices = @transform_4, window_bounds = array<i64: 1>}, {transform_indices = @transform_5, window_bounds = array<i64: 1, 8, 8, 32>}]} {
    %c0 = arith.constant 0 : index
    %c0_0 = arith.constant 0 : index
    %c0_1 = arith.constant 0 : index
    %c0_2 = arith.constant 0 : index
    %0 = vector.load %arg1[%c0, %c0_0, %c0_1, %c0_2] : memref<1x8x8x32xf32, #tpu.memory_space<vmem>>, vector<1x8x8x32xf32>
    %1 = vector.shape_cast %0 : vector<1x8x8x32xf32> to vector<8x8x32xf32>
    %c0_3 = arith.constant 0 : index
    %c0_4 = arith.constant 0 : index
    %c0_5 = arith.constant 0 : index
    %c0_6 = arith.constant 0 : index
    %2 = vector.load %arg2[%c0_3, %c0_4, %c0_5, %c0_6] : memref<1x8x8x40xbf16, #tpu.memory_space<vmem>>, vector<1x8x8x40xbf16>
    %3 = vector.shape_cast %2 : vector<1x8x8x40xbf16> to vector<8x8x40xbf16>
    %4 = vector.extract_strided_slice %3 {offsets = [0, 0, 0], sizes = [8, 8, 4], strides = [1, 1, 1]} : vector<8x8x40xbf16> to vector<8x8x4xbf16>
    %5 = vector.extract_strided_slice %3 {offsets = [0, 0, 4], sizes = [8, 8, 4], strides = [1, 1, 1]} : vector<8x8x40xbf16> to vector<8x8x4xbf16>
    %6 = vector.extract_strided_slice %3 {offsets = [0, 0, 8], sizes = [8, 8, 32], strides = [1, 1, 1]} : vector<8x8x40xbf16> to vector<8x8x32xbf16>
    %c0_7 = arith.constant 0 : index
    %c0_8 = arith.constant 0 : index
    %c0_9 = arith.constant 0 : index
    %c0_10 = arith.constant 0 : index
    %7 = vector.load %arg3[%c0_7, %c0_8, %c0_9, %c0_10] : memref<1x8x8x32xf32, #tpu.memory_space<vmem>>, vector<1x8x8x32xf32>
    %8 = vector.shape_cast %7 : vector<1x8x8x32xf32> to vector<8x8x32xf32>
    %c0_11 = arith.constant 0 : index
    %c0_12 = arith.constant 0 : index
    %c0_13 = arith.constant 0 : index
    %c0_14 = arith.constant 0 : index
    %9 = vector.load %arg4[%c0_11, %c0_12, %c0_13, %c0_14] : memref<1x2x8x8xf32, #tpu.memory_space<vmem>>, vector<1x1x8x8xf32>
    %10 = vector.shape_cast %9 : vector<1x1x8x8xf32> to vector<8x8xf32>
    %11 = vector.shape_cast %10 : vector<8x8xf32> to vector<8x8x1xf32>
    %c0_15 = arith.constant 0 : index
    %c1 = arith.constant 1 : index
    %c0_16 = arith.constant 0 : index
    %c0_17 = arith.constant 0 : index
    %12 = vector.load %arg4[%c0_15, %c1, %c0_16, %c0_17] : memref<1x2x8x8xf32, #tpu.memory_space<vmem>>, vector<1x1x8x8xf32>
    %13 = vector.shape_cast %12 : vector<1x1x8x8xf32> to vector<8x8xf32>
    %14 = vector.shape_cast %13 : vector<8x8xf32> to vector<8x8x1xf32>
    "tpu.trace_start"() <{level = 10 : i32, message = "hwc,hvc->hwv"}> : () -> ()
    %cst = arith.constant dense<0.000000e+00> : vector<8x8x8xf32>
    %15 = tpu.matmul %4, %5, %cst {dimension_numbers = #tpu.dot_dimension_numbers<[2], [2], [1], [1], [0, 0, 0, 1, 1, 1], [0], [0]>} : vector<8x8x4xbf16>, vector<8x8x4xbf16>, vector<8x8x8xf32> -> vector<8x8x8xf32>
    "tpu.trace_stop"() : () -> ()
    %cst_18 = arith.constant dense<0xFF800000> : vector<8x8xf32>
    %16 = vector.multi_reduction <maximumf>, %15, %cst_18 [2] : vector<8x8x8xf32> to vector<8x8xf32>
    %17 = vector.shape_cast %16 : vector<8x8xf32> to vector<8x8x1xf32>
    %18 = arith.maximumf %11, %17 : vector<8x8x1xf32>
    %19 = arith.subf %11, %18 : vector<8x8x1xf32>
    %20 = math.exp %19 : vector<8x8x1xf32>
    %21 = vector.broadcast %18 : vector<8x8x1xf32> to vector<8x8x8xf32>
    %22 = arith.subf %15, %21 : vector<8x8x8xf32>
    %23 = math.exp %22 : vector<8x8x8xf32>
    %24 = arith.mulf %14, %20 : vector<8x8x1xf32>
    %cst_19 = arith.constant dense<0.000000e+00> : vector<8x8xf32>
    %25 = vector.multi_reduction <add>, %23, %cst_19 [2] : vector<8x8x8xf32> to vector<8x8xf32>
    %26 = vector.shape_cast %25 : vector<8x8xf32> to vector<8x8x1xf32>
    %27 = arith.addf %24, %26 : vector<8x8x1xf32>
    %28 = tpu.reciprocal %27 {approx = true} : vector<8x8x1xf32> -> vector<8x8x1xf32>
    %29 = vector.broadcast %28 : vector<8x8x1xf32> to vector<8x8x8xf32>
    %30 = arith.mulf %23, %29 : vector<8x8x8xf32>
    %31 = arith.mulf %20, %28 : vector<8x8x1xf32>
    %32 = vector.broadcast %31 : vector<8x8x1xf32> to vector<8x8x32xf32>
    %33 = arith.mulf %8, %32 : vector<8x8x32xf32>
    %34 = arith.truncf %30 : vector<8x8x8xf32> to vector<8x8x8xbf16>
    "tpu.trace_start"() <{level = 10 : i32, message = "hwv,hvc->hwc"}> : () -> ()
    %cst_20 = arith.constant dense<0.000000e+00> : vector<8x8x32xf32>
    %35 = tpu.matmul %34, %6, %cst_20 {dimension_numbers = #tpu.dot_dimension_numbers<[2], [1], [1], [2], [0, 0, 0, 1, 1, 2], [0], [0]>} : vector<8x8x8xbf16>, vector<8x8x32xbf16>, vector<8x8x32xf32> -> vector<8x8x32xf32>
    "tpu.trace_stop"() : () -> ()
    %36 = arith.addf %33, %35 : vector<8x8x32xf32>
    %c0_21 = arith.constant 0 : index
    %37 = memref.load %arg5[%c0_21] : memref<1xf32, #tpu.memory_space<smem>>
    %38 = vector.broadcast %37 : f32 to vector<8x8x32xf32>
    %39 = arith.mulf %38, %36 : vector<8x8x32xf32>
    %40 = arith.addf %1, %39 : vector<8x8x32xf32>
    %41 = vector.shape_cast %40 : vector<8x8x32xf32> to vector<64x32xf32>
    %cst_22 = arith.constant dense<0.000000e+00> : vector<64xf32>
    %42 = vector.multi_reduction <add>, %41, %cst_22 [1] : vector<64x32xf32> to vector<64xf32>
    %43 = vector.shape_cast %42 : vector<64xf32> to vector<64x1xf32>
    %cst_23 = arith.constant dense<0.000000e+00> : vector<1xf32>
    %44 = vector.multi_reduction <add>, %43, %cst_23 [0] : vector<64x1xf32> to vector<1xf32>
    %45 = vector.shape_cast %44 : vector<1xf32> to vector<1x1xf32>
    %cst_24 = arith.constant 2.048000e+03 : f32
    %46 = vector.broadcast %cst_24 : f32 to vector<1x1xf32>
    %47 = arith.divf %45, %46 : vector<1x1xf32>
    %48 = vector.broadcast %47 : vector<1x1xf32> to vector<64x32xf32>
    %49 = arith.subf %41, %48 : vector<64x32xf32>
    %50 = arith.mulf %49, %49 : vector<64x32xf32>
    %cst_25 = arith.constant dense<0.000000e+00> : vector<64xf32>
    %51 = vector.multi_reduction <add>, %50, %cst_25 [1] : vector<64x32xf32> to vector<64xf32>
    %52 = vector.shape_cast %51 : vector<64xf32> to vector<64x1xf32>
    %cst_26 = arith.constant dense<0.000000e+00> : vector<1xf32>
    %53 = vector.multi_reduction <add>, %52, %cst_26 [0] : vector<64x1xf32> to vector<1xf32>
    %54 = vector.shape_cast %53 : vector<1xf32> to vector<1x1xf32>
    %cst_27 = arith.constant 2.048000e+03 : f32
    %55 = vector.broadcast %cst_27 : f32 to vector<1x1xf32>
    %56 = arith.divf %54, %55 : vector<1x1xf32>
    %cst_28 = arith.constant 9.99999974E-6 : f32
    %57 = vector.broadcast %cst_28 : f32 to vector<1x1xf32>
    %58 = arith.addf %56, %57 : vector<1x1xf32>
    %59 = math.rsqrt %58 : vector<1x1xf32>
    %60 = vector.broadcast %59 : vector<1x1xf32> to vector<64x32xf32>
    %61 = arith.mulf %49, %60 : vector<64x32xf32>
    %62 = vector.shape_cast %61 : vector<64x32xf32> to vector<8x8x32xf32>
    %c0_29 = arith.constant 0 : index
    %c0_30 = arith.constant 0 : index
    %c0_31 = arith.constant 0 : index
    %c0_32 = arith.constant 0 : index
    %63 = vector.load %arg6[%c0_29, %c0_30, %c0_31, %c0_32] : memref<1x8x8x32xf32, #tpu.memory_space<vmem>>, vector<1x8x8x32xf32>
    %64 = vector.shape_cast %63 : vector<1x8x8x32xf32> to vector<8x8x32xf32>
    %65 = vector.shape_cast %62 : vector<8x8x32xf32> to vector<1x8x8x32xf32>
    tpu.vector_store %arg6[%c0_29, %c0_30, %c0_31, %c0_32], %65 {strides = array<i32>} : memref<1x8x8x32xf32, #tpu.memory_space<vmem>>, vector<1x8x8x32xf32>,
    return
  }
  func.func @transform_0(%arg0: i32) -> (i32, i32, i32, i32) {
    %c0_i32 = arith.constant 0 : i32
    %c0_i32_0 = arith.constant 0 : i32
    %c0_i32_1 = arith.constant 0 : i32
    %c0_i32_2 = arith.constant 0 : i32
    return %arg0, %c0_i32, %c0_i32_0, %c0_i32_1 : i32, i32, i32, i32
  }
  func.func @transform_1(%arg0: i32) -> (i32, i32, i32, i32) {
    %c0_i32 = arith.constant 0 : i32
    %c0_i32_0 = arith.constant 0 : i32
    %c0_i32_1 = arith.constant 0 : i32
    %c0_i32_2 = arith.constant 0 : i32
    return %arg0, %c0_i32, %c0_i32_0, %c0_i32_1 : i32, i32, i32, i32
  }
  func.func @transform_2(%arg0: i32) -> (i32, i32, i32, i32) {
    %c0_i32 = arith.constant 0 : i32
    %c0_i32_0 = arith.constant 0 : i32
    %c0_i32_1 = arith.constant 0 : i32
    %c0_i32_2 = arith.constant 0 : i32
    return %arg0, %c0_i32, %c0_i32_0, %c0_i32_1 : i32, i32, i32, i32
  }
  func.func @transform_3(%arg0: i32) -> (i32, i32, i32, i32) {
    %c0_i32 = arith.constant 0 : i32
    %c0_i32_0 = arith.constant 0 : i32
    %c0_i32_1 = arith.constant 0 : i32
    %c0_i32_2 = arith.constant 0 : i32
    return %arg0, %c0_i32, %c0_i32_0, %c0_i32_1 : i32, i32, i32, i32
  }
  func.func @transform_4(%arg0: i32) -> i32 {
    %c0_i32 = arith.constant 0 : i32
    %c0_i32_0 = arith.constant 0 : i32
    return %c0_i32 : i32
  }
  func.func @transform_5(%arg0: i32) -> (i32, i32, i32, i32) {
    %c0_i32 = arith.constant 0 : i32
    %c0_i32_0 = arith.constant 0 : i32
    %c0_i32_1 = arith.constant 0 : i32
    %c0_i32_2 = arith.constant 0 : i32
    return %arg0, %c0_i32, %c0_i32_0, %c0_i32_1 : i32, i32, i32, i32
  }
}

module attributes {stable_mosaic.version = 11 : i64} {
  func.func @_cam_kernel(%arg0: i32, %arg1: memref<1x8x8x32xf32, #tpu.memory_space<vmem>>, %arg2: memref<1x8x8x32xf32, #tpu.memory_space<vmem>>) attributes {dimension_semantics = [#tpu.dimension_semantics<parallel>], iteration_bounds = array<i64: 2>, scalar_prefetch = 0 : i64, scratch_operands = 0 : i64, tpu.core_type = #tpu.core_type<tc>, window_params = [{transform_indices = @transform_0, window_bounds = array<i64: 1, 8, 8, 32>}, {transform_indices = @transform_1, window_bounds = array<i64: 1, 8, 8, 32>}]} {
    %c0 = arith.constant 0 : index
    %c0_0 = arith.constant 0 : index
    %c0_1 = arith.constant 0 : index
    %c0_2 = arith.constant 0 : index
    %0 = vector.load %arg1[%c0, %c0_0, %c0_1, %c0_2] : memref<1x8x8x32xf32, #tpu.memory_space<vmem>>, vector<1x8x8x32xf32>
    %1 = vector.shape_cast %0 : vector<1x8x8x32xf32> to vector<8x8x32xf32>
    %2 = vector.shape_cast %1 : vector<8x8x32xf32> to vector<64x32xf32>
    %3 = arith.truncf %2 : vector<64x32xf32> to vector<64x32xbf16>
    %4 = arith.truncf %2 : vector<64x32xf32> to vector<64x32xbf16>
    "tpu.trace_start"() <{level = 10 : i32, message = "sc,sd->cd"}> : () -> ()
    %cst = arith.constant dense<0.000000e+00> : vector<32x32xf32>
    %5 = tpu.matmul %3, %4, %cst {dimension_numbers = #tpu.dot_dimension_numbers<[0], [0], [1], [1], [0, 1, 1, 1], [], []>} : vector<64x32xbf16>, vector<64x32xbf16>, vector<32x32xf32> -> vector<32x32xf32>
    "tpu.trace_stop"() : () -> ()
    %cst_3 = arith.constant dense<0xFF800000> : vector<32xf32>
    %6 = vector.multi_reduction <maximumf>, %5, %cst_3 [1] : vector<32x32xf32> to vector<32xf32>
    %7 = vector.shape_cast %6 : vector<32xf32> to vector<32x1xf32>
    %8 = vector.broadcast %7 : vector<32x1xf32> to vector<32x32xf32>
    %9 = arith.subf %8, %5 : vector<32x32xf32>
    %cst_4 = arith.constant dense<0xFF800000> : vector<32xf32>
    %10 = vector.multi_reduction <maximumf>, %9, %cst_4 [1] : vector<32x32xf32> to vector<32xf32>
    %11 = vector.shape_cast %10 : vector<32xf32> to vector<32x1xf32>
    %12 = vector.broadcast %11 : vector<32x1xf32> to vector<32x32xf32>
    %13 = arith.subf %9, %12 : vector<32x32xf32>
    %14 = math.exp %13 : vector<32x32xf32>
    %cst_5 = arith.constant dense<0.000000e+00> : vector<32xf32>
    %15 = vector.multi_reduction <add>, %14, %cst_5 [1] : vector<32x32xf32> to vector<32xf32>
    %16 = vector.shape_cast %15 : vector<32xf32> to vector<32x1xf32>
    %17 = tpu.reciprocal %16 {approx = true} : vector<32x1xf32> -> vector<32x1xf32>
    %18 = vector.broadcast %17 : vector<32x1xf32> to vector<32x32xf32>
    %19 = arith.mulf %14, %18 : vector<32x32xf32>
    %20 = arith.truncf %2 : vector<64x32xf32> to vector<64x32xbf16>
    %21 = arith.truncf %19 : vector<32x32xf32> to vector<32x32xbf16>
    "tpu.trace_start"() <{level = 10 : i32, message = "sd,cd->sc"}> : () -> ()
    %cst_6 = arith.constant dense<0.000000e+00> : vector<64x32xf32>
    %22 = tpu.matmul %20, %21, %cst_6 {dimension_numbers = #tpu.dot_dimension_numbers<[1], [1], [0], [0], [0, 0, 1, 0], [], []>} : vector<64x32xbf16>, vector<32x32xbf16>, vector<64x32xf32> -> vector<64x32xf32>
    "tpu.trace_stop"() : () -> ()
    %23 = vector.shape_cast %22 : vector<64x32xf32> to vector<8x8x32xf32>
    %c0_7 = arith.constant 0 : index
    %c0_8 = arith.constant 0 : index
    %c0_9 = arith.constant 0 : index
    %c0_10 = arith.constant 0 : index
    %24 = vector.load %arg2[%c0_7, %c0_8, %c0_9, %c0_10] : memref<1x8x8x32xf32, #tpu.memory_space<vmem>>, vector<1x8x8x32xf32>
    %25 = vector.shape_cast %24 : vector<1x8x8x32xf32> to vector<8x8x32xf32>
    %26 = vector.shape_cast %23 : vector<8x8x32xf32> to vector<1x8x8x32xf32>
    tpu.vector_store %arg2[%c0_7, %c0_8, %c0_9, %c0_10], %26 {strides = array<i32>} : memref<1x8x8x32xf32, #tpu.memory_space<vmem>>, vector<1x8x8x32xf32>,
    return
  }
  func.func @transform_0(%arg0: i32) -> (i32, i32, i32, i32) {
    %c0_i32 = arith.constant 0 : i32
    %c0_i32_0 = arith.constant 0 : i32
    %c0_i32_1 = arith.constant 0 : i32
    %c0_i32_2 = arith.constant 0 : i32
    return %arg0, %c0_i32, %c0_i32_0, %c0_i32_1 : i32, i32, i32, i32
  }
  func.func @transform_1(%arg0: i32) -> (i32, i32, i32, i32) {
    %c0_i32 = arith.constant 0 : i32
    %c0_i32_0 = arith.constant 0 : i32
    %c0_i32_1 = arith.constant 0 : i32
    %c0_i32_2 = arith.constant 0 : i32
    return %arg0, %c0_i32, %c0_i32_0, %c0_i32_1 : i32, i32, i32, i32
  }
}

module attributes {stable_mosaic.version = 11 : i64} {
  func.func @_combine_cbam_kernel(%arg0: i32, %arg1: memref<1x8x8x32xf32, #tpu.memory_space<vmem>>, %arg2: memref<1x8x8x32xf32, #tpu.memory_space<vmem>>, %arg3: memref<1x8x8x32xf32, #tpu.memory_space<vmem>>, %arg4: memref<1x8x8x32xf32, #tpu.memory_space<vmem>>, %arg5: memref<32x2xf32, #tpu.memory_space<vmem>>, %arg6: memref<2x32xf32, #tpu.memory_space<vmem>>, %arg7: memref<3xf32, #tpu.memory_space<smem>>, %arg8: memref<98xf32, #tpu.memory_space<smem>>, %arg9: memref<1x8x8x32xf32, #tpu.memory_space<vmem>>, %arg10: memref<2x14x14xf32, #tpu.memory_space<vmem>>) attributes {dimension_semantics = [#tpu.dimension_semantics<parallel>], iteration_bounds = array<i64: 2>, scalar_prefetch = 0 : i64, scratch_operands = 1 : i64, tpu.core_type = #tpu.core_type<tc>, window_params = [{transform_indices = @transform_0, window_bounds = array<i64: 1, 8, 8, 32>}, {transform_indices = @transform_1, window_bounds = array<i64: 1, 8, 8, 32>}, {transform_indices = @transform_2, window_bounds = array<i64: 1, 8, 8, 32>}, {transform_indices = @transform_3, window_bounds = array<i64: 1, 8, 8, 32>}, {pipeline_mode = #tpu.pipeline_mode<synchronous>, transform_indices = @transform_4, window_bounds = array<i64: 32, 2>}, {pipeline_mode = #tpu.pipeline_mode<synchronous>, transform_indices = @transform_5, window_bounds = array<i64: 2, 32>}, {transform_indices = @transform_6, window_bounds = array<i64: 3>}, {transform_indices = @transform_7, window_bounds = array<i64: 98>}, {transform_indices = @transform_8, window_bounds = array<i64: 1, 8, 8, 32>}]} {
    %c0 = arith.constant 0 : index
    %c0_0 = arith.constant 0 : index
    %c0_1 = arith.constant 0 : index
    %c0_2 = arith.constant 0 : index
    %0 = vector.load %arg1[%c0, %c0_0, %c0_1, %c0_2] : memref<1x8x8x32xf32, #tpu.memory_space<vmem>>, vector<1x8x8x32xf32>
    %1 = vector.shape_cast %0 : vector<1x8x8x32xf32> to vector<8x8x32xf32>
    %cst = arith.constant 2.000000e+00 : f32
    %2 = vector.broadcast %cst : f32 to vector<8x8x32xf32>
    %3 = arith.mulf %2, %1 : vector<8x8x32xf32>
    %c0_3 = arith.constant 0 : index
    %4 = memref.load %arg7[%c0_3] : memref<3xf32, #tpu.memory_space<smem>>
    %c0_4 = arith.constant 0 : index
    %c0_5 = arith.constant 0 : index
    %c0_6 = arith.constant 0 : index
    %c0_7 = arith.constant 0 : index
    %5 = vector.load %arg2[%c0_4, %c0_5, %c0_6, %c0_7] : memref<1x8x8x32xf32, #tpu.memory_space<vmem>>, vector<1x8x8x32xf32>
    %6 = vector.shape_cast %5 : vector<1x8x8x32xf32> to vector<8x8x32xf32>
    %7 = vector.broadcast %4 : f32 to vector<8x8x32xf32>
    %8 = arith.mulf %7, %6 : vector<8x8x32xf32>
    %9 = arith.addf %3, %8 : vector<8x8x32xf32>
    %c1 = arith.constant 1 : index
    %10 = memref.load %arg7[%c1] : memref<3xf32, #tpu.memory_space<smem>>
    %c0_8 = arith.constant 0 : index
    %c0_9 = arith.constant 0 : index
    %c0_10 = arith.constant 0 : index
    %c0_11 = arith.constant 0 : index
    %11 = vector.load %arg3[%c0_8, %c0_9, %c0_10, %c0_11] : memref<1x8x8x32xf32, #tpu.memory_space<vmem>>, vector<1x8x8x32xf32>
    %12 = vector.shape_cast %11 : vector<1x8x8x32xf32> to vector<8x8x32xf32>
    %13 = vector.broadcast %10 : f32 to vector<8x8x32xf32>
    %14 = arith.mulf %13, %12 : vector<8x8x32xf32>
    %15 = arith.addf %9, %14 : vector<8x8x32xf32>
    %c2 = arith.constant 2 : index
    %16 = memref.load %arg7[%c2] : memref<3xf32, #tpu.memory_space<smem>>
    %c0_12 = arith.constant 0 : index
    %c0_13 = arith.constant 0 : index
    %c0_14 = arith.constant 0 : index
    %c0_15 = arith.constant 0 : index
    %17 = vector.load %arg4[%c0_12, %c0_13, %c0_14, %c0_15] : memref<1x8x8x32xf32, #tpu.memory_space<vmem>>, vector<1x8x8x32xf32>
    %18 = vector.shape_cast %17 : vector<1x8x8x32xf32> to vector<8x8x32xf32>
    %19 = vector.broadcast %16 : f32 to vector<8x8x32xf32>
    %20 = arith.mulf %19, %18 : vector<8x8x32xf32>
    %21 = arith.addf %15, %20 : vector<8x8x32xf32>
    %22 = vector.shape_cast %21 : vector<8x8x32xf32> to vector<64x32xf32>
    %cst_16 = arith.constant dense<0.000000e+00> : vector<32xf32>
    %23 = vector.multi_reduction <add>, %22, %cst_16 [0] : vector<64x32xf32> to vector<32xf32>
    %24 = vector.shape_cast %23 : vector<32xf32> to vector<1x32xf32>
    %cst_17 = arith.constant 6.400000e+01 : f32
    %25 = vector.broadcast %cst_17 : f32 to vector<1x32xf32>
    %26 = arith.divf %24, %25 : vector<1x32xf32>
    %cst_18 = arith.constant dense<0xFF800000> : vector<32xf32>
    %27 = vector.multi_reduction <maximumf>, %22, %cst_18 [0] : vector<64x32xf32> to vector<32xf32>
    %28 = vector.shape_cast %27 : vector<32xf32> to vector<1x32xf32>
    %c0_19 = arith.constant 0 : index
    %c0_20 = arith.constant 0 : index
    %29 = vector.load %arg5[%c0_19, %c0_20] : memref<32x2xf32, #tpu.memory_space<vmem>>, vector<32x2xf32>
    %30 = arith.truncf %26 : vector<1x32xf32> to vector<1x32xbf16>
    %31 = arith.truncf %29 : vector<32x2xf32> to vector<32x2xbf16>
    %cst_21 = arith.constant dense<0.000000e+00> : vector<1x2xf32>
    %32 = tpu.matmul %30, %31, %cst_21 {dimension_numbers = #tpu.dot_dimension_numbers<[1], [0], [0], [1], [0, 0, 1, 1], [], []>} : vector<1x32xbf16>, vector<32x2xbf16>, vector<1x2xf32> -> vector<1x2xf32>
    %cst_22 = arith.constant 0.000000e+00 : f32
    %33 = vector.broadcast %cst_22 : f32 to vector<1x2xf32>
    %34 = arith.maximumf %32, %33 : vector<1x2xf32>
    %c0_23 = arith.constant 0 : index
    %c0_24 = arith.constant 0 : index
    %35 = vector.load %arg6[%c0_23, %c0_24] : memref<2x32xf32, #tpu.memory_space<vmem>>, vector<2x32xf32>
    %36 = arith.truncf %34 : vector<1x2xf32> to vector<1x2xbf16>
    %37 = arith.truncf %35 : vector<2x32xf32> to vector<2x32xbf16>
    %cst_25 = arith.constant dense<0.000000e+00> : vector<1x32xf32>
    %38 = tpu.matmul %36, %37, %cst_25 {dimension_numbers = #tpu.dot_dimension_numbers<[1], [0], [0], [1], [0, 0, 1, 1], [], []>} : vector<1x2xbf16>, vector<2x32xbf16>, vector<1x32xf32> -> vector<1x32xf32>
    %c0_26 = arith.constant 0 : index
    %c0_27 = arith.constant 0 : index
    %39 = vector.load %arg5[%c0_26, %c0_27] : memref<32x2xf32, #tpu.memory_space<vmem>>, vector<32x2xf32>
    %40 = arith.truncf %28 : vector<1x32xf32> to vector<1x32xbf16>
    %41 = arith.truncf %39 : vector<32x2xf32> to vector<32x2xbf16>
    %cst_28 = arith.constant dense<0.000000e+00> : vector<1x2xf32>
    %42 = tpu.matmul %40, %41, %cst_28 {dimension_numbers = #tpu.dot_dimension_numbers<[1], [0], [0], [1], [0, 0, 1, 1], [], []>} : vector<1x32xbf16>, vector<32x2xbf16>, vector<1x2xf32> -> vector<1x2xf32>
    %cst_29 = arith.constant 0.000000e+00 : f32
    %43 = vector.broadcast %cst_29 : f32 to vector<1x2xf32>
    %44 = arith.maximumf %42, %43 : vector<1x2xf32>
    %c0_30 = arith.constant 0 : index
    %c0_31 = arith.constant 0 : index
    %45 = vector.load %arg6[%c0_30, %c0_31] : memref<2x32xf32, #tpu.memory_space<vmem>>, vector<2x32xf32>
    %46 = arith.truncf %44 : vector<1x2xf32> to vector<1x2xbf16>
    %47 = arith.truncf %45 : vector<2x32xf32> to vector<2x32xbf16>
    %cst_32 = arith.constant dense<0.000000e+00> : vector<1x32xf32>
    %48 = tpu.matmul %46, %47, %cst_32 {dimension_numbers = #tpu.dot_dimension_numbers<[1], [0], [0], [1], [0, 0, 1, 1], [], []>} : vector<1x2xbf16>, vector<2x32xbf16>, vector<1x32xf32> -> vector<1x32xf32>
    %49 = arith.addf %38, %48 : vector<1x32xf32>
    %cst_33 = arith.constant 0.000000e+00 : f32
    %50 = vector.broadcast %cst_33 : f32 to vector<1x32xf32>
    %51 = arith.subf %50, %49 : vector<1x32xf32>
    %52 = math.exp %51 : vector<1x32xf32>
    %cst_34 = arith.constant 1.000000e+00 : f32
    %53 = vector.broadcast %cst_34 : f32 to vector<1x32xf32>
    %54 = arith.addf %53, %52 : vector<1x32xf32>
    %cst_35 = arith.constant 1.000000e+00 : f32
    %55 = vector.broadcast %cst_35 : f32 to vector<1x32xf32>
    %56 = arith.divf %55, %54 : vector<1x32xf32>
    %57 = vector.shape_cast %56 : vector<1x32xf32> to vector<1x1x32xf32>
    %58 = vector.broadcast %57 : vector<1x1x32xf32> to vector<8x8x32xf32>
    %59 = arith.mulf %21, %58 : vector<8x8x32xf32>
    %cst_36 = arith.constant dense<0.000000e+00> : vector<8x8xf32>
    %60 = vector.multi_reduction <add>, %59, %cst_36 [2] : vector<8x8x32xf32> to vector<8x8xf32>
    %cst_37 = arith.constant 3.200000e+01 : f32
    %61 = vector.broadcast %cst_37 : f32 to vector<8x8xf32>
    %62 = arith.divf %60, %61 : vector<8x8xf32>
    %cst_38 = arith.constant dense<0xFF800000> : vector<8x8xf32>
    %63 = vector.multi_reduction <maximumf>, %59, %cst_38 [2] : vector<8x8x32xf32> to vector<8x8xf32>
    %cst_39 = arith.constant 0.000000e+00 : f32
    %64 = vector.broadcast %cst_39 : f32 to vector<2x14x14xf32>
    %c0_40 = arith.constant 0 : index
    %c0_41 = arith.constant 0 : index
    %c0_42 = arith.constant 0 : index
    %65 = vector.load %arg10[%c0_40, %c0_41, %c0_42] : memref<2x14x14xf32, #tpu.memory_space<vmem>>, vector<2x14x14xf32>
    tpu.vector_store %arg10[%c0_40, %c0_41, %c0_42], %64 {strides = array<i32>} : memref<2x14x14xf32, #tpu.memory_space<vmem>>, vector<2x14x14xf32>,
    %c0_43 = arith.constant 0 : index
    %c3 = arith.constant 3 : index
    %c3_44 = arith.constant 3 : index
    %66 = vector.load %arg10[%c0_43, %c3, %c3_44] : memref<2x14x14xf32, #tpu.memory_space<vmem>>, vector<1x8x8xf32>
    %67 = vector.shape_cast %66 : vector<1x8x8xf32> to vector<8x8xf32>
    %68 = vector.shape_cast %62 : vector<8x8xf32> to vector<1x8x8xf32>
    tpu.vector_store %arg10[%c0_43, %c3, %c3_44], %68 {strides = array<i32>} : memref<2x14x14xf32, #tpu.memory_space<vmem>>, vector<1x8x8xf32>,
    %c1_45 = arith.constant 1 : index
    %c3_46 = arith.constant 3 : index
    %c3_47 = arith.constant 3 : index
    %69 = vector.load %arg10[%c1_45, %c3_46, %c3_47] : memref<2x14x14xf32, #tpu.memory_space<vmem>>, vector<1x8x8xf32>
    %70 = vector.shape_cast %69 : vector<1x8x8xf32> to vector<8x8xf32>
    %71 = vector.shape_cast %63 : vector<8x8xf32> to vector<1x8x8xf32>
    tpu.vector_store %arg10[%c1_45, %c3_46, %c3_47], %71 {strides = array<i32>} : memref<2x14x14xf32, #tpu.memory_space<vmem>>, vector<1x8x8xf32>,
    %cst_48 = arith.constant 0.000000e+00 : f32
    %72 = vector.broadcast %cst_48 : f32 to vector<8x8xf32>
    %cst_49 = arith.constant 0.000000e+00 : f32
    %73 = vector.broadcast %cst_49 : f32 to vector<8x8xf32>
    %cst_50 = arith.constant 0.000000e+00 : f32
    %74 = vector.broadcast %cst_50 : f32 to vector<8x8xf32>
    %cst_51 = arith.constant 0.000000e+00 : f32
    %75 = vector.broadcast %cst_51 : f32 to vector<8x8xf32>
    %c0_52 = arith.constant 0 : index
    %c0_53 = arith.constant 0 : index
    %c0_54 = arith.constant 0 : index
    %76 = vector.load %arg10[%c0_52, %c0_53, %c0_54] : memref<2x14x14xf32, #tpu.memory_space<vmem>>, vector<1x8x14xf32>
    %77 = vector.shape_cast %76 : vector<1x8x14xf32> to vector<8x14xf32>
    %c0_55 = arith.constant 0 : index
    %78 = memref.load %arg8[%c0_55] : memref<98xf32, #tpu.memory_space<smem>>
    %79 = vector.extract_strided_slice %77 {offsets = [0, 0], sizes = [8, 8], strides = [1, 1]} : vector<8x14xf32> to vector<8x8xf32>
    %80 = vector.broadcast %78 : f32 to vector<8x8xf32>
    %81 = arith.mulf %80, %79 : vector<8x8xf32>
    %82 = arith.addf %72, %81 : vector<8x8xf32>
    %c1_56 = arith.constant 1 : index
    %83 = memref.load %arg8[%c1_56] : memref<98xf32, #tpu.memory_space<smem>>
    %84 = vector.extract_strided_slice %77 {offsets = [0, 1], sizes = [8, 8], strides = [1, 1]} : vector<8x14xf32> to vector<8x8xf32>
    %85 = vector.broadcast %83 : f32 to vector<8x8xf32>
    %86 = arith.mulf %85, %84 : vector<8x8xf32>
    %87 = arith.addf %73, %86 : vector<8x8xf32>
    %c2_57 = arith.constant 2 : index
    %88 = memref.load %arg8[%c2_57] : memref<98xf32, #tpu.memory_space<smem>>
    %89 = vector.extract_strided_slice %77 {offsets = [0, 2], sizes = [8, 8], strides = [1, 1]} : vector<8x14xf32> to vector<8x8xf32>
    %90 = vector.broadcast %88 : f32 to vector<8x8xf32>
    %91 = arith.mulf %90, %89 : vector<8x8xf32>
    %92 = arith.addf %74, %91 : vector<8x8xf32>
    %c3_58 = arith.constant 3 : index
    %93 = memref.load %arg8[%c3_58] : memref<98xf32, #tpu.memory_space<smem>>
    %94 = vector.extract_strided_slice %77 {offsets = [0, 3], sizes = [8, 8], strides = [1, 1]} : vector<8x14xf32> to vector<8x8xf32>
    %95 = vector.broadcast %93 : f32 to vector<8x8xf32>
    %96 = arith.mulf %95, %94 : vector<8x8xf32>
    %97 = arith.addf %75, %96 : vector<8x8xf32>
    %c4 = arith.constant 4 : index
    %98 = memref.load %arg8[%c4] : memref<98xf32, #tpu.memory_space<smem>>
    %99 = vector.extract_strided_slice %77 {offsets = [0, 4], sizes = [8, 8], strides = [1, 1]} : vector<8x14xf32> to vector<8x8xf32>
    %100 = vector.broadcast %98 : f32 to vector<8x8xf32>
    %101 = arith.mulf %100, %99 : vector<8x8xf32>
    %102 = arith.addf %82, %101 : vector<8x8xf32>
    %c5 = arith.constant 5 : index
    %103 = memref.load %arg8[%c5] : memref<98xf32, #tpu.memory_space<smem>>
    %104 = vector.extract_strided_slice %77 {offsets = [0, 5], sizes = [8, 8], strides = [1, 1]} : vector<8x14xf32> to vector<8x8xf32>
    %105 = vector.broadcast %103 : f32 to vector<8x8xf32>
    %106 = arith.mulf %105, %104 : vector<8x8xf32>
    %107 = arith.addf %87, %106 : vector<8x8xf32>
    %c6 = arith.constant 6 : index
    %108 = memref.load %arg8[%c6] : memref<98xf32, #tpu.memory_space<smem>>
    %109 = vector.extract_strided_slice %77 {offsets = [0, 6], sizes = [8, 8], strides = [1, 1]} : vector<8x14xf32> to vector<8x8xf32>
    %110 = vector.broadcast %108 : f32 to vector<8x8xf32>
    %111 = arith.mulf %110, %109 : vector<8x8xf32>
    %112 = arith.addf %92, %111 : vector<8x8xf32>
    %c0_59 = arith.constant 0 : index
    %c1_60 = arith.constant 1 : index
    %c0_61 = arith.constant 0 : index
    %113 = vector.load %arg10[%c0_59, %c1_60, %c0_61] : memref<2x14x14xf32, #tpu.memory_space<vmem>>, vector<1x8x14xf32>
    %114 = vector.shape_cast %113 : vector<1x8x14xf32> to vector<8x14xf32>
    %c7 = arith.constant 7 : index
    %115 = memref.load %arg8[%c7] : memref<98xf32, #tpu.memory_space<smem>>
    %116 = vector.extract_strided_slice %114 {offsets = [0, 0], sizes = [8, 8], strides = [1, 1]} : vector<8x14xf32> to vector<8x8xf32>
    %117 = vector.broadcast %115 : f32 to vector<8x8xf32>
    %118 = arith.mulf %117, %116 : vector<8x8xf32>
    %119 = arith.addf %97, %118 : vector<8x8xf32>
    %c8 = arith.constant 8 : index
    %120 = memref.load %arg8[%c8] : memref<98xf32, #tpu.memory_space<smem>>
    %121 = vector.extract_strided_slice %114 {offsets = [0, 1], sizes = [8, 8], strides = [1, 1]} : vector<8x14xf32> to vector<8x8xf32>
    %122 = vector.broadcast %120 : f32 to vector<8x8xf32>
    %123 = arith.mulf %122, %121 : vector<8x8xf32>
    %124 = arith.addf %102, %123 : vector<8x8xf32>
    %c9 = arith.constant 9 : index
    %125 = memref.load %arg8[%c9] : memref<98xf32, #tpu.memory_space<smem>>
    %126 = vector.extract_strided_slice %114 {offsets = [0, 2], sizes = [8, 8], strides = [1, 1]} : vector<8x14xf32> to vector<8x8xf32>
    %127 = vector.broadcast %125 : f32 to vector<8x8xf32>
    %128 = arith.mulf %127, %126 : vector<8x8xf32>
    %129 = arith.addf %107, %128 : vector<8x8xf32>
    %c10 = arith.constant 10 : index
    %130 = memref.load %arg8[%c10] : memref<98xf32, #tpu.memory_space<smem>>
    %131 = vector.extract_strided_slice %114 {offsets = [0, 3], sizes = [8, 8], strides = [1, 1]} : vector<8x14xf32> to vector<8x8xf32>
    %132 = vector.broadcast %130 : f32 to vector<8x8xf32>
    %133 = arith.mulf %132, %131 : vector<8x8xf32>
    %134 = arith.addf %112, %133 : vector<8x8xf32>
    %c11 = arith.constant 11 : index
    %135 = memref.load %arg8[%c11] : memref<98xf32, #tpu.memory_space<smem>>
    %136 = vector.extract_strided_slice %114 {offsets = [0, 4], sizes = [8, 8], strides = [1, 1]} : vector<8x14xf32> to vector<8x8xf32>
    %137 = vector.broadcast %135 : f32 to vector<8x8xf32>
    %138 = arith.mulf %137, %136 : vector<8x8xf32>
    %139 = arith.addf %119, %138 : vector<8x8xf32>
    %c12 = arith.constant 12 : index
    %140 = memref.load %arg8[%c12] : memref<98xf32, #tpu.memory_space<smem>>
    %141 = vector.extract_strided_slice %114 {offsets = [0, 5], sizes = [8, 8], strides = [1, 1]} : vector<8x14xf32> to vector<8x8xf32>
    %142 = vector.broadcast %140 : f32 to vector<8x8xf32>
    %143 = arith.mulf %142, %141 : vector<8x8xf32>
    %144 = arith.addf %124, %143 : vector<8x8xf32>
    %c13 = arith.constant 13 : index
    %145 = memref.load %arg8[%c13] : memref<98xf32, #tpu.memory_space<smem>>
    %146 = vector.extract_strided_slice %114 {offsets = [0, 6], sizes = [8, 8], strides = [1, 1]} : vector<8x14xf32> to vector<8x8xf32>
    %147 = vector.broadcast %145 : f32 to vector<8x8xf32>
    %148 = arith.mulf %147, %146 : vector<8x8xf32>
    %149 = arith.addf %129, %148 : vector<8x8xf32>
    %c0_62 = arith.constant 0 : index
    %c2_63 = arith.constant 2 : index
    %c0_64 = arith.constant 0 : index
    %150 = vector.load %arg10[%c0_62, %c2_63, %c0_64] : memref<2x14x14xf32, #tpu.memory_space<vmem>>, vector<1x8x14xf32>
    %151 = vector.shape_cast %150 : vector<1x8x14xf32> to vector<8x14xf32>
    %c14 = arith.constant 14 : index
    %152 = memref.load %arg8[%c14] : memref<98xf32, #tpu.memory_space<smem>>
    %153 = vector.extract_strided_slice %151 {offsets = [0, 0], sizes = [8, 8], strides = [1, 1]} : vector<8x14xf32> to vector<8x8xf32>
    %154 = vector.broadcast %152 : f32 to vector<8x8xf32>
    %155 = arith.mulf %154, %153 : vector<8x8xf32>
    %156 = arith.addf %134, %155 : vector<8x8xf32>
    %c15 = arith.constant 15 : index
    %157 = memref.load %arg8[%c15] : memref<98xf32, #tpu.memory_space<smem>>
    %158 = vector.extract_strided_slice %151 {offsets = [0, 1], sizes = [8, 8], strides = [1, 1]} : vector<8x14xf32> to vector<8x8xf32>
    %159 = vector.broadcast %157 : f32 to vector<8x8xf32>
    %160 = arith.mulf %159, %158 : vector<8x8xf32>
    %161 = arith.addf %139, %160 : vector<8x8xf32>
    %c16 = arith.constant 16 : index
    %162 = memref.load %arg8[%c16] : memref<98xf32, #tpu.memory_space<smem>>
    %163 = vector.extract_strided_slice %151 {offsets = [0, 2], sizes = [8, 8], strides = [1, 1]} : vector<8x14xf32> to vector<8x8xf32>
    %164 = vector.broadcast %162 : f32 to vector<8x8xf32>
    %165 = arith.mulf %164, %163 : vector<8x8xf32>
    %166 = arith.addf %144, %165 : vector<8x8xf32>
    %c17 = arith.constant 17 : index
    %167 = memref.load %arg8[%c17] : memref<98xf32, #tpu.memory_space<smem>>
    %168 = vector.extract_strided_slice %151 {offsets = [0, 3], sizes = [8, 8], strides = [1, 1]} : vector<8x14xf32> to vector<8x8xf32>
    %169 = vector.broadcast %167 : f32 to vector<8x8xf32>
    %170 = arith.mulf %169, %168 : vector<8x8xf32>
    %171 = arith.addf %149, %170 : vector<8x8xf32>
    %c18 = arith.constant 18 : index
    %172 = memref.load %arg8[%c18] : memref<98xf32, #tpu.memory_space<smem>>
    %173 = vector.extract_strided_slice %151 {offsets = [0, 4], sizes = [8, 8], strides = [1, 1]} : vector<8x14xf32> to vector<8x8xf32>
    %174 = vector.broadcast %172 : f32 to vector<8x8xf32>
    %175 = arith.mulf %174, %173 : vector<8x8xf32>
    %176 = arith.addf %156, %175 : vector<8x8xf32>
    %c19 = arith.constant 19 : index
    %177 = memref.load %arg8[%c19] : memref<98xf32, #tpu.memory_space<smem>>
    %178 = vector.extract_strided_slice %151 {offsets = [0, 5], sizes = [8, 8], strides = [1, 1]} : vector<8x14xf32> to vector<8x8xf32>
    %179 = vector.broadcast %177 : f32 to vector<8x8xf32>
    %180 = arith.mulf %179, %178 : vector<8x8xf32>
    %181 = arith.addf %161, %180 : vector<8x8xf32>
    %c20 = arith.constant 20 : index
    %182 = memref.load %arg8[%c20] : memref<98xf32, #tpu.memory_space<smem>>
    %183 = vector.extract_strided_slice %151 {offsets = [0, 6], sizes = [8, 8], strides = [1, 1]} : vector<8x14xf32> to vector<8x8xf32>
    %184 = vector.broadcast %182 : f32 to vector<8x8xf32>
    %185 = arith.mulf %184, %183 : vector<8x8xf32>
    %186 = arith.addf %166, %185 : vector<8x8xf32>
    %c0_65 = arith.constant 0 : index
    %c3_66 = arith.constant 3 : index
    %c0_67 = arith.constant 0 : index
    %187 = vector.load %arg10[%c0_65, %c3_66, %c0_67] : memref<2x14x14xf32, #tpu.memory_space<vmem>>, vector<1x8x14xf32>
    %188 = vector.shape_cast %187 : vector<1x8x14xf32> to vector<8x14xf32>
    %c21 = arith.constant 21 : index
    %189 = memref.load %arg8[%c21] : memref<98xf32, #tpu.memory_space<smem>>
    %190 = vector.extract_strided_slice %188 {offsets = [0, 0], sizes = [8, 8], strides = [1, 1]} : vector<8x14xf32> to vector<8x8xf32>
    %191 = vector.broadcast %189 : f32 to vector<8x8xf32>
    %192 = arith.mulf %191, %190 : vector<8x8xf32>
    %193 = arith.addf %171, %192 : vector<8x8xf32>
    %c22 = arith.constant 22 : index
    %194 = memref.load %arg8[%c22] : memref<98xf32, #tpu.memory_space<smem>>
    %195 = vector.extract_strided_slice %188 {offsets = [0, 1], sizes = [8, 8], strides = [1, 1]} : vector<8x14xf32> to vector<8x8xf32>
    %196 = vector.broadcast %194 : f32 to vector<8x8xf32>
    %197 = arith.mulf %196, %195 : vector<8x8xf32>
    %198 = arith.addf %176, %197 : vector<8x8xf32>
    %c23 = arith.constant 23 : index
    %199 = memref.load %arg8[%c23] : memref<98xf32, #tpu.memory_space<smem>>
    %200 = vector.extract_strided_slice %188 {offsets = [0, 2], sizes = [8, 8], strides = [1, 1]} : vector<8x14xf32> to vector<8x8xf32>
    %201 = vector.broadcast %199 : f32 to vector<8x8xf32>
    %202 = arith.mulf %201, %200 : vector<8x8xf32>
    %203 = arith.addf %181, %202 : vector<8x8xf32>
    %c24 = arith.constant 24 : index
    %204 = memref.load %arg8[%c24] : memref<98xf32, #tpu.memory_space<smem>>
    %205 = vector.extract_strided_slice %188 {offsets = [0, 3], sizes = [8, 8], strides = [1, 1]} : vector<8x14xf32> to vector<8x8xf32>
    %206 = vector.broadcast %204 : f32 to vector<8x8xf32>
    %207 = arith.mulf %206, %205 : vector<8x8xf32>
    %208 = arith.addf %186, %207 : vector<8x8xf32>
    %c25 = arith.constant 25 : index
    %209 = memref.load %arg8[%c25] : memref<98xf32, #tpu.memory_space<smem>>
    %210 = vector.extract_strided_slice %188 {offsets = [0, 4], sizes = [8, 8], strides = [1, 1]} : vector<8x14xf32> to vector<8x8xf32>
    %211 = vector.broadcast %209 : f32 to vector<8x8xf32>
    %212 = arith.mulf %211, %210 : vector<8x8xf32>
    %213 = arith.addf %193, %212 : vector<8x8xf32>
    %c26 = arith.constant 26 : index
    %214 = memref.load %arg8[%c26] : memref<98xf32, #tpu.memory_space<smem>>
    %215 = vector.extract_strided_slice %188 {offsets = [0, 5], sizes = [8, 8], strides = [1, 1]} : vector<8x14xf32> to vector<8x8xf32>
    %216 = vector.broadcast %214 : f32 to vector<8x8xf32>
    %217 = arith.mulf %216, %215 : vector<8x8xf32>
    %218 = arith.addf %198, %217 : vector<8x8xf32>
    %c27 = arith.constant 27 : index
    %219 = memref.load %arg8[%c27] : memref<98xf32, #tpu.memory_space<smem>>
    %220 = vector.extract_strided_slice %188 {offsets = [0, 6], sizes = [8, 8], strides = [1, 1]} : vector<8x14xf32> to vector<8x8xf32>
    %221 = vector.broadcast %219 : f32 to vector<8x8xf32>
    %222 = arith.mulf %221, %220 : vector<8x8xf32>
    %223 = arith.addf %203, %222 : vector<8x8xf32>
    %c0_68 = arith.constant 0 : index
    %c4_69 = arith.constant 4 : index
    %c0_70 = arith.constant 0 : index
    %224 = vector.load %arg10[%c0_68, %c4_69, %c0_70] : memref<2x14x14xf32, #tpu.memory_space<vmem>>, vector<1x8x14xf32>
    %225 = vector.shape_cast %224 : vector<1x8x14xf32> to vector<8x14xf32>
    %c28 = arith.constant 28 : index
    %226 = memref.load %arg8[%c28] : memref<98xf32, #tpu.memory_space<smem>>
    %227 = vector.extract_strided_slice %225 {offsets = [0, 0], sizes = [8, 8], strides = [1, 1]} : vector<8x14xf32> to vector<8x8xf32>
    %228 = vector.broadcast %226 : f32 to vector<8x8xf32>
    %229 = arith.mulf %228, %227 : vector<8x8xf32>
    %230 = arith.addf %208, %229 : vector<8x8xf32>
    %c29 = arith.constant 29 : index
    %231 = memref.load %arg8[%c29] : memref<98xf32, #tpu.memory_space<smem>>
    %232 = vector.extract_strided_slice %225 {offsets = [0, 1], sizes = [8, 8], strides = [1, 1]} : vector<8x14xf32> to vector<8x8xf32>
    %233 = vector.broadcast %231 : f32 to vector<8x8xf32>
    %234 = arith.mulf %233, %232 : vector<8x8xf32>
    %235 = arith.addf %213, %234 : vector<8x8xf32>
    %c30 = arith.constant 30 : index
    %236 = memref.load %arg8[%c30] : memref<98xf32, #tpu.memory_space<smem>>
    %237 = vector.extract_strided_slice %225 {offsets = [0, 2], sizes = [8, 8], strides = [1, 1]} : vector<8x14xf32> to vector<8x8xf32>
    %238 = vector.broadcast %236 : f32 to vector<8x8xf32>
    %239 = arith.mulf %238, %237 : vector<8x8xf32>
    %240 = arith.addf %218, %239 : vector<8x8xf32>
    %c31 = arith.constant 31 : index
    %241 = memref.load %arg8[%c31] : memref<98xf32, #tpu.memory_space<smem>>
    %242 = vector.extract_strided_slice %225 {offsets = [0, 3], sizes = [8, 8], strides = [1, 1]} : vector<8x14xf32> to vector<8x8xf32>
    %243 = vector.broadcast %241 : f32 to vector<8x8xf32>
    %244 = arith.mulf %243, %242 : vector<8x8xf32>
    %245 = arith.addf %223, %244 : vector<8x8xf32>
    %c32 = arith.constant 32 : index
    %246 = memref.load %arg8[%c32] : memref<98xf32, #tpu.memory_space<smem>>
    %247 = vector.extract_strided_slice %225 {offsets = [0, 4], sizes = [8, 8], strides = [1, 1]} : vector<8x14xf32> to vector<8x8xf32>
    %248 = vector.broadcast %246 : f32 to vector<8x8xf32>
    %249 = arith.mulf %248, %247 : vector<8x8xf32>
    %250 = arith.addf %230, %249 : vector<8x8xf32>
    %c33 = arith.constant 33 : index
    %251 = memref.load %arg8[%c33] : memref<98xf32, #tpu.memory_space<smem>>
    %252 = vector.extract_strided_slice %225 {offsets = [0, 5], sizes = [8, 8], strides = [1, 1]} : vector<8x14xf32> to vector<8x8xf32>
    %253 = vector.broadcast %251 : f32 to vector<8x8xf32>
    %254 = arith.mulf %253, %252 : vector<8x8xf32>
    %255 = arith.addf %235, %254 : vector<8x8xf32>
    %c34 = arith.constant 34 : index
    %256 = memref.load %arg8[%c34] : memref<98xf32, #tpu.memory_space<smem>>
    %257 = vector.extract_strided_slice %225 {offsets = [0, 6], sizes = [8, 8], strides = [1, 1]} : vector<8x14xf32> to vector<8x8xf32>
    %258 = vector.broadcast %256 : f32 to vector<8x8xf32>
    %259 = arith.mulf %258, %257 : vector<8x8xf32>
    %260 = arith.addf %240, %259 : vector<8x8xf32>
    %c0_71 = arith.constant 0 : index
    %c5_72 = arith.constant 5 : index
    %c0_73 = arith.constant 0 : index
    %261 = vector.load %arg10[%c0_71, %c5_72, %c0_73] : memref<2x14x14xf32, #tpu.memory_space<vmem>>, vector<1x8x14xf32>
    %262 = vector.shape_cast %261 : vector<1x8x14xf32> to vector<8x14xf32>
    %c35 = arith.constant 35 : index
    %263 = memref.load %arg8[%c35] : memref<98xf32, #tpu.memory_space<smem>>
    %264 = vector.extract_strided_slice %262 {offsets = [0, 0], sizes = [8, 8], strides = [1, 1]} : vector<8x14xf32> to vector<8x8xf32>
    %265 = vector.broadcast %263 : f32 to vector<8x8xf32>
    %266 = arith.mulf %265, %264 : vector<8x8xf32>
    %267 = arith.addf %245, %266 : vector<8x8xf32>
    %c36 = arith.constant 36 : index
    %268 = memref.load %arg8[%c36] : memref<98xf32, #tpu.memory_space<smem>>
    %269 = vector.extract_strided_slice %262 {offsets = [0, 1], sizes = [8, 8], strides = [1, 1]} : vector<8x14xf32> to vector<8x8xf32>
    %270 = vector.broadcast %268 : f32 to vector<8x8xf32>
    %271 = arith.mulf %270, %269 : vector<8x8xf32>
    %272 = arith.addf %250, %271 : vector<8x8xf32>
    %c37 = arith.constant 37 : index
    %273 = memref.load %arg8[%c37] : memref<98xf32, #tpu.memory_space<smem>>
    %274 = vector.extract_strided_slice %262 {offsets = [0, 2], sizes = [8, 8], strides = [1, 1]} : vector<8x14xf32> to vector<8x8xf32>
    %275 = vector.broadcast %273 : f32 to vector<8x8xf32>
    %276 = arith.mulf %275, %274 : vector<8x8xf32>
    %277 = arith.addf %255, %276 : vector<8x8xf32>
    %c38 = arith.constant 38 : index
    %278 = memref.load %arg8[%c38] : memref<98xf32, #tpu.memory_space<smem>>
    %279 = vector.extract_strided_slice %262 {offsets = [0, 3], sizes = [8, 8], strides = [1, 1]} : vector<8x14xf32> to vector<8x8xf32>
    %280 = vector.broadcast %278 : f32 to vector<8x8xf32>
    %281 = arith.mulf %280, %279 : vector<8x8xf32>
    %282 = arith.addf %260, %281 : vector<8x8xf32>
    %c39 = arith.constant 39 : index
    %283 = memref.load %arg8[%c39] : memref<98xf32, #tpu.memory_space<smem>>
    %284 = vector.extract_strided_slice %262 {offsets = [0, 4], sizes = [8, 8], strides = [1, 1]} : vector<8x14xf32> to vector<8x8xf32>
    %285 = vector.broadcast %283 : f32 to vector<8x8xf32>
    %286 = arith.mulf %285, %284 : vector<8x8xf32>
    %287 = arith.addf %267, %286 : vector<8x8xf32>
    %c40 = arith.constant 40 : index
    %288 = memref.load %arg8[%c40] : memref<98xf32, #tpu.memory_space<smem>>
    %289 = vector.extract_strided_slice %262 {offsets = [0, 5], sizes = [8, 8], strides = [1, 1]} : vector<8x14xf32> to vector<8x8xf32>
    %290 = vector.broadcast %288 : f32 to vector<8x8xf32>
    %291 = arith.mulf %290, %289 : vector<8x8xf32>
    %292 = arith.addf %272, %291 : vector<8x8xf32>
    %c41 = arith.constant 41 : index
    %293 = memref.load %arg8[%c41] : memref<98xf32, #tpu.memory_space<smem>>
    %294 = vector.extract_strided_slice %262 {offsets = [0, 6], sizes = [8, 8], strides = [1, 1]} : vector<8x14xf32> to vector<8x8xf32>
    %295 = vector.broadcast %293 : f32 to vector<8x8xf32>
    %296 = arith.mulf %295, %294 : vector<8x8xf32>
    %297 = arith.addf %277, %296 : vector<8x8xf32>
    %c0_74 = arith.constant 0 : index
    %c6_75 = arith.constant 6 : index
    %c0_76 = arith.constant 0 : index
    %298 = vector.load %arg10[%c0_74, %c6_75, %c0_76] : memref<2x14x14xf32, #tpu.memory_space<vmem>>, vector<1x8x14xf32>
    %299 = vector.shape_cast %298 : vector<1x8x14xf32> to vector<8x14xf32>
    %c42 = arith.constant 42 : index
    %300 = memref.load %arg8[%c42] : memref<98xf32, #tpu.memory_space<smem>>
    %301 = vector.extract_strided_slice %299 {offsets = [0, 0], sizes = [8, 8], strides = [1, 1]} : vector<8x14xf32> to vector<8x8xf32>
    %302 = vector.broadcast %300 : f32 to vector<8x8xf32>
    %303 = arith.mulf %302, %301 : vector<8x8xf32>
    %304 = arith.addf %282, %303 : vector<8x8xf32>
    %c43 = arith.constant 43 : index
    %305 = memref.load %arg8[%c43] : memref<98xf32, #tpu.memory_space<smem>>
    %306 = vector.extract_strided_slice %299 {offsets = [0, 1], sizes = [8, 8], strides = [1, 1]} : vector<8x14xf32> to vector<8x8xf32>
    %307 = vector.broadcast %305 : f32 to vector<8x8xf32>
    %308 = arith.mulf %307, %306 : vector<8x8xf32>
    %309 = arith.addf %287, %308 : vector<8x8xf32>
    %c44 = arith.constant 44 : index
    %310 = memref.load %arg8[%c44] : memref<98xf32, #tpu.memory_space<smem>>
    %311 = vector.extract_strided_slice %299 {offsets = [0, 2], sizes = [8, 8], strides = [1, 1]} : vector<8x14xf32> to vector<8x8xf32>
    %312 = vector.broadcast %310 : f32 to vector<8x8xf32>
    %313 = arith.mulf %312, %311 : vector<8x8xf32>
    %314 = arith.addf %292, %313 : vector<8x8xf32>
    %c45 = arith.constant 45 : index
    %315 = memref.load %arg8[%c45] : memref<98xf32, #tpu.memory_space<smem>>
    %316 = vector.extract_strided_slice %299 {offsets = [0, 3], sizes = [8, 8], strides = [1, 1]} : vector<8x14xf32> to vector<8x8xf32>
    %317 = vector.broadcast %315 : f32 to vector<8x8xf32>
    %318 = arith.mulf %317, %316 : vector<8x8xf32>
    %319 = arith.addf %297, %318 : vector<8x8xf32>
    %c46 = arith.constant 46 : index
    %320 = memref.load %arg8[%c46] : memref<98xf32, #tpu.memory_space<smem>>
    %321 = vector.extract_strided_slice %299 {offsets = [0, 4], sizes = [8, 8], strides = [1, 1]} : vector<8x14xf32> to vector<8x8xf32>
    %322 = vector.broadcast %320 : f32 to vector<8x8xf32>
    %323 = arith.mulf %322, %321 : vector<8x8xf32>
    %324 = arith.addf %304, %323 : vector<8x8xf32>
    %c47 = arith.constant 47 : index
    %325 = memref.load %arg8[%c47] : memref<98xf32, #tpu.memory_space<smem>>
    %326 = vector.extract_strided_slice %299 {offsets = [0, 5], sizes = [8, 8], strides = [1, 1]} : vector<8x14xf32> to vector<8x8xf32>
    %327 = vector.broadcast %325 : f32 to vector<8x8xf32>
    %328 = arith.mulf %327, %326 : vector<8x8xf32>
    %329 = arith.addf %309, %328 : vector<8x8xf32>
    %c48 = arith.constant 48 : index
    %330 = memref.load %arg8[%c48] : memref<98xf32, #tpu.memory_space<smem>>
    %331 = vector.extract_strided_slice %299 {offsets = [0, 6], sizes = [8, 8], strides = [1, 1]} : vector<8x14xf32> to vector<8x8xf32>
    %332 = vector.broadcast %330 : f32 to vector<8x8xf32>
    %333 = arith.mulf %332, %331 : vector<8x8xf32>
    %334 = arith.addf %314, %333 : vector<8x8xf32>
    %c1_77 = arith.constant 1 : index
    %c0_78 = arith.constant 0 : index
    %c0_79 = arith.constant 0 : index
    %335 = vector.load %arg10[%c1_77, %c0_78, %c0_79] : memref<2x14x14xf32, #tpu.memory_space<vmem>>, vector<1x8x14xf32>
    %336 = vector.shape_cast %335 : vector<1x8x14xf32> to vector<8x14xf32>
    %c49 = arith.constant 49 : index
    %337 = memref.load %arg8[%c49] : memref<98xf32, #tpu.memory_space<smem>>
    %338 = vector.extract_strided_slice %336 {offsets = [0, 0], sizes = [8, 8], strides = [1, 1]} : vector<8x14xf32> to vector<8x8xf32>
    %339 = vector.broadcast %337 : f32 to vector<8x8xf32>
    %340 = arith.mulf %339, %338 : vector<8x8xf32>
    %341 = arith.addf %319, %340 : vector<8x8xf32>
    %c50 = arith.constant 50 : index
    %342 = memref.load %arg8[%c50] : memref<98xf32, #tpu.memory_space<smem>>
    %343 = vector.extract_strided_slice %336 {offsets = [0, 1], sizes = [8, 8], strides = [1, 1]} : vector<8x14xf32> to vector<8x8xf32>
    %344 = vector.broadcast %342 : f32 to vector<8x8xf32>
    %345 = arith.mulf %344, %343 : vector<8x8xf32>
    %346 = arith.addf %324, %345 : vector<8x8xf32>
    %c51 = arith.constant 51 : index
    %347 = memref.load %arg8[%c51] : memref<98xf32, #tpu.memory_space<smem>>
    %348 = vector.extract_strided_slice %336 {offsets = [0, 2], sizes = [8, 8], strides = [1, 1]} : vector<8x14xf32> to vector<8x8xf32>
    %349 = vector.broadcast %347 : f32 to vector<8x8xf32>
    %350 = arith.mulf %349, %348 : vector<8x8xf32>
    %351 = arith.addf %329, %350 : vector<8x8xf32>
    %c52 = arith.constant 52 : index
    %352 = memref.load %arg8[%c52] : memref<98xf32, #tpu.memory_space<smem>>
    %353 = vector.extract_strided_slice %336 {offsets = [0, 3], sizes = [8, 8], strides = [1, 1]} : vector<8x14xf32> to vector<8x8xf32>
    %354 = vector.broadcast %352 : f32 to vector<8x8xf32>
    %355 = arith.mulf %354, %353 : vector<8x8xf32>
    %356 = arith.addf %334, %355 : vector<8x8xf32>
    %c53 = arith.constant 53 : index
    %357 = memref.load %arg8[%c53] : memref<98xf32, #tpu.memory_space<smem>>
    %358 = vector.extract_strided_slice %336 {offsets = [0, 4], sizes = [8, 8], strides = [1, 1]} : vector<8x14xf32> to vector<8x8xf32>
    %359 = vector.broadcast %357 : f32 to vector<8x8xf32>
    %360 = arith.mulf %359, %358 : vector<8x8xf32>
    %361 = arith.addf %341, %360 : vector<8x8xf32>
    %c54 = arith.constant 54 : index
    %362 = memref.load %arg8[%c54] : memref<98xf32, #tpu.memory_space<smem>>
    %363 = vector.extract_strided_slice %336 {offsets = [0, 5], sizes = [8, 8], strides = [1, 1]} : vector<8x14xf32> to vector<8x8xf32>
    %364 = vector.broadcast %362 : f32 to vector<8x8xf32>
    %365 = arith.mulf %364, %363 : vector<8x8xf32>
    %366 = arith.addf %346, %365 : vector<8x8xf32>
    %c55 = arith.constant 55 : index
    %367 = memref.load %arg8[%c55] : memref<98xf32, #tpu.memory_space<smem>>
    %368 = vector.extract_strided_slice %336 {offsets = [0, 6], sizes = [8, 8], strides = [1, 1]} : vector<8x14xf32> to vector<8x8xf32>
    %369 = vector.broadcast %367 : f32 to vector<8x8xf32>
    %370 = arith.mulf %369, %368 : vector<8x8xf32>
    %371 = arith.addf %351, %370 : vector<8x8xf32>
    %c1_80 = arith.constant 1 : index
    %c1_81 = arith.constant 1 : index
    %c0_82 = arith.constant 0 : index
    %372 = vector.load %arg10[%c1_80, %c1_81, %c0_82] : memref<2x14x14xf32, #tpu.memory_space<vmem>>, vector<1x8x14xf32>
    %373 = vector.shape_cast %372 : vector<1x8x14xf32> to vector<8x14xf32>
    %c56 = arith.constant 56 : index
    %374 = memref.load %arg8[%c56] : memref<98xf32, #tpu.memory_space<smem>>
    %375 = vector.extract_strided_slice %373 {offsets = [0, 0], sizes = [8, 8], strides = [1, 1]} : vector<8x14xf32> to vector<8x8xf32>
    %376 = vector.broadcast %374 : f32 to vector<8x8xf32>
    %377 = arith.mulf %376, %375 : vector<8x8xf32>
    %378 = arith.addf %356, %377 : vector<8x8xf32>
    %c57 = arith.constant 57 : index
    %379 = memref.load %arg8[%c57] : memref<98xf32, #tpu.memory_space<smem>>
    %380 = vector.extract_strided_slice %373 {offsets = [0, 1], sizes = [8, 8], strides = [1, 1]} : vector<8x14xf32> to vector<8x8xf32>
    %381 = vector.broadcast %379 : f32 to vector<8x8xf32>
    %382 = arith.mulf %381, %380 : vector<8x8xf32>
    %383 = arith.addf %361, %382 : vector<8x8xf32>
    %c58 = arith.constant 58 : index
    %384 = memref.load %arg8[%c58] : memref<98xf32, #tpu.memory_space<smem>>
    %385 = vector.extract_strided_slice %373 {offsets = [0, 2], sizes = [8, 8], strides = [1, 1]} : vector<8x14xf32> to vector<8x8xf32>
    %386 = vector.broadcast %384 : f32 to vector<8x8xf32>
    %387 = arith.mulf %386, %385 : vector<8x8xf32>
    %388 = arith.addf %366, %387 : vector<8x8xf32>
    %c59 = arith.constant 59 : index
    %389 = memref.load %arg8[%c59] : memref<98xf32, #tpu.memory_space<smem>>
    %390 = vector.extract_strided_slice %373 {offsets = [0, 3], sizes = [8, 8], strides = [1, 1]} : vector<8x14xf32> to vector<8x8xf32>
    %391 = vector.broadcast %389 : f32 to vector<8x8xf32>
    %392 = arith.mulf %391, %390 : vector<8x8xf32>
    %393 = arith.addf %371, %392 : vector<8x8xf32>
    %c60 = arith.constant 60 : index
    %394 = memref.load %arg8[%c60] : memref<98xf32, #tpu.memory_space<smem>>
    %395 = vector.extract_strided_slice %373 {offsets = [0, 4], sizes = [8, 8], strides = [1, 1]} : vector<8x14xf32> to vector<8x8xf32>
    %396 = vector.broadcast %394 : f32 to vector<8x8xf32>
    %397 = arith.mulf %396, %395 : vector<8x8xf32>
    %398 = arith.addf %378, %397 : vector<8x8xf32>
    %c61 = arith.constant 61 : index
    %399 = memref.load %arg8[%c61] : memref<98xf32, #tpu.memory_space<smem>>
    %400 = vector.extract_strided_slice %373 {offsets = [0, 5], sizes = [8, 8], strides = [1, 1]} : vector<8x14xf32> to vector<8x8xf32>
    %401 = vector.broadcast %399 : f32 to vector<8x8xf32>
    %402 = arith.mulf %401, %400 : vector<8x8xf32>
    %403 = arith.addf %383, %402 : vector<8x8xf32>
    %c62 = arith.constant 62 : index
    %404 = memref.load %arg8[%c62] : memref<98xf32, #tpu.memory_space<smem>>
    %405 = vector.extract_strided_slice %373 {offsets = [0, 6], sizes = [8, 8], strides = [1, 1]} : vector<8x14xf32> to vector<8x8xf32>
    %406 = vector.broadcast %404 : f32 to vector<8x8xf32>
    %407 = arith.mulf %406, %405 : vector<8x8xf32>
    %408 = arith.addf %388, %407 : vector<8x8xf32>
    %c1_83 = arith.constant 1 : index
    %c2_84 = arith.constant 2 : index
    %c0_85 = arith.constant 0 : index
    %409 = vector.load %arg10[%c1_83, %c2_84, %c0_85] : memref<2x14x14xf32, #tpu.memory_space<vmem>>, vector<1x8x14xf32>
    %410 = vector.shape_cast %409 : vector<1x8x14xf32> to vector<8x14xf32>
    %c63 = arith.constant 63 : index
    %411 = memref.load %arg8[%c63] : memref<98xf32, #tpu.memory_space<smem>>
    %412 = vector.extract_strided_slice %410 {offsets = [0, 0], sizes = [8, 8], strides = [1, 1]} : vector<8x14xf32> to vector<8x8xf32>
    %413 = vector.broadcast %411 : f32 to vector<8x8xf32>
    %414 = arith.mulf %413, %412 : vector<8x8xf32>
    %415 = arith.addf %393, %414 : vector<8x8xf32>
    %c64 = arith.constant 64 : index
    %416 = memref.load %arg8[%c64] : memref<98xf32, #tpu.memory_space<smem>>
    %417 = vector.extract_strided_slice %410 {offsets = [0, 1], sizes = [8, 8], strides = [1, 1]} : vector<8x14xf32> to vector<8x8xf32>
    %418 = vector.broadcast %416 : f32 to vector<8x8xf32>
    %419 = arith.mulf %418, %417 : vector<8x8xf32>
    %420 = arith.addf %398, %419 : vector<8x8xf32>
    %c65 = arith.constant 65 : index
    %421 = memref.load %arg8[%c65] : memref<98xf32, #tpu.memory_space<smem>>
    %422 = vector.extract_strided_slice %410 {offsets = [0, 2], sizes = [8, 8], strides = [1, 1]} : vector<8x14xf32> to vector<8x8xf32>
    %423 = vector.broadcast %421 : f32 to vector<8x8xf32>
    %424 = arith.mulf %423, %422 : vector<8x8xf32>
    %425 = arith.addf %403, %424 : vector<8x8xf32>
    %c66 = arith.constant 66 : index
    %426 = memref.load %arg8[%c66] : memref<98xf32, #tpu.memory_space<smem>>
    %427 = vector.extract_strided_slice %410 {offsets = [0, 3], sizes = [8, 8], strides = [1, 1]} : vector<8x14xf32> to vector<8x8xf32>
    %428 = vector.broadcast %426 : f32 to vector<8x8xf32>
    %429 = arith.mulf %428, %427 : vector<8x8xf32>
    %430 = arith.addf %408, %429 : vector<8x8xf32>
    %c67 = arith.constant 67 : index
    %431 = memref.load %arg8[%c67] : memref<98xf32, #tpu.memory_space<smem>>
    %432 = vector.extract_strided_slice %410 {offsets = [0, 4], sizes = [8, 8], strides = [1, 1]} : vector<8x14xf32> to vector<8x8xf32>
    %433 = vector.broadcast %431 : f32 to vector<8x8xf32>
    %434 = arith.mulf %433, %432 : vector<8x8xf32>
    %435 = arith.addf %415, %434 : vector<8x8xf32>
    %c68 = arith.constant 68 : index
    %436 = memref.load %arg8[%c68] : memref<98xf32, #tpu.memory_space<smem>>
    %437 = vector.extract_strided_slice %410 {offsets = [0, 5], sizes = [8, 8], strides = [1, 1]} : vector<8x14xf32> to vector<8x8xf32>
    %438 = vector.broadcast %436 : f32 to vector<8x8xf32>
    %439 = arith.mulf %438, %437 : vector<8x8xf32>
    %440 = arith.addf %420, %439 : vector<8x8xf32>
    %c69 = arith.constant 69 : index
    %441 = memref.load %arg8[%c69] : memref<98xf32, #tpu.memory_space<smem>>
    %442 = vector.extract_strided_slice %410 {offsets = [0, 6], sizes = [8, 8], strides = [1, 1]} : vector<8x14xf32> to vector<8x8xf32>
    %443 = vector.broadcast %441 : f32 to vector<8x8xf32>
    %444 = arith.mulf %443, %442 : vector<8x8xf32>
    %445 = arith.addf %425, %444 : vector<8x8xf32>
    %c1_86 = arith.constant 1 : index
    %c3_87 = arith.constant 3 : index
    %c0_88 = arith.constant 0 : index
    %446 = vector.load %arg10[%c1_86, %c3_87, %c0_88] : memref<2x14x14xf32, #tpu.memory_space<vmem>>, vector<1x8x14xf32>
    %447 = vector.shape_cast %446 : vector<1x8x14xf32> to vector<8x14xf32>
    %c70 = arith.constant 70 : index
    %448 = memref.load %arg8[%c70] : memref<98xf32, #tpu.memory_space<smem>>
    %449 = vector.extract_strided_slice %447 {offsets = [0, 0], sizes = [8, 8], strides = [1, 1]} : vector<8x14xf32> to vector<8x8xf32>
    %450 = vector.broadcast %448 : f32 to vector<8x8xf32>
    %451 = arith.mulf %450, %449 : vector<8x8xf32>
    %452 = arith.addf %430, %451 : vector<8x8xf32>
    %c71 = arith.constant 71 : index
    %453 = memref.load %arg8[%c71] : memref<98xf32, #tpu.memory_space<smem>>
    %454 = vector.extract_strided_slice %447 {offsets = [0, 1], sizes = [8, 8], strides = [1, 1]} : vector<8x14xf32> to vector<8x8xf32>
    %455 = vector.broadcast %453 : f32 to vector<8x8xf32>
    %456 = arith.mulf %455, %454 : vector<8x8xf32>
    %457 = arith.addf %435, %456 : vector<8x8xf32>
    %c72 = arith.constant 72 : index
    %458 = memref.load %arg8[%c72] : memref<98xf32, #tpu.memory_space<smem>>
    %459 = vector.extract_strided_slice %447 {offsets = [0, 2], sizes = [8, 8], strides = [1, 1]} : vector<8x14xf32> to vector<8x8xf32>
    %460 = vector.broadcast %458 : f32 to vector<8x8xf32>
    %461 = arith.mulf %460, %459 : vector<8x8xf32>
    %462 = arith.addf %440, %461 : vector<8x8xf32>
    %c73 = arith.constant 73 : index
    %463 = memref.load %arg8[%c73] : memref<98xf32, #tpu.memory_space<smem>>
    %464 = vector.extract_strided_slice %447 {offsets = [0, 3], sizes = [8, 8], strides = [1, 1]} : vector<8x14xf32> to vector<8x8xf32>
    %465 = vector.broadcast %463 : f32 to vector<8x8xf32>
    %466 = arith.mulf %465, %464 : vector<8x8xf32>
    %467 = arith.addf %445, %466 : vector<8x8xf32>
    %c74 = arith.constant 74 : index
    %468 = memref.load %arg8[%c74] : memref<98xf32, #tpu.memory_space<smem>>
    %469 = vector.extract_strided_slice %447 {offsets = [0, 4], sizes = [8, 8], strides = [1, 1]} : vector<8x14xf32> to vector<8x8xf32>
    %470 = vector.broadcast %468 : f32 to vector<8x8xf32>
    %471 = arith.mulf %470, %469 : vector<8x8xf32>
    %472 = arith.addf %452, %471 : vector<8x8xf32>
    %c75 = arith.constant 75 : index
    %473 = memref.load %arg8[%c75] : memref<98xf32, #tpu.memory_space<smem>>
    %474 = vector.extract_strided_slice %447 {offsets = [0, 5], sizes = [8, 8], strides = [1, 1]} : vector<8x14xf32> to vector<8x8xf32>
    %475 = vector.broadcast %473 : f32 to vector<8x8xf32>
    %476 = arith.mulf %475, %474 : vector<8x8xf32>
    %477 = arith.addf %457, %476 : vector<8x8xf32>
    %c76 = arith.constant 76 : index
    %478 = memref.load %arg8[%c76] : memref<98xf32, #tpu.memory_space<smem>>
    %479 = vector.extract_strided_slice %447 {offsets = [0, 6], sizes = [8, 8], strides = [1, 1]} : vector<8x14xf32> to vector<8x8xf32>
    %480 = vector.broadcast %478 : f32 to vector<8x8xf32>
    %481 = arith.mulf %480, %479 : vector<8x8xf32>
    %482 = arith.addf %462, %481 : vector<8x8xf32>
    %c1_89 = arith.constant 1 : index
    %c4_90 = arith.constant 4 : index
    %c0_91 = arith.constant 0 : index
    %483 = vector.load %arg10[%c1_89, %c4_90, %c0_91] : memref<2x14x14xf32, #tpu.memory_space<vmem>>, vector<1x8x14xf32>
    %484 = vector.shape_cast %483 : vector<1x8x14xf32> to vector<8x14xf32>
    %c77 = arith.constant 77 : index
    %485 = memref.load %arg8[%c77] : memref<98xf32, #tpu.memory_space<smem>>
    %486 = vector.extract_strided_slice %484 {offsets = [0, 0], sizes = [8, 8], strides = [1, 1]} : vector<8x14xf32> to vector<8x8xf32>
    %487 = vector.broadcast %485 : f32 to vector<8x8xf32>
    %488 = arith.mulf %487, %486 : vector<8x8xf32>
    %489 = arith.addf %467, %488 : vector<8x8xf32>
    %c78 = arith.constant 78 : index
    %490 = memref.load %arg8[%c78] : memref<98xf32, #tpu.memory_space<smem>>
    %491 = vector.extract_strided_slice %484 {offsets = [0, 1], sizes = [8, 8], strides = [1, 1]} : vector<8x14xf32> to vector<8x8xf32>
    %492 = vector.broadcast %490 : f32 to vector<8x8xf32>
    %493 = arith.mulf %492, %491 : vector<8x8xf32>
    %494 = arith.addf %472, %493 : vector<8x8xf32>
    %c79 = arith.constant 79 : index
    %495 = memref.load %arg8[%c79] : memref<98xf32, #tpu.memory_space<smem>>
    %496 = vector.extract_strided_slice %484 {offsets = [0, 2], sizes = [8, 8], strides = [1, 1]} : vector<8x14xf32> to vector<8x8xf32>
    %497 = vector.broadcast %495 : f32 to vector<8x8xf32>
    %498 = arith.mulf %497, %496 : vector<8x8xf32>
    %499 = arith.addf %477, %498 : vector<8x8xf32>
    %c80 = arith.constant 80 : index
    %500 = memref.load %arg8[%c80] : memref<98xf32, #tpu.memory_space<smem>>
    %501 = vector.extract_strided_slice %484 {offsets = [0, 3], sizes = [8, 8], strides = [1, 1]} : vector<8x14xf32> to vector<8x8xf32>
    %502 = vector.broadcast %500 : f32 to vector<8x8xf32>
    %503 = arith.mulf %502, %501 : vector<8x8xf32>
    %504 = arith.addf %482, %503 : vector<8x8xf32>
    %c81 = arith.constant 81 : index
    %505 = memref.load %arg8[%c81] : memref<98xf32, #tpu.memory_space<smem>>
    %506 = vector.extract_strided_slice %484 {offsets = [0, 4], sizes = [8, 8], strides = [1, 1]} : vector<8x14xf32> to vector<8x8xf32>
    %507 = vector.broadcast %505 : f32 to vector<8x8xf32>
    %508 = arith.mulf %507, %506 : vector<8x8xf32>
    %509 = arith.addf %489, %508 : vector<8x8xf32>
    %c82 = arith.constant 82 : index
    %510 = memref.load %arg8[%c82] : memref<98xf32, #tpu.memory_space<smem>>
    %511 = vector.extract_strided_slice %484 {offsets = [0, 5], sizes = [8, 8], strides = [1, 1]} : vector<8x14xf32> to vector<8x8xf32>
    %512 = vector.broadcast %510 : f32 to vector<8x8xf32>
    %513 = arith.mulf %512, %511 : vector<8x8xf32>
    %514 = arith.addf %494, %513 : vector<8x8xf32>
    %c83 = arith.constant 83 : index
    %515 = memref.load %arg8[%c83] : memref<98xf32, #tpu.memory_space<smem>>
    %516 = vector.extract_strided_slice %484 {offsets = [0, 6], sizes = [8, 8], strides = [1, 1]} : vector<8x14xf32> to vector<8x8xf32>
    %517 = vector.broadcast %515 : f32 to vector<8x8xf32>
    %518 = arith.mulf %517, %516 : vector<8x8xf32>
    %519 = arith.addf %499, %518 : vector<8x8xf32>
    %c1_92 = arith.constant 1 : index
    %c5_93 = arith.constant 5 : index
    %c0_94 = arith.constant 0 : index
    %520 = vector.load %arg10[%c1_92, %c5_93, %c0_94] : memref<2x14x14xf32, #tpu.memory_space<vmem>>, vector<1x8x14xf32>
    %521 = vector.shape_cast %520 : vector<1x8x14xf32> to vector<8x14xf32>
    %c84 = arith.constant 84 : index
    %522 = memref.load %arg8[%c84] : memref<98xf32, #tpu.memory_space<smem>>
    %523 = vector.extract_strided_slice %521 {offsets = [0, 0], sizes = [8, 8], strides = [1, 1]} : vector<8x14xf32> to vector<8x8xf32>
    %524 = vector.broadcast %522 : f32 to vector<8x8xf32>
    %525 = arith.mulf %524, %523 : vector<8x8xf32>
    %526 = arith.addf %504, %525 : vector<8x8xf32>
    %c85 = arith.constant 85 : index
    %527 = memref.load %arg8[%c85] : memref<98xf32, #tpu.memory_space<smem>>
    %528 = vector.extract_strided_slice %521 {offsets = [0, 1], sizes = [8, 8], strides = [1, 1]} : vector<8x14xf32> to vector<8x8xf32>
    %529 = vector.broadcast %527 : f32 to vector<8x8xf32>
    %530 = arith.mulf %529, %528 : vector<8x8xf32>
    %531 = arith.addf %509, %530 : vector<8x8xf32>
    %c86 = arith.constant 86 : index
    %532 = memref.load %arg8[%c86] : memref<98xf32, #tpu.memory_space<smem>>
    %533 = vector.extract_strided_slice %521 {offsets = [0, 2], sizes = [8, 8], strides = [1, 1]} : vector<8x14xf32> to vector<8x8xf32>
    %534 = vector.broadcast %532 : f32 to vector<8x8xf32>
    %535 = arith.mulf %534, %533 : vector<8x8xf32>
    %536 = arith.addf %514, %535 : vector<8x8xf32>
    %c87 = arith.constant 87 : index
    %537 = memref.load %arg8[%c87] : memref<98xf32, #tpu.memory_space<smem>>
    %538 = vector.extract_strided_slice %521 {offsets = [0, 3], sizes = [8, 8], strides = [1, 1]} : vector<8x14xf32> to vector<8x8xf32>
    %539 = vector.broadcast %537 : f32 to vector<8x8xf32>
    %540 = arith.mulf %539, %538 : vector<8x8xf32>
    %541 = arith.addf %519, %540 : vector<8x8xf32>
    %c88 = arith.constant 88 : index
    %542 = memref.load %arg8[%c88] : memref<98xf32, #tpu.memory_space<smem>>
    %543 = vector.extract_strided_slice %521 {offsets = [0, 4], sizes = [8, 8], strides = [1, 1]} : vector<8x14xf32> to vector<8x8xf32>
    %544 = vector.broadcast %542 : f32 to vector<8x8xf32>
    %545 = arith.mulf %544, %543 : vector<8x8xf32>
    %546 = arith.addf %526, %545 : vector<8x8xf32>
    %c89 = arith.constant 89 : index
    %547 = memref.load %arg8[%c89] : memref<98xf32, #tpu.memory_space<smem>>
    %548 = vector.extract_strided_slice %521 {offsets = [0, 5], sizes = [8, 8], strides = [1, 1]} : vector<8x14xf32> to vector<8x8xf32>
    %549 = vector.broadcast %547 : f32 to vector<8x8xf32>
    %550 = arith.mulf %549, %548 : vector<8x8xf32>
    %551 = arith.addf %531, %550 : vector<8x8xf32>
    %c90 = arith.constant 90 : index
    %552 = memref.load %arg8[%c90] : memref<98xf32, #tpu.memory_space<smem>>
    %553 = vector.extract_strided_slice %521 {offsets = [0, 6], sizes = [8, 8], strides = [1, 1]} : vector<8x14xf32> to vector<8x8xf32>
    %554 = vector.broadcast %552 : f32 to vector<8x8xf32>
    %555 = arith.mulf %554, %553 : vector<8x8xf32>
    %556 = arith.addf %536, %555 : vector<8x8xf32>
    %c1_95 = arith.constant 1 : index
    %c6_96 = arith.constant 6 : index
    %c0_97 = arith.constant 0 : index
    %557 = vector.load %arg10[%c1_95, %c6_96, %c0_97] : memref<2x14x14xf32, #tpu.memory_space<vmem>>, vector<1x8x14xf32>
    %558 = vector.shape_cast %557 : vector<1x8x14xf32> to vector<8x14xf32>
    %c91 = arith.constant 91 : index
    %559 = memref.load %arg8[%c91] : memref<98xf32, #tpu.memory_space<smem>>
    %560 = vector.extract_strided_slice %558 {offsets = [0, 0], sizes = [8, 8], strides = [1, 1]} : vector<8x14xf32> to vector<8x8xf32>
    %561 = vector.broadcast %559 : f32 to vector<8x8xf32>
    %562 = arith.mulf %561, %560 : vector<8x8xf32>
    %563 = arith.addf %541, %562 : vector<8x8xf32>
    %c92 = arith.constant 92 : index
    %564 = memref.load %arg8[%c92] : memref<98xf32, #tpu.memory_space<smem>>
    %565 = vector.extract_strided_slice %558 {offsets = [0, 1], sizes = [8, 8], strides = [1, 1]} : vector<8x14xf32> to vector<8x8xf32>
    %566 = vector.broadcast %564 : f32 to vector<8x8xf32>
    %567 = arith.mulf %566, %565 : vector<8x8xf32>
    %568 = arith.addf %546, %567 : vector<8x8xf32>
    %c93 = arith.constant 93 : index
    %569 = memref.load %arg8[%c93] : memref<98xf32, #tpu.memory_space<smem>>
    %570 = vector.extract_strided_slice %558 {offsets = [0, 2], sizes = [8, 8], strides = [1, 1]} : vector<8x14xf32> to vector<8x8xf32>
    %571 = vector.broadcast %569 : f32 to vector<8x8xf32>
    %572 = arith.mulf %571, %570 : vector<8x8xf32>
    %573 = arith.addf %551, %572 : vector<8x8xf32>
    %c94 = arith.constant 94 : index
    %574 = memref.load %arg8[%c94] : memref<98xf32, #tpu.memory_space<smem>>
    %575 = vector.extract_strided_slice %558 {offsets = [0, 3], sizes = [8, 8], strides = [1, 1]} : vector<8x14xf32> to vector<8x8xf32>
    %576 = vector.broadcast %574 : f32 to vector<8x8xf32>
    %577 = arith.mulf %576, %575 : vector<8x8xf32>
    %578 = arith.addf %556, %577 : vector<8x8xf32>
    %c95 = arith.constant 95 : index
    %579 = memref.load %arg8[%c95] : memref<98xf32, #tpu.memory_space<smem>>
    %580 = vector.extract_strided_slice %558 {offsets = [0, 4], sizes = [8, 8], strides = [1, 1]} : vector<8x14xf32> to vector<8x8xf32>
    %581 = vector.broadcast %579 : f32 to vector<8x8xf32>
    %582 = arith.mulf %581, %580 : vector<8x8xf32>
    %583 = arith.addf %563, %582 : vector<8x8xf32>
    %c96 = arith.constant 96 : index
    %584 = memref.load %arg8[%c96] : memref<98xf32, #tpu.memory_space<smem>>
    %585 = vector.extract_strided_slice %558 {offsets = [0, 5], sizes = [8, 8], strides = [1, 1]} : vector<8x14xf32> to vector<8x8xf32>
    %586 = vector.broadcast %584 : f32 to vector<8x8xf32>
    %587 = arith.mulf %586, %585 : vector<8x8xf32>
    %588 = arith.addf %568, %587 : vector<8x8xf32>
    %c97 = arith.constant 97 : index
    %589 = memref.load %arg8[%c97] : memref<98xf32, #tpu.memory_space<smem>>
    %590 = vector.extract_strided_slice %558 {offsets = [0, 6], sizes = [8, 8], strides = [1, 1]} : vector<8x14xf32> to vector<8x8xf32>
    %591 = vector.broadcast %589 : f32 to vector<8x8xf32>
    %592 = arith.mulf %591, %590 : vector<8x8xf32>
    %593 = arith.addf %573, %592 : vector<8x8xf32>
    %594 = arith.addf %588, %593 : vector<8x8xf32>
    %595 = arith.addf %578, %583 : vector<8x8xf32>
    %596 = arith.addf %594, %595 : vector<8x8xf32>
    %cst_98 = arith.constant 0.000000e+00 : f32
    %597 = vector.broadcast %cst_98 : f32 to vector<8x8xf32>
    %598 = arith.subf %597, %596 : vector<8x8xf32>
    %599 = math.exp %598 : vector<8x8xf32>
    %cst_99 = arith.constant 1.000000e+00 : f32
    %600 = vector.broadcast %cst_99 : f32 to vector<8x8xf32>
    %601 = arith.addf %600, %599 : vector<8x8xf32>
    %cst_100 = arith.constant 1.000000e+00 : f32
    %602 = vector.broadcast %cst_100 : f32 to vector<8x8xf32>
    %603 = arith.divf %602, %601 : vector<8x8xf32>
    %604 = vector.shape_cast %603 : vector<8x8xf32> to vector<8x8x1xf32>
    %605 = vector.broadcast %604 : vector<8x8x1xf32> to vector<8x8x32xf32>
    %606 = arith.mulf %59, %605 : vector<8x8x32xf32>
    %c0_101 = arith.constant 0 : index
    %c0_102 = arith.constant 0 : index
    %c0_103 = arith.constant 0 : index
    %c0_104 = arith.constant 0 : index
    %607 = vector.load %arg9[%c0_101, %c0_102, %c0_103, %c0_104] : memref<1x8x8x32xf32, #tpu.memory_space<vmem>>, vector<1x8x8x32xf32>
    %608 = vector.shape_cast %607 : vector<1x8x8x32xf32> to vector<8x8x32xf32>
    %609 = vector.shape_cast %606 : vector<8x8x32xf32> to vector<1x8x8x32xf32>
    tpu.vector_store %arg9[%c0_101, %c0_102, %c0_103, %c0_104], %609 {strides = array<i32>} : memref<1x8x8x32xf32, #tpu.memory_space<vmem>>, vector<1x8x8x32xf32>,
    return
  }
  func.func @transform_0(%arg0: i32) -> (i32, i32, i32, i32) {
    %c0_i32 = arith.constant 0 : i32
    %c0_i32_0 = arith.constant 0 : i32
    %c0_i32_1 = arith.constant 0 : i32
    %c0_i32_2 = arith.constant 0 : i32
    return %arg0, %c0_i32, %c0_i32_0, %c0_i32_1 : i32, i32, i32, i32
  }
  func.func @transform_1(%arg0: i32) -> (i32, i32, i32, i32) {
    %c0_i32 = arith.constant 0 : i32
    %c0_i32_0 = arith.constant 0 : i32
    %c0_i32_1 = arith.constant 0 : i32
    %c0_i32_2 = arith.constant 0 : i32
    return %arg0, %c0_i32, %c0_i32_0, %c0_i32_1 : i32, i32, i32, i32
  }
  func.func @transform_2(%arg0: i32) -> (i32, i32, i32, i32) {
    %c0_i32 = arith.constant 0 : i32
    %c0_i32_0 = arith.constant 0 : i32
    %c0_i32_1 = arith.constant 0 : i32
    %c0_i32_2 = arith.constant 0 : i32
    return %arg0, %c0_i32, %c0_i32_0, %c0_i32_1 : i32, i32, i32, i32
  }
  func.func @transform_3(%arg0: i32) -> (i32, i32, i32, i32) {
    %c0_i32 = arith.constant 0 : i32
    %c0_i32_0 = arith.constant 0 : i32
    %c0_i32_1 = arith.constant 0 : i32
    %c0_i32_2 = arith.constant 0 : i32
    return %arg0, %c0_i32, %c0_i32_0, %c0_i32_1 : i32, i32, i32, i32
  }
  func.func @transform_4(%arg0: i32) -> (i32, i32) {
    %c0_i32 = arith.constant 0 : i32
    %c0_i32_0 = arith.constant 0 : i32
    %c0_i32_1 = arith.constant 0 : i32
    return %c0_i32, %c0_i32_0 : i32, i32
  }
  func.func @transform_5(%arg0: i32) -> (i32, i32) {
    %c0_i32 = arith.constant 0 : i32
    %c0_i32_0 = arith.constant 0 : i32
    %c0_i32_1 = arith.constant 0 : i32
    return %c0_i32, %c0_i32_0 : i32, i32
  }
  func.func @transform_6(%arg0: i32) -> i32 {
    %c0_i32 = arith.constant 0 : i32
    %c0_i32_0 = arith.constant 0 : i32
    return %c0_i32 : i32
  }
  func.func @transform_7(%arg0: i32) -> i32 {
    %c0_i32 = arith.constant 0 : i32
    %c0_i32_0 = arith.constant 0 : i32
    return %c0_i32 : i32
  }
  func.func @transform_8(%arg0: i32) -> (i32, i32, i32, i32) {
    %c0_i32 = arith.constant 0 : i32
    %c0_i32_0 = arith.constant 0 : i32
    %c0_i32_1 = arith.constant 0 : i32
    %c0_i32_2 = arith.constant 0 : i32
    return %arg0, %c0_i32, %c0_i32_0, %c0_i32_1 : i32, i32, i32, i32
  }
}

</mosaic_0001>

<llo_original>
// kernel: stage_attention_forward.15
$region0: #{stage_attention_forward.15}
  #allocation0 [shape = 'u32[]', space=smem, size = 0x4, offset = 0x4, fixed_abs, tag = 'smem constant byte address 0x4 - core index']
  #allocation1 [shape = 'u32[144,128]{1,0:T(1,128)}', space=vmem, size = 0x12000, scoped, tag = 'internal scratch']
  %s0 = inlined_call_operand.vmem [shape: f32[128,32], index: 0, kind: input, shape index: {}]
  %s1 = inlined_call_operand.vmem [shape: f32[8,32], index: 1, kind: input, shape index: {}]
  %s2 = inlined_call_operand.vmem [shape: f32[1,32], index: 2, kind: input, shape index: {}]
  %s3 = inlined_call_operand.vmem [shape: f32[1,32], index: 3, kind: input, shape index: {}]
  %s4 = inlined_call_operand.vmem [shape: f32[1,32], index: 4, kind: input, shape index: {}]
  %s5 = inlined_call_operand.vmem [shape: f32[128,32], index: 5, kind: output, shape index: {}]
  %s6 = sld [smem:[#allocation0]]
  $region30: #{stage_attention_forward.15} parent=0
    _
  %s8 = ssub.s32 1, %s6
  %s9 = scalar_select 0, %s8, %s6
  // Predicated region
  $region2: #{stage_attention_forward.15} parent=0 // pred_check
    _
  $region3: #{stage_attention_forward.15} parent=0 // pred_check_branch
    %11 = sbr.rel (0) target = $region5
  $region4: #{stage_attention_forward.15} parent=0 // pred_region
    _
  $region5: #{stage_attention_forward.15} parent=0 // pred_fallthru
    _
  // Predicated region
  $region6: #{stage_attention_forward.15} parent=0 // pred_check
    _
  $region7: #{stage_attention_forward.15} parent=0 // pred_check_branch
    %13 = sbr.rel (0) target = $region9
  $region8: #{stage_attention_forward.15} parent=0 // pred_region
    _
  $region9: #{stage_attention_forward.15} parent=0 // pred_fallthru
    _
  // Predicated region
  $region10: #{stage_attention_forward.15} parent=0 // pred_check
    _
  $region11: #{stage_attention_forward.15} parent=0 // pred_check_branch
    %15 = sbr.rel (0) target = $region13
  $region12: #{stage_attention_forward.15} parent=0 // pred_region
    _
  $region13: #{stage_attention_forward.15} parent=0 // pred_fallthru
    _
  // Predicated region
  $region14: #{stage_attention_forward.15} parent=0 // pred_check
    _
  $region15: #{stage_attention_forward.15} parent=0 // pred_check_branch
    %17 = sbr.rel (0) target = $region17
  $region16: #{stage_attention_forward.15} parent=0 // pred_region
    _
  $region17: #{stage_attention_forward.15} parent=0 // pred_fallthru
    _
  // Predicated region
  $region18: #{stage_attention_forward.15} parent=0 // pred_check
    _
  $region19: #{stage_attention_forward.15} parent=0 // pred_check_branch
    %19 = sbr.rel (0) target = $region21
  $region20: #{stage_attention_forward.15} parent=0 // pred_region
    _
  $region21: #{stage_attention_forward.15} parent=0 // pred_fallthru
    _
  %v20 = vld [vmem:[%s1] sm:$0x1]
  %v21 = vmul.f32 %v20, 0.0078125
  %v22 = vld [vmem:[%s1 + $0x1] sm:$0x1]
  %v23 = vmul.f32 %v22, 0.0078125
  %v24 = vmul.f32 %v21, %v21
  %v25 = vsub.f32 %v23, %v24
  %v26 = vld [vmem:[%s0] sm:$0xff]
  %v27 = vld [vmem:[%s0 + $0x8] sm:$0xff]
  %v28 = vld [vmem:[%s0 + $0x10] sm:$0xff]
  %v29 = vld [vmem:[%s0 + $0x18] sm:$0xff]
  %v30 = vld [vmem:[%s0 + $0x20] sm:$0xff]
  %v31 = vld [vmem:[%s0 + $0x28] sm:$0xff]
  %v32 = vld [vmem:[%s0 + $0x30] sm:$0xff]
  %v33 = vld [vmem:[%s0 + $0x38] sm:$0xff]
  %v34 = vld [vmem:[%s0 + $0x40] sm:$0xff]
  %v35 = vld [vmem:[%s0 + $0x48] sm:$0xff]
  %v36 = vld [vmem:[%s0 + $0x50] sm:$0xff]
  %v37 = vld [vmem:[%s0 + $0x58] sm:$0xff]
  %v38 = vld [vmem:[%s0 + $0x60] sm:$0xff]
  %v39 = vld [vmem:[%s0 + $0x68] sm:$0xff]
  %v40 = vld [vmem:[%s0 + $0x70] sm:$0xff]
  %v41 = vld [vmem:[%s0 + $0x78] sm:$0xff]
  %v42 = vlaneseq
  %v43 = vshrl.u32 %v42, 7
  %v44 = vsub.s32 0, %v43
  %v45 = vrot.slane %v21, %v44
  %v46 = vsub.f32 %v26, %v45
  %v47 = vsub.f32 %v27, %v45
  %v48 = vsub.f32 %v28, %v45
  %v49 = vsub.f32 %v29, %v45
  %v50 = vsub.f32 %v30, %v45
  %v51 = vsub.f32 %v31, %v45
  %v52 = vsub.f32 %v32, %v45
  %v53 = vsub.f32 %v33, %v45
  %v54 = vsub.f32 %v34, %v45
  %v55 = vsub.f32 %v35, %v45
  %v56 = vsub.f32 %v36, %v45
  %v57 = vsub.f32 %v37, %v45
  %v58 = vsub.f32 %v38, %v45
  %v59 = vsub.f32 %v39, %v45
  %v60 = vsub.f32 %v40, %v45
  %v61 = vsub.f32 %v41, %v45
  %v62 = vadd.f32 %v25, 1e-05
  %v63 = vrsqrt.pop %v62
  %v64 = vld [vmem:[%s2] sm:$0x1]
  %v65 = vmul.f32 %v63, %v64
  %v66 = vlaneseq
  %v67 = vshrl.u32 %v66, 7
  %v68 = vsub.s32 0, %v67
  %v69 = vrot.slane %v65, %v68
  %v70 = vmul.f32 %v46, %v69
  %v71 = vmul.f32 %v47, %v69
  %v72 = vmul.f32 %v48, %v69
  %v73 = vmul.f32 %v49, %v69
  %v74 = vmul.f32 %v50, %v69
  %v75 = vmul.f32 %v51, %v69
  %v76 = vmul.f32 %v52, %v69
  %v77 = vmul.f32 %v53, %v69
  %v78 = vmul.f32 %v54, %v69
  %v79 = vmul.f32 %v55, %v69
  %v80 = vmul.f32 %v56, %v69
  %v81 = vmul.f32 %v57, %v69
  %v82 = vmul.f32 %v58, %v69
  %v83 = vmul.f32 %v59, %v69
  %v84 = vmul.f32 %v60, %v69
  %v85 = vmul.f32 %v61, %v69
  %v86 = vld [vmem:[%s3] sm:$0x1]
  %v88 = vlaneseq
  %v89 = vshrl.u32 %v88, 7
  %v90 = vsub.s32 0, %v89
  %v91 = vrot.slane %v86, %v90
  %v93 = vadd.f32 %v70, %v91
  %v94 = vadd.f32 %v71, %v91
  %v95 = vadd.f32 %v72, %v91
  %v96 = vadd.f32 %v73, %v91
  %v97 = vadd.f32 %v74, %v91
  %v98 = vadd.f32 %v75, %v91
  %v99 = vadd.f32 %v76, %v91
  %v100 = vadd.f32 %v77, %v91
  %v101 = vadd.f32 %v78, %v91
  %v102 = vadd.f32 %v79, %v91
  %v103 = vadd.f32 %v80, %v91
  %v104 = vadd.f32 %v81, %v91
  %v105 = vadd.f32 %v82, %v91
  %v106 = vadd.f32 %v83, %v91
  %v107 = vadd.f32 %v84, %v91
  %v108 = vadd.f32 %v85, %v91
  %v109 = vld [vmem:[%s4] sm:$0x1]
  %v110 = vmax.f32 %v93, 0.0
  %v111 = vmax.f32 %v94, 0.0
  %v112 = vmax.f32 %v95, 0.0
  %v113 = vmax.f32 %v96, 0.0
  %v114 = vmax.f32 %v97, 0.0
  %v115 = vmax.f32 %v98, 0.0
  %v116 = vmax.f32 %v99, 0.0
  %v117 = vmax.f32 %v100, 0.0
  %v118 = vmax.f32 %v101, 0.0
  %v119 = vmax.f32 %v102, 0.0
  %v120 = vmax.f32 %v103, 0.0
  %v121 = vmax.f32 %v104, 0.0
  %v122 = vmax.f32 %v105, 0.0
  %v123 = vmax.f32 %v106, 0.0
  %v124 = vmax.f32 %v107, 0.0
  %v125 = vmax.f32 %v108, 0.0
  %v127 = vlaneseq
  %v128 = vshrl.u32 %v127, 7
  %v129 = vsub.s32 0, %v128
  %v130 = vrot.slane %v109, %v129
  %v132 = vmul.f32 %v130, %v110
  %v133 = vmul.f32 %v130, %v111
  %v134 = vmul.f32 %v130, %v112
  %v135 = vmul.f32 %v130, %v113
  %v136 = vmul.f32 %v130, %v114
  %v137 = vmul.f32 %v130, %v115
  %v138 = vmul.f32 %v130, %v116
  %v139 = vmul.f32 %v130, %v117
  %v140 = vmul.f32 %v130, %v118
  %v141 = vmul.f32 %v130, %v119
  %v142 = vmul.f32 %v130, %v120
  %v143 = vmul.f32 %v130, %v121
  %v144 = vmul.f32 %v130, %v122
  %v145 = vmul.f32 %v130, %v123
  %v146 = vmul.f32 %v130, %v124
  %v147 = vmul.f32 %v130, %v125
  %v148 = vsub.f32 1.0, %v109
  %v150 = vlaneseq
  %v151 = vshrl.u32 %v150, 7
  %v152 = vsub.s32 0, %v151
  %v153 = vrot.slane %v148, %v152
  %v155 = vmul.f32 %v153, %v93
  %v156 = vmul.f32 %v153, %v94
  %v157 = vmul.f32 %v153, %v95
  %v158 = vmul.f32 %v153, %v96
  %v159 = vmul.f32 %v153, %v97
  %v160 = vmul.f32 %v153, %v98
  %v161 = vmul.f32 %v153, %v99
  %v162 = vmul.f32 %v153, %v100
  %v163 = vmul.f32 %v153, %v101
  %v164 = vmul.f32 %v153, %v102
  %v165 = vmul.f32 %v153, %v103
  %v166 = vmul.f32 %v153, %v104
  %v167 = vmul.f32 %v153, %v105
  %v168 = vmul.f32 %v153, %v106
  %v169 = vmul.f32 %v153, %v107
  %v170 = vmul.f32 %v153, %v108
  %v171 = vadd.f32 %v132, %v155
  %v172 = vadd.f32 %v133, %v156
  %v173 = vadd.f32 %v134, %v157
  %v174 = vadd.f32 %v135, %v158
  %v175 = vadd.f32 %v136, %v159
  %v176 = vadd.f32 %v137, %v160
  %v177 = vadd.f32 %v138, %v161
  %v178 = vadd.f32 %v139, %v162
  %v179 = vadd.f32 %v140, %v163
  %v180 = vadd.f32 %v141, %v164
  %v181 = vadd.f32 %v142, %v165
  %v182 = vadd.f32 %v143, %v166
  %v183 = vadd.f32 %v144, %v167
  %v184 = vadd.f32 %v145, %v168
  %v185 = vadd.f32 %v146, %v169
  %v186 = vadd.f32 %v147, %v170
  %vm187 = vcmask 261120
  %188 = vst.msk [vmem:[%s5] sm:$0xff] %vm187, %v171
  %189 = vst.msk [vmem:[%s5 + $0x8] sm:$0xff] %vm187, %v172
  %190 = vst.msk [vmem:[%s5 + $0x10] sm:$0xff] %vm187, %v173
  %191 = vst.msk [vmem:[%s5 + $0x18] sm:$0xff] %vm187, %v174
  %192 = vst.msk [vmem:[%s5 + $0x20] sm:$0xff] %vm187, %v175
  %193 = vst.msk [vmem:[%s5 + $0x28] sm:$0xff] %vm187, %v176
  %194 = vst.msk [vmem:[%s5 + $0x30] sm:$0xff] %vm187, %v177
  %195 = vst.msk [vmem:[%s5 + $0x38] sm:$0xff] %vm187, %v178
  %196 = vst.msk [vmem:[%s5 + $0x40] sm:$0xff] %vm187, %v179
  %197 = vst.msk [vmem:[%s5 + $0x48] sm:$0xff] %vm187, %v180
  %198 = vst.msk [vmem:[%s5 + $0x50] sm:$0xff] %vm187, %v181
  %199 = vst.msk [vmem:[%s5 + $0x58] sm:$0xff] %vm187, %v182
  %200 = vst.msk [vmem:[%s5 + $0x60] sm:$0xff] %vm187, %v183
  %201 = vst.msk [vmem:[%s5 + $0x68] sm:$0xff] %vm187, %v184
  %202 = vst.msk [vmem:[%s5 + $0x70] sm:$0xff] %vm187, %v185
  %203 = vst.msk [vmem:[%s5 + $0x78] sm:$0xff] %vm187, %v186
  // Predicated region
  $region22: #{stage_attention_forward.15} parent=0 // pred_check
    _
  $region23: #{stage_attention_forward.15} parent=0 // pred_check_branch
    %205 = sbr.rel (0) target = $region25
  $region24: #{stage_attention_forward.15} parent=0 // pred_region
    _
  $region25: #{stage_attention_forward.15} parent=0 // pred_fallthru
    _
  // Predicated region
  $region26: #{stage_attention_forward.15} parent=0 // pred_check
    _
  $region27: #{stage_attention_forward.15} parent=0 // pred_check_branch
    %207 = sbr.rel (0) target = $region29
  $region28: #{stage_attention_forward.15} parent=0 // pred_region
    _
  $region29: #{stage_attention_forward.15} parent=0 // pred_fallthru
    _

// kernel: stage_attention_forward.14
$region0: #{stage_attention_forward.14}
  #allocation0 [shape = 'u32[]', space=smem, size = 0x4, offset = 0x4, fixed_abs, tag = 'smem constant byte address 0x4 - core index']
  #allocation1 [shape = 'u32[144,128]{1,0:T(1,128)}', space=vmem, size = 0x12000, scoped, tag = 'internal scratch']
  %s0 = inlined_call_operand.vmem [shape: f32[128,16], index: 0, kind: input, shape index: {}]
  %s1 = inlined_call_operand.vmem [shape: f32[16,32], index: 1, kind: input, shape index: {}]
  %s2 = inlined_call_operand.vmem [shape: f32[1,32], index: 2, kind: input, shape index: {}]
  %s3 = inlined_call_operand.vmem [shape: f32[128,32], index: 3, kind: output, shape index: {0}]
  %s4 = inlined_call_operand.vmem [shape: f32[8,32], index: 4, kind: output, shape index: {1}]
  %5 = xla_tuple %s3, %s4
  %s6 = sld [smem:[#allocation0]]
  $region34: #{stage_attention_forward.14} parent=0
    _
  %s8 = ssub.s32 1, %s6
  %s9 = scalar_select 0, %s8, %s6
  // Predicated region
  $region2: #{stage_attention_forward.14} parent=0 // pred_check
    _
  $region3: #{stage_attention_forward.14} parent=0 // pred_check_branch
    %11 = sbr.rel (0) target = $region5
  $region4: #{stage_attention_forward.14} parent=0 // pred_region
    %s12 = sadd.s32 0, 0
    %s13 = smul.u32 16, %s12
    %p14 = scmp.lt.s32.totalorder %s13, 15
    %s15 = scalar_select %p14, %s13, 15
    %s16 = smul.addr %s15, 8
    %s17 = scalar_lea.vmem %s0, %s16
    %s18 = sadd.s32 0, 0
    %s19 = smul.u32 16, %s18
  $region5: #{stage_attention_forward.14} parent=0 // pred_fallthru
    _
  // Predicated region
  $region6: #{stage_attention_forward.14} parent=0 // pred_check
    _
  $region7: #{stage_attention_forward.14} parent=0 // pred_check_branch
    %21 = sbr.rel (0) target = $region9
  $region8: #{stage_attention_forward.14} parent=0 // pred_region
    _
  $region9: #{stage_attention_forward.14} parent=0 // pred_fallthru
    _
  // Predicated region
  $region10: #{stage_attention_forward.14} parent=0 // pred_check
    _
  $region11: #{stage_attention_forward.14} parent=0 // pred_check_branch
    %23 = sbr.rel (0) target = $region13
  $region12: #{stage_attention_forward.14} parent=0 // pred_region
    _
  $region13: #{stage_attention_forward.14} parent=0 // pred_fallthru
    _
  %s24 = sadd.s32 0, 0
  %s25 = smul.u32 16, %s24
  %p26 = scmp.lt.s32.totalorder %s25, 15
  %s27 = scalar_select %p26, %s25, 15
  %s28 = smul.addr %s27, 8
  %s29 = scalar_lea.vmem %s0, %s28
  %s30 = sadd.s32 0, 0
  %s31 = smul.u32 16, %s30
  %p32 = scmp.lt.s32.totalorder %s31, 15
  %s33 = scalar_select %p32, %s31, 15
  %s34 = smul.addr %s33, 8
  %s35 = scalar_lea.vmem %s3, %s34
  %s36 = sadd.s32 0, 0
  %s37 = smul.u32 16, %s36
  %p38 = scmp.lt.s32.totalorder %s37, 15
  %s39 = scalar_select %p38, %s37, 15
  %s40 = smul.addr %s39, 8
  %s41 = scalar_lea.vmem %s0, %s40
  %s42 = sadd.s32 0, 0
  %s43 = smul.u32 16, %s42
  %s44 = sadd.s32 0, 0
  %s45 = smul.u32 16, %s44
  %p46 = scmp.lt.s32.totalorder %s45, 15
  %s47 = scalar_select %p46, %s45, 15
  %s48 = smul.addr %s47, 8
  %s49 = scalar_lea.vmem %s3, %s48
  %s50 = sadd.s32 0, 0
  %s51 = smul.u32 16, %s50
  %v53 = vld [vmem:[%s41] sm:$0xff]
  %v54 = vld [vmem:[%s41 + $0x8] sm:$0xff]
  %v55 = vld [vmem:[%s41 + $0x10] sm:$0xff]
  %v56 = vld [vmem:[%s41 + $0x18] sm:$0xff]
  %v57 = vld [vmem:[%s41 + $0x20] sm:$0xff]
  %v58 = vld [vmem:[%s41 + $0x28] sm:$0xff]
  %v59 = vld [vmem:[%s41 + $0x30] sm:$0xff]
  %v60 = vld [vmem:[%s41 + $0x38] sm:$0xff]
  %v61 = vld [vmem:[%s41 + $0x40] sm:$0xff]
  %v62 = vld [vmem:[%s41 + $0x48] sm:$0xff]
  %v63 = vld [vmem:[%s41 + $0x50] sm:$0xff]
  %v64 = vld [vmem:[%s41 + $0x58] sm:$0xff]
  %v65 = vld [vmem:[%s41 + $0x60] sm:$0xff]
  %v66 = vld [vmem:[%s41 + $0x68] sm:$0xff]
  %v67 = vld [vmem:[%s41 + $0x70] sm:$0xff]
  %v68 = vld [vmem:[%s41 + $0x78] sm:$0xff]
  %v69 = vld [vmem:[%s1] sm:$0xff]
  %v70 = vld [vmem:[%s1 + $0x8] sm:$0xff]
  %v71 = vpack.c.bf16 %v54, %v53
  %v72 = vpack.c.bf16 %v56, %v55
  %v73 = vpack.c.bf16 %v58, %v57
  %v74 = vpack.c.bf16 %v60, %v59
  %v75 = vpack.c.bf16 %v62, %v61
  %v76 = vpack.c.bf16 %v64, %v63
  %v77 = vpack.c.bf16 %v66, %v65
  %v78 = vpack.c.bf16 %v68, %v67
  %v79 = vpack.c.bf16 %v70, %v69
  %v80 = vld [vmem:[%s2] sm:$0x1]
  %v82 = vlaneseq
  %v83 = vshrl.u32 %v82, 7
  %v84 = vsub.s32 0, %v83
  %v85 = vrot.slane %v80, %v84
  %vm87 = vcmask 130048
  %v89 = vsel %vm87, %v71, 0
  %v92 = vsel %vm87, %v72, 0
  %v95 = vsel %vm87, %v73, 0
  %v98 = vsel %vm87, %v74, 0
  %v101 = vsel %vm87, %v75, 0
  %v104 = vsel %vm87, %v76, 0
  %v107 = vsel %vm87, %v77, 0
  %v110 = vsel %vm87, %v78, 0
  %112 = vmatprep.subr.bf16.mxu0 0
  %113 = vmatpush1.bf16.msra.mxu0 0
  %114 = vmatprep.subr.bf16.mxu0 0
  %115 = vmatpush1.bf16.msra.mxu0 0
  %116 = vmatprep.subr.bf16.mxu0 0
  %117 = vmatpush1.bf16.msra.mxu0 0
  %118 = vmatprep.subr.bf16.mxu0 0
  %119 = vmatpush1.bf16.msra.mxu0 0
  %120 = vmatprep.subr.bf16.mxu0 0
  %121 = vmatpush1.bf16.msra.mxu0 0
  %122 = vmatprep.subr.bf16.mxu0 0
  %123 = vmatpush1.bf16.msra.mxu0 0
  %124 = vmatprep.subr.bf16.mxu0 0
  %125 = vmatpush1.bf16.msra.mxu0 0
  %126 = vmatprep.subr.bf16.mxu0 0
  %127 = vmatpush1.bf16.msra.mxu0 %v79
  %128 = vmatprep.subr.bf16.mxu0 0
  %129 = vmatpush2.bf16.msra.mxu0 0
  %130 = vmatprep.subr.bf16.mxu0 0
  %131 = vmatpush2.bf16.msra.mxu0 0
  %132 = vmatprep.subr.bf16.mxu0 0
  %133 = vmatpush2.bf16.msra.mxu0 0
  %134 = vmatprep.subr.bf16.mxu0 0
  %135 = vmatpush2.bf16.msra.mxu0 0
  %136 = vmatprep.subr.bf16.mxu0 0
  %137 = vmatpush2.bf16.msra.mxu0 0
  %138 = vmatprep.subr.bf16.mxu0 0
  %139 = vmatpush2.bf16.msra.mxu0 0
  %140 = vmatprep.subr.bf16.mxu0 0
  %141 = vmatpush2.bf16.msra.mxu0 0
  %142 = vmatprep.subr.bf16.mxu0 0
  %143 = vmatpush2.bf16.msra.mxu0 0
  %144 = vmatprep.mubr.bf16.mxu0 0
  %145 = vmatmul.mubr.bf16.gmra.mxu0 %v89
  %v146 = vpop.f32.mrf.mxu0
  %v147 = vadd.f32 %v85, %v146
  %v148 = vpop.f32.mrf.mxu0
  %v149 = vpop.f32.mrf.mxu0
  %v150 = vadd.f32 %v85, %v149
  %v151 = vpop.f32.mrf.mxu0
  %152 = vmatprep.mubr.bf16.mxu0 0
  %153 = vmatmul.mubr.bf16.gmra.mxu0 %v92
  %v154 = vpop.f32.mrf.mxu0
  %v155 = vadd.f32 %v85, %v154
  %v156 = vpop.f32.mrf.mxu0
  %v157 = vpop.f32.mrf.mxu0
  %v158 = vadd.f32 %v85, %v157
  %v159 = vpop.f32.mrf.mxu0
  %160 = vmatprep.mubr.bf16.mxu0 0
  %161 = vmatmul.mubr.bf16.gmra.mxu0 %v95
  %v162 = vpop.f32.mrf.mxu0
  %v163 = vadd.f32 %v85, %v162
  %v164 = vpop.f32.mrf.mxu0
  %v165 = vpop.f32.mrf.mxu0
  %v166 = vadd.f32 %v85, %v165
  %v167 = vpop.f32.mrf.mxu0
  %168 = vmatprep.mubr.bf16.mxu0 0
  %169 = vmatmul.mubr.bf16.gmra.mxu0 %v98
  %v170 = vpop.f32.mrf.mxu0
  %v171 = vadd.f32 %v85, %v170
  %v172 = vpop.f32.mrf.mxu0
  %v173 = vpop.f32.mrf.mxu0
  %v174 = vadd.f32 %v85, %v173
  %v175 = vpop.f32.mrf.mxu0
  %176 = vmatprep.mubr.bf16.mxu0 0
  %177 = vmatmul.mubr.bf16.gmra.mxu0 %v101
  %v178 = vpop.f32.mrf.mxu0
  %v179 = vadd.f32 %v85, %v178
  %v180 = vpop.f32.mrf.mxu0
  %v181 = vpop.f32.mrf.mxu0
  %v182 = vadd.f32 %v85, %v181
  %v183 = vpop.f32.mrf.mxu0
  %184 = vmatprep.mubr.bf16.mxu0 0
  %185 = vmatmul.mubr.bf16.gmra.mxu0 %v104
  %v186 = vpop.f32.mrf.mxu0
  %v187 = vadd.f32 %v85, %v186
  %v188 = vpop.f32.mrf.mxu0
  %v189 = vpop.f32.mrf.mxu0
  %v190 = vadd.f32 %v85, %v189
  %v191 = vpop.f32.mrf.mxu0
  %192 = vmatprep.mubr.bf16.mxu0 0
  %193 = vmatmul.mubr.bf16.gmra.mxu0 %v107
  %v194 = vpop.f32.mrf.mxu0
  %v195 = vadd.f32 %v85, %v194
  %v196 = vpop.f32.mrf.mxu0
  %v197 = vpop.f32.mrf.mxu0
  %v198 = vadd.f32 %v85, %v197
  %v199 = vpop.f32.mrf.mxu0
  %200 = vmatprep.mubr.bf16.mxu0 0
  %201 = vmatmul.mubr.bf16.gmra.mxu0 %v110
  %v202 = vpop.f32.mrf.mxu0
  %v203 = vadd.f32 %v85, %v202
  %v204 = vpop.f32.mrf.mxu0
  %v205 = vpop.f32.mrf.mxu0
  %v206 = vadd.f32 %v85, %v205
  %v207 = vpop.f32.mrf.mxu0
  %208 = vdwg.mxu0
  %vm209 = vcmask 261120
  %210 = vst.msk [vmem:[%s49] sm:$0xff] %vm209, %v147
  %211 = vst.msk [vmem:[%s49 + $0x8] sm:$0xff] %vm209, %v150
  %212 = vst.msk [vmem:[%s49 + $0x10] sm:$0xff] %vm209, %v155
  %213 = vst.msk [vmem:[%s49 + $0x18] sm:$0xff] %vm209, %v158
  %214 = vst.msk [vmem:[%s49 + $0x20] sm:$0xff] %vm209, %v163
  %215 = vst.msk [vmem:[%s49 + $0x28] sm:$0xff] %vm209, %v166
  %216 = vst.msk [vmem:[%s49 + $0x30] sm:$0xff] %vm209, %v171
  %217 = vst.msk [vmem:[%s49 + $0x38] sm:$0xff] %vm209, %v174
  %218 = vst.msk [vmem:[%s49 + $0x40] sm:$0xff] %vm209, %v179
  %219 = vst.msk [vmem:[%s49 + $0x48] sm:$0xff] %vm209, %v182
  %220 = vst.msk [vmem:[%s49 + $0x50] sm:$0xff] %vm209, %v187
  %221 = vst.msk [vmem:[%s49 + $0x58] sm:$0xff] %vm209, %v190
  %222 = vst.msk [vmem:[%s49 + $0x60] sm:$0xff] %vm209, %v195
  %223 = vst.msk [vmem:[%s49 + $0x68] sm:$0xff] %vm209, %v198
  %224 = vst.msk [vmem:[%s49 + $0x70] sm:$0xff] %vm209, %v203
  %225 = vst.msk [vmem:[%s49 + $0x78] sm:$0xff] %vm209, %v206
  %p226 = scmp.eq.s32.totalorder 0, 0
  // Predicated region
  $region14: #{stage_attention_forward.14} parent=0 // pred_check
    %p227 = pneg %p226
  $region15: #{stage_attention_forward.14} parent=0 // pred_check_branch
    %229 = sbr.rel (%p227) target = $region17
  $region16: #{stage_attention_forward.14} parent=0 // pred_region
    %230 = vst.msk [vmem:[%s4] sm:$0xff] %vm209, 0.0
  $region17: #{stage_attention_forward.14} parent=0 // pred_fallthru
    _
  %v231 = vld [vmem:[%s4] sm:$0x1]
  %v232 = vsel %vm209, %v147, 0.0
  %v233 = vsel %vm209, %v150, 0.0
  %v234 = vadd.f32 %v232, %v233
  %v235 = vsel %vm209, %v155, 0.0
  %v236 = vadd.f32 %v234, %v235
  %v237 = vsel %vm209, %v158, 0.0
  %v238 = vadd.f32 %v236, %v237
  %v239 = vsel %vm209, %v163, 0.0
  %v240 = vadd.f32 %v238, %v239
  %v241 = vsel %vm209, %v166, 0.0
  %v242 = vadd.f32 %v240, %v241
  %v243 = vsel %vm209, %v171, 0.0
  %v244 = vadd.f32 %v242, %v243
  %v245 = vsel %vm209, %v174, 0.0
  %v246 = vadd.f32 %v244, %v245
  %v247 = vsel %vm209, %v179, 0.0
  %v248 = vadd.f32 %v246, %v247
  %v249 = vsel %vm209, %v182, 0.0
  %v250 = vadd.f32 %v248, %v249
  %v251 = vsel %vm209, %v187, 0.0
  %v252 = vadd.f32 %v250, %v251
  %v253 = vsel %vm209, %v190, 0.0
  %v254 = vadd.f32 %v252, %v253
  %v255 = vsel %vm209, %v195, 0.0
  %v256 = vadd.f32 %v254, %v255
  %v257 = vsel %vm209, %v198, 0.0
  %v258 = vadd.f32 %v256, %v257
  %v259 = vsel %vm209, %v203, 0.0
  %v260 = vadd.f32 %v258, %v259
  %v261 = vsel %vm209, %v206, 0.0
  %v262 = vadd.f32 %v260, %v261
  %v263 = vrot.slane %v262, 4
  %v264 = vadd.f32 %v262, %v263
  %v265 = vrot.slane %v264, 2
  %v266 = vadd.f32 %v264, %v265
  %v267 = vrot.slane %v266, 1
  %v268 = vadd.f32 %v266, %v267
  %v269 = vadd.f32 %v231, %v268
  %vm270 = vcmask 253952
  %271 = vst.msk [vmem:[%s4] sm:$0x1] %vm270, %v269
  %v272 = vld [vmem:[%s4 + $0x1] sm:$0x1]
  %v273 = vmul.f32 %v147, %v147
  %v274 = vmul.f32 %v150, %v150
  %v275 = vmul.f32 %v155, %v155
  %v276 = vmul.f32 %v158, %v158
  %v277 = vmul.f32 %v163, %v163
  %v278 = vmul.f32 %v166, %v166
  %v279 = vmul.f32 %v171, %v171
  %v280 = vmul.f32 %v174, %v174
  %v281 = vmul.f32 %v179, %v179
  %v282 = vmul.f32 %v182, %v182
  %v283 = vmul.f32 %v187, %v187
  %v284 = vmul.f32 %v190, %v190
  %v285 = vmul.f32 %v195, %v195
  %v286 = vmul.f32 %v198, %v198
  %v287 = vmul.f32 %v203, %v203
  %v288 = vmul.f32 %v206, %v206
  %v289 = vsel %vm209, %v273, 0.0
  %v290 = vsel %vm209, %v274, 0.0
  %v291 = vadd.f32 %v289, %v290
  %v292 = vsel %vm209, %v275, 0.0
  %v293 = vadd.f32 %v291, %v292
  %v294 = vsel %vm209, %v276, 0.0
  %v295 = vadd.f32 %v293, %v294
  %v296 = vsel %vm209, %v277, 0.0
  %v297 = vadd.f32 %v295, %v296
  %v298 = vsel %vm209, %v278, 0.0
  %v299 = vadd.f32 %v297, %v298
  %v300 = vsel %vm209, %v279, 0.0
  %v301 = vadd.f32 %v299, %v300
  %v302 = vsel %vm209, %v280, 0.0
  %v303 = vadd.f32 %v301, %v302
  %v304 = vsel %vm209, %v281, 0.0
  %v305 = vadd.f32 %v303, %v304
  %v306 = vsel %vm209, %v282, 0.0
  %v307 = vadd.f32 %v305, %v306
  %v308 = vsel %vm209, %v283, 0.0
  %v309 = vadd.f32 %v307, %v308
  %v310 = vsel %vm209, %v284, 0.0
  %v311 = vadd.f32 %v309, %v310
  %v312 = vsel %vm209, %v285, 0.0
  %v313 = vadd.f32 %v311, %v312
  %v314 = vsel %vm209, %v286, 0.0
  %v315 = vadd.f32 %v313, %v314
  %v316 = vsel %vm209, %v287, 0.0
  %v317 = vadd.f32 %v315, %v316
  %v318 = vsel %vm209, %v288, 0.0
  %v319 = vadd.f32 %v317, %v318
  %v320 = vrot.slane %v319, 4
  %v321 = vadd.f32 %v319, %v320
  %v322 = vrot.slane %v321, 2
  %v323 = vadd.f32 %v321, %v322
  %v324 = vrot.slane %v323, 1
  %v325 = vadd.f32 %v323, %v324
  %v326 = vadd.f32 %v272, %v325
  %327 = vst.msk [vmem:[%s4 + $0x1] sm:$0x1] %vm270, %v326
  %s328 = sadd.s32 0, 0
  %s329 = smul.u32 16, %s328
  %p330 = scmp.lt.s32.totalorder %s329, 15
  %s331 = scalar_select %p330, %s329, 15
  %s332 = smul.addr %s331, 8
  %s333 = scalar_lea.vmem %s3, %s332
  // Predicated region
  $region18: #{stage_attention_forward.14} parent=0 // pred_check
    _
  $region19: #{stage_attention_forward.14} parent=0 // pred_check_branch
    %335 = sbr.rel (0) target = $region21
  $region20: #{stage_attention_forward.14} parent=0 // pred_region
    %s336 = sadd.s32 0, 0
    %s337 = smul.u32 16, %s336
  $region21: #{stage_attention_forward.14} parent=0 // pred_fallthru
    _
  // Predicated region
  $region22: #{stage_attention_forward.14} parent=0 // pred_check
    _
  $region23: #{stage_attention_forward.14} parent=0 // pred_check_branch
    %339 = sbr.rel (0) target = $region25
  $region24: #{stage_attention_forward.14} parent=0 // pred_region
    _
  $region25: #{stage_attention_forward.14} parent=0 // pred_fallthru
    _
  // Predicated region
  $region26: #{stage_attention_forward.14} parent=0 // pred_check
    _
  $region27: #{stage_attention_forward.14} parent=0 // pred_check_branch
    %341 = sbr.rel (0) target = $region29
  $region28: #{stage_attention_forward.14} parent=0 // pred_region
    %s342 = sadd.s32 0, 0
    %s343 = smul.u32 16, %s342
    %p344 = scmp.lt.s32.totalorder %s343, 15
    %s345 = scalar_select %p344, %s343, 15
    %s346 = smul.addr %s345, 8
    %s347 = scalar_lea.vmem %s3, %s346
  $region29: #{stage_attention_forward.14} parent=0 // pred_fallthru
    _
  // Predicated region
  $region30: #{stage_attention_forward.14} parent=0 // pred_check
    _
  $region31: #{stage_attention_forward.14} parent=0 // pred_check_branch
    %349 = sbr.rel (0) target = $region33
  $region32: #{stage_attention_forward.14} parent=0 // pred_region
    _
  $region33: #{stage_attention_forward.14} parent=0 // pred_fallthru
    _

// kernel: stage_attention_forward.21
$region0: #{stage_attention_forward.21}
  #allocation0 [shape = 'u32[]', space=smem, size = 0x4, offset = 0x4, fixed_abs, tag = 'smem constant byte address 0x4 - core index']
  #allocation1 [shape = 'u32[144,128]{1,0:T(1,128)}', space=vmem, size = 0x12000, scoped, tag = 'internal scratch']
  %s0 = inlined_call_operand.vmem [shape: f32[2,8,8,32], index: 0, kind: input, shape index: {}]
  %s1 = inlined_call_operand.vmem [shape: f32[8,8,32], index: 1, kind: input, shape index: {}]
  %s2 = inlined_call_operand.vmem [shape: f32[32,2], index: 2, kind: input, shape index: {}]
  %s3 = inlined_call_operand.vmem [shape: f32[2,32], index: 3, kind: input, shape index: {}]
  %s4 = inlined_call_operand.vmem [shape: f32[2,8,8,32], index: 4, kind: output, shape index: {}]
  %s5 = sld [smem:[#allocation0]]
  $region49: #{stage_attention_forward.21} parent=0
    _
  %s7 = ssub.s32 1, %s5
  %s8 = scalar_select 0, %s7, %s5
  loop: start=0, step=1, limit=4
  $region2: #{stage_attention_forward.21} parent=0 // loop_pre_header
    _
  $region3: #{stage_attention_forward.21} parent=0 // loop_header
    %s10 = sphi 0, %s14
    %p11 = scmp.ge.s32.totalorder %s10, 4
    %s20 = sphi 0, %s22
    %s23 = sphi 0, %s20
    %s24 = sphi 0, %s23
    %s40 = sphi 0, %s24
    %s44 = sphi 0, %s44
    %s46 = sphi 0, %s44
    %s47 = sphi 0, %s46
    %s61 = sphi 0, %s47
    %s65 = sphi 0, %s65
    %s67 = sphi 0, %s65
    %s68 = sphi 0, %s67
    %s82 = sphi 0, %s68
    %s86 = sphi 0, %s86
    %s88 = sphi 0, %s86
    %s89 = sphi 0, %s88
    %s103 = sphi 0, %s89
    %s109 = sphi 0, %s111
    %s112 = sphi 0, %s109
    %s113 = sphi 0, %s112
    %s129 = sphi 0, %s113
  $region4: #{stage_attention_forward.21} parent=0 // loop_header_branch
    %13 = sbr.rel (%p11) target = $region8
  $region5: #{stage_attention_forward.21} parent=0 // loop_body
    %s15 = ssub.s32 %s10, 1
    %s16 = ssub.s32 %s10, 2
    %s17 = sadd.s32 %s10, 1
    %s18 = ssub.s32 %s10, %s17
    %p19 = scmp.eq.s32.totalorder %s18, 0
    %s21 = sadd.s32 %s20, 1
    %s22 = scalar_select %p19, %s20, %s21
    %p25 = pneg %p19
    %p26 = scmp.eq.s32.totalorder %s10, 1
    %p27 = por %p25, %p26
    %p28 = scmp.ne.s32.totalorder %s20, %s23
    %p29 = scmp.eq.s32.totalorder %s10, 0
    %p30 = por %p28, %p29
    %p31 = scmp.ne.s32.totalorder %s20, %s23
    %p32 = scmp.eq.s32.totalorder %s15, 1
    %p33 = por %p31, %p32
    %p34 = scmp.ne.s32.totalorder %s23, %s24
    %p35 = scmp.eq.s32.totalorder %s15, 0
    %p36 = por %p34, %p35
    %p37 = scmp.ne.s32.totalorder %s23, %s24
    %p38 = scmp.eq.s32.totalorder %s16, 1
    %p39 = por %p37, %p38
    %p41 = scmp.ne.s32.totalorder %s24, %s40
    %p42 = scmp.eq.s32.totalorder %s16, 0
    %p43 = por %p41, %p42
    %s45 = sadd.s32 %s44, 1
    %p48 = scmp.eq.s32.totalorder %s10, 1
    %p49 = scmp.ne.s32.totalorder %s44, %s46
    %p50 = scmp.eq.s32.totalorder %s10, 0
    %p51 = por %p49, %p50
    %p52 = scmp.ne.s32.totalorder %s44, %s46
    %p53 = scmp.eq.s32.totalorder %s15, 1
    %p54 = por %p52, %p53
    %p55 = scmp.ne.s32.totalorder %s46, %s47
    %p56 = scmp.eq.s32.totalorder %s15, 0
    %p57 = por %p55, %p56
    %p58 = scmp.ne.s32.totalorder %s46, %s47
    %p59 = scmp.eq.s32.totalorder %s16, 1
    %p60 = por %p58, %p59
    %p62 = scmp.ne.s32.totalorder %s47, %s61
    %p63 = scmp.eq.s32.totalorder %s16, 0
    %p64 = por %p62, %p63
    %s66 = sadd.s32 %s65, 1
    %p69 = scmp.eq.s32.totalorder %s10, 1
    %p70 = scmp.ne.s32.totalorder %s65, %s67
    %p71 = scmp.eq.s32.totalorder %s10, 0
    %p72 = por %p70, %p71
    %p73 = scmp.ne.s32.totalorder %s65, %s67
    %p74 = scmp.eq.s32.totalorder %s15, 1
    %p75 = por %p73, %p74
    %p76 = scmp.ne.s32.totalorder %s67, %s68
    %p77 = scmp.eq.s32.totalorder %s15, 0
    %p78 = por %p76, %p77
    %p79 = scmp.ne.s32.totalorder %s67, %s68
    %p80 = scmp.eq.s32.totalorder %s16, 1
    %p81 = por %p79, %p80
    %p83 = scmp.ne.s32.totalorder %s68, %s82
    %p84 = scmp.eq.s32.totalorder %s16, 0
    %p85 = por %p83, %p84
    %s87 = sadd.s32 %s86, 1
    %p90 = scmp.eq.s32.totalorder %s10, 1
    %p91 = scmp.ne.s32.totalorder %s86, %s88
    %p92 = scmp.eq.s32.totalorder %s10, 0
    %p93 = por %p91, %p92
    %p94 = scmp.ne.s32.totalorder %s86, %s88
    %p95 = scmp.eq.s32.totalorder %s15, 1
    %p96 = por %p94, %p95
    %p97 = scmp.ne.s32.totalorder %s88, %s89
    %p98 = scmp.eq.s32.totalorder %s15, 0
    %p99 = por %p97, %p98
    %p100 = scmp.ne.s32.totalorder %s88, %s89
    %p101 = scmp.eq.s32.totalorder %s16, 1
    %p102 = por %p100, %p101
    %p104 = scmp.ne.s32.totalorder %s89, %s103
    %p105 = scmp.eq.s32.totalorder %s16, 0
    %p106 = por %p104, %p105
    %s107 = ssub.s32 %s10, %s17
    %p108 = scmp.eq.s32.totalorder %s107, 0
    %s110 = sadd.s32 %s109, 1
    %s111 = scalar_select %p108, %s109, %s110
    %p114 = pneg %p108
    %p115 = scmp.eq.s32.totalorder %s10, 1
    %p116 = por %p114, %p115
    %p117 = scmp.ne.s32.totalorder %s109, %s112
    %p118 = scmp.eq.s32.totalorder %s10, 0
    %p119 = por %p117, %p118
    %p120 = scmp.ne.s32.totalorder %s109, %s112
    %p121 = scmp.eq.s32.totalorder %s15, 1
    %p122 = por %p120, %p121
    %p123 = scmp.ne.s32.totalorder %s112, %s113
    %p124 = scmp.eq.s32.totalorder %s15, 0
    %p125 = por %p123, %p124
    %p126 = scmp.ne.s32.totalorder %s112, %s113
    %p127 = scmp.eq.s32.totalorder %s16, 1
    %p128 = por %p126, %p127
    %p130 = scmp.ne.s32.totalorder %s113, %s129
    %p131 = scmp.eq.s32.totalorder %s16, 0
    %p132 = por %p130, %p131
    %p133 = scmp.le.s32.totalorder 1, %s10
    %p134 = scmp.lt.s32.totalorder %s10, 3
    %p135 = pnand %p133, %p134
    %p136 = pneg %p135
    // Predicated region
    $region9: #{stage_attention_forward.21} parent=5 // pred_check
      _
    $region10: #{stage_attention_forward.21} parent=5 // pred_check_branch
      %138 = sbr.rel (%p135) target = $region12
    $region11: #{stage_attention_forward.21} parent=5 // pred_region
      %s139 = ssub.s32 %s10, 1
      // Predicated region
      $region13: #{stage_attention_forward.21} parent=11 // pred_check
        %p140 = pneg %p57
      $region14: #{stage_attention_forward.21} parent=11 // pred_check_branch
        %142 = sbr.rel (%p140) target = $region16
      $region15: #{stage_attention_forward.21} parent=11 // pred_region
        _
      $region16: #{stage_attention_forward.21} parent=11 // pred_fallthru
        _
      // Predicated region
      $region17: #{stage_attention_forward.21} parent=11 // pred_check
        %p143 = pneg %p78
      $region18: #{stage_attention_forward.21} parent=11 // pred_check_branch
        %145 = sbr.rel (%p143) target = $region20
      $region19: #{stage_attention_forward.21} parent=11 // pred_region
        _
      $region20: #{stage_attention_forward.21} parent=11 // pred_fallthru
        _
      // Predicated region
      $region21: #{stage_attention_forward.21} parent=11 // pred_check
        %p146 = pneg %p99
      $region22: #{stage_attention_forward.21} parent=11 // pred_check_branch
        %148 = sbr.rel (%p146) target = $region24
      $region23: #{stage_attention_forward.21} parent=11 // pred_region
        _
      $region24: #{stage_attention_forward.21} parent=11 // pred_fallthru
        _
    $region12: #{stage_attention_forward.21} parent=5 // pred_fallthru
      _
    %p149 = scmp.lt.s32.totalorder %s10, 2
    // Predicated region
    $region25: #{stage_attention_forward.21} parent=5 // pred_check
      %p150 = pneg %p149
    $region26: #{stage_attention_forward.21} parent=5 // pred_check_branch
      %152 = sbr.rel (%p150) target = $region28
    $region27: #{stage_attention_forward.21} parent=5 // pred_region
      // Predicated region
      $region29: #{stage_attention_forward.21} parent=27 // pred_check
        %p153 = pneg %p30
      $region30: #{stage_attention_forward.21} parent=27 // pred_check_branch
        %155 = sbr.rel (%p153) target = $region32
      $region31: #{stage_attention_forward.21} parent=27 // pred_region
        %p156 = scmp.lt.s32.totalorder %s10, 1
        %s157 = scalar_select %p156, %s10, 1
        %s158 = smul.addr %s157, 8
        %s159 = smul.addr %s158, 8
        %s160 = scalar_lea.vmem %s0, %s159
      $region32: #{stage_attention_forward.21} parent=27 // pred_fallthru
        _
    $region28: #{stage_attention_forward.21} parent=5 // pred_fallthru
      _
    %p161 = scmp.le.s32.totalorder 1, %s10
    %p162 = scmp.lt.s32.totalorder %s10, 3
    %p163 = pnand %p161, %p162
    %p164 = pneg %p163
    // Predicated region
    $region33: #{stage_attention_forward.21} parent=5 // pred_check
      _
    $region34: #{stage_attention_forward.21} parent=5 // pred_check_branch
      %166 = sbr.rel (%p163) target = $region36
    $region35: #{stage_attention_forward.21} parent=5 // pred_region
      %s167 = ssub.s32 %s10, 1
      %p168 = scmp.lt.s32.totalorder %s15, 1
      %s169 = scalar_select %p168, %s15, 1
      %s170 = smul.addr %s169, 8
      %s171 = smul.addr %s170, 8
      %s172 = scalar_lea.vmem %s0, %s171
      %p173 = pneg %p36
      %p174 = pneg %p33
      %p175 = pneg %p57
      %p176 = pneg %p54
      %p177 = pneg %p78
      %p178 = pneg %p75
      %p179 = pneg %p99
      %p180 = pneg %p96
      %p181 = pneg %p125
      %p182 = pneg %p122
      %p183 = scmp.lt.s32.totalorder %s15, 1
      %s184 = scalar_select %p183, %s15, 1
      %s185 = smul.addr %s184, 8
      %s186 = smul.addr %s185, 8
      %s187 = scalar_lea.vmem %s4, %s186
      %p188 = scmp.lt.s32.totalorder %s15, 1
      %s189 = scalar_select %p188, %s15, 1
      %s190 = smul.addr %s189, 8
      %s191 = smul.addr %s190, 8
      %s192 = scalar_lea.vmem %s0, %s191
      %p193 = scmp.lt.s32.totalorder %s15, 1
      %s194 = scalar_select %p193, %s15, 1
      %s195 = smul.addr %s194, 8
      %s196 = smul.addr %s195, 8
      %s197 = scalar_lea.vmem %s4, %s196
      %v199 = vld [vmem:[%s192] sm:$0xff]
      %v200 = vld [vmem:[%s192 + $0x8] sm:$0xff]
      %v201 = vld [vmem:[%s192 + $0x10] sm:$0xff]
      %v202 = vld [vmem:[%s192 + $0x18] sm:$0xff]
      %v203 = vld [vmem:[%s192 + $0x20] sm:$0xff]
      %v204 = vld [vmem:[%s192 + $0x28] sm:$0xff]
      %v205 = vld [vmem:[%s192 + $0x30] sm:$0xff]
      %v206 = vld [vmem:[%s192 + $0x38] sm:$0xff]
      %v207 = vld [vmem:[%s1] sm:$0xff]
      %v208 = vld [vmem:[%s1 + $0x8] sm:$0xff]
      %v209 = vld [vmem:[%s1 + $0x10] sm:$0xff]
      %v210 = vld [vmem:[%s1 + $0x18] sm:$0xff]
      %v211 = vld [vmem:[%s1 + $0x20] sm:$0xff]
      %v212 = vld [vmem:[%s1 + $0x28] sm:$0xff]
      %v213 = vld [vmem:[%s1 + $0x30] sm:$0xff]
      %v214 = vld [vmem:[%s1 + $0x38] sm:$0xff]
      %v215 = vadd.f32 %v199, %v207
      %v216 = vadd.f32 %v200, %v208
      %v217 = vadd.f32 %v201, %v209
      %v218 = vadd.f32 %v202, %v210
      %v219 = vadd.f32 %v203, %v211
      %v220 = vadd.f32 %v204, %v212
      %v221 = vadd.f32 %v205, %v213
      %v222 = vadd.f32 %v206, %v214
      %vm223 = vcmask 261120
      %v224 = vsel %vm223, %v215, 0.0
      %v225 = vsel %vm223, %v216, 0.0
      %v226 = vadd.f32 %v224, %v225
      %v227 = vsel %vm223, %v217, 0.0
      %v228 = vadd.f32 %v226, %v227
      %v229 = vsel %vm223, %v218, 0.0
      %v230 = vadd.f32 %v228, %v229
      %v231 = vsel %vm223, %v219, 0.0
      %v232 = vadd.f32 %v230, %v231
      %v233 = vsel %vm223, %v220, 0.0
      %v234 = vadd.f32 %v232, %v233
      %v235 = vsel %vm223, %v221, 0.0
      %v236 = vadd.f32 %v234, %v235
      %v237 = vsel %vm223, %v222, 0.0
      %v238 = vadd.f32 %v236, %v237
      %v239 = vrot.slane %v238, 4
      %v240 = vadd.f32 %v238, %v239
      %v241 = vrot.slane %v240, 2
      %v242 = vadd.f32 %v240, %v241
      %v243 = vrot.slane %v242, 1
      %v244 = vadd.f32 %v242, %v243
      %v245 = vrcp.pop 64.0
      %v246 = vmul.f32 %v244, %v245
      %v247 = vld [vmem:[%s2] sm:$0xff]
      %v248 = vld [vmem:[%s2 + $0x8] sm:$0xff]
      %v249 = vld [vmem:[%s2 + $0x10] sm:$0xff]
      %v250 = vld [vmem:[%s2 + $0x18] sm:$0xff]
      %v251 = vpack.c.bf16 %v246, %v246
      %v252 = vpack.c.bf16 %v248, %v247
      %v253 = vpack.c.bf16 %v250, %v249
      %v255 = vsel %vm223, %v251, 0
      %257 = vmatprep.subr.bf16.mxu0 0
      %258 = vmatpush1.bf16.msra.mxu0 0
      %259 = vmatprep.subr.bf16.mxu0 0
      %260 = vmatpush1.bf16.msra.mxu0 0
      %261 = vmatprep.subr.bf16.mxu0 0
      %262 = vmatpush1.bf16.msra.mxu0 0
      %263 = vmatprep.subr.bf16.mxu0 0
      %264 = vmatpush1.bf16.msra.mxu0 0
      %265 = vmatprep.subr.bf16.mxu0 0
      %266 = vmatpush1.bf16.msra.mxu0 0
      %267 = vmatprep.subr.bf16.mxu0 0
      %268 = vmatpush1.bf16.msra.mxu0 0
      %269 = vmatprep.subr.bf16.mxu0 0
      %270 = vmatpush1.bf16.msra.mxu0 %v253
      %271 = vmatprep.subr.bf16.mxu0 0
      %272 = vmatpush1.bf16.msra.mxu0 %v252
      %273 = vmatprep.subr.bf16.mxu0 0
      %274 = vmatpush2.bf16.msra.mxu0 0
      %275 = vmatprep.subr.bf16.mxu0 0
      %276 = vmatpush2.bf16.msra.mxu0 0
      %277 = vmatprep.subr.bf16.mxu0 0
      %278 = vmatpush2.bf16.msra.mxu0 0
      %279 = vmatprep.subr.bf16.mxu0 0
      %280 = vmatpush2.bf16.msra.mxu0 0
      %281 = vmatprep.subr.bf16.mxu0 0
      %282 = vmatpush2.bf16.msra.mxu0 0
      %283 = vmatprep.subr.bf16.mxu0 0
      %284 = vmatpush2.bf16.msra.mxu0 0
      %285 = vmatprep.subr.bf16.mxu0 0
      %286 = vmatpush2.bf16.msra.mxu0 0
      %287 = vmatprep.subr.bf16.mxu0 0
      %288 = vmatpush2.bf16.msra.mxu0 0
      %289 = vmatprep.mubr.bf16.mxu0 0
      %290 = vmatmul.mubr.bf16.gmra.mxu0 %v255
      %v291 = vpop.f32.mrf.mxu0
      %v292 = vadd.f32 0.0, %v291
      %v293 = vpop.f32.mrf.mxu0
      %v294 = vpop.f32.mrf.mxu0
      %v295 = vpop.f32.mrf.mxu0
      %296 = vdwg.mxu0
      %v297 = vmax.f32 %v292, 0.0
      %v298 = vld [vmem:[%s3] sm:$0x3]
      %v299 = vpack.c.bf16 %v297, %v297
      %v300 = vpack.c.bf16 %v298, %v298
      %vm301 = vcmask 15360
      %v303 = vsel %vm301, %v299, 0
      %vm305 = vcmask 1040384
      %v307 = vsel %vm305, %v300, 0
      %309 = vmatprep.subr.bf16.mxu0 0
      %310 = vmatpush1.bf16.msra.mxu0 0
      %311 = vmatprep.subr.bf16.mxu0 0
      %312 = vmatpush1.bf16.msra.mxu0 0
      %313 = vmatprep.subr.bf16.mxu0 0
      %314 = vmatpush1.bf16.msra.mxu0 0
      %315 = vmatprep.subr.bf16.mxu0 0
      %316 = vmatpush1.bf16.msra.mxu0 0
      %317 = vmatprep.subr.bf16.mxu0 0
      %318 = vmatpush1.bf16.msra.mxu0 0
      %319 = vmatprep.subr.bf16.mxu0 0
      %320 = vmatpush1.bf16.msra.mxu0 0
      %321 = vmatprep.subr.bf16.mxu0 0
      %322 = vmatpush1.bf16.msra.mxu0 0
      %323 = vmatprep.subr.bf16.mxu0 0
      %324 = vmatpush1.bf16.msra.mxu0 %v307
      %325 = vmatprep.subr.bf16.mxu0 0
      %326 = vmatpush2.bf16.msra.mxu0 0
      %327 = vmatprep.subr.bf16.mxu0 0
      %328 = vmatpush2.bf16.msra.mxu0 0
      %329 = vmatprep.subr.bf16.mxu0 0
      %330 = vmatpush2.bf16.msra.mxu0 0
      %331 = vmatprep.subr.bf16.mxu0 0
      %332 = vmatpush2.bf16.msra.mxu0 0
      %333 = vmatprep.subr.bf16.mxu0 0
      %334 = vmatpush2.bf16.msra.mxu0 0
      %335 = vmatprep.subr.bf16.mxu0 0
      %336 = vmatpush2.bf16.msra.mxu0 0
      %337 = vmatprep.subr.bf16.mxu0 0
      %338 = vmatpush2.bf16.msra.mxu0 0
      %339 = vmatprep.subr.bf16.mxu0 0
      %340 = vmatpush2.bf16.msra.mxu0 0
      %341 = vmatprep.mubr.bf16.mxu0 0
      %342 = vmatmul.mubr.bf16.gmra.mxu0 %v303
      %v343 = vpop.f32.mrf.mxu0
      %v344 = vadd.f32 0.0, %v343
      %v345 = vpop.f32.mrf.mxu0
      %v346 = vpop.f32.mrf.mxu0
      %v347 = vpop.f32.mrf.mxu0
      %348 = vdwg.mxu0
      %v349 = vsub.f32 0.0, %v344
      %v350 = vmul.f32 %v349, 1.442695
      %v351 = vpow.pop %v350
      %v352 = vadd.f32 %v351, 1.0
      %v353 = vrcp.pop %v352
      %v354 = vmul.f32 1.0, %v353
      %v355 = vlaneseq
      %v356 = vshrl.u32 %v355, 7
      %v357 = vsub.s32 0, %v356
      %v358 = vrot.slane %v354, %v357
      %v359 = vmul.f32 %v215, %v358
      %v360 = vmul.f32 %v216, %v358
      %v361 = vmul.f32 %v217, %v358
      %v362 = vmul.f32 %v218, %v358
      %v363 = vmul.f32 %v219, %v358
      %v364 = vmul.f32 %v220, %v358
      %v365 = vmul.f32 %v221, %v358
      %v366 = vmul.f32 %v222, %v358
      %367 = vst.msk [vmem:[%s197] sm:$0xff] %vm223, %v359
      %368 = vst.msk [vmem:[%s197 + $0x8] sm:$0xff] %vm223, %v360
      %369 = vst.msk [vmem:[%s197 + $0x10] sm:$0xff] %vm223, %v361
      %370 = vst.msk [vmem:[%s197 + $0x18] sm:$0xff] %vm223, %v362
      %371 = vst.msk [vmem:[%s197 + $0x20] sm:$0xff] %vm223, %v363
      %372 = vst.msk [vmem:[%s197 + $0x28] sm:$0xff] %vm223, %v364
      %373 = vst.msk [vmem:[%s197 + $0x30] sm:$0xff] %vm223, %v365
      %374 = vst.msk [vmem:[%s197 + $0x38] sm:$0xff] %vm223, %v366
      %p375 = scmp.lt.s32.totalorder %s15, 1
      %s376 = scalar_select %p375, %s15, 1
      %s377 = smul.addr %s376, 8
      %s378 = smul.addr %s377, 8
      %s379 = scalar_lea.vmem %s4, %s378
      // Predicated region
      $region37: #{stage_attention_forward.21} parent=35 // pred_check
        %p380 = pneg %p122
      $region38: #{stage_attention_forward.21} parent=35 // pred_check_branch
        %382 = sbr.rel (%p380) target = $region40
      $region39: #{stage_attention_forward.21} parent=35 // pred_region
        _
      $region40: #{stage_attention_forward.21} parent=35 // pred_fallthru
        _
    $region36: #{stage_attention_forward.21} parent=5 // pred_fallthru
      _
    %p383 = scmp.le.s32.totalorder 2, %s10
    // Predicated region
    $region41: #{stage_attention_forward.21} parent=5 // pred_check
      %p384 = pneg %p383
    $region42: #{stage_attention_forward.21} parent=5 // pred_check_branch
      %386 = sbr.rel (%p384) target = $region44
    $region43: #{stage_attention_forward.21} parent=5 // pred_region
      %s387 = ssub.s32 %s10, 2
      // Predicated region
      $region45: #{stage_attention_forward.21} parent=43 // pred_check
        %p388 = pneg %p128
      $region46: #{stage_attention_forward.21} parent=43 // pred_check_branch
        %390 = sbr.rel (%p388) target = $region48
      $region47: #{stage_attention_forward.21} parent=43 // pred_region
        %p391 = scmp.lt.s32.totalorder %s16, 1
        %s392 = scalar_select %p391, %s16, 1
        %s393 = smul.addr %s392, 8
        %s394 = smul.addr %s393, 8
        %s395 = scalar_lea.vmem %s4, %s394
      $region48: #{stage_attention_forward.21} parent=43 // pred_fallthru
        _
    $region44: #{stage_attention_forward.21} parent=5 // pred_fallthru
      _
  $region6: #{stage_attention_forward.21} parent=0 // loop_footer
    %s14 = sadd.s32 1, %s10
  $region7: #{stage_attention_forward.21} parent=0 // loop_footer_branch
    %9 = sbr.rel target = $region3
  $region8: #{stage_attention_forward.21} parent=0 // loop_exit
    _

// kernel: stage_attention_forward.22
$region0: #{stage_attention_forward.22}
  #allocation0 [shape = 'u32[]', space=smem, size = 0x4, offset = 0x4, fixed_abs, tag = 'smem constant byte address 0x4 - core index']
  #allocation1 [shape = 'u32[144,128]{1,0:T(1,128)}', space=vmem, size = 0x12000, scoped, tag = 'internal scratch']
  %s0 = inlined_call_operand.vmem [shape: f32[128,32], index: 0, kind: input, shape index: {}]
  %s1 = inlined_call_operand.vmem [shape: f32[32,40], index: 1, kind: input, shape index: {}]
  %s2 = inlined_call_operand.vmem [shape: f32[1,40], index: 2, kind: input, shape index: {}]
  %s3 = inlined_call_operand.vmem [shape: f32[128,40], index: 3, kind: output, shape index: {0}]
  %s4 = inlined_call_operand.vmem [shape: f32[8,40], index: 4, kind: output, shape index: {1}]
  %5 = xla_tuple %s3, %s4
  %s6 = sld [smem:[#allocation0]]
  $region34: #{stage_attention_forward.22} parent=0
    _
  %s8 = ssub.s32 1, %s6
  %s9 = scalar_select 0, %s8, %s6
  // Predicated region
  $region2: #{stage_attention_forward.22} parent=0 // pred_check
    _
  $region3: #{stage_attention_forward.22} parent=0 // pred_check_branch
    %11 = sbr.rel (0) target = $region5
  $region4: #{stage_attention_forward.22} parent=0 // pred_region
    %s12 = sadd.s32 0, 0
    %s13 = smul.u32 16, %s12
    %p14 = scmp.lt.s32.totalorder %s13, 15
    %s15 = scalar_select %p14, %s13, 15
    %s16 = smul.addr %s15, 8
    %s17 = scalar_lea.vmem %s0, %s16
    %s18 = sadd.s32 0, 0
    %s19 = smul.u32 16, %s18
  $region5: #{stage_attention_forward.22} parent=0 // pred_fallthru
    _
  // Predicated region
  $region6: #{stage_attention_forward.22} parent=0 // pred_check
    _
  $region7: #{stage_attention_forward.22} parent=0 // pred_check_branch
    %21 = sbr.rel (0) target = $region9
  $region8: #{stage_attention_forward.22} parent=0 // pred_region
    _
  $region9: #{stage_attention_forward.22} parent=0 // pred_fallthru
    _
  // Predicated region
  $region10: #{stage_attention_forward.22} parent=0 // pred_check
    _
  $region11: #{stage_attention_forward.22} parent=0 // pred_check_branch
    %23 = sbr.rel (0) target = $region13
  $region12: #{stage_attention_forward.22} parent=0 // pred_region
    _
  $region13: #{stage_attention_forward.22} parent=0 // pred_fallthru
    _
  %s24 = sadd.s32 0, 0
  %s25 = smul.u32 16, %s24
  %p26 = scmp.lt.s32.totalorder %s25, 15
  %s27 = scalar_select %p26, %s25, 15
  %s28 = smul.addr %s27, 8
  %s29 = scalar_lea.vmem %s0, %s28
  %s30 = sadd.s32 0, 0
  %s31 = smul.u32 16, %s30
  %p32 = scmp.lt.s32.totalorder %s31, 15
  %s33 = scalar_select %p32, %s31, 15
  %s34 = smul.addr %s33, 8
  %s35 = scalar_lea.vmem %s3, %s34
  %s36 = sadd.s32 0, 0
  %s37 = smul.u32 16, %s36
  %p38 = scmp.lt.s32.totalorder %s37, 15
  %s39 = scalar_select %p38, %s37, 15
  %s40 = smul.addr %s39, 8
  %s41 = scalar_lea.vmem %s0, %s40
  %s42 = sadd.s32 0, 0
  %s43 = smul.u32 16, %s42
  %s44 = sadd.s32 0, 0
  %s45 = smul.u32 16, %s44
  %p46 = scmp.lt.s32.totalorder %s45, 15
  %s47 = scalar_select %p46, %s45, 15
  %s48 = smul.addr %s47, 8
  %s49 = scalar_lea.vmem %s3, %s48
  %s50 = sadd.s32 0, 0
  %s51 = smul.u32 16, %s50
  %v53 = vld [vmem:[%s41] sm:$0xff]
  %v54 = vld [vmem:[%s41 + $0x8] sm:$0xff]
  %v55 = vld [vmem:[%s41 + $0x10] sm:$0xff]
  %v56 = vld [vmem:[%s41 + $0x18] sm:$0xff]
  %v57 = vld [vmem:[%s41 + $0x20] sm:$0xff]
  %v58 = vld [vmem:[%s41 + $0x28] sm:$0xff]
  %v59 = vld [vmem:[%s41 + $0x30] sm:$0xff]
  %v60 = vld [vmem:[%s41 + $0x38] sm:$0xff]
  %v61 = vld [vmem:[%s41 + $0x40] sm:$0xff]
  %v62 = vld [vmem:[%s41 + $0x48] sm:$0xff]
  %v63 = vld [vmem:[%s41 + $0x50] sm:$0xff]
  %v64 = vld [vmem:[%s41 + $0x58] sm:$0xff]
  %v65 = vld [vmem:[%s41 + $0x60] sm:$0xff]
  %v66 = vld [vmem:[%s41 + $0x68] sm:$0xff]
  %v67 = vld [vmem:[%s41 + $0x70] sm:$0xff]
  %v68 = vld [vmem:[%s41 + $0x78] sm:$0xff]
  %v69 = vld [vmem:[%s1] sm:$0xff]
  %v70 = vld [vmem:[%s1 + $0x8] sm:$0xff]
  %v71 = vld [vmem:[%s1 + $0x10] sm:$0xff]
  %v72 = vld [vmem:[%s1 + $0x18] sm:$0xff]
  %v73 = vpack.c.bf16 %v54, %v53
  %v74 = vpack.c.bf16 %v56, %v55
  %v75 = vpack.c.bf16 %v58, %v57
  %v76 = vpack.c.bf16 %v60, %v59
  %v77 = vpack.c.bf16 %v62, %v61
  %v78 = vpack.c.bf16 %v64, %v63
  %v79 = vpack.c.bf16 %v66, %v65
  %v80 = vpack.c.bf16 %v68, %v67
  %v81 = vpack.c.bf16 %v70, %v69
  %v82 = vpack.c.bf16 %v72, %v71
  %v83 = vld [vmem:[%s2] sm:$0x1]
  %v85 = vlaneseq
  %v86 = vshrl.u32 %v85, 7
  %v87 = vsub.s32 0, %v86
  %v88 = vrot.slane %v83, %v87
  %vm90 = vcmask 261120
  %v92 = vsel %vm90, %v73, 0
  %v95 = vsel %vm90, %v74, 0
  %v98 = vsel %vm90, %v75, 0
  %v101 = vsel %vm90, %v76, 0
  %v104 = vsel %vm90, %v77, 0
  %v107 = vsel %vm90, %v78, 0
  %v110 = vsel %vm90, %v79, 0
  %v113 = vsel %vm90, %v80, 0
  %115 = vmatprep.subr.bf16.mxu0 0
  %116 = vmatpush1.bf16.msra.mxu0 0
  %117 = vmatprep.subr.bf16.mxu0 0
  %118 = vmatpush1.bf16.msra.mxu0 0
  %119 = vmatprep.subr.bf16.mxu0 0
  %120 = vmatpush1.bf16.msra.mxu0 0
  %121 = vmatprep.subr.bf16.mxu0 0
  %122 = vmatpush1.bf16.msra.mxu0 0
  %123 = vmatprep.subr.bf16.mxu0 0
  %124 = vmatpush1.bf16.msra.mxu0 0
  %125 = vmatprep.subr.bf16.mxu0 0
  %126 = vmatpush1.bf16.msra.mxu0 0
  %127 = vmatprep.subr.bf16.mxu0 0
  %128 = vmatpush1.bf16.msra.mxu0 %v82
  %129 = vmatprep.subr.bf16.mxu0 0
  %130 = vmatpush1.bf16.msra.mxu0 %v81
  %131 = vmatprep.subr.bf16.mxu0 0
  %132 = vmatpush2.bf16.msra.mxu0 0
  %133 = vmatprep.subr.bf16.mxu0 0
  %134 = vmatpush2.bf16.msra.mxu0 0
  %135 = vmatprep.subr.bf16.mxu0 0
  %136 = vmatpush2.bf16.msra.mxu0 0
  %137 = vmatprep.subr.bf16.mxu0 0
  %138 = vmatpush2.bf16.msra.mxu0 0
  %139 = vmatprep.subr.bf16.mxu0 0
  %140 = vmatpush2.bf16.msra.mxu0 0
  %141 = vmatprep.subr.bf16.mxu0 0
  %142 = vmatpush2.bf16.msra.mxu0 0
  %143 = vmatprep.subr.bf16.mxu0 0
  %144 = vmatpush2.bf16.msra.mxu0 0
  %145 = vmatprep.subr.bf16.mxu0 0
  %146 = vmatpush2.bf16.msra.mxu0 0
  %147 = vmatprep.mubr.bf16.mxu0 0
  %148 = vmatmul.mubr.bf16.gmra.mxu0 %v92
  %v149 = vpop.f32.mrf.mxu0
  %v150 = vadd.f32 %v88, %v149
  %v151 = vpop.f32.mrf.mxu0
  %v152 = vpop.f32.mrf.mxu0
  %v153 = vadd.f32 %v88, %v152
  %v154 = vpop.f32.mrf.mxu0
  %155 = vmatprep.mubr.bf16.mxu0 0
  %156 = vmatmul.mubr.bf16.gmra.mxu0 %v95
  %v157 = vpop.f32.mrf.mxu0
  %v158 = vadd.f32 %v88, %v157
  %v159 = vpop.f32.mrf.mxu0
  %v160 = vpop.f32.mrf.mxu0
  %v161 = vadd.f32 %v88, %v160
  %v162 = vpop.f32.mrf.mxu0
  %163 = vmatprep.mubr.bf16.mxu0 0
  %164 = vmatmul.mubr.bf16.gmra.mxu0 %v98
  %v165 = vpop.f32.mrf.mxu0
  %v166 = vadd.f32 %v88, %v165
  %v167 = vpop.f32.mrf.mxu0
  %v168 = vpop.f32.mrf.mxu0
  %v169 = vadd.f32 %v88, %v168
  %v170 = vpop.f32.mrf.mxu0
  %171 = vmatprep.mubr.bf16.mxu0 0
  %172 = vmatmul.mubr.bf16.gmra.mxu0 %v101
  %v173 = vpop.f32.mrf.mxu0
  %v174 = vadd.f32 %v88, %v173
  %v175 = vpop.f32.mrf.mxu0
  %v176 = vpop.f32.mrf.mxu0
  %v177 = vadd.f32 %v88, %v176
  %v178 = vpop.f32.mrf.mxu0
  %179 = vmatprep.mubr.bf16.mxu0 0
  %180 = vmatmul.mubr.bf16.gmra.mxu0 %v104
  %v181 = vpop.f32.mrf.mxu0
  %v182 = vadd.f32 %v88, %v181
  %v183 = vpop.f32.mrf.mxu0
  %v184 = vpop.f32.mrf.mxu0
  %v185 = vadd.f32 %v88, %v184
  %v186 = vpop.f32.mrf.mxu0
  %187 = vmatprep.mubr.bf16.mxu0 0
  %188 = vmatmul.mubr.bf16.gmra.mxu0 %v107
  %v189 = vpop.f32.mrf.mxu0
  %v190 = vadd.f32 %v88, %v189
  %v191 = vpop.f32.mrf.mxu0
  %v192 = vpop.f32.mrf.mxu0
  %v193 = vadd.f32 %v88, %v192
  %v194 = vpop.f32.mrf.mxu0
  %195 = vmatprep.mubr.bf16.mxu0 0
  %196 = vmatmul.mubr.bf16.gmra.mxu0 %v110
  %v197 = vpop.f32.mrf.mxu0
  %v198 = vadd.f32 %v88, %v197
  %v199 = vpop.f32.mrf.mxu0
  %v200 = vpop.f32.mrf.mxu0
  %v201 = vadd.f32 %v88, %v200
  %v202 = vpop.f32.mrf.mxu0
  %203 = vmatprep.mubr.bf16.mxu0 0
  %204 = vmatmul.mubr.bf16.gmra.mxu0 %v113
  %v205 = vpop.f32.mrf.mxu0
  %v206 = vadd.f32 %v88, %v205
  %v207 = vpop.f32.mrf.mxu0
  %v208 = vpop.f32.mrf.mxu0
  %v209 = vadd.f32 %v88, %v208
  %v210 = vpop.f32.mrf.mxu0
  %211 = vdwg.mxu0
  %vm212 = vcmask 326656
  %213 = vst.msk [vmem:[%s49] sm:$0xff] %vm212, %v150
  %214 = vst.msk [vmem:[%s49 + $0x8] sm:$0xff] %vm212, %v153
  %215 = vst.msk [vmem:[%s49 + $0x10] sm:$0xff] %vm212, %v158
  %216 = vst.msk [vmem:[%s49 + $0x18] sm:$0xff] %vm212, %v161
  %217 = vst.msk [vmem:[%s49 + $0x20] sm:$0xff] %vm212, %v166
  %218 = vst.msk [vmem:[%s49 + $0x28] sm:$0xff] %vm212, %v169
  %219 = vst.msk [vmem:[%s49 + $0x30] sm:$0xff] %vm212, %v174
  %220 = vst.msk [vmem:[%s49 + $0x38] sm:$0xff] %vm212, %v177
  %221 = vst.msk [vmem:[%s49 + $0x40] sm:$0xff] %vm212, %v182
  %222 = vst.msk [vmem:[%s49 + $0x48] sm:$0xff] %vm212, %v185
  %223 = vst.msk [vmem:[%s49 + $0x50] sm:$0xff] %vm212, %v190
  %224 = vst.msk [vmem:[%s49 + $0x58] sm:$0xff] %vm212, %v193
  %225 = vst.msk [vmem:[%s49 + $0x60] sm:$0xff] %vm212, %v198
  %226 = vst.msk [vmem:[%s49 + $0x68] sm:$0xff] %vm212, %v201
  %227 = vst.msk [vmem:[%s49 + $0x70] sm:$0xff] %vm212, %v206
  %228 = vst.msk [vmem:[%s49 + $0x78] sm:$0xff] %vm212, %v209
  %p229 = scmp.eq.s32.totalorder 0, 0
  // Predicated region
  $region14: #{stage_attention_forward.22} parent=0 // pred_check
    %p230 = pneg %p229
  $region15: #{stage_attention_forward.22} parent=0 // pred_check_branch
    %232 = sbr.rel (%p230) target = $region17
  $region16: #{stage_attention_forward.22} parent=0 // pred_region
    %233 = vst.msk [vmem:[%s4] sm:$0xff] %vm212, 0.0
  $region17: #{stage_attention_forward.22} parent=0 // pred_fallthru
    _
  %v234 = vld [vmem:[%s4] sm:$0x1]
  %v235 = vsel %vm212, %v150, 0.0
  %v236 = vsel %vm212, %v153, 0.0
  %v237 = vadd.f32 %v235, %v236
  %v238 = vsel %vm212, %v158, 0.0
  %v239 = vadd.f32 %v237, %v238
  %v240 = vsel %vm212, %v161, 0.0
  %v241 = vadd.f32 %v239, %v240
  %v242 = vsel %vm212, %v166, 0.0
  %v243 = vadd.f32 %v241, %v242
  %v244 = vsel %vm212, %v169, 0.0
  %v245 = vadd.f32 %v243, %v244
  %v246 = vsel %vm212, %v174, 0.0
  %v247 = vadd.f32 %v245, %v246
  %v248 = vsel %vm212, %v177, 0.0
  %v249 = vadd.f32 %v247, %v248
  %v250 = vsel %vm212, %v182, 0.0
  %v251 = vadd.f32 %v249, %v250
  %v252 = vsel %vm212, %v185, 0.0
  %v253 = vadd.f32 %v251, %v252
  %v254 = vsel %vm212, %v190, 0.0
  %v255 = vadd.f32 %v253, %v254
  %v256 = vsel %vm212, %v193, 0.0
  %v257 = vadd.f32 %v255, %v256
  %v258 = vsel %vm212, %v198, 0.0
  %v259 = vadd.f32 %v257, %v258
  %v260 = vsel %vm212, %v201, 0.0
  %v261 = vadd.f32 %v259, %v260
  %v262 = vsel %vm212, %v206, 0.0
  %v263 = vadd.f32 %v261, %v262
  %v264 = vsel %vm212, %v209, 0.0
  %v265 = vadd.f32 %v263, %v264
  %v266 = vrot.slane %v265, 4
  %v267 = vadd.f32 %v265, %v266
  %v268 = vrot.slane %v267, 2
  %v269 = vadd.f32 %v267, %v268
  %v270 = vrot.slane %v269, 1
  %v271 = vadd.f32 %v269, %v270
  %v272 = vadd.f32 %v234, %v271
  %vm273 = vcmask 319488
  %274 = vst.msk [vmem:[%s4] sm:$0x1] %vm273, %v272
  %v275 = vld [vmem:[%s4 + $0x1] sm:$0x1]
  %v276 = vmul.f32 %v150, %v150
  %v277 = vmul.f32 %v153, %v153
  %v278 = vmul.f32 %v158, %v158
  %v279 = vmul.f32 %v161, %v161
  %v280 = vmul.f32 %v166, %v166
  %v281 = vmul.f32 %v169, %v169
  %v282 = vmul.f32 %v174, %v174
  %v283 = vmul.f32 %v177, %v177
  %v284 = vmul.f32 %v182, %v182
  %v285 = vmul.f32 %v185, %v185
  %v286 = vmul.f32 %v190, %v190
  %v287 = vmul.f32 %v193, %v193
  %v288 = vmul.f32 %v198, %v198
  %v289 = vmul.f32 %v201, %v201
  %v290 = vmul.f32 %v206, %v206
  %v291 = vmul.f32 %v209, %v209
  %v292 = vsel %vm212, %v276, 0.0
  %v293 = vsel %vm212, %v277, 0.0
  %v294 = vadd.f32 %v292, %v293
  %v295 = vsel %vm212, %v278, 0.0
  %v296 = vadd.f32 %v294, %v295
  %v297 = vsel %vm212, %v279, 0.0
  %v298 = vadd.f32 %v296, %v297
  %v299 = vsel %vm212, %v280, 0.0
  %v300 = vadd.f32 %v298, %v299
  %v301 = vsel %vm212, %v281, 0.0
  %v302 = vadd.f32 %v300, %v301
  %v303 = vsel %vm212, %v282, 0.0
  %v304 = vadd.f32 %v302, %v303
  %v305 = vsel %vm212, %v283, 0.0
  %v306 = vadd.f32 %v304, %v305
  %v307 = vsel %vm212, %v284, 0.0
  %v308 = vadd.f32 %v306, %v307
  %v309 = vsel %vm212, %v285, 0.0
  %v310 = vadd.f32 %v308, %v309
  %v311 = vsel %vm212, %v286, 0.0
  %v312 = vadd.f32 %v310, %v311
  %v313 = vsel %vm212, %v287, 0.0
  %v314 = vadd.f32 %v312, %v313
  %v315 = vsel %vm212, %v288, 0.0
  %v316 = vadd.f32 %v314, %v315
  %v317 = vsel %vm212, %v289, 0.0
  %v318 = vadd.f32 %v316, %v317
  %v319 = vsel %vm212, %v290, 0.0
  %v320 = vadd.f32 %v318, %v319
  %v321 = vsel %vm212, %v291, 0.0
  %v322 = vadd.f32 %v320, %v321
  %v323 = vrot.slane %v322, 4
  %v324 = vadd.f32 %v322, %v323
  %v325 = vrot.slane %v324, 2
  %v326 = vadd.f32 %v324, %v325
  %v327 = vrot.slane %v326, 1
  %v328 = vadd.f32 %v326, %v327
  %v329 = vadd.f32 %v275, %v328
  %330 = vst.msk [vmem:[%s4 + $0x1] sm:$0x1] %vm273, %v329
  %s331 = sadd.s32 0, 0
  %s332 = smul.u32 16, %s331
  %p333 = scmp.lt.s32.totalorder %s332, 15
  %s334 = scalar_select %p333, %s332, 15
  %s335 = smul.addr %s334, 8
  %s336 = scalar_lea.vmem %s3, %s335
  // Predicated region
  $region18: #{stage_attention_forward.22} parent=0 // pred_check
    _
  $region19: #{stage_attention_forward.22} parent=0 // pred_check_branch
    %338 = sbr.rel (0) target = $region21
  $region20: #{stage_attention_forward.22} parent=0 // pred_region
    %s339 = sadd.s32 0, 0
    %s340 = smul.u32 16, %s339
  $region21: #{stage_attention_forward.22} parent=0 // pred_fallthru
    _
  // Predicated region
  $region22: #{stage_attention_forward.22} parent=0 // pred_check
    _
  $region23: #{stage_attention_forward.22} parent=0 // pred_check_branch
    %342 = sbr.rel (0) target = $region25
  $region24: #{stage_attention_forward.22} parent=0 // pred_region
    _
  $region25: #{stage_attention_forward.22} parent=0 // pred_fallthru
    _
  // Predicated region
  $region26: #{stage_attention_forward.22} parent=0 // pred_check
    _
  $region27: #{stage_attention_forward.22} parent=0 // pred_check_branch
    %344 = sbr.rel (0) target = $region29
  $region28: #{stage_attention_forward.22} parent=0 // pred_region
    %s345 = sadd.s32 0, 0
    %s346 = smul.u32 16, %s345
    %p347 = scmp.lt.s32.totalorder %s346, 15
    %s348 = scalar_select %p347, %s346, 15
    %s349 = smul.addr %s348, 8
    %s350 = scalar_lea.vmem %s3, %s349
  $region29: #{stage_attention_forward.22} parent=0 // pred_fallthru
    _
  // Predicated region
  $region30: #{stage_attention_forward.22} parent=0 // pred_check
    _
  $region31: #{stage_attention_forward.22} parent=0 // pred_check_branch
    %352 = sbr.rel (0) target = $region33
  $region32: #{stage_attention_forward.22} parent=0 // pred_region
    _
  $region33: #{stage_attention_forward.22} parent=0 // pred_fallthru
    _

// kernel: stage_attention_forward.23
$region0: #{stage_attention_forward.23}
  #allocation0 [shape = 'u32[]', space=smem, size = 0x4, offset = 0x4, fixed_abs, tag = 'smem constant byte address 0x4 - core index']
  #allocation1 [shape = 'u32[144,128]{1,0:T(1,128)}', space=vmem, size = 0x12000, scoped, tag = 'internal scratch']
  %s0 = inlined_call_operand.vmem [shape: f32[128,40], index: 0, kind: input, shape index: {}]
  %s1 = inlined_call_operand.vmem [shape: f32[8,40], index: 1, kind: input, shape index: {}]
  %s2 = inlined_call_operand.vmem [shape: f32[1,40], index: 2, kind: input, shape index: {}]
  %s3 = inlined_call_operand.vmem [shape: f32[1,40], index: 3, kind: input, shape index: {}]
  %s4 = inlined_call_operand.vmem [shape: f32[1,40], index: 4, kind: input, shape index: {}]
  %s5 = inlined_call_operand.vmem [shape: bf16[128,40], index: 5, kind: output, shape index: {}]
  %s6 = sld [smem:[#allocation0]]
  $region30: #{stage_attention_forward.23} parent=0
    _
  %s8 = ssub.s32 1, %s6
  %s9 = scalar_select 0, %s8, %s6
  // Predicated region
  $region2: #{stage_attention_forward.23} parent=0 // pred_check
    _
  $region3: #{stage_attention_forward.23} parent=0 // pred_check_branch
    %11 = sbr.rel (0) target = $region5
  $region4: #{stage_attention_forward.23} parent=0 // pred_region
    _
  $region5: #{stage_attention_forward.23} parent=0 // pred_fallthru
    _
  // Predicated region
  $region6: #{stage_attention_forward.23} parent=0 // pred_check
    _
  $region7: #{stage_attention_forward.23} parent=0 // pred_check_branch
    %13 = sbr.rel (0) target = $region9
  $region8: #{stage_attention_forward.23} parent=0 // pred_region
    _
  $region9: #{stage_attention_forward.23} parent=0 // pred_fallthru
    _
  // Predicated region
  $region10: #{stage_attention_forward.23} parent=0 // pred_check
    _
  $region11: #{stage_attention_forward.23} parent=0 // pred_check_branch
    %15 = sbr.rel (0) target = $region13
  $region12: #{stage_attention_forward.23} parent=0 // pred_region
    _
  $region13: #{stage_attention_forward.23} parent=0 // pred_fallthru
    _
  // Predicated region
  $region14: #{stage_attention_forward.23} parent=0 // pred_check
    _
  $region15: #{stage_attention_forward.23} parent=0 // pred_check_branch
    %17 = sbr.rel (0) target = $region17
  $region16: #{stage_attention_forward.23} parent=0 // pred_region
    _
  $region17: #{stage_attention_forward.23} parent=0 // pred_fallthru
    _
  // Predicated region
  $region18: #{stage_attention_forward.23} parent=0 // pred_check
    _
  $region19: #{stage_attention_forward.23} parent=0 // pred_check_branch
    %19 = sbr.rel (0) target = $region21
  $region20: #{stage_attention_forward.23} parent=0 // pred_region
    _
  $region21: #{stage_attention_forward.23} parent=0 // pred_fallthru
    _
  %v20 = vld [vmem:[%s1] sm:$0x1]
  %v21 = vmul.f32 %v20, 0.0078125
  %v22 = vld [vmem:[%s1 + $0x1] sm:$0x1]
  %v23 = vmul.f32 %v22, 0.0078125
  %v24 = vmul.f32 %v21, %v21
  %v25 = vsub.f32 %v23, %v24
  %v26 = vld [vmem:[%s0] sm:$0xff]
  %v27 = vld [vmem:[%s0 + $0x8] sm:$0xff]
  %v28 = vld [vmem:[%s0 + $0x10] sm:$0xff]
  %v29 = vld [vmem:[%s0 + $0x18] sm:$0xff]
  %v30 = vld [vmem:[%s0 + $0x20] sm:$0xff]
  %v31 = vld [vmem:[%s0 + $0x28] sm:$0xff]
  %v32 = vld [vmem:[%s0 + $0x30] sm:$0xff]
  %v33 = vld [vmem:[%s0 + $0x38] sm:$0xff]
  %v34 = vld [vmem:[%s0 + $0x40] sm:$0xff]
  %v35 = vld [vmem:[%s0 + $0x48] sm:$0xff]
  %v36 = vld [vmem:[%s0 + $0x50] sm:$0xff]
  %v37 = vld [vmem:[%s0 + $0x58] sm:$0xff]
  %v38 = vld [vmem:[%s0 + $0x60] sm:$0xff]
  %v39 = vld [vmem:[%s0 + $0x68] sm:$0xff]
  %v40 = vld [vmem:[%s0 + $0x70] sm:$0xff]
  %v41 = vld [vmem:[%s0 + $0x78] sm:$0xff]
  %v42 = vlaneseq
  %v43 = vshrl.u32 %v42, 7
  %v44 = vsub.s32 0, %v43
  %v45 = vrot.slane %v21, %v44
  %v46 = vsub.f32 %v26, %v45
  %v47 = vsub.f32 %v27, %v45
  %v48 = vsub.f32 %v28, %v45
  %v49 = vsub.f32 %v29, %v45
  %v50 = vsub.f32 %v30, %v45
  %v51 = vsub.f32 %v31, %v45
  %v52 = vsub.f32 %v32, %v45
  %v53 = vsub.f32 %v33, %v45
  %v54 = vsub.f32 %v34, %v45
  %v55 = vsub.f32 %v35, %v45
  %v56 = vsub.f32 %v36, %v45
  %v57 = vsub.f32 %v37, %v45
  %v58 = vsub.f32 %v38, %v45
  %v59 = vsub.f32 %v39, %v45
  %v60 = vsub.f32 %v40, %v45
  %v61 = vsub.f32 %v41, %v45
  %v62 = vadd.f32 %v25, 1e-05
  %v63 = vrsqrt.pop %v62
  %v64 = vld [vmem:[%s2] sm:$0x1]
  %v65 = vmul.f32 %v63, %v64
  %v66 = vlaneseq
  %v67 = vshrl.u32 %v66, 7
  %v68 = vsub.s32 0, %v67
  %v69 = vrot.slane %v65, %v68
  %v70 = vmul.f32 %v46, %v69
  %v71 = vmul.f32 %v47, %v69
  %v72 = vmul.f32 %v48, %v69
  %v73 = vmul.f32 %v49, %v69
  %v74 = vmul.f32 %v50, %v69
  %v75 = vmul.f32 %v51, %v69
  %v76 = vmul.f32 %v52, %v69
  %v77 = vmul.f32 %v53, %v69
  %v78 = vmul.f32 %v54, %v69
  %v79 = vmul.f32 %v55, %v69
  %v80 = vmul.f32 %v56, %v69
  %v81 = vmul.f32 %v57, %v69
  %v82 = vmul.f32 %v58, %v69
  %v83 = vmul.f32 %v59, %v69
  %v84 = vmul.f32 %v60, %v69
  %v85 = vmul.f32 %v61, %v69
  %v86 = vld [vmem:[%s3] sm:$0x1]
  %v88 = vlaneseq
  %v89 = vshrl.u32 %v88, 7
  %v90 = vsub.s32 0, %v89
  %v91 = vrot.slane %v86, %v90
  %v93 = vadd.f32 %v70, %v91
  %v94 = vadd.f32 %v71, %v91
  %v95 = vadd.f32 %v72, %v91
  %v96 = vadd.f32 %v73, %v91
  %v97 = vadd.f32 %v74, %v91
  %v98 = vadd.f32 %v75, %v91
  %v99 = vadd.f32 %v76, %v91
  %v100 = vadd.f32 %v77, %v91
  %v101 = vadd.f32 %v78, %v91
  %v102 = vadd.f32 %v79, %v91
  %v103 = vadd.f32 %v80, %v91
  %v104 = vadd.f32 %v81, %v91
  %v105 = vadd.f32 %v82, %v91
  %v106 = vadd.f32 %v83, %v91
  %v107 = vadd.f32 %v84, %v91
  %v108 = vadd.f32 %v85, %v91
  %v109 = vld [vmem:[%s4] sm:$0x1]
  %v110 = vmax.f32 %v93, 0.0
  %v111 = vmax.f32 %v94, 0.0
  %v112 = vmax.f32 %v95, 0.0
  %v113 = vmax.f32 %v96, 0.0
  %v114 = vmax.f32 %v97, 0.0
  %v115 = vmax.f32 %v98, 0.0
  %v116 = vmax.f32 %v99, 0.0
  %v117 = vmax.f32 %v100, 0.0
  %v118 = vmax.f32 %v101, 0.0
  %v119 = vmax.f32 %v102, 0.0
  %v120 = vmax.f32 %v103, 0.0
  %v121 = vmax.f32 %v104, 0.0
  %v122 = vmax.f32 %v105, 0.0
  %v123 = vmax.f32 %v106, 0.0
  %v124 = vmax.f32 %v107, 0.0
  %v125 = vmax.f32 %v108, 0.0
  %v127 = vlaneseq
  %v128 = vshrl.u32 %v127, 7
  %v129 = vsub.s32 0, %v128
  %v130 = vrot.slane %v109, %v129
  %v132 = vmul.f32 %v130, %v110
  %v133 = vmul.f32 %v130, %v111
  %v134 = vmul.f32 %v130, %v112
  %v135 = vmul.f32 %v130, %v113
  %v136 = vmul.f32 %v130, %v114
  %v137 = vmul.f32 %v130, %v115
  %v138 = vmul.f32 %v130, %v116
  %v139 = vmul.f32 %v130, %v117
  %v140 = vmul.f32 %v130, %v118
  %v141 = vmul.f32 %v130, %v119
  %v142 = vmul.f32 %v130, %v120
  %v143 = vmul.f32 %v130, %v121
  %v144 = vmul.f32 %v130, %v122
  %v145 = vmul.f32 %v130, %v123
  %v146 = vmul.f32 %v130, %v124
  %v147 = vmul.f32 %v130, %v125
  %v148 = vsub.f32 1.0, %v109
  %v150 = vlaneseq
  %v151 = vshrl.u32 %v150, 7
  %v152 = vsub.s32 0, %v151
  %v153 = vrot.slane %v148, %v152
  %v155 = vmul.f32 %v153, %v93
  %v156 = vmul.f32 %v153, %v94
  %v157 = vmul.f32 %v153, %v95
  %v158 = vmul.f32 %v153, %v96
  %v159 = vmul.f32 %v153, %v97
  %v160 = vmul.f32 %v153, %v98
  %v161 = vmul.f32 %v153, %v99
  %v162 = vmul.f32 %v153, %v100
  %v163 = vmul.f32 %v153, %v101
  %v164 = vmul.f32 %v153, %v102
  %v165 = vmul.f32 %v153, %v103
  %v166 = vmul.f32 %v153, %v104
  %v167 = vmul.f32 %v153, %v105
  %v168 = vmul.f32 %v153, %v106
  %v169 = vmul.f32 %v153, %v107
  %v170 = vmul.f32 %v153, %v108
  %v171 = vadd.f32 %v132, %v155
  %v172 = vadd.f32 %v133, %v156
  %v173 = vadd.f32 %v134, %v157
  %v174 = vadd.f32 %v135, %v158
  %v175 = vadd.f32 %v136, %v159
  %v176 = vadd.f32 %v137, %v160
  %v177 = vadd.f32 %v138, %v161
  %v178 = vadd.f32 %v139, %v162
  %v179 = vadd.f32 %v140, %v163
  %v180 = vadd.f32 %v141, %v164
  %v181 = vadd.f32 %v142, %v165
  %v182 = vadd.f32 %v143, %v166
  %v183 = vadd.f32 %v144, %v167
  %v184 = vadd.f32 %v145, %v168
  %v185 = vadd.f32 %v146, %v169
  %v186 = vadd.f32 %v147, %v170
  %v187 = vpack.c.bf16 %v172, %v171
  %v188 = vpack.c.bf16 %v174, %v173
  %v189 = vpack.c.bf16 %v176, %v175
  %v190 = vpack.c.bf16 %v178, %v177
  %v191 = vpack.c.bf16 %v180, %v179
  %v192 = vpack.c.bf16 %v182, %v181
  %v193 = vpack.c.bf16 %v184, %v183
  %v194 = vpack.c.bf16 %v186, %v185
  %v203 = vunpack.c.l.b16 %v187
  %v204 = vunpack.c.h.b16 %v187
  %v205 = vunpack.c.l.b16 %v188
  %v206 = vunpack.c.h.b16 %v188
  %v207 = vunpack.c.l.b16 %v189
  %v208 = vunpack.c.h.b16 %v189
  %v209 = vunpack.c.l.b16 %v190
  %v210 = vunpack.c.h.b16 %v190
  %v211 = vunpack.c.l.b16 %v191
  %v212 = vunpack.c.h.b16 %v191
  %v213 = vunpack.c.l.b16 %v192
  %v214 = vunpack.c.h.b16 %v192
  %v215 = vunpack.c.l.b16 %v193
  %v216 = vunpack.c.h.b16 %v193
  %v217 = vunpack.c.l.b16 %v194
  %v218 = vunpack.c.h.b16 %v194
  %v219 = vpack.c.b16 %v203, %v203
  %v220 = vpack.c.b16 %v204, %v204
  %v221 = vpack.c.b16 %v205, %v205
  %v222 = vpack.c.b16 %v206, %v206
  %v223 = vpack.c.b16 %v207, %v207
  %v224 = vpack.c.b16 %v208, %v208
  %v225 = vpack.c.b16 %v209, %v209
  %v226 = vpack.c.b16 %v210, %v210
  %v227 = vpack.c.b16 %v211, %v211
  %v228 = vpack.c.b16 %v212, %v212
  %v229 = vpack.c.b16 %v213, %v213
  %v230 = vpack.c.b16 %v214, %v214
  %v231 = vpack.c.b16 %v215, %v215
  %v232 = vpack.c.b16 %v216, %v216
  %v233 = vpack.c.b16 %v217, %v217
  %v234 = vpack.c.b16 %v218, %v218
  %vm251 = vcmask 322560
  %252 = vst.msk [vmem:[%s5] sm:$0xf] %vm251, %v219
  %253 = vst.msk [vmem:[%s5 + $0x4] sm:$0xf] %vm251, %v220
  %254 = vst.msk [vmem:[%s5 + $0x8] sm:$0xf] %vm251, %v221
  %255 = vst.msk [vmem:[%s5 + $0xc] sm:$0xf] %vm251, %v222
  %256 = vst.msk [vmem:[%s5 + $0x10] sm:$0xf] %vm251, %v223
  %257 = vst.msk [vmem:[%s5 + $0x14] sm:$0xf] %vm251, %v224
  %258 = vst.msk [vmem:[%s5 + $0x18] sm:$0xf] %vm251, %v225
  %259 = vst.msk [vmem:[%s5 + $0x1c] sm:$0xf] %vm251, %v226
  %260 = vst.msk [vmem:[%s5 + $0x20] sm:$0xf] %vm251, %v227
  %261 = vst.msk [vmem:[%s5 + $0x24] sm:$0xf] %vm251, %v228
  %262 = vst.msk [vmem:[%s5 + $0x28] sm:$0xf] %vm251, %v229
  %263 = vst.msk [vmem:[%s5 + $0x2c] sm:$0xf] %vm251, %v230
  %264 = vst.msk [vmem:[%s5 + $0x30] sm:$0xf] %vm251, %v231
  %265 = vst.msk [vmem:[%s5 + $0x34] sm:$0xf] %vm251, %v232
  %266 = vst.msk [vmem:[%s5 + $0x38] sm:$0xf] %vm251, %v233
  %267 = vst.msk [vmem:[%s5 + $0x3c] sm:$0xf] %vm251, %v234
  // Predicated region
  $region22: #{stage_attention_forward.23} parent=0 // pred_check
    _
  $region23: #{stage_attention_forward.23} parent=0 // pred_check_branch
    %269 = sbr.rel (0) target = $region25
  $region24: #{stage_attention_forward.23} parent=0 // pred_region
    _
  $region25: #{stage_attention_forward.23} parent=0 // pred_fallthru
    _
  // Predicated region
  $region26: #{stage_attention_forward.23} parent=0 // pred_check
    _
  $region27: #{stage_attention_forward.23} parent=0 // pred_check_branch
    %271 = sbr.rel (0) target = $region29
  $region28: #{stage_attention_forward.23} parent=0 // pred_region
    _
  $region29: #{stage_attention_forward.23} parent=0 // pred_fallthru
    _

// kernel: squeeze.19
$region0: #{squeeze.19}
  %s0 = inlined_call_operand.vmem [shape: f32[1,2,7,7], index: 0, kind: input, shape index: {}]
  %s1 = inlined_call_operand.vmem [shape: f32[98], index: 1, kind: output, shape index: {}]
  $region1: #{squeeze.19} parent=0
    #allocation0 [shape = 'u8[4096]{0}', space=vmem, size = 0x1000, scoped, tag = 'scoped mem for output reshape']
    %v2 = vld [vmem:[%s0] sm:$0x1]
    %vm3 = vcmask 56320
    %4 = vst.msk [vmem:[#allocation0] sm:$0x1] %vm3, %v2
    %s5 = scalar_lea.vmem %s0, 14
    %v6 = vld [vmem:[%s5] sm:$0x1]
    %7 = vrot.lane.b32.xlu0 %v6, 91
    %v8 = vpop.permute.xlu0 %7
    %vm9 = vcmask 802520
    %10 = vst.msk [vmem:[#allocation0] sm:$0x1] %vm9, %v8
    %s11 = scalar_lea.vmem %s0, 13
    %v12 = vld [vmem:[%s11] sm:$0x1]
    %13 = vrot.lane.b32.xlu0 %v12, 84
    %v14 = vpop.permute.xlu0 %13
    %vm15 = vcmask 745120
    %16 = vst.msk [vmem:[#allocation0] sm:$0x1] %vm15, %v14
    %s17 = scalar_lea.vmem %s0, 12
    %v18 = vld [vmem:[%s17] sm:$0x1]
    %19 = vrot.lane.b32.xlu0 %v18, 77
    %v20 = vpop.permute.xlu0 %19
    %vm21 = vcmask 687720
    %22 = vst.msk [vmem:[#allocation0] sm:$0x1] %vm21, %v20
    %s23 = scalar_lea.vmem %s0, 11
    %v24 = vld [vmem:[%s23] sm:$0x1]
    %25 = vrot.lane.b32.xlu0 %v24, 70
    %v26 = vpop.permute.xlu0 %25
    %vm27 = vcmask 630320
    %28 = vst.msk [vmem:[#allocation0] sm:$0x1] %vm27, %v26
    %s29 = scalar_lea.vmem %s0, 10
    %v30 = vld [vmem:[%s29] sm:$0x1]
    %31 = vrot.lane.b32.xlu0 %v30, 63
    %v32 = vpop.permute.xlu0 %31
    %vm33 = vcmask 572920
    %34 = vst.msk [vmem:[#allocation0] sm:$0x1] %vm33, %v32
    %s35 = scalar_lea.vmem %s0, 9
    %v36 = vld [vmem:[%s35] sm:$0x1]
    %37 = vrot.lane.b32.xlu0 %v36, 56
    %v38 = vpop.permute.xlu0 %37
    %vm39 = vcmask 515520
    %40 = vst.msk [vmem:[#allocation0] sm:$0x1] %vm39, %v38
    %s41 = scalar_lea.vmem %s0, 8
    %v42 = vld [vmem:[%s41] sm:$0x1]
    %43 = vrot.lane.b32.xlu0 %v42, 49
    %v44 = vpop.permute.xlu0 %43
    %vm45 = vcmask 458120
    %46 = vst.msk [vmem:[#allocation0] sm:$0x1] %vm45, %v44
    %s47 = scalar_lea.vmem %s0, 6
    %v48 = vld [vmem:[%s47] sm:$0x1]
    %49 = vrot.lane.b32.xlu0 %v48, 42
    %v50 = vpop.permute.xlu0 %49
    %vm51 = vcmask 400720
    %52 = vst.msk [vmem:[#allocation0] sm:$0x1] %vm51, %v50
    %s53 = scalar_lea.vmem %s0, 5
    %v54 = vld [vmem:[%s53] sm:$0x1]
    %55 = vrot.lane.b32.xlu0 %v54, 35
    %v56 = vpop.permute.xlu0 %55
    %vm57 = vcmask 343320
    %58 = vst.msk [vmem:[#allocation0] sm:$0x1] %vm57, %v56
    %s59 = scalar_lea.vmem %s0, 4
    %v60 = vld [vmem:[%s59] sm:$0x1]
    %61 = vrot.lane.b32.xlu0 %v60, 28
    %v62 = vpop.permute.xlu0 %61
    %vm63 = vcmask 285920
    %64 = vst.msk [vmem:[#allocation0] sm:$0x1] %vm63, %v62
    %s65 = scalar_lea.vmem %s0, 3
    %v66 = vld [vmem:[%s65] sm:$0x1]
    %67 = vrot.lane.b32.xlu0 %v66, 21
    %v68 = vpop.permute.xlu0 %67
    %vm69 = vcmask 228520
    %70 = vst.msk [vmem:[#allocation0] sm:$0x1] %vm69, %v68
    %s71 = scalar_lea.vmem %s0, 2
    %v72 = vld [vmem:[%s71] sm:$0x1]
    %73 = vrot.lane.b32.xlu0 %v72, 14
    %v74 = vpop.permute.xlu0 %73
    %vm75 = vcmask 171120
    %76 = vst.msk [vmem:[#allocation0] sm:$0x1] %vm75, %v74
    %s77 = scalar_lea.vmem %s0, 1
    %v78 = vld [vmem:[%s77] sm:$0x1]
    %79 = vrot.lane.b32.xlu0 %v78, 7
    %v80 = vpop.permute.xlu0 %79
    %vm81 = vcmask 113720
    %82 = vst.msk [vmem:[#allocation0] sm:$0x1] %vm81, %v80
    %s84 = sshll.u32 1, 1
    %s85 = ssub.s32 %s84, 1
    %v87 = vld [vmem:[#allocation0] sm:%s85]
    %s88 = sshll.u32 1, 1
    %s89 = ssub.s32 %s88, 1
    %90 = vst [vmem:[%s1] sm:%s89] %v87

// kernel: stage_attention_forward.24
$region0: #{stage_attention_forward.24}
  #allocation0 [shape = 'u32[]', space=smem, size = 0x4, offset = 0x4, fixed_abs, tag = 'smem constant byte address 0x4 - core index']
  #allocation1 [shape = 'u32[144,128]{1,0:T(1,128)}', space=vmem, size = 0x12000, scoped, tag = 'internal scratch']
  %s0 = inlined_call_operand.vmem [shape: bf16[2,8,8,40], index: 0, kind: input, shape index: {}]
  %s1 = inlined_call_operand.vmem [shape: f32[2,8,8,32], index: 1, kind: output, shape index: {0}]
  %s2 = inlined_call_operand.vmem [shape: f32[2,2,8,8], index: 2, kind: output, shape index: {1}]
  %3 = xla_tuple %s1, %s2
  %s4 = sld [smem:[#allocation0]]
  $region45: #{stage_attention_forward.24} parent=0
    _
  %s6 = ssub.s32 1, %s4
  %s7 = scalar_select 0, %s6, %s4
  loop: start=0, step=1, limit=4
  $region2: #{stage_attention_forward.24} parent=0 // loop_pre_header
    _
  $region3: #{stage_attention_forward.24} parent=0 // loop_header
    %s9 = sphi 0, %s13
    %p10 = scmp.ge.s32.totalorder %s9, 4
    %s19 = sphi 0, %s21
    %s22 = sphi 0, %s19
    %s23 = sphi 0, %s22
    %s39 = sphi 0, %s23
    %s45 = sphi 0, %s47
    %s48 = sphi 0, %s45
    %s49 = sphi 0, %s48
    %s65 = sphi 0, %s49
    %s71 = sphi 0, %s73
    %s74 = sphi 0, %s71
    %s75 = sphi 0, %s74
    %s91 = sphi 0, %s75
  $region4: #{stage_attention_forward.24} parent=0 // loop_header_branch
    %12 = sbr.rel (%p10) target = $region8
  $region5: #{stage_attention_forward.24} parent=0 // loop_body
    %s14 = ssub.s32 %s9, 1
    %s15 = ssub.s32 %s9, 2
    %s16 = sadd.s32 %s9, 1
    %s17 = ssub.s32 %s9, %s16
    %p18 = scmp.eq.s32.totalorder %s17, 0
    %s20 = sadd.s32 %s19, 1
    %s21 = scalar_select %p18, %s19, %s20
    %p24 = pneg %p18
    %p25 = scmp.eq.s32.totalorder %s9, 1
    %p26 = por %p24, %p25
    %p27 = scmp.ne.s32.totalorder %s19, %s22
    %p28 = scmp.eq.s32.totalorder %s9, 0
    %p29 = por %p27, %p28
    %p30 = scmp.ne.s32.totalorder %s19, %s22
    %p31 = scmp.eq.s32.totalorder %s14, 1
    %p32 = por %p30, %p31
    %p33 = scmp.ne.s32.totalorder %s22, %s23
    %p34 = scmp.eq.s32.totalorder %s14, 0
    %p35 = por %p33, %p34
    %p36 = scmp.ne.s32.totalorder %s22, %s23
    %p37 = scmp.eq.s32.totalorder %s15, 1
    %p38 = por %p36, %p37
    %p40 = scmp.ne.s32.totalorder %s23, %s39
    %p41 = scmp.eq.s32.totalorder %s15, 0
    %p42 = por %p40, %p41
    %s43 = ssub.s32 %s9, %s16
    %p44 = scmp.eq.s32.totalorder %s43, 0
    %s46 = sadd.s32 %s45, 1
    %s47 = scalar_select %p44, %s45, %s46
    %p50 = pneg %p44
    %p51 = scmp.eq.s32.totalorder %s9, 1
    %p52 = por %p50, %p51
    %p53 = scmp.ne.s32.totalorder %s45, %s48
    %p54 = scmp.eq.s32.totalorder %s9, 0
    %p55 = por %p53, %p54
    %p56 = scmp.ne.s32.totalorder %s45, %s48
    %p57 = scmp.eq.s32.totalorder %s14, 1
    %p58 = por %p56, %p57
    %p59 = scmp.ne.s32.totalorder %s48, %s49
    %p60 = scmp.eq.s32.totalorder %s14, 0
    %p61 = por %p59, %p60
    %p62 = scmp.ne.s32.totalorder %s48, %s49
    %p63 = scmp.eq.s32.totalorder %s15, 1
    %p64 = por %p62, %p63
    %p66 = scmp.ne.s32.totalorder %s49, %s65
    %p67 = scmp.eq.s32.totalorder %s15, 0
    %p68 = por %p66, %p67
    %s69 = ssub.s32 %s9, %s16
    %p70 = scmp.eq.s32.totalorder %s69, 0
    %s72 = sadd.s32 %s71, 1
    %s73 = scalar_select %p70, %s71, %s72
    %p76 = pneg %p70
    %p77 = scmp.eq.s32.totalorder %s9, 1
    %p78 = por %p76, %p77
    %p79 = scmp.ne.s32.totalorder %s71, %s74
    %p80 = scmp.eq.s32.totalorder %s9, 0
    %p81 = por %p79, %p80
    %p82 = scmp.ne.s32.totalorder %s71, %s74
    %p83 = scmp.eq.s32.totalorder %s14, 1
    %p84 = por %p82, %p83
    %p85 = scmp.ne.s32.totalorder %s74, %s75
    %p86 = scmp.eq.s32.totalorder %s14, 0
    %p87 = por %p85, %p86
    %p88 = scmp.ne.s32.totalorder %s74, %s75
    %p89 = scmp.eq.s32.totalorder %s15, 1
    %p90 = por %p88, %p89
    %p92 = scmp.ne.s32.totalorder %s75, %s91
    %p93 = scmp.eq.s32.totalorder %s15, 0
    %p94 = por %p92, %p93
    %p95 = scmp.le.s32.totalorder 1, %s9
    %p96 = scmp.lt.s32.totalorder %s9, 3
    %p97 = pnand %p95, %p96
    %p98 = pneg %p97
    // Predicated region
    $region9: #{stage_attention_forward.24} parent=5 // pred_check
      _
    $region10: #{stage_attention_forward.24} parent=5 // pred_check_branch
      %100 = sbr.rel (%p97) target = $region12
    $region11: #{stage_attention_forward.24} parent=5 // pred_region
      %s101 = ssub.s32 %s9, 1
    $region12: #{stage_attention_forward.24} parent=5 // pred_fallthru
      _
    %p102 = scmp.lt.s32.totalorder %s9, 2
    // Predicated region
    $region13: #{stage_attention_forward.24} parent=5 // pred_check
      %p103 = pneg %p102
    $region14: #{stage_attention_forward.24} parent=5 // pred_check_branch
      %105 = sbr.rel (%p103) target = $region16
    $region15: #{stage_attention_forward.24} parent=5 // pred_region
      // Predicated region
      $region17: #{stage_attention_forward.24} parent=15 // pred_check
        %p106 = pneg %p29
      $region18: #{stage_attention_forward.24} parent=15 // pred_check_branch
        %108 = sbr.rel (%p106) target = $region20
      $region19: #{stage_attention_forward.24} parent=15 // pred_region
        %p109 = scmp.lt.s32.totalorder %s9, 1
        %s110 = scalar_select %p109, %s9, 1
        %s111 = smul.addr %s110, 8
        %s112 = smul.addr %s111, 4
        %s113 = scalar_lea.vmem %s0, %s112
      $region20: #{stage_attention_forward.24} parent=15 // pred_fallthru
        _
    $region16: #{stage_attention_forward.24} parent=5 // pred_fallthru
      _
    %p114 = scmp.le.s32.totalorder 1, %s9
    %p115 = scmp.lt.s32.totalorder %s9, 3
    %p116 = pnand %p114, %p115
    %p117 = pneg %p116
    // Predicated region
    $region21: #{stage_attention_forward.24} parent=5 // pred_check
      _
    $region22: #{stage_attention_forward.24} parent=5 // pred_check_branch
      %119 = sbr.rel (%p116) target = $region24
    $region23: #{stage_attention_forward.24} parent=5 // pred_region
      %s120 = ssub.s32 %s9, 1
      %p121 = scmp.lt.s32.totalorder %s14, 1
      %s122 = scalar_select %p121, %s14, 1
      %s123 = smul.addr %s122, 8
      %s124 = smul.addr %s123, 4
      %s125 = scalar_lea.vmem %s0, %s124
      %p126 = pneg %p35
      %p127 = pneg %p32
      %p128 = pneg %p61
      %p129 = pneg %p58
      %p130 = scmp.lt.s32.totalorder %s14, 1
      %s131 = scalar_select %p130, %s14, 1
      %s132 = smul.addr %s131, 8
      %s133 = smul.addr %s132, 8
      %s134 = scalar_lea.vmem %s1, %s133
      %p135 = pneg %p87
      %p136 = pneg %p84
      %p137 = scmp.lt.s32.totalorder %s14, 1
      %s138 = scalar_select %p137, %s14, 1
      %s139 = smul.addr %s138, 2
      %s140 = smul.addr %s139, 8
      %s141 = scalar_lea.vmem %s2, %s140
      %p142 = scmp.lt.s32.totalorder %s14, 1
      %s143 = scalar_select %p142, %s14, 1
      %s144 = smul.addr %s143, 8
      %s145 = smul.addr %s144, 4
      %s146 = scalar_lea.vmem %s0, %s145
      %p147 = scmp.lt.s32.totalorder %s14, 1
      %s148 = scalar_select %p147, %s14, 1
      %s149 = smul.addr %s148, 8
      %s150 = smul.addr %s149, 8
      %s151 = scalar_lea.vmem %s1, %s150
      %p152 = scmp.lt.s32.totalorder %s14, 1
      %s153 = scalar_select %p152, %s14, 1
      %s154 = smul.addr %s153, 2
      %s155 = smul.addr %s154, 8
      %s156 = scalar_lea.vmem %s2, %s155
      %v158 = vld [vmem:[%s146] sm:$0xf]
      %v159 = vld [vmem:[%s146 + $0x4] sm:$0xf]
      %v160 = vld [vmem:[%s146 + $0x8] sm:$0xf]
      %v161 = vld [vmem:[%s146 + $0xc] sm:$0xf]
      %v162 = vld [vmem:[%s146 + $0x10] sm:$0xf]
      %v163 = vld [vmem:[%s146 + $0x14] sm:$0xf]
      %v164 = vld [vmem:[%s146 + $0x18] sm:$0xf]
      %v165 = vld [vmem:[%s146 + $0x1c] sm:$0xf]
      %v167 = vunpack.c.l.b16 %v158
      %v168 = vpack.c.b16 %v167, %v167
      %169 = vrot.lane.b32.xlu0 %v168, 124
      %v170 = vpop.permute.xlu0 %169
      %vm171 = vcmask 31744
      %v173 = vsel %vm171, %v158, 0
      %v176 = vsel %vm171, %v170, 0
      %178 = vmatprep.subr.bf16.mxu0 0
      %179 = vmatpush1.bf16.xpose.msra.mxu0 0
      %180 = vmatprep.subr.bf16.mxu0 0
      %181 = vmatpush1.bf16.xpose.msra.mxu0 0
      %182 = vmatprep.subr.bf16.mxu0 0
      %183 = vmatpush1.bf16.xpose.msra.mxu0 0
      %184 = vmatprep.subr.bf16.mxu0 0
      %185 = vmatpush1.bf16.xpose.msra.mxu0 0
      %186 = vmatprep.subr.bf16.mxu0 0
      %187 = vmatpush1.bf16.xpose.msra.mxu0 0
      %188 = vmatprep.subr.bf16.mxu0 0
      %189 = vmatpush1.bf16.xpose.msra.mxu0 0
      %190 = vmatprep.subr.bf16.mxu0 0
      %191 = vmatpush1.bf16.xpose.msra.mxu0 0
      %192 = vmatprep.subr.bf16.mxu0 0
      %193 = vmatpush1.bf16.xpose.msra.mxu0 %v176
      %194 = vmatprep.subr.bf16.mxu0 0
      %195 = vmatpush2.bf16.xpose.msra.mxu0 0
      %196 = vmatprep.subr.bf16.mxu0 0
      %197 = vmatpush2.bf16.xpose.msra.mxu0 0
      %198 = vmatprep.subr.bf16.mxu0 0
      %199 = vmatpush2.bf16.xpose.msra.mxu0 0
      %200 = vmatprep.subr.bf16.mxu0 0
      %201 = vmatpush2.bf16.xpose.msra.mxu0 0
      %202 = vmatprep.subr.bf16.mxu0 0
      %203 = vmatpush2.bf16.xpose.msra.mxu0 0
      %204 = vmatprep.subr.bf16.mxu0 0
      %205 = vmatpush2.bf16.xpose.msra.mxu0 0
      %206 = vmatprep.subr.bf16.mxu0 0
      %207 = vmatpush2.bf16.xpose.msra.mxu0 0
      %208 = vmatprep.subr.bf16.mxu0 0
      %209 = vmatpush2.bf16.xpose.msra.mxu0 0
      %210 = vmatprep.mubr.bf16.mxu0 0
      %211 = vmatmul.mubr.bf16.gmra.mxu0 %v173
      %v212 = vpop.f32.mrf.mxu0
      %v213 = vadd.f32 0.0, %v212
      %v214 = vpop.f32.mrf.mxu0
      %v215 = vpop.f32.mrf.mxu0
      %v216 = vpop.f32.mrf.mxu0
      %217 = vdwg.mxu0
      %v219 = vunpack.c.l.b16 %v159
      %v220 = vpack.c.b16 %v219, %v219
      %221 = vrot.lane.b32.xlu0 %v220, 124
      %v222 = vpop.permute.xlu0 %221
      %v224 = vsel %vm171, %v159, 0
      %v227 = vsel %vm171, %v222, 0
      %229 = vmatprep.subr.bf16.mxu0 0
      %230 = vmatpush1.bf16.xpose.msra.mxu0 0
      %231 = vmatprep.subr.bf16.mxu0 0
      %232 = vmatpush1.bf16.xpose.msra.mxu0 0
      %233 = vmatprep.subr.bf16.mxu0 0
      %234 = vmatpush1.bf16.xpose.msra.mxu0 0
      %235 = vmatprep.subr.bf16.mxu0 0
      %236 = vmatpush1.bf16.xpose.msra.mxu0 0
      %237 = vmatprep.subr.bf16.mxu0 0
      %238 = vmatpush1.bf16.xpose.msra.mxu0 0
      %239 = vmatprep.subr.bf16.mxu0 0
      %240 = vmatpush1.bf16.xpose.msra.mxu0 0
      %241 = vmatprep.subr.bf16.mxu0 0
      %242 = vmatpush1.bf16.xpose.msra.mxu0 0
      %243 = vmatprep.subr.bf16.mxu0 0
      %244 = vmatpush1.bf16.xpose.msra.mxu0 %v227
      %245 = vmatprep.subr.bf16.mxu0 0
      %246 = vmatpush2.bf16.xpose.msra.mxu0 0
      %247 = vmatprep.subr.bf16.mxu0 0
      %248 = vmatpush2.bf16.xpose.msra.mxu0 0
      %249 = vmatprep.subr.bf16.mxu0 0
      %250 = vmatpush2.bf16.xpose.msra.mxu0 0
      %251 = vmatprep.subr.bf16.mxu0 0
      %252 = vmatpush2.bf16.xpose.msra.mxu0 0
      %253 = vmatprep.subr.bf16.mxu0 0
      %254 = vmatpush2.bf16.xpose.msra.mxu0 0
      %255 = vmatprep.subr.bf16.mxu0 0
      %256 = vmatpush2.bf16.xpose.msra.mxu0 0
      %257 = vmatprep.subr.bf16.mxu0 0
      %258 = vmatpush2.bf16.xpose.msra.mxu0 0
      %259 = vmatprep.subr.bf16.mxu0 0
      %260 = vmatpush2.bf16.xpose.msra.mxu0 0
      %261 = vmatprep.mubr.bf16.mxu0 0
      %262 = vmatmul.mubr.bf16.gmra.mxu0 %v224
      %v263 = vpop.f32.mrf.mxu0
      %v264 = vadd.f32 0.0, %v263
      %v265 = vpop.f32.mrf.mxu0
      %v266 = vpop.f32.mrf.mxu0
      %v267 = vpop.f32.mrf.mxu0
      %268 = vdwg.mxu0
      %v270 = vunpack.c.l.b16 %v160
      %v271 = vpack.c.b16 %v270, %v270
      %272 = vrot.lane.b32.xlu0 %v271, 124
      %v273 = vpop.permute.xlu0 %272
      %v275 = vsel %vm171, %v160, 0
      %v278 = vsel %vm171, %v273, 0
      %280 = vmatprep.subr.bf16.mxu0 0
      %281 = vmatpush1.bf16.xpose.msra.mxu0 0
      %282 = vmatprep.subr.bf16.mxu0 0
      %283 = vmatpush1.bf16.xpose.msra.mxu0 0
      %284 = vmatprep.subr.bf16.mxu0 0
      %285 = vmatpush1.bf16.xpose.msra.mxu0 0
      %286 = vmatprep.subr.bf16.mxu0 0
      %287 = vmatpush1.bf16.xpose.msra.mxu0 0
      %288 = vmatprep.subr.bf16.mxu0 0
      %289 = vmatpush1.bf16.xpose.msra.mxu0 0
      %290 = vmatprep.subr.bf16.mxu0 0
      %291 = vmatpush1.bf16.xpose.msra.mxu0 0
      %292 = vmatprep.subr.bf16.mxu0 0
      %293 = vmatpush1.bf16.xpose.msra.mxu0 0
      %294 = vmatprep.subr.bf16.mxu0 0
      %295 = vmatpush1.bf16.xpose.msra.mxu0 %v278
      %296 = vmatprep.subr.bf16.mxu0 0
      %297 = vmatpush2.bf16.xpose.msra.mxu0 0
      %298 = vmatprep.subr.bf16.mxu0 0
      %299 = vmatpush2.bf16.xpose.msra.mxu0 0
      %300 = vmatprep.subr.bf16.mxu0 0
      %301 = vmatpush2.bf16.xpose.msra.mxu0 0
      %302 = vmatprep.subr.bf16.mxu0 0
      %303 = vmatpush2.bf16.xpose.msra.mxu0 0
      %304 = vmatprep.subr.bf16.mxu0 0
      %305 = vmatpush2.bf16.xpose.msra.mxu0 0
      %306 = vmatprep.subr.bf16.mxu0 0
      %307 = vmatpush2.bf16.xpose.msra.mxu0 0
      %308 = vmatprep.subr.bf16.mxu0 0
      %309 = vmatpush2.bf16.xpose.msra.mxu0 0
      %310 = vmatprep.subr.bf16.mxu0 0
      %311 = vmatpush2.bf16.xpose.msra.mxu0 0
      %312 = vmatprep.mubr.bf16.mxu0 0
      %313 = vmatmul.mubr.bf16.gmra.mxu0 %v275
      %v314 = vpop.f32.mrf.mxu0
      %v315 = vadd.f32 0.0, %v314
      %v316 = vpop.f32.mrf.mxu0
      %v317 = vpop.f32.mrf.mxu0
      %v318 = vpop.f32.mrf.mxu0
      %319 = vdwg.mxu0
      %v321 = vunpack.c.l.b16 %v161
      %v322 = vpack.c.b16 %v321, %v321
      %323 = vrot.lane.b32.xlu0 %v322, 124
      %v324 = vpop.permute.xlu0 %323
      %v326 = vsel %vm171, %v161, 0
      %v329 = vsel %vm171, %v324, 0
      %331 = vmatprep.subr.bf16.mxu0 0
      %332 = vmatpush1.bf16.xpose.msra.mxu0 0
      %333 = vmatprep.subr.bf16.mxu0 0
      %334 = vmatpush1.bf16.xpose.msra.mxu0 0
      %335 = vmatprep.subr.bf16.mxu0 0
      %336 = vmatpush1.bf16.xpose.msra.mxu0 0
      %337 = vmatprep.subr.bf16.mxu0 0
      %338 = vmatpush1.bf16.xpose.msra.mxu0 0
      %339 = vmatprep.subr.bf16.mxu0 0
      %340 = vmatpush1.bf16.xpose.msra.mxu0 0
      %341 = vmatprep.subr.bf16.mxu0 0
      %342 = vmatpush1.bf16.xpose.msra.mxu0 0
      %343 = vmatprep.subr.bf16.mxu0 0
      %344 = vmatpush1.bf16.xpose.msra.mxu0 0
      %345 = vmatprep.subr.bf16.mxu0 0
      %346 = vmatpush1.bf16.xpose.msra.mxu0 %v329
      %347 = vmatprep.subr.bf16.mxu0 0
      %348 = vmatpush2.bf16.xpose.msra.mxu0 0
      %349 = vmatprep.subr.bf16.mxu0 0
      %350 = vmatpush2.bf16.xpose.msra.mxu0 0
      %351 = vmatprep.subr.bf16.mxu0 0
      %352 = vmatpush2.bf16.xpose.msra.mxu0 0
      %353 = vmatprep.subr.bf16.mxu0 0
      %354 = vmatpush2.bf16.xpose.msra.mxu0 0
      %355 = vmatprep.subr.bf16.mxu0 0
      %356 = vmatpush2.bf16.xpose.msra.mxu0 0
      %357 = vmatprep.subr.bf16.mxu0 0
      %358 = vmatpush2.bf16.xpose.msra.mxu0 0
      %359 = vmatprep.subr.bf16.mxu0 0
      %360 = vmatpush2.bf16.xpose.msra.mxu0 0
      %361 = vmatprep.subr.bf16.mxu0 0
      %362 = vmatpush2.bf16.xpose.msra.mxu0 0
      %363 = vmatprep.mubr.bf16.mxu0 0
      %364 = vmatmul.mubr.bf16.gmra.mxu0 %v326
      %v365 = vpop.f32.mrf.mxu0
      %v366 = vadd.f32 0.0, %v365
      %v367 = vpop.f32.mrf.mxu0
      %v368 = vpop.f32.mrf.mxu0
      %v369 = vpop.f32.mrf.mxu0
      %370 = vdwg.mxu0
      %v372 = vunpack.c.l.b16 %v162
      %v373 = vpack.c.b16 %v372, %v372
      %374 = vrot.lane.b32.xlu0 %v373, 124
      %v375 = vpop.permute.xlu0 %374
      %v377 = vsel %vm171, %v162, 0
      %v380 = vsel %vm171, %v375, 0
      %382 = vmatprep.subr.bf16.mxu0 0
      %383 = vmatpush1.bf16.xpose.msra.mxu0 0
      %384 = vmatprep.subr.bf16.mxu0 0
      %385 = vmatpush1.bf16.xpose.msra.mxu0 0
      %386 = vmatprep.subr.bf16.mxu0 0
      %387 = vmatpush1.bf16.xpose.msra.mxu0 0
      %388 = vmatprep.subr.bf16.mxu0 0
      %389 = vmatpush1.bf16.xpose.msra.mxu0 0
      %390 = vmatprep.subr.bf16.mxu0 0
      %391 = vmatpush1.bf16.xpose.msra.mxu0 0
      %392 = vmatprep.subr.bf16.mxu0 0
      %393 = vmatpush1.bf16.xpose.msra.mxu0 0
      %394 = vmatprep.subr.bf16.mxu0 0
      %395 = vmatpush1.bf16.xpose.msra.mxu0 0
      %396 = vmatprep.subr.bf16.mxu0 0
      %397 = vmatpush1.bf16.xpose.msra.mxu0 %v380
      %398 = vmatprep.subr.bf16.mxu0 0
      %399 = vmatpush2.bf16.xpose.msra.mxu0 0
      %400 = vmatprep.subr.bf16.mxu0 0
      %401 = vmatpush2.bf16.xpose.msra.mxu0 0
      %402 = vmatprep.subr.bf16.mxu0 0
      %403 = vmatpush2.bf16.xpose.msra.mxu0 0
      %404 = vmatprep.subr.bf16.mxu0 0
      %405 = vmatpush2.bf16.xpose.msra.mxu0 0
      %406 = vmatprep.subr.bf16.mxu0 0
      %407 = vmatpush2.bf16.xpose.msra.mxu0 0
      %408 = vmatprep.subr.bf16.mxu0 0
      %409 = vmatpush2.bf16.xpose.msra.mxu0 0
      %410 = vmatprep.subr.bf16.mxu0 0
      %411 = vmatpush2.bf16.xpose.msra.mxu0 0
      %412 = vmatprep.subr.bf16.mxu0 0
      %413 = vmatpush2.bf16.xpose.msra.mxu0 0
      %414 = vmatprep.mubr.bf16.mxu0 0
      %415 = vmatmul.mubr.bf16.gmra.mxu0 %v377
      %v416 = vpop.f32.mrf.mxu0
      %v417 = vadd.f32 0.0, %v416
      %v418 = vpop.f32.mrf.mxu0
      %v419 = vpop.f32.mrf.mxu0
      %v420 = vpop.f32.mrf.mxu0
      %421 = vdwg.mxu0
      %v423 = vunpack.c.l.b16 %v163
      %v424 = vpack.c.b16 %v423, %v423
      %425 = vrot.lane.b32.xlu0 %v424, 124
      %v426 = vpop.permute.xlu0 %425
      %v428 = vsel %vm171, %v163, 0
      %v431 = vsel %vm171, %v426, 0
      %433 = vmatprep.subr.bf16.mxu0 0
      %434 = vmatpush1.bf16.xpose.msra.mxu0 0
      %435 = vmatprep.subr.bf16.mxu0 0
      %436 = vmatpush1.bf16.xpose.msra.mxu0 0
      %437 = vmatprep.subr.bf16.mxu0 0
      %438 = vmatpush1.bf16.xpose.msra.mxu0 0
      %439 = vmatprep.subr.bf16.mxu0 0
      %440 = vmatpush1.bf16.xpose.msra.mxu0 0
      %441 = vmatprep.subr.bf16.mxu0 0
      %442 = vmatpush1.bf16.xpose.msra.mxu0 0
      %443 = vmatprep.subr.bf16.mxu0 0
      %444 = vmatpush1.bf16.xpose.msra.mxu0 0
      %445 = vmatprep.subr.bf16.mxu0 0
      %446 = vmatpush1.bf16.xpose.msra.mxu0 0
      %447 = vmatprep.subr.bf16.mxu0 0
      %448 = vmatpush1.bf16.xpose.msra.mxu0 %v431
      %449 = vmatprep.subr.bf16.mxu0 0
      %450 = vmatpush2.bf16.xpose.msra.mxu0 0
      %451 = vmatprep.subr.bf16.mxu0 0
      %452 = vmatpush2.bf16.xpose.msra.mxu0 0
      %453 = vmatprep.subr.bf16.mxu0 0
      %454 = vmatpush2.bf16.xpose.msra.mxu0 0
      %455 = vmatprep.subr.bf16.mxu0 0
      %456 = vmatpush2.bf16.xpose.msra.mxu0 0
      %457 = vmatprep.subr.bf16.mxu0 0
      %458 = vmatpush2.bf16.xpose.msra.mxu0 0
      %459 = vmatprep.subr.bf16.mxu0 0
      %460 = vmatpush2.bf16.xpose.msra.mxu0 0
      %461 = vmatprep.subr.bf16.mxu0 0
      %462 = vmatpush2.bf16.xpose.msra.mxu0 0
      %463 = vmatprep.subr.bf16.mxu0 0
      %464 = vmatpush2.bf16.xpose.msra.mxu0 0
      %465 = vmatprep.mubr.bf16.mxu0 0
      %466 = vmatmul.mubr.bf16.gmra.mxu0 %v428
      %v467 = vpop.f32.mrf.mxu0
      %v468 = vadd.f32 0.0, %v467
      %v469 = vpop.f32.mrf.mxu0
      %v470 = vpop.f32.mrf.mxu0
      %v471 = vpop.f32.mrf.mxu0
      %472 = vdwg.mxu0
      %v474 = vunpack.c.l.b16 %v164
      %v475 = vpack.c.b16 %v474, %v474
      %476 = vrot.lane.b32.xlu0 %v475, 124
      %v477 = vpop.permute.xlu0 %476
      %v479 = vsel %vm171, %v164, 0
      %v482 = vsel %vm171, %v477, 0
      %484 = vmatprep.subr.bf16.mxu0 0
      %485 = vmatpush1.bf16.xpose.msra.mxu0 0
      %486 = vmatprep.subr.bf16.mxu0 0
      %487 = vmatpush1.bf16.xpose.msra.mxu0 0
      %488 = vmatprep.subr.bf16.mxu0 0
      %489 = vmatpush1.bf16.xpose.msra.mxu0 0
      %490 = vmatprep.subr.bf16.mxu0 0
      %491 = vmatpush1.bf16.xpose.msra.mxu0 0
      %492 = vmatprep.subr.bf16.mxu0 0
      %493 = vmatpush1.bf16.xpose.msra.mxu0 0
      %494 = vmatprep.subr.bf16.mxu0 0
      %495 = vmatpush1.bf16.xpose.msra.mxu0 0
      %496 = vmatprep.subr.bf16.mxu0 0
      %497 = vmatpush1.bf16.xpose.msra.mxu0 0
      %498 = vmatprep.subr.bf16.mxu0 0
      %499 = vmatpush1.bf16.xpose.msra.mxu0 %v482
      %500 = vmatprep.subr.bf16.mxu0 0
      %501 = vmatpush2.bf16.xpose.msra.mxu0 0
      %502 = vmatprep.subr.bf16.mxu0 0
      %503 = vmatpush2.bf16.xpose.msra.mxu0 0
      %504 = vmatprep.subr.bf16.mxu0 0
      %505 = vmatpush2.bf16.xpose.msra.mxu0 0
      %506 = vmatprep.subr.bf16.mxu0 0
      %507 = vmatpush2.bf16.xpose.msra.mxu0 0
      %508 = vmatprep.subr.bf16.mxu0 0
      %509 = vmatpush2.bf16.xpose.msra.mxu0 0
      %510 = vmatprep.subr.bf16.mxu0 0
      %511 = vmatpush2.bf16.xpose.msra.mxu0 0
      %512 = vmatprep.subr.bf16.mxu0 0
      %513 = vmatpush2.bf16.xpose.msra.mxu0 0
      %514 = vmatprep.subr.bf16.mxu0 0
      %515 = vmatpush2.bf16.xpose.msra.mxu0 0
      %516 = vmatprep.mubr.bf16.mxu0 0
      %517 = vmatmul.mubr.bf16.gmra.mxu0 %v479
      %v518 = vpop.f32.mrf.mxu0
      %v519 = vadd.f32 0.0, %v518
      %v520 = vpop.f32.mrf.mxu0
      %v521 = vpop.f32.mrf.mxu0
      %v522 = vpop.f32.mrf.mxu0
      %523 = vdwg.mxu0
      %v525 = vunpack.c.l.b16 %v165
      %v526 = vpack.c.b16 %v525, %v525
      %527 = vrot.lane.b32.xlu0 %v526, 124
      %v528 = vpop.permute.xlu0 %527
      %v530 = vsel %vm171, %v165, 0
      %v533 = vsel %vm171, %v528, 0
      %535 = vmatprep.subr.bf16.mxu0 0
      %536 = vmatpush1.bf16.xpose.msra.mxu0 0
      %537 = vmatprep.subr.bf16.mxu0 0
      %538 = vmatpush1.bf16.xpose.msra.mxu0 0
      %539 = vmatprep.subr.bf16.mxu0 0
      %540 = vmatpush1.bf16.xpose.msra.mxu0 0
      %541 = vmatprep.subr.bf16.mxu0 0
      %542 = vmatpush1.bf16.xpose.msra.mxu0 0
      %543 = vmatprep.subr.bf16.mxu0 0
      %544 = vmatpush1.bf16.xpose.msra.mxu0 0
      %545 = vmatprep.subr.bf16.mxu0 0
      %546 = vmatpush1.bf16.xpose.msra.mxu0 0
      %547 = vmatprep.subr.bf16.mxu0 0
      %548 = vmatpush1.bf16.xpose.msra.mxu0 0
      %549 = vmatprep.subr.bf16.mxu0 0
      %550 = vmatpush1.bf16.xpose.msra.mxu0 %v533
      %551 = vmatprep.subr.bf16.mxu0 0
      %552 = vmatpush2.bf16.xpose.msra.mxu0 0
      %553 = vmatprep.subr.bf16.mxu0 0
      %554 = vmatpush2.bf16.xpose.msra.mxu0 0
      %555 = vmatprep.subr.bf16.mxu0 0
      %556 = vmatpush2.bf16.xpose.msra.mxu0 0
      %557 = vmatprep.subr.bf16.mxu0 0
      %558 = vmatpush2.bf16.xpose.msra.mxu0 0
      %559 = vmatprep.subr.bf16.mxu0 0
      %560 = vmatpush2.bf16.xpose.msra.mxu0 0
      %561 = vmatprep.subr.bf16.mxu0 0
      %562 = vmatpush2.bf16.xpose.msra.mxu0 0
      %563 = vmatprep.subr.bf16.mxu0 0
      %564 = vmatpush2.bf16.xpose.msra.mxu0 0
      %565 = vmatprep.subr.bf16.mxu0 0
      %566 = vmatpush2.bf16.xpose.msra.mxu0 0
      %567 = vmatprep.mubr.bf16.mxu0 0
      %568 = vmatmul.mubr.bf16.gmra.mxu0 %v530
      %v569 = vpop.f32.mrf.mxu0
      %v570 = vadd.f32 0.0, %v569
      %v571 = vpop.f32.mrf.mxu0
      %v572 = vpop.f32.mrf.mxu0
      %v573 = vpop.f32.mrf.mxu0
      %574 = vdwg.mxu0
      %v575 = vlaneseq
      %v576 = vshrl.u32 %v575, 7
      %v577 = vlaneseq
      %v578 = vand.u32 %v577, 127
      %vm579 = vcmp.eq.s32.totalorder %v576, %v578
      %v580 = vsel %vm579, -1e+30, %v213
      %v581 = vsel %vm579, -1e+30, %v264
      %v582 = vsel %vm579, -1e+30, %v315
      %v583 = vsel %vm579, -1e+30, %v366
      %v584 = vsel %vm579, -1e+30, %v417
      %v585 = vsel %vm579, -1e+30, %v468
      %v586 = vsel %vm579, -1e+30, %v519
      %v587 = vsel %vm579, -1e+30, %v570
      %vm588 = vcmask 64512
      %v589 = vsel %vm588, %v580, -inf
      %590 = vmax.xlane.f32.xlu0 %v589
      %v591 = vpop.xlane.xlu0 %590
      %v592 = vsel %vm588, %v581, -inf
      %593 = vmax.xlane.f32.xlu0 %v592
      %v594 = vpop.xlane.xlu0 %593
      %v595 = vsel %vm588, %v582, -inf
      %596 = vmax.xlane.f32.xlu0 %v595
      %v597 = vpop.xlane.xlu0 %596
      %v598 = vsel %vm588, %v583, -inf
      %599 = vmax.xlane.f32.xlu0 %v598
      %v600 = vpop.xlane.xlu0 %599
      %v601 = vsel %vm588, %v584, -inf
      %602 = vmax.xlane.f32.xlu0 %v601
      %v603 = vpop.xlane.xlu0 %602
      %v604 = vsel %vm588, %v585, -inf
      %605 = vmax.xlane.f32.xlu0 %v604
      %v606 = vpop.xlane.xlu0 %605
      %v607 = vsel %vm588, %v586, -inf
      %608 = vmax.xlane.f32.xlu0 %v607
      %v609 = vpop.xlane.xlu0 %608
      %v610 = vsel %vm588, %v587, -inf
      %611 = vmax.xlane.f32.xlu0 %v610
      %v612 = vpop.xlane.xlu0 %611
      %v613 = vsub.f32 %v580, %v591
      %v614 = vsub.f32 %v581, %v594
      %v615 = vsub.f32 %v582, %v597
      %v616 = vsub.f32 %v583, %v600
      %v617 = vsub.f32 %v584, %v603
      %v618 = vsub.f32 %v585, %v606
      %v619 = vsub.f32 %v586, %v609
      %v620 = vsub.f32 %v587, %v612
      %v621 = vmul.f32 %v613, 1.442695
      %v622 = vpow.pop %v621
      %v623 = vmul.f32 %v614, 1.442695
      %v624 = vpow.pop %v623
      %v625 = vmul.f32 %v615, 1.442695
      %v626 = vpow.pop %v625
      %v627 = vmul.f32 %v616, 1.442695
      %v628 = vpow.pop %v627
      %v629 = vmul.f32 %v617, 1.442695
      %v630 = vpow.pop %v629
      %v631 = vmul.f32 %v618, 1.442695
      %v632 = vpow.pop %v631
      %v633 = vmul.f32 %v619, 1.442695
      %v634 = vpow.pop %v633
      %v635 = vmul.f32 %v620, 1.442695
      %v636 = vpow.pop %v635
      %v637 = vsel %vm588, %v622, 0.0
      %638 = vadd.xlane.f32.xlu0 %v637
      %v639 = vpop.xlane.xlu0 %638
      %v640 = vsel %vm588, %v624, 0.0
      %641 = vadd.xlane.f32.xlu0 %v640
      %v642 = vpop.xlane.xlu0 %641
      %v643 = vsel %vm588, %v626, 0.0
      %644 = vadd.xlane.f32.xlu0 %v643
      %v645 = vpop.xlane.xlu0 %644
      %v646 = vsel %vm588, %v628, 0.0
      %647 = vadd.xlane.f32.xlu0 %v646
      %v648 = vpop.xlane.xlu0 %647
      %v649 = vsel %vm588, %v630, 0.0
      %650 = vadd.xlane.f32.xlu0 %v649
      %v651 = vpop.xlane.xlu0 %650
      %v652 = vsel %vm588, %v632, 0.0
      %653 = vadd.xlane.f32.xlu0 %v652
      %v654 = vpop.xlane.xlu0 %653
      %v655 = vsel %vm588, %v634, 0.0
      %656 = vadd.xlane.f32.xlu0 %v655
      %v657 = vpop.xlane.xlu0 %656
      %v658 = vsel %vm588, %v636, 0.0
      %659 = vadd.xlane.f32.xlu0 %v658
      %v660 = vpop.xlane.xlu0 %659
      %v661 = vpack.c.bf16 %v622, %v622
      %v662 = vpack.c.bf16 %v624, %v624
      %v663 = vpack.c.bf16 %v626, %v626
      %v664 = vpack.c.bf16 %v628, %v628
      %v665 = vpack.c.bf16 %v630, %v630
      %v666 = vpack.c.bf16 %v632, %v632
      %v667 = vpack.c.bf16 %v634, %v634
      %v668 = vpack.c.bf16 %v636, %v636
      %669 = vrot.lane.b32.xlu0 %v168, 120
      %v670 = vpop.permute.xlu0 %669
      %v672 = vsel %vm588, %v661, 0
      %vm674 = vcmask 1043456
      %v676 = vsel %vm674, %v670, 0
      %678 = vmatprep.subr.bf16.mxu0 0
      %679 = vmatpush1.bf16.msra.mxu0 0
      %680 = vmatprep.subr.bf16.mxu0 0
      %681 = vmatpush1.bf16.msra.mxu0 0
      %682 = vmatprep.subr.bf16.mxu0 0
      %683 = vmatpush1.bf16.msra.mxu0 0
      %684 = vmatprep.subr.bf16.mxu0 0
      %685 = vmatpush1.bf16.msra.mxu0 0
      %686 = vmatprep.subr.bf16.mxu0 0
      %687 = vmatpush1.bf16.msra.mxu0 0
      %688 = vmatprep.subr.bf16.mxu0 0
      %689 = vmatpush1.bf16.msra.mxu0 0
      %690 = vmatprep.subr.bf16.mxu0 0
      %691 = vmatpush1.bf16.msra.mxu0 0
      %692 = vmatprep.subr.bf16.mxu0 0
      %693 = vmatpush1.bf16.msra.mxu0 %v676
      %694 = vmatprep.subr.bf16.mxu0 0
      %695 = vmatpush2.bf16.msra.mxu0 0
      %696 = vmatprep.subr.bf16.mxu0 0
      %697 = vmatpush2.bf16.msra.mxu0 0
      %698 = vmatprep.subr.bf16.mxu0 0
      %699 = vmatpush2.bf16.msra.mxu0 0
      %700 = vmatprep.subr.bf16.mxu0 0
      %701 = vmatpush2.bf16.msra.mxu0 0
      %702 = vmatprep.subr.bf16.mxu0 0
      %703 = vmatpush2.bf16.msra.mxu0 0
      %704 = vmatprep.subr.bf16.mxu0 0
      %705 = vmatpush2.bf16.msra.mxu0 0
      %706 = vmatprep.subr.bf16.mxu0 0
      %707 = vmatpush2.bf16.msra.mxu0 0
      %708 = vmatprep.subr.bf16.mxu0 0
      %709 = vmatpush2.bf16.msra.mxu0 0
      %710 = vmatprep.mubr.bf16.mxu0 0
      %711 = vmatmul.mubr.bf16.gmra.mxu0 %v672
      %v712 = vpop.f32.mrf.mxu0
      %v713 = vadd.f32 0.0, %v712
      %v714 = vpop.f32.mrf.mxu0
      %v715 = vpop.f32.mrf.mxu0
      %v716 = vpop.f32.mrf.mxu0
      %717 = vdwg.mxu0
      %718 = vrot.lane.b32.xlu0 %v220, 120
      %v719 = vpop.permute.xlu0 %718
      %v721 = vsel %vm588, %v662, 0
      %v724 = vsel %vm674, %v719, 0
      %726 = vmatprep.subr.bf16.mxu0 0
      %727 = vmatpush1.bf16.msra.mxu0 0
      %728 = vmatprep.subr.bf16.mxu0 0
      %729 = vmatpush1.bf16.msra.mxu0 0
      %730 = vmatprep.subr.bf16.mxu0 0
      %731 = vmatpush1.bf16.msra.mxu0 0
      %732 = vmatprep.subr.bf16.mxu0 0
      %733 = vmatpush1.bf16.msra.mxu0 0
      %734 = vmatprep.subr.bf16.mxu0 0
      %735 = vmatpush1.bf16.msra.mxu0 0
      %736 = vmatprep.subr.bf16.mxu0 0
      %737 = vmatpush1.bf16.msra.mxu0 0
      %738 = vmatprep.subr.bf16.mxu0 0
      %739 = vmatpush1.bf16.msra.mxu0 0
      %740 = vmatprep.subr.bf16.mxu0 0
      %741 = vmatpush1.bf16.msra.mxu0 %v724
      %742 = vmatprep.subr.bf16.mxu0 0
      %743 = vmatpush2.bf16.msra.mxu0 0
      %744 = vmatprep.subr.bf16.mxu0 0
      %745 = vmatpush2.bf16.msra.mxu0 0
      %746 = vmatprep.subr.bf16.mxu0 0
      %747 = vmatpush2.bf16.msra.mxu0 0
      %748 = vmatprep.subr.bf16.mxu0 0
      %749 = vmatpush2.bf16.msra.mxu0 0
      %750 = vmatprep.subr.bf16.mxu0 0
      %751 = vmatpush2.bf16.msra.mxu0 0
      %752 = vmatprep.subr.bf16.mxu0 0
      %753 = vmatpush2.bf16.msra.mxu0 0
      %754 = vmatprep.subr.bf16.mxu0 0
      %755 = vmatpush2.bf16.msra.mxu0 0
      %756 = vmatprep.subr.bf16.mxu0 0
      %757 = vmatpush2.bf16.msra.mxu0 0
      %758 = vmatprep.mubr.bf16.mxu0 0
      %759 = vmatmul.mubr.bf16.gmra.mxu0 %v721
      %v760 = vpop.f32.mrf.mxu0
      %v761 = vadd.f32 0.0, %v760
      %v762 = vpop.f32.mrf.mxu0
      %v763 = vpop.f32.mrf.mxu0
      %v764 = vpop.f32.mrf.mxu0
      %765 = vdwg.mxu0
      %766 = vrot.lane.b32.xlu0 %v271, 120
      %v767 = vpop.permute.xlu0 %766
      %v769 = vsel %vm588, %v663, 0
      %v772 = vsel %vm674, %v767, 0
      %774 = vmatprep.subr.bf16.mxu0 0
      %775 = vmatpush1.bf16.msra.mxu0 0
      %776 = vmatprep.subr.bf16.mxu0 0
      %777 = vmatpush1.bf16.msra.mxu0 0
      %778 = vmatprep.subr.bf16.mxu0 0
      %779 = vmatpush1.bf16.msra.mxu0 0
      %780 = vmatprep.subr.bf16.mxu0 0
      %781 = vmatpush1.bf16.msra.mxu0 0
      %782 = vmatprep.subr.bf16.mxu0 0
      %783 = vmatpush1.bf16.msra.mxu0 0
      %784 = vmatprep.subr.bf16.mxu0 0
      %785 = vmatpush1.bf16.msra.mxu0 0
      %786 = vmatprep.subr.bf16.mxu0 0
      %787 = vmatpush1.bf16.msra.mxu0 0
      %788 = vmatprep.subr.bf16.mxu0 0
      %789 = vmatpush1.bf16.msra.mxu0 %v772
      %790 = vmatprep.subr.bf16.mxu0 0
      %791 = vmatpush2.bf16.msra.mxu0 0
      %792 = vmatprep.subr.bf16.mxu0 0
      %793 = vmatpush2.bf16.msra.mxu0 0
      %794 = vmatprep.subr.bf16.mxu0 0
      %795 = vmatpush2.bf16.msra.mxu0 0
      %796 = vmatprep.subr.bf16.mxu0 0
      %797 = vmatpush2.bf16.msra.mxu0 0
      %798 = vmatprep.subr.bf16.mxu0 0
      %799 = vmatpush2.bf16.msra.mxu0 0
      %800 = vmatprep.subr.bf16.mxu0 0
      %801 = vmatpush2.bf16.msra.mxu0 0
      %802 = vmatprep.subr.bf16.mxu0 0
      %803 = vmatpush2.bf16.msra.mxu0 0
      %804 = vmatprep.subr.bf16.mxu0 0
      %805 = vmatpush2.bf16.msra.mxu0 0
      %806 = vmatprep.mubr.bf16.mxu0 0
      %807 = vmatmul.mubr.bf16.gmra.mxu0 %v769
      %v808 = vpop.f32.mrf.mxu0
      %v809 = vadd.f32 0.0, %v808
      %v810 = vpop.f32.mrf.mxu0
      %v811 = vpop.f32.mrf.mxu0
      %v812 = vpop.f32.mrf.mxu0
      %813 = vdwg.mxu0
      %814 = vrot.lane.b32.xlu0 %v322, 120
      %v815 = vpop.permute.xlu0 %814
      %v817 = vsel %vm588, %v664, 0
      %v820 = vsel %vm674, %v815, 0
      %822 = vmatprep.subr.bf16.mxu0 0
      %823 = vmatpush1.bf16.msra.mxu0 0
      %824 = vmatprep.subr.bf16.mxu0 0
      %825 = vmatpush1.bf16.msra.mxu0 0
      %826 = vmatprep.subr.bf16.mxu0 0
      %827 = vmatpush1.bf16.msra.mxu0 0
      %828 = vmatprep.subr.bf16.mxu0 0
      %829 = vmatpush1.bf16.msra.mxu0 0
      %830 = vmatprep.subr.bf16.mxu0 0
      %831 = vmatpush1.bf16.msra.mxu0 0
      %832 = vmatprep.subr.bf16.mxu0 0
      %833 = vmatpush1.bf16.msra.mxu0 0
      %834 = vmatprep.subr.bf16.mxu0 0
      %835 = vmatpush1.bf16.msra.mxu0 0
      %836 = vmatprep.subr.bf16.mxu0 0
      %837 = vmatpush1.bf16.msra.mxu0 %v820
      %838 = vmatprep.subr.bf16.mxu0 0
      %839 = vmatpush2.bf16.msra.mxu0 0
      %840 = vmatprep.subr.bf16.mxu0 0
      %841 = vmatpush2.bf16.msra.mxu0 0
      %842 = vmatprep.subr.bf16.mxu0 0
      %843 = vmatpush2.bf16.msra.mxu0 0
      %844 = vmatprep.subr.bf16.mxu0 0
      %845 = vmatpush2.bf16.msra.mxu0 0
      %846 = vmatprep.subr.bf16.mxu0 0
      %847 = vmatpush2.bf16.msra.mxu0 0
      %848 = vmatprep.subr.bf16.mxu0 0
      %849 = vmatpush2.bf16.msra.mxu0 0
      %850 = vmatprep.subr.bf16.mxu0 0
      %851 = vmatpush2.bf16.msra.mxu0 0
      %852 = vmatprep.subr.bf16.mxu0 0
      %853 = vmatpush2.bf16.msra.mxu0 0
      %854 = vmatprep.mubr.bf16.mxu0 0
      %855 = vmatmul.mubr.bf16.gmra.mxu0 %v817
      %v856 = vpop.f32.mrf.mxu0
      %v857 = vadd.f32 0.0, %v856
      %v858 = vpop.f32.mrf.mxu0
      %v859 = vpop.f32.mrf.mxu0
      %v860 = vpop.f32.mrf.mxu0
      %861 = vdwg.mxu0
      %862 = vrot.lane.b32.xlu0 %v373, 120
      %v863 = vpop.permute.xlu0 %862
      %v865 = vsel %vm588, %v665, 0
      %v868 = vsel %vm674, %v863, 0
      %870 = vmatprep.subr.bf16.mxu0 0
      %871 = vmatpush1.bf16.msra.mxu0 0
      %872 = vmatprep.subr.bf16.mxu0 0
      %873 = vmatpush1.bf16.msra.mxu0 0
      %874 = vmatprep.subr.bf16.mxu0 0
      %875 = vmatpush1.bf16.msra.mxu0 0
      %876 = vmatprep.subr.bf16.mxu0 0
      %877 = vmatpush1.bf16.msra.mxu0 0
      %878 = vmatprep.subr.bf16.mxu0 0
      %879 = vmatpush1.bf16.msra.mxu0 0
      %880 = vmatprep.subr.bf16.mxu0 0
      %881 = vmatpush1.bf16.msra.mxu0 0
      %882 = vmatprep.subr.bf16.mxu0 0
      %883 = vmatpush1.bf16.msra.mxu0 0
      %884 = vmatprep.subr.bf16.mxu0 0
      %885 = vmatpush1.bf16.msra.mxu0 %v868
      %886 = vmatprep.subr.bf16.mxu0 0
      %887 = vmatpush2.bf16.msra.mxu0 0
      %888 = vmatprep.subr.bf16.mxu0 0
      %889 = vmatpush2.bf16.msra.mxu0 0
      %890 = vmatprep.subr.bf16.mxu0 0
      %891 = vmatpush2.bf16.msra.mxu0 0
      %892 = vmatprep.subr.bf16.mxu0 0
      %893 = vmatpush2.bf16.msra.mxu0 0
      %894 = vmatprep.subr.bf16.mxu0 0
      %895 = vmatpush2.bf16.msra.mxu0 0
      %896 = vmatprep.subr.bf16.mxu0 0
      %897 = vmatpush2.bf16.msra.mxu0 0
      %898 = vmatprep.subr.bf16.mxu0 0
      %899 = vmatpush2.bf16.msra.mxu0 0
      %900 = vmatprep.subr.bf16.mxu0 0
      %901 = vmatpush2.bf16.msra.mxu0 0
      %902 = vmatprep.mubr.bf16.mxu0 0
      %903 = vmatmul.mubr.bf16.gmra.mxu0 %v865
      %v904 = vpop.f32.mrf.mxu0
      %v905 = vadd.f32 0.0, %v904
      %v906 = vpop.f32.mrf.mxu0
      %v907 = vpop.f32.mrf.mxu0
      %v908 = vpop.f32.mrf.mxu0
      %909 = vdwg.mxu0
      %910 = vrot.lane.b32.xlu0 %v424, 120
      %v911 = vpop.permute.xlu0 %910
      %v913 = vsel %vm588, %v666, 0
      %v916 = vsel %vm674, %v911, 0
      %918 = vmatprep.subr.bf16.mxu0 0
      %919 = vmatpush1.bf16.msra.mxu0 0
      %920 = vmatprep.subr.bf16.mxu0 0
      %921 = vmatpush1.bf16.msra.mxu0 0
      %922 = vmatprep.subr.bf16.mxu0 0
      %923 = vmatpush1.bf16.msra.mxu0 0
      %924 = vmatprep.subr.bf16.mxu0 0
      %925 = vmatpush1.bf16.msra.mxu0 0
      %926 = vmatprep.subr.bf16.mxu0 0
      %927 = vmatpush1.bf16.msra.mxu0 0
      %928 = vmatprep.subr.bf16.mxu0 0
      %929 = vmatpush1.bf16.msra.mxu0 0
      %930 = vmatprep.subr.bf16.mxu0 0
      %931 = vmatpush1.bf16.msra.mxu0 0
      %932 = vmatprep.subr.bf16.mxu0 0
      %933 = vmatpush1.bf16.msra.mxu0 %v916
      %934 = vmatprep.subr.bf16.mxu0 0
      %935 = vmatpush2.bf16.msra.mxu0 0
      %936 = vmatprep.subr.bf16.mxu0 0
      %937 = vmatpush2.bf16.msra.mxu0 0
      %938 = vmatprep.subr.bf16.mxu0 0
      %939 = vmatpush2.bf16.msra.mxu0 0
      %940 = vmatprep.subr.bf16.mxu0 0
      %941 = vmatpush2.bf16.msra.mxu0 0
      %942 = vmatprep.subr.bf16.mxu0 0
      %943 = vmatpush2.bf16.msra.mxu0 0
      %944 = vmatprep.subr.bf16.mxu0 0
      %945 = vmatpush2.bf16.msra.mxu0 0
      %946 = vmatprep.subr.bf16.mxu0 0
      %947 = vmatpush2.bf16.msra.mxu0 0
      %948 = vmatprep.subr.bf16.mxu0 0
      %949 = vmatpush2.bf16.msra.mxu0 0
      %950 = vmatprep.mubr.bf16.mxu0 0
      %951 = vmatmul.mubr.bf16.gmra.mxu0 %v913
      %v952 = vpop.f32.mrf.mxu0
      %v953 = vadd.f32 0.0, %v952
      %v954 = vpop.f32.mrf.mxu0
      %v955 = vpop.f32.mrf.mxu0
      %v956 = vpop.f32.mrf.mxu0
      %957 = vdwg.mxu0
      %958 = vrot.lane.b32.xlu0 %v475, 120
      %v959 = vpop.permute.xlu0 %958
      %v961 = vsel %vm588, %v667, 0
      %v964 = vsel %vm674, %v959, 0
      %966 = vmatprep.subr.bf16.mxu0 0
      %967 = vmatpush1.bf16.msra.mxu0 0
      %968 = vmatprep.subr.bf16.mxu0 0
      %969 = vmatpush1.bf16.msra.mxu0 0
      %970 = vmatprep.subr.bf16.mxu0 0
      %971 = vmatpush1.bf16.msra.mxu0 0
      %972 = vmatprep.subr.bf16.mxu0 0
      %973 = vmatpush1.bf16.msra.mxu0 0
      %974 = vmatprep.subr.bf16.mxu0 0
      %975 = vmatpush1.bf16.msra.mxu0 0
      %976 = vmatprep.subr.bf16.mxu0 0
      %977 = vmatpush1.bf16.msra.mxu0 0
      %978 = vmatprep.subr.bf16.mxu0 0
      %979 = vmatpush1.bf16.msra.mxu0 0
      %980 = vmatprep.subr.bf16.mxu0 0
      %981 = vmatpush1.bf16.msra.mxu0 %v964
      %982 = vmatprep.subr.bf16.mxu0 0
      %983 = vmatpush2.bf16.msra.mxu0 0
      %984 = vmatprep.subr.bf16.mxu0 0
      %985 = vmatpush2.bf16.msra.mxu0 0
      %986 = vmatprep.subr.bf16.mxu0 0
      %987 = vmatpush2.bf16.msra.mxu0 0
      %988 = vmatprep.subr.bf16.mxu0 0
      %989 = vmatpush2.bf16.msra.mxu0 0
      %990 = vmatprep.subr.bf16.mxu0 0
      %991 = vmatpush2.bf16.msra.mxu0 0
      %992 = vmatprep.subr.bf16.mxu0 0
      %993 = vmatpush2.bf16.msra.mxu0 0
      %994 = vmatprep.subr.bf16.mxu0 0
      %995 = vmatpush2.bf16.msra.mxu0 0
      %996 = vmatprep.subr.bf16.mxu0 0
      %997 = vmatpush2.bf16.msra.mxu0 0
      %998 = vmatprep.mubr.bf16.mxu0 0
      %999 = vmatmul.mubr.bf16.gmra.mxu0 %v961
      %v1000 = vpop.f32.mrf.mxu0
      %v1001 = vadd.f32 0.0, %v1000
      %v1002 = vpop.f32.mrf.mxu0
      %v1003 = vpop.f32.mrf.mxu0
      %v1004 = vpop.f32.mrf.mxu0
      %1005 = vdwg.mxu0
      %1006 = vrot.lane.b32.xlu0 %v526, 120
      %v1007 = vpop.permute.xlu0 %1006
      %v1009 = vsel %vm588, %v668, 0
      %v1012 = vsel %vm674, %v1007, 0
      %1014 = vmatprep.subr.bf16.mxu0 0
      %1015 = vmatpush1.bf16.msra.mxu0 0
      %1016 = vmatprep.subr.bf16.mxu0 0
      %1017 = vmatpush1.bf16.msra.mxu0 0
      %1018 = vmatprep.subr.bf16.mxu0 0
      %1019 = vmatpush1.bf16.msra.mxu0 0
      %1020 = vmatprep.subr.bf16.mxu0 0
      %1021 = vmatpush1.bf16.msra.mxu0 0
      %1022 = vmatprep.subr.bf16.mxu0 0
      %1023 = vmatpush1.bf16.msra.mxu0 0
      %1024 = vmatprep.subr.bf16.mxu0 0
      %1025 = vmatpush1.bf16.msra.mxu0 0
      %1026 = vmatprep.subr.bf16.mxu0 0
      %1027 = vmatpush1.bf16.msra.mxu0 0
      %1028 = vmatprep.subr.bf16.mxu0 0
      %1029 = vmatpush1.bf16.msra.mxu0 %v1012
      %1030 = vmatprep.subr.bf16.mxu0 0
      %1031 = vmatpush2.bf16.msra.mxu0 0
      %1032 = vmatprep.subr.bf16.mxu0 0
      %1033 = vmatpush2.bf16.msra.mxu0 0
      %1034 = vmatprep.subr.bf16.mxu0 0
      %1035 = vmatpush2.bf16.msra.mxu0 0
      %1036 = vmatprep.subr.bf16.mxu0 0
      %1037 = vmatpush2.bf16.msra.mxu0 0
      %1038 = vmatprep.subr.bf16.mxu0 0
      %1039 = vmatpush2.bf16.msra.mxu0 0
      %1040 = vmatprep.subr.bf16.mxu0 0
      %1041 = vmatpush2.bf16.msra.mxu0 0
      %1042 = vmatprep.subr.bf16.mxu0 0
      %1043 = vmatpush2.bf16.msra.mxu0 0
      %1044 = vmatprep.subr.bf16.mxu0 0
      %1045 = vmatpush2.bf16.msra.mxu0 0
      %1046 = vmatprep.mubr.bf16.mxu0 0
      %1047 = vmatmul.mubr.bf16.gmra.mxu0 %v1009
      %v1048 = vpop.f32.mrf.mxu0
      %v1049 = vadd.f32 0.0, %v1048
      %v1050 = vpop.f32.mrf.mxu0
      %v1051 = vpop.f32.mrf.mxu0
      %v1052 = vpop.f32.mrf.mxu0
      %1053 = vdwg.mxu0
      %vm1054 = vcmask 261120
      %1055 = vst.msk [vmem:[%s151] sm:$0xff] %vm1054, %v713
      %1056 = vst.msk [vmem:[%s151 + $0x8] sm:$0xff] %vm1054, %v761
      %1057 = vst.msk [vmem:[%s151 + $0x10] sm:$0xff] %vm1054, %v809
      %1058 = vst.msk [vmem:[%s151 + $0x18] sm:$0xff] %vm1054, %v857
      %1059 = vst.msk [vmem:[%s151 + $0x20] sm:$0xff] %vm1054, %v905
      %1060 = vst.msk [vmem:[%s151 + $0x28] sm:$0xff] %vm1054, %v953
      %1061 = vst.msk [vmem:[%s151 + $0x30] sm:$0xff] %vm1054, %v1001
      %1062 = vst.msk [vmem:[%s151 + $0x38] sm:$0xff] %vm1054, %v1049
      %v1071 = vlaneseq
      %v1072 = vshrl.u32 %v1071, 7
      %v1073 = vsub.s32 %v578, %v1072
      %v1074 = vrot.slane %v591, %v1073
      %v1075 = vlaneseq
      %v1076 = vshrl.u32 %v1075, 7
      %v1077 = vsub.s32 %v578, %v1076
      %v1078 = vrot.slane %v594, %v1077
      %v1079 = vlaneseq
      %v1080 = vshrl.u32 %v1079, 7
      %v1081 = vsub.s32 %v578, %v1080
      %v1082 = vrot.slane %v597, %v1081
      %v1083 = vlaneseq
      %v1084 = vshrl.u32 %v1083, 7
      %v1085 = vsub.s32 %v578, %v1084
      %v1086 = vrot.slane %v600, %v1085
      %v1087 = vlaneseq
      %v1088 = vshrl.u32 %v1087, 7
      %v1089 = vsub.s32 %v578, %v1088
      %v1090 = vrot.slane %v603, %v1089
      %v1091 = vlaneseq
      %v1092 = vshrl.u32 %v1091, 7
      %v1093 = vsub.s32 %v578, %v1092
      %v1094 = vrot.slane %v606, %v1093
      %v1095 = vlaneseq
      %v1096 = vshrl.u32 %v1095, 7
      %v1097 = vsub.s32 %v578, %v1096
      %v1098 = vrot.slane %v609, %v1097
      %v1099 = vlaneseq
      %v1100 = vshrl.u32 %v1099, 7
      %v1101 = vsub.s32 %v578, %v1100
      %v1102 = vrot.slane %v612, %v1101
      %vm1103 = vcmask 1041409
      %v1104 = vsel %vm1103, %v1078, %v1074
      %vm1105 = vcmask 1042434
      %v1106 = vsel %vm1105, %v1082, %v1104
      %vm1107 = vcmask 1043459
      %v1108 = vsel %vm1107, %v1086, %v1106
      %vm1109 = vcmask 1044484
      %v1110 = vsel %vm1109, %v1090, %v1108
      %vm1111 = vcmask 1045509
      %v1112 = vsel %vm1111, %v1094, %v1110
      %vm1113 = vcmask 1046534
      %v1114 = vsel %vm1113, %v1098, %v1112
      %vm1115 = vcmask 1047559
      %v1116 = vsel %vm1115, %v1102, %v1114
      %1118 = vst.msk [vmem:[%s156] sm:$0xff] %vm588, %v1116
      %v1127 = vlaneseq
      %v1128 = vshrl.u32 %v1127, 7
      %v1129 = vsub.s32 %v578, %v1128
      %v1130 = vrot.slane %v639, %v1129
      %v1131 = vlaneseq
      %v1132 = vshrl.u32 %v1131, 7
      %v1133 = vsub.s32 %v578, %v1132
      %v1134 = vrot.slane %v642, %v1133
      %v1135 = vlaneseq
      %v1136 = vshrl.u32 %v1135, 7
      %v1137 = vsub.s32 %v578, %v1136
      %v1138 = vrot.slane %v645, %v1137
      %v1139 = vlaneseq
      %v1140 = vshrl.u32 %v1139, 7
      %v1141 = vsub.s32 %v578, %v1140
      %v1142 = vrot.slane %v648, %v1141
      %v1143 = vlaneseq
      %v1144 = vshrl.u32 %v1143, 7
      %v1145 = vsub.s32 %v578, %v1144
      %v1146 = vrot.slane %v651, %v1145
      %v1147 = vlaneseq
      %v1148 = vshrl.u32 %v1147, 7
      %v1149 = vsub.s32 %v578, %v1148
      %v1150 = vrot.slane %v654, %v1149
      %v1151 = vlaneseq
      %v1152 = vshrl.u32 %v1151, 7
      %v1153 = vsub.s32 %v578, %v1152
      %v1154 = vrot.slane %v657, %v1153
      %v1155 = vlaneseq
      %v1156 = vshrl.u32 %v1155, 7
      %v1157 = vsub.s32 %v578, %v1156
      %v1158 = vrot.slane %v660, %v1157
      %v1159 = vsel %vm1103, %v1134, %v1130
      %v1160 = vsel %vm1105, %v1138, %v1159
      %v1161 = vsel %vm1107, %v1142, %v1160
      %v1162 = vsel %vm1109, %v1146, %v1161
      %v1163 = vsel %vm1111, %v1150, %v1162
      %v1164 = vsel %vm1113, %v1154, %v1163
      %v1165 = vsel %vm1115, %v1158, %v1164
      %s1167 = scalar_lea.vmem %s156, 8
      %1168 = vst.msk [vmem:[%s1167] sm:$0xff] %vm588, %v1165
      %p1169 = scmp.lt.s32.totalorder %s14, 1
      %s1170 = scalar_select %p1169, %s14, 1
      %s1171 = smul.addr %s1170, 8
      %s1172 = smul.addr %s1171, 8
      %s1173 = scalar_lea.vmem %s1, %s1172
      %p1174 = scmp.lt.s32.totalorder %s14, 1
      %s1175 = scalar_select %p1174, %s14, 1
      %s1176 = smul.addr %s1175, 2
      %s1177 = smul.addr %s1176, 8
      %s1178 = scalar_lea.vmem %s2, %s1177
      // Predicated region
      $region25: #{stage_attention_forward.24} parent=23 // pred_check
        %p1179 = pneg %p58
      $region26: #{stage_attention_forward.24} parent=23 // pred_check_branch
        %1181 = sbr.rel (%p1179) target = $region28
      $region27: #{stage_attention_forward.24} parent=23 // pred_region
        _
      $region28: #{stage_attention_forward.24} parent=23 // pred_fallthru
        _
      // Predicated region
      $region29: #{stage_attention_forward.24} parent=23 // pred_check
        %p1182 = pneg %p84
      $region30: #{stage_attention_forward.24} parent=23 // pred_check_branch
        %1184 = sbr.rel (%p1182) target = $region32
      $region31: #{stage_attention_forward.24} parent=23 // pred_region
        _
      $region32: #{stage_attention_forward.24} parent=23 // pred_fallthru
        _
    $region24: #{stage_attention_forward.24} parent=5 // pred_fallthru
      _
    %p1185 = scmp.le.s32.totalorder 2, %s9
    // Predicated region
    $region33: #{stage_attention_forward.24} parent=5 // pred_check
      %p1186 = pneg %p1185
    $region34: #{stage_attention_forward.24} parent=5 // pred_check_branch
      %1188 = sbr.rel (%p1186) target = $region36
    $region35: #{stage_attention_forward.24} parent=5 // pred_region
      %s1189 = ssub.s32 %s9, 2
      // Predicated region
      $region37: #{stage_attention_forward.24} parent=35 // pred_check
        %p1190 = pneg %p64
      $region38: #{stage_attention_forward.24} parent=35 // pred_check_branch
        %1192 = sbr.rel (%p1190) target = $region40
      $region39: #{stage_attention_forward.24} parent=35 // pred_region
        %p1193 = scmp.lt.s32.totalorder %s15, 1
        %s1194 = scalar_select %p1193, %s15, 1
        %s1195 = smul.addr %s1194, 8
        %s1196 = smul.addr %s1195, 8
        %s1197 = scalar_lea.vmem %s1, %s1196
      $region40: #{stage_attention_forward.24} parent=35 // pred_fallthru
        _
      // Predicated region
      $region41: #{stage_attention_forward.24} parent=35 // pred_check
        %p1198 = pneg %p90
      $region42: #{stage_attention_forward.24} parent=35 // pred_check_branch
        %1200 = sbr.rel (%p1198) target = $region44
      $region43: #{stage_attention_forward.24} parent=35 // pred_region
        %p1201 = scmp.lt.s32.totalorder %s15, 1
        %s1202 = scalar_select %p1201, %s15, 1
        %s1203 = smul.addr %s1202, 2
        %s1204 = smul.addr %s1203, 8
        %s1205 = scalar_lea.vmem %s2, %s1204
      $region44: #{stage_attention_forward.24} parent=35 // pred_fallthru
        _
    $region36: #{stage_attention_forward.24} parent=5 // pred_fallthru
      _
  $region6: #{stage_attention_forward.24} parent=0 // loop_footer
    %s13 = sadd.s32 1, %s9
  $region7: #{stage_attention_forward.24} parent=0 // loop_footer_branch
    %8 = sbr.rel target = $region3
  $region8: #{stage_attention_forward.24} parent=0 // loop_exit
    _

// kernel: stage_attention_forward.26
$region0: #{stage_attention_forward.26}
  #allocation0 [shape = 'u32[]', space=smem, size = 0x4, offset = 0x4, fixed_abs, tag = 'smem constant byte address 0x4 - core index']
  #allocation1 [shape = 'u32[144,128]{1,0:T(1,128)}', space=vmem, size = 0x12000, scoped, tag = 'internal scratch']
  %s0 = inlined_call_operand.vmem [shape: f32[2,8,8,32], index: 0, kind: input, shape index: {}]
  %s1 = inlined_call_operand.vmem [shape: f32[2,8,8,32], index: 1, kind: output, shape index: {}]
  %s2 = sld [smem:[#allocation0]]
  $region37: #{stage_attention_forward.26} parent=0
    _
  %s4 = ssub.s32 1, %s2
  %s5 = scalar_select 0, %s4, %s2
  loop: start=0, step=1, limit=4
  $region2: #{stage_attention_forward.26} parent=0 // loop_pre_header
    _
  $region3: #{stage_attention_forward.26} parent=0 // loop_header
    %s7 = sphi 0, %s11
    %p8 = scmp.ge.s32.totalorder %s7, 4
    %s17 = sphi 0, %s19
    %s20 = sphi 0, %s17
    %s21 = sphi 0, %s20
    %s37 = sphi 0, %s21
    %s43 = sphi 0, %s45
    %s46 = sphi 0, %s43
    %s47 = sphi 0, %s46
    %s63 = sphi 0, %s47
  $region4: #{stage_attention_forward.26} parent=0 // loop_header_branch
    %10 = sbr.rel (%p8) target = $region8
  $region5: #{stage_attention_forward.26} parent=0 // loop_body
    %s12 = ssub.s32 %s7, 1
    %s13 = ssub.s32 %s7, 2
    %s14 = sadd.s32 %s7, 1
    %s15 = ssub.s32 %s7, %s14
    %p16 = scmp.eq.s32.totalorder %s15, 0
    %s18 = sadd.s32 %s17, 1
    %s19 = scalar_select %p16, %s17, %s18
    %p22 = pneg %p16
    %p23 = scmp.eq.s32.totalorder %s7, 1
    %p24 = por %p22, %p23
    %p25 = scmp.ne.s32.totalorder %s17, %s20
    %p26 = scmp.eq.s32.totalorder %s7, 0
    %p27 = por %p25, %p26
    %p28 = scmp.ne.s32.totalorder %s17, %s20
    %p29 = scmp.eq.s32.totalorder %s12, 1
    %p30 = por %p28, %p29
    %p31 = scmp.ne.s32.totalorder %s20, %s21
    %p32 = scmp.eq.s32.totalorder %s12, 0
    %p33 = por %p31, %p32
    %p34 = scmp.ne.s32.totalorder %s20, %s21
    %p35 = scmp.eq.s32.totalorder %s13, 1
    %p36 = por %p34, %p35
    %p38 = scmp.ne.s32.totalorder %s21, %s37
    %p39 = scmp.eq.s32.totalorder %s13, 0
    %p40 = por %p38, %p39
    %s41 = ssub.s32 %s7, %s14
    %p42 = scmp.eq.s32.totalorder %s41, 0
    %s44 = sadd.s32 %s43, 1
    %s45 = scalar_select %p42, %s43, %s44
    %p48 = pneg %p42
    %p49 = scmp.eq.s32.totalorder %s7, 1
    %p50 = por %p48, %p49
    %p51 = scmp.ne.s32.totalorder %s43, %s46
    %p52 = scmp.eq.s32.totalorder %s7, 0
    %p53 = por %p51, %p52
    %p54 = scmp.ne.s32.totalorder %s43, %s46
    %p55 = scmp.eq.s32.totalorder %s12, 1
    %p56 = por %p54, %p55
    %p57 = scmp.ne.s32.totalorder %s46, %s47
    %p58 = scmp.eq.s32.totalorder %s12, 0
    %p59 = por %p57, %p58
    %p60 = scmp.ne.s32.totalorder %s46, %s47
    %p61 = scmp.eq.s32.totalorder %s13, 1
    %p62 = por %p60, %p61
    %p64 = scmp.ne.s32.totalorder %s47, %s63
    %p65 = scmp.eq.s32.totalorder %s13, 0
    %p66 = por %p64, %p65
    %p67 = scmp.le.s32.totalorder 1, %s7
    %p68 = scmp.lt.s32.totalorder %s7, 3
    %p69 = pnand %p67, %p68
    %p70 = pneg %p69
    // Predicated region
    $region9: #{stage_attention_forward.26} parent=5 // pred_check
      _
    $region10: #{stage_attention_forward.26} parent=5 // pred_check_branch
      %72 = sbr.rel (%p69) target = $region12
    $region11: #{stage_attention_forward.26} parent=5 // pred_region
      %s73 = ssub.s32 %s7, 1
    $region12: #{stage_attention_forward.26} parent=5 // pred_fallthru
      _
    %p74 = scmp.lt.s32.totalorder %s7, 2
    // Predicated region
    $region13: #{stage_attention_forward.26} parent=5 // pred_check
      %p75 = pneg %p74
    $region14: #{stage_attention_forward.26} parent=5 // pred_check_branch
      %77 = sbr.rel (%p75) target = $region16
    $region15: #{stage_attention_forward.26} parent=5 // pred_region
      // Predicated region
      $region17: #{stage_attention_forward.26} parent=15 // pred_check
        %p78 = pneg %p27
      $region18: #{stage_attention_forward.26} parent=15 // pred_check_branch
        %80 = sbr.rel (%p78) target = $region20
      $region19: #{stage_attention_forward.26} parent=15 // pred_region
        %p81 = scmp.lt.s32.totalorder %s7, 1
        %s82 = scalar_select %p81, %s7, 1
        %s83 = smul.addr %s82, 8
        %s84 = smul.addr %s83, 8
        %s85 = scalar_lea.vmem %s0, %s84
      $region20: #{stage_attention_forward.26} parent=15 // pred_fallthru
        _
    $region16: #{stage_attention_forward.26} parent=5 // pred_fallthru
      _
    %p86 = scmp.le.s32.totalorder 1, %s7
    %p87 = scmp.lt.s32.totalorder %s7, 3
    %p88 = pnand %p86, %p87
    %p89 = pneg %p88
    // Predicated region
    $region21: #{stage_attention_forward.26} parent=5 // pred_check
      _
    $region22: #{stage_attention_forward.26} parent=5 // pred_check_branch
      %91 = sbr.rel (%p88) target = $region24
    $region23: #{stage_attention_forward.26} parent=5 // pred_region
      %s92 = ssub.s32 %s7, 1
      %p93 = scmp.lt.s32.totalorder %s12, 1
      %s94 = scalar_select %p93, %s12, 1
      %s95 = smul.addr %s94, 8
      %s96 = smul.addr %s95, 8
      %s97 = scalar_lea.vmem %s0, %s96
      %p98 = pneg %p33
      %p99 = pneg %p30
      %p100 = pneg %p59
      %p101 = pneg %p56
      %p102 = scmp.lt.s32.totalorder %s12, 1
      %s103 = scalar_select %p102, %s12, 1
      %s104 = smul.addr %s103, 8
      %s105 = smul.addr %s104, 8
      %s106 = scalar_lea.vmem %s1, %s105
      %p107 = scmp.lt.s32.totalorder %s12, 1
      %s108 = scalar_select %p107, %s12, 1
      %s109 = smul.addr %s108, 8
      %s110 = smul.addr %s109, 8
      %s111 = scalar_lea.vmem %s0, %s110
      %p112 = scmp.lt.s32.totalorder %s12, 1
      %s113 = scalar_select %p112, %s12, 1
      %s114 = smul.addr %s113, 8
      %s115 = smul.addr %s114, 8
      %s116 = scalar_lea.vmem %s1, %s115
      %v118 = vld [vmem:[%s111] sm:$0xff]
      %v119 = vld [vmem:[%s111 + $0x8] sm:$0xff]
      %v120 = vld [vmem:[%s111 + $0x10] sm:$0xff]
      %v121 = vld [vmem:[%s111 + $0x18] sm:$0xff]
      %v122 = vld [vmem:[%s111 + $0x20] sm:$0xff]
      %v123 = vld [vmem:[%s111 + $0x28] sm:$0xff]
      %v124 = vld [vmem:[%s111 + $0x30] sm:$0xff]
      %v125 = vld [vmem:[%s111 + $0x38] sm:$0xff]
      %v126 = vpack.c.bf16 %v119, %v118
      %v127 = vpack.c.bf16 %v121, %v120
      %v128 = vpack.c.bf16 %v123, %v122
      %v129 = vpack.c.bf16 %v125, %v124
      %130 = vxpose.xlu0.c.b16.start [1/8] %v126, 128
      %131 = vxpose.xlu0.c.b16.cont [2/8] %v127, 128
      %132 = vxpose.xlu0.c.b16.cont [3/8] %v128, 128
      %133 = vxpose.xlu0.c.b16.cont [4/8] %v129, 128
      %134 = vxpose.xlu0.c.b16.cont [5/8] 0, 128
      %135 = vxpose.xlu0.c.b16.cont [6/8] 0, 128
      %136 = vxpose.xlu0.c.b16.cont [7/8] 0, 128
      %137 = vxpose.xlu0.c.b16.end [8/8] 0, 128
      %v138 = vpop.trf.xlu0
      %v139 = vpop.trf.xlu0
      %v140 = vpop.trf.xlu0
      %v141 = vpop.trf.xlu0
      %v142 = vpop.trf.xlu0
      %v143 = vpop.trf.xlu0
      %v144 = vpop.trf.xlu0
      %v145 = vpop.trf.xlu0
      %vm146 = vcmask 523264
      %v148 = vsel %vm146, %v138, 0
      %v151 = vsel %vm146, %v139, 0
      %153 = vmatprep.subr.bf16.mxu0 0
      %154 = vmatpush1.bf16.msra.mxu0 0
      %155 = vmatprep.subr.bf16.mxu0 0
      %156 = vmatpush1.bf16.msra.mxu0 0
      %157 = vmatprep.subr.bf16.mxu0 0
      %158 = vmatpush1.bf16.msra.mxu0 0
      %159 = vmatprep.subr.bf16.mxu0 0
      %160 = vmatpush1.bf16.msra.mxu0 0
      %161 = vmatprep.subr.bf16.mxu0 0
      %162 = vmatpush1.bf16.msra.mxu0 %v129
      %163 = vmatprep.subr.bf16.mxu0 0
      %164 = vmatpush1.bf16.msra.mxu0 %v128
      %165 = vmatprep.subr.bf16.mxu0 0
      %166 = vmatpush1.bf16.msra.mxu0 %v127
      %167 = vmatprep.subr.bf16.mxu0 0
      %168 = vmatpush1.bf16.msra.mxu0 %v126
      %169 = vmatprep.subr.bf16.mxu0 0
      %170 = vmatpush2.bf16.msra.mxu0 0
      %171 = vmatprep.subr.bf16.mxu0 0
      %172 = vmatpush2.bf16.msra.mxu0 0
      %173 = vmatprep.subr.bf16.mxu0 0
      %174 = vmatpush2.bf16.msra.mxu0 0
      %175 = vmatprep.subr.bf16.mxu0 0
      %176 = vmatpush2.bf16.msra.mxu0 0
      %177 = vmatprep.subr.bf16.mxu0 0
      %178 = vmatpush2.bf16.msra.mxu0 0
      %179 = vmatprep.subr.bf16.mxu0 0
      %180 = vmatpush2.bf16.msra.mxu0 0
      %181 = vmatprep.subr.bf16.mxu0 0
      %182 = vmatpush2.bf16.msra.mxu0 0
      %183 = vmatprep.subr.bf16.mxu0 0
      %184 = vmatpush2.bf16.msra.mxu0 0
      %185 = vmatprep.mubr.bf16.mxu0 0
      %186 = vmatmul.mubr.bf16.gmra.mxu0 %v148
      %v187 = vpop.f32.mrf.mxu0
      %v188 = vadd.f32 0.0, %v187
      %v189 = vpop.f32.mrf.mxu0
      %v190 = vpop.f32.mrf.mxu0
      %v191 = vadd.f32 0.0, %v190
      %v192 = vpop.f32.mrf.mxu0
      %193 = vmatprep.mubr.bf16.mxu0 0
      %194 = vmatmul.mubr.bf16.gmra.mxu0 %v151
      %v195 = vpop.f32.mrf.mxu0
      %v196 = vadd.f32 0.0, %v195
      %v197 = vpop.f32.mrf.mxu0
      %v198 = vpop.f32.mrf.mxu0
      %v199 = vadd.f32 0.0, %v198
      %v200 = vpop.f32.mrf.mxu0
      %201 = vdwg.mxu0
      %vm202 = vcmask 261120
      %v203 = vsel %vm202, %v188, -inf
      %204 = vmax.xlane.f32.xlu0 %v203
      %v205 = vpop.xlane.xlu0 %204
      %v206 = vsel %vm202, %v191, -inf
      %207 = vmax.xlane.f32.xlu0 %v206
      %v208 = vpop.xlane.xlu0 %207
      %v209 = vsel %vm202, %v196, -inf
      %210 = vmax.xlane.f32.xlu0 %v209
      %v211 = vpop.xlane.xlu0 %210
      %v212 = vsel %vm202, %v199, -inf
      %213 = vmax.xlane.f32.xlu0 %v212
      %v214 = vpop.xlane.xlu0 %213
      %v215 = vsub.f32 %v205, %v188
      %v216 = vsub.f32 %v208, %v191
      %v217 = vsub.f32 %v211, %v196
      %v218 = vsub.f32 %v214, %v199
      %v219 = vsel %vm202, %v215, -inf
      %220 = vmax.xlane.f32.xlu0 %v219
      %v221 = vpop.xlane.xlu0 %220
      %v222 = vsel %vm202, %v216, -inf
      %223 = vmax.xlane.f32.xlu0 %v222
      %v224 = vpop.xlane.xlu0 %223
      %v225 = vsel %vm202, %v217, -inf
      %226 = vmax.xlane.f32.xlu0 %v225
      %v227 = vpop.xlane.xlu0 %226
      %v228 = vsel %vm202, %v218, -inf
      %229 = vmax.xlane.f32.xlu0 %v228
      %v230 = vpop.xlane.xlu0 %229
      %v231 = vsub.f32 %v215, %v221
      %v232 = vsub.f32 %v216, %v224
      %v233 = vsub.f32 %v217, %v227
      %v234 = vsub.f32 %v218, %v230
      %v235 = vmul.f32 %v231, 1.442695
      %v236 = vpow.pop %v235
      %v237 = vmul.f32 %v232, 1.442695
      %v238 = vpow.pop %v237
      %v239 = vmul.f32 %v233, 1.442695
      %v240 = vpow.pop %v239
      %v241 = vmul.f32 %v234, 1.442695
      %v242 = vpow.pop %v241
      %v243 = vsel %vm202, %v236, 0.0
      %244 = vadd.xlane.f32.xlu0 %v243
      %v245 = vpop.xlane.xlu0 %244
      %v246 = vsel %vm202, %v238, 0.0
      %247 = vadd.xlane.f32.xlu0 %v246
      %v248 = vpop.xlane.xlu0 %247
      %v249 = vsel %vm202, %v240, 0.0
      %250 = vadd.xlane.f32.xlu0 %v249
      %v251 = vpop.xlane.xlu0 %250
      %v252 = vsel %vm202, %v242, 0.0
      %253 = vadd.xlane.f32.xlu0 %v252
      %v254 = vpop.xlane.xlu0 %253
      %v255 = vrcp.pop %v245
      %v256 = vrcp.pop %v248
      %v257 = vrcp.pop %v251
      %v258 = vrcp.pop %v254
      %v259 = vmul.f32 %v236, %v255
      %v260 = vmul.f32 %v238, %v256
      %v261 = vmul.f32 %v240, %v257
      %v262 = vmul.f32 %v242, %v258
      %v263 = vpack.c.bf16 %v260, %v259
      %v264 = vpack.c.bf16 %v262, %v261
      %v266 = vsel %vm202, %v126, 0
      %v269 = vsel %vm202, %v127, 0
      %v272 = vsel %vm202, %v128, 0
      %v275 = vsel %vm202, %v129, 0
      %v278 = vsel %vm202, %v263, 0
      %v281 = vsel %vm202, %v264, 0
      %283 = vmatprep.subr.bf16.mxu0 0
      %284 = vmatpush1.bf16.xpose.msra.mxu0 0
      %285 = vmatprep.subr.bf16.mxu0 0
      %286 = vmatpush1.bf16.xpose.msra.mxu0 0
      %287 = vmatprep.subr.bf16.mxu0 0
      %288 = vmatpush1.bf16.xpose.msra.mxu0 0
      %289 = vmatprep.subr.bf16.mxu0 0
      %290 = vmatpush1.bf16.xpose.msra.mxu0 0
      %291 = vmatprep.subr.bf16.mxu0 0
      %292 = vmatpush1.bf16.xpose.msra.mxu0 0
      %293 = vmatprep.subr.bf16.mxu0 0
      %294 = vmatpush1.bf16.xpose.msra.mxu0 0
      %295 = vmatprep.subr.bf16.mxu0 0
      %296 = vmatpush1.bf16.xpose.msra.mxu0 %v281
      %297 = vmatprep.subr.bf16.mxu0 0
      %298 = vmatpush1.bf16.xpose.msra.mxu0 %v278
      %299 = vmatprep.subr.bf16.mxu0 0
      %300 = vmatpush2.bf16.xpose.msra.mxu0 0
      %301 = vmatprep.subr.bf16.mxu0 0
      %302 = vmatpush2.bf16.xpose.msra.mxu0 0
      %303 = vmatprep.subr.bf16.mxu0 0
      %304 = vmatpush2.bf16.xpose.msra.mxu0 0
      %305 = vmatprep.subr.bf16.mxu0 0
      %306 = vmatpush2.bf16.xpose.msra.mxu0 0
      %307 = vmatprep.subr.bf16.mxu0 0
      %308 = vmatpush2.bf16.xpose.msra.mxu0 0
      %309 = vmatprep.subr.bf16.mxu0 0
      %310 = vmatpush2.bf16.xpose.msra.mxu0 0
      %311 = vmatprep.subr.bf16.mxu0 0
      %312 = vmatpush2.bf16.xpose.msra.mxu0 0
      %313 = vmatprep.subr.bf16.mxu0 0
      %314 = vmatpush2.bf16.xpose.msra.mxu0 0
      %315 = vmatprep.mubr.bf16.mxu0 0
      %316 = vmatmul.mubr.bf16.gmra.mxu0 %v266
      %v317 = vpop.f32.mrf.mxu0
      %v318 = vadd.f32 0.0, %v317
      %v319 = vpop.f32.mrf.mxu0
      %v320 = vpop.f32.mrf.mxu0
      %v321 = vadd.f32 0.0, %v320
      %v322 = vpop.f32.mrf.mxu0
      %323 = vmatprep.mubr.bf16.mxu0 0
      %324 = vmatmul.mubr.bf16.gmra.mxu0 %v269
      %v325 = vpop.f32.mrf.mxu0
      %v326 = vadd.f32 0.0, %v325
      %v327 = vpop.f32.mrf.mxu0
      %v328 = vpop.f32.mrf.mxu0
      %v329 = vadd.f32 0.0, %v328
      %v330 = vpop.f32.mrf.mxu0
      %331 = vmatprep.mubr.bf16.mxu0 0
      %332 = vmatmul.mubr.bf16.gmra.mxu0 %v272
      %v333 = vpop.f32.mrf.mxu0
      %v334 = vadd.f32 0.0, %v333
      %v335 = vpop.f32.mrf.mxu0
      %v336 = vpop.f32.mrf.mxu0
      %v337 = vadd.f32 0.0, %v336
      %v338 = vpop.f32.mrf.mxu0
      %339 = vmatprep.mubr.bf16.mxu0 0
      %340 = vmatmul.mubr.bf16.gmra.mxu0 %v275
      %v341 = vpop.f32.mrf.mxu0
      %v342 = vadd.f32 0.0, %v341
      %v343 = vpop.f32.mrf.mxu0
      %v344 = vpop.f32.mrf.mxu0
      %v345 = vadd.f32 0.0, %v344
      %v346 = vpop.f32.mrf.mxu0
      %347 = vdwg.mxu0
      %348 = vst.msk [vmem:[%s116] sm:$0xff] %vm202, %v318
      %349 = vst.msk [vmem:[%s116 + $0x8] sm:$0xff] %vm202, %v321
      %350 = vst.msk [vmem:[%s116 + $0x10] sm:$0xff] %vm202, %v326
      %351 = vst.msk [vmem:[%s116 + $0x18] sm:$0xff] %vm202, %v329
      %352 = vst.msk [vmem:[%s116 + $0x20] sm:$0xff] %vm202, %v334
      %353 = vst.msk [vmem:[%s116 + $0x28] sm:$0xff] %vm202, %v337
      %354 = vst.msk [vmem:[%s116 + $0x30] sm:$0xff] %vm202, %v342
      %355 = vst.msk [vmem:[%s116 + $0x38] sm:$0xff] %vm202, %v345
      %p356 = scmp.lt.s32.totalorder %s12, 1
      %s357 = scalar_select %p356, %s12, 1
      %s358 = smul.addr %s357, 8
      %s359 = smul.addr %s358, 8
      %s360 = scalar_lea.vmem %s1, %s359
      // Predicated region
      $region25: #{stage_attention_forward.26} parent=23 // pred_check
        %p361 = pneg %p56
      $region26: #{stage_attention_forward.26} parent=23 // pred_check_branch
        %363 = sbr.rel (%p361) target = $region28
      $region27: #{stage_attention_forward.26} parent=23 // pred_region
        _
      $region28: #{stage_attention_forward.26} parent=23 // pred_fallthru
        _
    $region24: #{stage_attention_forward.26} parent=5 // pred_fallthru
      _
    %p364 = scmp.le.s32.totalorder 2, %s7
    // Predicated region
    $region29: #{stage_attention_forward.26} parent=5 // pred_check
      %p365 = pneg %p364
    $region30: #{stage_attention_forward.26} parent=5 // pred_check_branch
      %367 = sbr.rel (%p365) target = $region32
    $region31: #{stage_attention_forward.26} parent=5 // pred_region
      %s368 = ssub.s32 %s7, 2
      // Predicated region
      $region33: #{stage_attention_forward.26} parent=31 // pred_check
        %p369 = pneg %p62
      $region34: #{stage_attention_forward.26} parent=31 // pred_check_branch
        %371 = sbr.rel (%p369) target = $region36
      $region35: #{stage_attention_forward.26} parent=31 // pred_region
        %p372 = scmp.lt.s32.totalorder %s13, 1
        %s373 = scalar_select %p372, %s13, 1
        %s374 = smul.addr %s373, 8
        %s375 = smul.addr %s374, 8
        %s376 = scalar_lea.vmem %s1, %s375
      $region36: #{stage_attention_forward.26} parent=31 // pred_fallthru
        _
    $region32: #{stage_attention_forward.26} parent=5 // pred_fallthru
      _
  $region6: #{stage_attention_forward.26} parent=0 // loop_footer
    %s11 = sadd.s32 1, %s7
  $region7: #{stage_attention_forward.26} parent=0 // loop_footer_branch
    %6 = sbr.rel target = $region3
  $region8: #{stage_attention_forward.26} parent=0 // loop_exit
    _

// kernel: stage_attention_forward.25
$region0: #{stage_attention_forward.25}
  #allocation0 [shape = 'u32[]', space=smem, size = 0x4, offset = 0x4, fixed_abs, tag = 'smem constant byte address 0x4 - core index']
  #allocation1 [shape = 'u32[144,128]{1,0:T(1,128)}', space=vmem, size = 0x12000, scoped, tag = 'internal scratch']
  #allocation2 [shape = 'f32[1]{0:T(128)S(6)}', space=smem, size = 0x200, scoped, tag = 'scoped memory for stage_attention_forward.25']
  %s0 = inlined_call_operand.vmem [shape: f32[2,8,8,32], index: 0, kind: input, shape index: {}]
  %s1 = inlined_call_operand.vmem [shape: bf16[2,8,8,40], index: 1, kind: input, shape index: {}]
  %s2 = inlined_call_operand.vmem [shape: f32[2,8,8,32], index: 2, kind: input, shape index: {}]
  %s3 = inlined_call_operand.vmem [shape: f32[2,2,8,8], index: 3, kind: input, shape index: {}]
  %s4 = inlined_call_operand.<no memory space> [shape: f32[1], index: 4, kind: input, shape index: {}]
  %s5 = inlined_call_operand.vmem [shape: f32[2,8,8,32], index: 5, kind: output, shape index: {}]
  %s6 = sld [smem:[#allocation0]]
  $region53: #{stage_attention_forward.25} parent=0
    _
  %s8 = ssub.s32 1, %s6
  %s9 = scalar_select 0, %s8, %s6
  %10 = sst [smem:[#allocation2]] %s4
  loop: start=0, step=1, limit=4
  $region2: #{stage_attention_forward.25} parent=0 // loop_pre_header
    _
  $region3: #{stage_attention_forward.25} parent=0 // loop_header
    %s12 = sphi 0, %s16
    %p13 = scmp.ge.s32.totalorder %s12, 4
    %s22 = sphi 0, %s24
    %s25 = sphi 0, %s22
    %s26 = sphi 0, %s25
    %s42 = sphi 0, %s26
    %s48 = sphi 0, %s50
    %s51 = sphi 0, %s48
    %s52 = sphi 0, %s51
    %s68 = sphi 0, %s52
    %s74 = sphi 0, %s76
    %s77 = sphi 0, %s74
    %s78 = sphi 0, %s77
    %s94 = sphi 0, %s78
    %s100 = sphi 0, %s102
    %s103 = sphi 0, %s100
    %s104 = sphi 0, %s103
    %s120 = sphi 0, %s104
    %s124 = sphi 0, %s124
    %s126 = sphi 0, %s124
    %s127 = sphi 0, %s126
    %s141 = sphi 0, %s127
    %s147 = sphi 0, %s149
    %s150 = sphi 0, %s147
    %s151 = sphi 0, %s150
    %s167 = sphi 0, %s151
  $region4: #{stage_attention_forward.25} parent=0 // loop_header_branch
    %15 = sbr.rel (%p13) target = $region8
  $region5: #{stage_attention_forward.25} parent=0 // loop_body
    %s17 = ssub.s32 %s12, 1
    %s18 = ssub.s32 %s12, 2
    %s19 = sadd.s32 %s12, 1
    %s20 = ssub.s32 %s12, %s19
    %p21 = scmp.eq.s32.totalorder %s20, 0
    %s23 = sadd.s32 %s22, 1
    %s24 = scalar_select %p21, %s22, %s23
    %p27 = pneg %p21
    %p28 = scmp.eq.s32.totalorder %s12, 1
    %p29 = por %p27, %p28
    %p30 = scmp.ne.s32.totalorder %s22, %s25
    %p31 = scmp.eq.s32.totalorder %s12, 0
    %p32 = por %p30, %p31
    %p33 = scmp.ne.s32.totalorder %s22, %s25
    %p34 = scmp.eq.s32.totalorder %s17, 1
    %p35 = por %p33, %p34
    %p36 = scmp.ne.s32.totalorder %s25, %s26
    %p37 = scmp.eq.s32.totalorder %s17, 0
    %p38 = por %p36, %p37
    %p39 = scmp.ne.s32.totalorder %s25, %s26
    %p40 = scmp.eq.s32.totalorder %s18, 1
    %p41 = por %p39, %p40
    %p43 = scmp.ne.s32.totalorder %s26, %s42
    %p44 = scmp.eq.s32.totalorder %s18, 0
    %p45 = por %p43, %p44
    %s46 = ssub.s32 %s12, %s19
    %p47 = scmp.eq.s32.totalorder %s46, 0
    %s49 = sadd.s32 %s48, 1
    %s50 = scalar_select %p47, %s48, %s49
    %p53 = pneg %p47
    %p54 = scmp.eq.s32.totalorder %s12, 1
    %p55 = por %p53, %p54
    %p56 = scmp.ne.s32.totalorder %s48, %s51
    %p57 = scmp.eq.s32.totalorder %s12, 0
    %p58 = por %p56, %p57
    %p59 = scmp.ne.s32.totalorder %s48, %s51
    %p60 = scmp.eq.s32.totalorder %s17, 1
    %p61 = por %p59, %p60
    %p62 = scmp.ne.s32.totalorder %s51, %s52
    %p63 = scmp.eq.s32.totalorder %s17, 0
    %p64 = por %p62, %p63
    %p65 = scmp.ne.s32.totalorder %s51, %s52
    %p66 = scmp.eq.s32.totalorder %s18, 1
    %p67 = por %p65, %p66
    %p69 = scmp.ne.s32.totalorder %s52, %s68
    %p70 = scmp.eq.s32.totalorder %s18, 0
    %p71 = por %p69, %p70
    %s72 = ssub.s32 %s12, %s19
    %p73 = scmp.eq.s32.totalorder %s72, 0
    %s75 = sadd.s32 %s74, 1
    %s76 = scalar_select %p73, %s74, %s75
    %p79 = pneg %p73
    %p80 = scmp.eq.s32.totalorder %s12, 1
    %p81 = por %p79, %p80
    %p82 = scmp.ne.s32.totalorder %s74, %s77
    %p83 = scmp.eq.s32.totalorder %s12, 0
    %p84 = por %p82, %p83
    %p85 = scmp.ne.s32.totalorder %s74, %s77
    %p86 = scmp.eq.s32.totalorder %s17, 1
    %p87 = por %p85, %p86
    %p88 = scmp.ne.s32.totalorder %s77, %s78
    %p89 = scmp.eq.s32.totalorder %s17, 0
    %p90 = por %p88, %p89
    %p91 = scmp.ne.s32.totalorder %s77, %s78
    %p92 = scmp.eq.s32.totalorder %s18, 1
    %p93 = por %p91, %p92
    %p95 = scmp.ne.s32.totalorder %s78, %s94
    %p96 = scmp.eq.s32.totalorder %s18, 0
    %p97 = por %p95, %p96
    %s98 = ssub.s32 %s12, %s19
    %p99 = scmp.eq.s32.totalorder %s98, 0
    %s101 = sadd.s32 %s100, 1
    %s102 = scalar_select %p99, %s100, %s101
    %p105 = pneg %p99
    %p106 = scmp.eq.s32.totalorder %s12, 1
    %p107 = por %p105, %p106
    %p108 = scmp.ne.s32.totalorder %s100, %s103
    %p109 = scmp.eq.s32.totalorder %s12, 0
    %p110 = por %p108, %p109
    %p111 = scmp.ne.s32.totalorder %s100, %s103
    %p112 = scmp.eq.s32.totalorder %s17, 1
    %p113 = por %p111, %p112
    %p114 = scmp.ne.s32.totalorder %s103, %s104
    %p115 = scmp.eq.s32.totalorder %s17, 0
    %p116 = por %p114, %p115
    %p117 = scmp.ne.s32.totalorder %s103, %s104
    %p118 = scmp.eq.s32.totalorder %s18, 1
    %p119 = por %p117, %p118
    %p121 = scmp.ne.s32.totalorder %s104, %s120
    %p122 = scmp.eq.s32.totalorder %s18, 0
    %p123 = por %p121, %p122
    %s125 = sadd.s32 %s124, 1
    %p128 = scmp.eq.s32.totalorder %s12, 1
    %p129 = scmp.ne.s32.totalorder %s124, %s126
    %p130 = scmp.eq.s32.totalorder %s12, 0
    %p131 = por %p129, %p130
    %p132 = scmp.ne.s32.totalorder %s124, %s126
    %p133 = scmp.eq.s32.totalorder %s17, 1
    %p134 = por %p132, %p133
    %p135 = scmp.ne.s32.totalorder %s126, %s127
    %p136 = scmp.eq.s32.totalorder %s17, 0
    %p137 = por %p135, %p136
    %p138 = scmp.ne.s32.totalorder %s126, %s127
    %p139 = scmp.eq.s32.totalorder %s18, 1
    %p140 = por %p138, %p139
    %p142 = scmp.ne.s32.totalorder %s127, %s141
    %p143 = scmp.eq.s32.totalorder %s18, 0
    %p144 = por %p142, %p143
    %s145 = ssub.s32 %s12, %s19
    %p146 = scmp.eq.s32.totalorder %s145, 0
    %s148 = sadd.s32 %s147, 1
    %s149 = scalar_select %p146, %s147, %s148
    %p152 = pneg %p146
    %p153 = scmp.eq.s32.totalorder %s12, 1
    %p154 = por %p152, %p153
    %p155 = scmp.ne.s32.totalorder %s147, %s150
    %p156 = scmp.eq.s32.totalorder %s12, 0
    %p157 = por %p155, %p156
    %p158 = scmp.ne.s32.totalorder %s147, %s150
    %p159 = scmp.eq.s32.totalorder %s17, 1
    %p160 = por %p158, %p159
    %p161 = scmp.ne.s32.totalorder %s150, %s151
    %p162 = scmp.eq.s32.totalorder %s17, 0
    %p163 = por %p161, %p162
    %p164 = scmp.ne.s32.totalorder %s150, %s151
    %p165 = scmp.eq.s32.totalorder %s18, 1
    %p166 = por %p164, %p165
    %p168 = scmp.ne.s32.totalorder %s151, %s167
    %p169 = scmp.eq.s32.totalorder %s18, 0
    %p170 = por %p168, %p169
    %p171 = scmp.le.s32.totalorder 1, %s12
    %p172 = scmp.lt.s32.totalorder %s12, 3
    %p173 = pnand %p171, %p172
    %p174 = pneg %p173
    // Predicated region
    $region9: #{stage_attention_forward.25} parent=5 // pred_check
      _
    $region10: #{stage_attention_forward.25} parent=5 // pred_check_branch
      %176 = sbr.rel (%p173) target = $region12
    $region11: #{stage_attention_forward.25} parent=5 // pred_region
      %s177 = ssub.s32 %s12, 1
      // Predicated region
      $region13: #{stage_attention_forward.25} parent=11 // pred_check
        %p178 = pneg %p137
      $region14: #{stage_attention_forward.25} parent=11 // pred_check_branch
        %180 = sbr.rel (%p178) target = $region16
      $region15: #{stage_attention_forward.25} parent=11 // pred_region
        _
      $region16: #{stage_attention_forward.25} parent=11 // pred_fallthru
        _
    $region12: #{stage_attention_forward.25} parent=5 // pred_fallthru
      _
    %p181 = scmp.lt.s32.totalorder %s12, 2
    // Predicated region
    $region17: #{stage_attention_forward.25} parent=5 // pred_check
      %p182 = pneg %p181
    $region18: #{stage_attention_forward.25} parent=5 // pred_check_branch
      %184 = sbr.rel (%p182) target = $region20
    $region19: #{stage_attention_forward.25} parent=5 // pred_region
      // Predicated region
      $region21: #{stage_attention_forward.25} parent=19 // pred_check
        %p185 = pneg %p32
      $region22: #{stage_attention_forward.25} parent=19 // pred_check_branch
        %187 = sbr.rel (%p185) target = $region24
      $region23: #{stage_attention_forward.25} parent=19 // pred_region
        %p188 = scmp.lt.s32.totalorder %s12, 1
        %s189 = scalar_select %p188, %s12, 1
        %s190 = smul.addr %s189, 8
        %s191 = smul.addr %s190, 8
        %s192 = scalar_lea.vmem %s0, %s191
      $region24: #{stage_attention_forward.25} parent=19 // pred_fallthru
        _
      // Predicated region
      $region25: #{stage_attention_forward.25} parent=19 // pred_check
        %p193 = pneg %p58
      $region26: #{stage_attention_forward.25} parent=19 // pred_check_branch
        %195 = sbr.rel (%p193) target = $region28
      $region27: #{stage_attention_forward.25} parent=19 // pred_region
        %p196 = scmp.lt.s32.totalorder %s12, 1
        %s197 = scalar_select %p196, %s12, 1
        %s198 = smul.addr %s197, 8
        %s199 = smul.addr %s198, 4
        %s200 = scalar_lea.vmem %s1, %s199
      $region28: #{stage_attention_forward.25} parent=19 // pred_fallthru
        _
      // Predicated region
      $region29: #{stage_attention_forward.25} parent=19 // pred_check
        %p201 = pneg %p84
      $region30: #{stage_attention_forward.25} parent=19 // pred_check_branch
        %203 = sbr.rel (%p201) target = $region32
      $region31: #{stage_attention_forward.25} parent=19 // pred_region
        %p204 = scmp.lt.s32.totalorder %s12, 1
        %s205 = scalar_select %p204, %s12, 1
        %s206 = smul.addr %s205, 8
        %s207 = smul.addr %s206, 8
        %s208 = scalar_lea.vmem %s2, %s207
      $region32: #{stage_attention_forward.25} parent=19 // pred_fallthru
        _
      // Predicated region
      $region33: #{stage_attention_forward.25} parent=19 // pred_check
        %p209 = pneg %p110
      $region34: #{stage_attention_forward.25} parent=19 // pred_check_branch
        %211 = sbr.rel (%p209) target = $region36
      $region35: #{stage_attention_forward.25} parent=19 // pred_region
        %p212 = scmp.lt.s32.totalorder %s12, 1
        %s213 = scalar_select %p212, %s12, 1
        %s214 = smul.addr %s213, 2
        %s215 = smul.addr %s214, 8
        %s216 = scalar_lea.vmem %s3, %s215
      $region36: #{stage_attention_forward.25} parent=19 // pred_fallthru
        _
    $region20: #{stage_attention_forward.25} parent=5 // pred_fallthru
      _
    %p217 = scmp.le.s32.totalorder 1, %s12
    %p218 = scmp.lt.s32.totalorder %s12, 3
    %p219 = pnand %p217, %p218
    %p220 = pneg %p219
    // Predicated region
    $region37: #{stage_attention_forward.25} parent=5 // pred_check
      _
    $region38: #{stage_attention_forward.25} parent=5 // pred_check_branch
      %222 = sbr.rel (%p219) target = $region40
    $region39: #{stage_attention_forward.25} parent=5 // pred_region
      %s223 = ssub.s32 %s12, 1
      %p224 = scmp.lt.s32.totalorder %s17, 1
      %s225 = scalar_select %p224, %s17, 1
      %s226 = smul.addr %s225, 8
      %s227 = smul.addr %s226, 8
      %s228 = scalar_lea.vmem %s0, %s227
      %p229 = pneg %p38
      %p230 = pneg %p35
      %p231 = scmp.lt.s32.totalorder %s17, 1
      %s232 = scalar_select %p231, %s17, 1
      %s233 = smul.addr %s232, 8
      %s234 = smul.addr %s233, 4
      %s235 = scalar_lea.vmem %s1, %s234
      %p236 = pneg %p64
      %p237 = pneg %p61
      %p238 = scmp.lt.s32.totalorder %s17, 1
      %s239 = scalar_select %p238, %s17, 1
      %s240 = smul.addr %s239, 8
      %s241 = smul.addr %s240, 8
      %s242 = scalar_lea.vmem %s2, %s241
      %p243 = pneg %p90
      %p244 = pneg %p87
      %p245 = scmp.lt.s32.totalorder %s17, 1
      %s246 = scalar_select %p245, %s17, 1
      %s247 = smul.addr %s246, 2
      %s248 = smul.addr %s247, 8
      %s249 = scalar_lea.vmem %s3, %s248
      %p250 = pneg %p116
      %p251 = pneg %p113
      %p252 = pneg %p137
      %p253 = pneg %p134
      %p254 = pneg %p163
      %p255 = pneg %p160
      %p256 = scmp.lt.s32.totalorder %s17, 1
      %s257 = scalar_select %p256, %s17, 1
      %s258 = smul.addr %s257, 8
      %s259 = smul.addr %s258, 8
      %s260 = scalar_lea.vmem %s5, %s259
      %p261 = scmp.lt.s32.totalorder %s17, 1
      %s262 = scalar_select %p261, %s17, 1
      %s263 = smul.addr %s262, 8
      %s264 = smul.addr %s263, 8
      %s265 = scalar_lea.vmem %s0, %s264
      %p266 = scmp.lt.s32.totalorder %s17, 1
      %s267 = scalar_select %p266, %s17, 1
      %s268 = smul.addr %s267, 8
      %s269 = smul.addr %s268, 4
      %s270 = scalar_lea.vmem %s1, %s269
      %p271 = scmp.lt.s32.totalorder %s17, 1
      %s272 = scalar_select %p271, %s17, 1
      %s273 = smul.addr %s272, 8
      %s274 = smul.addr %s273, 8
      %s275 = scalar_lea.vmem %s2, %s274
      %p276 = scmp.lt.s32.totalorder %s17, 1
      %s277 = scalar_select %p276, %s17, 1
      %s278 = smul.addr %s277, 2
      %s279 = smul.addr %s278, 8
      %s280 = scalar_lea.vmem %s3, %s279
      %p281 = scmp.lt.s32.totalorder %s17, 1
      %s282 = scalar_select %p281, %s17, 1
      %s283 = smul.addr %s282, 8
      %s284 = smul.addr %s283, 8
      %s285 = scalar_lea.vmem %s5, %s284
      %v287 = vld [vmem:[%s265] sm:$0xff]
      %v288 = vld [vmem:[%s265 + $0x8] sm:$0xff]
      %v289 = vld [vmem:[%s265 + $0x10] sm:$0xff]
      %v290 = vld [vmem:[%s265 + $0x18] sm:$0xff]
      %v291 = vld [vmem:[%s265 + $0x20] sm:$0xff]
      %v292 = vld [vmem:[%s265 + $0x28] sm:$0xff]
      %v293 = vld [vmem:[%s265 + $0x30] sm:$0xff]
      %v294 = vld [vmem:[%s265 + $0x38] sm:$0xff]
      %v295 = vld [vmem:[%s270] sm:$0xf]
      %v296 = vld [vmem:[%s270 + $0x4] sm:$0xf]
      %v297 = vld [vmem:[%s270 + $0x8] sm:$0xf]
      %v298 = vld [vmem:[%s270 + $0xc] sm:$0xf]
      %v299 = vld [vmem:[%s270 + $0x10] sm:$0xf]
      %v300 = vld [vmem:[%s270 + $0x14] sm:$0xf]
      %v301 = vld [vmem:[%s270 + $0x18] sm:$0xf]
      %v302 = vld [vmem:[%s270 + $0x1c] sm:$0xf]
      %v303 = vld [vmem:[%s275] sm:$0xff]
      %v304 = vld [vmem:[%s275 + $0x8] sm:$0xff]
      %v305 = vld [vmem:[%s275 + $0x10] sm:$0xff]
      %v306 = vld [vmem:[%s275 + $0x18] sm:$0xff]
      %v307 = vld [vmem:[%s275 + $0x20] sm:$0xff]
      %v308 = vld [vmem:[%s275 + $0x28] sm:$0xff]
      %v309 = vld [vmem:[%s275 + $0x30] sm:$0xff]
      %v310 = vld [vmem:[%s275 + $0x38] sm:$0xff]
      %v311 = vld [vmem:[%s280] sm:$0xff]
      %v312 = vlaneseq
      %v313 = vshrl.u32 %v312, 7
      %v314 = vsub.s32 0, %v313
      %v315 = vrot.slane %v311, %v314
      %317 = vbcast.lane.b32.xlu0 %v315, 256
      %v318 = vpop.permute.xlu0 %317
      %v319 = vlaneseq
      %v320 = vshrl.u32 %v319, 7
      %v321 = vsub.s32 1, %v320
      %v322 = vrot.slane %v311, %v321
      %324 = vbcast.lane.b32.xlu0 %v322, 256
      %v325 = vpop.permute.xlu0 %324
      %v326 = vlaneseq
      %v327 = vshrl.u32 %v326, 7
      %v328 = vsub.s32 2, %v327
      %v329 = vrot.slane %v311, %v328
      %331 = vbcast.lane.b32.xlu0 %v329, 256
      %v332 = vpop.permute.xlu0 %331
      %v333 = vlaneseq
      %v334 = vshrl.u32 %v333, 7
      %v335 = vsub.s32 3, %v334
      %v336 = vrot.slane %v311, %v335
      %338 = vbcast.lane.b32.xlu0 %v336, 256
      %v339 = vpop.permute.xlu0 %338
      %v340 = vlaneseq
      %v341 = vshrl.u32 %v340, 7
      %v342 = vsub.s32 4, %v341
      %v343 = vrot.slane %v311, %v342
      %345 = vbcast.lane.b32.xlu0 %v343, 256
      %v346 = vpop.permute.xlu0 %345
      %v347 = vlaneseq
      %v348 = vshrl.u32 %v347, 7
      %v349 = vsub.s32 5, %v348
      %v350 = vrot.slane %v311, %v349
      %352 = vbcast.lane.b32.xlu0 %v350, 256
      %v353 = vpop.permute.xlu0 %352
      %v354 = vlaneseq
      %v355 = vshrl.u32 %v354, 7
      %v356 = vsub.s32 6, %v355
      %v357 = vrot.slane %v311, %v356
      %359 = vbcast.lane.b32.xlu0 %v357, 256
      %v360 = vpop.permute.xlu0 %359
      %v361 = vlaneseq
      %v362 = vshrl.u32 %v361, 7
      %v363 = vsub.s32 7, %v362
      %v364 = vrot.slane %v311, %v363
      %366 = vbcast.lane.b32.xlu0 %v364, 256
      %v367 = vpop.permute.xlu0 %366
      %s368 = scalar_lea.vmem %s280, 8
      %v369 = vld [vmem:[%s368] sm:$0xff]
      %v370 = vlaneseq
      %v371 = vshrl.u32 %v370, 7
      %v372 = vsub.s32 0, %v371
      %v373 = vrot.slane %v369, %v372
      %375 = vbcast.lane.b32.xlu0 %v373, 256
      %v376 = vpop.permute.xlu0 %375
      %v377 = vlaneseq
      %v378 = vshrl.u32 %v377, 7
      %v379 = vsub.s32 1, %v378
      %v380 = vrot.slane %v369, %v379
      %382 = vbcast.lane.b32.xlu0 %v380, 256
      %v383 = vpop.permute.xlu0 %382
      %v384 = vlaneseq
      %v385 = vshrl.u32 %v384, 7
      %v386 = vsub.s32 2, %v385
      %v387 = vrot.slane %v369, %v386
      %389 = vbcast.lane.b32.xlu0 %v387, 256
      %v390 = vpop.permute.xlu0 %389
      %v391 = vlaneseq
      %v392 = vshrl.u32 %v391, 7
      %v393 = vsub.s32 3, %v392
      %v394 = vrot.slane %v369, %v393
      %396 = vbcast.lane.b32.xlu0 %v394, 256
      %v397 = vpop.permute.xlu0 %396
      %v398 = vlaneseq
      %v399 = vshrl.u32 %v398, 7
      %v400 = vsub.s32 4, %v399
      %v401 = vrot.slane %v369, %v400
      %403 = vbcast.lane.b32.xlu0 %v401, 256
      %v404 = vpop.permute.xlu0 %403
      %v405 = vlaneseq
      %v406 = vshrl.u32 %v405, 7
      %v407 = vsub.s32 5, %v406
      %v408 = vrot.slane %v369, %v407
      %410 = vbcast.lane.b32.xlu0 %v408, 256
      %v411 = vpop.permute.xlu0 %410
      %v412 = vlaneseq
      %v413 = vshrl.u32 %v412, 7
      %v414 = vsub.s32 6, %v413
      %v415 = vrot.slane %v369, %v414
      %417 = vbcast.lane.b32.xlu0 %v415, 256
      %v418 = vpop.permute.xlu0 %417
      %v419 = vlaneseq
      %v420 = vshrl.u32 %v419, 7
      %v421 = vsub.s32 7, %v420
      %v422 = vrot.slane %v369, %v421
      %424 = vbcast.lane.b32.xlu0 %v422, 256
      %v425 = vpop.permute.xlu0 %424
      %v427 = vunpack.c.l.b16 %v295
      %v428 = vpack.c.b16 %v427, %v427
      %429 = vrot.lane.b32.xlu0 %v428, 124
      %v430 = vpop.permute.xlu0 %429
      %vm431 = vcmask 31744
      %v433 = vsel %vm431, %v295, 0
      %v436 = vsel %vm431, %v430, 0
      %438 = vmatprep.subr.bf16.mxu0 0
      %439 = vmatpush1.bf16.xpose.msra.mxu0 0
      %440 = vmatprep.subr.bf16.mxu0 0
      %441 = vmatpush1.bf16.xpose.msra.mxu0 0
      %442 = vmatprep.subr.bf16.mxu0 0
      %443 = vmatpush1.bf16.xpose.msra.mxu0 0
      %444 = vmatprep.subr.bf16.mxu0 0
      %445 = vmatpush1.bf16.xpose.msra.mxu0 0
      %446 = vmatprep.subr.bf16.mxu0 0
      %447 = vmatpush1.bf16.xpose.msra.mxu0 0
      %448 = vmatprep.subr.bf16.mxu0 0
      %449 = vmatpush1.bf16.xpose.msra.mxu0 0
      %450 = vmatprep.subr.bf16.mxu0 0
      %451 = vmatpush1.bf16.xpose.msra.mxu0 0
      %452 = vmatprep.subr.bf16.mxu0 0
      %453 = vmatpush1.bf16.xpose.msra.mxu0 %v436
      %454 = vmatprep.subr.bf16.mxu0 0
      %455 = vmatpush2.bf16.xpose.msra.mxu0 0
      %456 = vmatprep.subr.bf16.mxu0 0
      %457 = vmatpush2.bf16.xpose.msra.mxu0 0
      %458 = vmatprep.subr.bf16.mxu0 0
      %459 = vmatpush2.bf16.xpose.msra.mxu0 0
      %460 = vmatprep.subr.bf16.mxu0 0
      %461 = vmatpush2.bf16.xpose.msra.mxu0 0
      %462 = vmatprep.subr.bf16.mxu0 0
      %463 = vmatpush2.bf16.xpose.msra.mxu0 0
      %464 = vmatprep.subr.bf16.mxu0 0
      %465 = vmatpush2.bf16.xpose.msra.mxu0 0
      %466 = vmatprep.subr.bf16.mxu0 0
      %467 = vmatpush2.bf16.xpose.msra.mxu0 0
      %468 = vmatprep.subr.bf16.mxu0 0
      %469 = vmatpush2.bf16.xpose.msra.mxu0 0
      %470 = vmatprep.mubr.bf16.mxu0 0
      %471 = vmatmul.mubr.bf16.gmra.mxu0 %v433
      %v472 = vpop.f32.mrf.mxu0
      %v473 = vadd.f32 0.0, %v472
      %v474 = vpop.f32.mrf.mxu0
      %v475 = vpop.f32.mrf.mxu0
      %v476 = vpop.f32.mrf.mxu0
      %477 = vdwg.mxu0
      %v479 = vunpack.c.l.b16 %v296
      %v480 = vpack.c.b16 %v479, %v479
      %481 = vrot.lane.b32.xlu0 %v480, 124
      %v482 = vpop.permute.xlu0 %481
      %v484 = vsel %vm431, %v296, 0
      %v487 = vsel %vm431, %v482, 0
      %489 = vmatprep.subr.bf16.mxu0 0
      %490 = vmatpush1.bf16.xpose.msra.mxu0 0
      %491 = vmatprep.subr.bf16.mxu0 0
      %492 = vmatpush1.bf16.xpose.msra.mxu0 0
      %493 = vmatprep.subr.bf16.mxu0 0
      %494 = vmatpush1.bf16.xpose.msra.mxu0 0
      %495 = vmatprep.subr.bf16.mxu0 0
      %496 = vmatpush1.bf16.xpose.msra.mxu0 0
      %497 = vmatprep.subr.bf16.mxu0 0
      %498 = vmatpush1.bf16.xpose.msra.mxu0 0
      %499 = vmatprep.subr.bf16.mxu0 0
      %500 = vmatpush1.bf16.xpose.msra.mxu0 0
      %501 = vmatprep.subr.bf16.mxu0 0
      %502 = vmatpush1.bf16.xpose.msra.mxu0 0
      %503 = vmatprep.subr.bf16.mxu0 0
      %504 = vmatpush1.bf16.xpose.msra.mxu0 %v487
      %505 = vmatprep.subr.bf16.mxu0 0
      %506 = vmatpush2.bf16.xpose.msra.mxu0 0
      %507 = vmatprep.subr.bf16.mxu0 0
      %508 = vmatpush2.bf16.xpose.msra.mxu0 0
      %509 = vmatprep.subr.bf16.mxu0 0
      %510 = vmatpush2.bf16.xpose.msra.mxu0 0
      %511 = vmatprep.subr.bf16.mxu0 0
      %512 = vmatpush2.bf16.xpose.msra.mxu0 0
      %513 = vmatprep.subr.bf16.mxu0 0
      %514 = vmatpush2.bf16.xpose.msra.mxu0 0
      %515 = vmatprep.subr.bf16.mxu0 0
      %516 = vmatpush2.bf16.xpose.msra.mxu0 0
      %517 = vmatprep.subr.bf16.mxu0 0
      %518 = vmatpush2.bf16.xpose.msra.mxu0 0
      %519 = vmatprep.subr.bf16.mxu0 0
      %520 = vmatpush2.bf16.xpose.msra.mxu0 0
      %521 = vmatprep.mubr.bf16.mxu0 0
      %522 = vmatmul.mubr.bf16.gmra.mxu0 %v484
      %v523 = vpop.f32.mrf.mxu0
      %v524 = vadd.f32 0.0, %v523
      %v525 = vpop.f32.mrf.mxu0
      %v526 = vpop.f32.mrf.mxu0
      %v527 = vpop.f32.mrf.mxu0
      %528 = vdwg.mxu0
      %v530 = vunpack.c.l.b16 %v297
      %v531 = vpack.c.b16 %v530, %v530
      %532 = vrot.lane.b32.xlu0 %v531, 124
      %v533 = vpop.permute.xlu0 %532
      %v535 = vsel %vm431, %v297, 0
      %v538 = vsel %vm431, %v533, 0
      %540 = vmatprep.subr.bf16.mxu0 0
      %541 = vmatpush1.bf16.xpose.msra.mxu0 0
      %542 = vmatprep.subr.bf16.mxu0 0
      %543 = vmatpush1.bf16.xpose.msra.mxu0 0
      %544 = vmatprep.subr.bf16.mxu0 0
      %545 = vmatpush1.bf16.xpose.msra.mxu0 0
      %546 = vmatprep.subr.bf16.mxu0 0
      %547 = vmatpush1.bf16.xpose.msra.mxu0 0
      %548 = vmatprep.subr.bf16.mxu0 0
      %549 = vmatpush1.bf16.xpose.msra.mxu0 0
      %550 = vmatprep.subr.bf16.mxu0 0
      %551 = vmatpush1.bf16.xpose.msra.mxu0 0
      %552 = vmatprep.subr.bf16.mxu0 0
      %553 = vmatpush1.bf16.xpose.msra.mxu0 0
      %554 = vmatprep.subr.bf16.mxu0 0
      %555 = vmatpush1.bf16.xpose.msra.mxu0 %v538
      %556 = vmatprep.subr.bf16.mxu0 0
      %557 = vmatpush2.bf16.xpose.msra.mxu0 0
      %558 = vmatprep.subr.bf16.mxu0 0
      %559 = vmatpush2.bf16.xpose.msra.mxu0 0
      %560 = vmatprep.subr.bf16.mxu0 0
      %561 = vmatpush2.bf16.xpose.msra.mxu0 0
      %562 = vmatprep.subr.bf16.mxu0 0
      %563 = vmatpush2.bf16.xpose.msra.mxu0 0
      %564 = vmatprep.subr.bf16.mxu0 0
      %565 = vmatpush2.bf16.xpose.msra.mxu0 0
      %566 = vmatprep.subr.bf16.mxu0 0
      %567 = vmatpush2.bf16.xpose.msra.mxu0 0
      %568 = vmatprep.subr.bf16.mxu0 0
      %569 = vmatpush2.bf16.xpose.msra.mxu0 0
      %570 = vmatprep.subr.bf16.mxu0 0
      %571 = vmatpush2.bf16.xpose.msra.mxu0 0
      %572 = vmatprep.mubr.bf16.mxu0 0
      %573 = vmatmul.mubr.bf16.gmra.mxu0 %v535
      %v574 = vpop.f32.mrf.mxu0
      %v575 = vadd.f32 0.0, %v574
      %v576 = vpop.f32.mrf.mxu0
      %v577 = vpop.f32.mrf.mxu0
      %v578 = vpop.f32.mrf.mxu0
      %579 = vdwg.mxu0
      %v581 = vunpack.c.l.b16 %v298
      %v582 = vpack.c.b16 %v581, %v581
      %583 = vrot.lane.b32.xlu0 %v582, 124
      %v584 = vpop.permute.xlu0 %583
      %v586 = vsel %vm431, %v298, 0
      %v589 = vsel %vm431, %v584, 0
      %591 = vmatprep.subr.bf16.mxu0 0
      %592 = vmatpush1.bf16.xpose.msra.mxu0 0
      %593 = vmatprep.subr.bf16.mxu0 0
      %594 = vmatpush1.bf16.xpose.msra.mxu0 0
      %595 = vmatprep.subr.bf16.mxu0 0
      %596 = vmatpush1.bf16.xpose.msra.mxu0 0
      %597 = vmatprep.subr.bf16.mxu0 0
      %598 = vmatpush1.bf16.xpose.msra.mxu0 0
      %599 = vmatprep.subr.bf16.mxu0 0
      %600 = vmatpush1.bf16.xpose.msra.mxu0 0
      %601 = vmatprep.subr.bf16.mxu0 0
      %602 = vmatpush1.bf16.xpose.msra.mxu0 0
      %603 = vmatprep.subr.bf16.mxu0 0
      %604 = vmatpush1.bf16.xpose.msra.mxu0 0
      %605 = vmatprep.subr.bf16.mxu0 0
      %606 = vmatpush1.bf16.xpose.msra.mxu0 %v589
      %607 = vmatprep.subr.bf16.mxu0 0
      %608 = vmatpush2.bf16.xpose.msra.mxu0 0
      %609 = vmatprep.subr.bf16.mxu0 0
      %610 = vmatpush2.bf16.xpose.msra.mxu0 0
      %611 = vmatprep.subr.bf16.mxu0 0
      %612 = vmatpush2.bf16.xpose.msra.mxu0 0
      %613 = vmatprep.subr.bf16.mxu0 0
      %614 = vmatpush2.bf16.xpose.msra.mxu0 0
      %615 = vmatprep.subr.bf16.mxu0 0
      %616 = vmatpush2.bf16.xpose.msra.mxu0 0
      %617 = vmatprep.subr.bf16.mxu0 0
      %618 = vmatpush2.bf16.xpose.msra.mxu0 0
      %619 = vmatprep.subr.bf16.mxu0 0
      %620 = vmatpush2.bf16.xpose.msra.mxu0 0
      %621 = vmatprep.subr.bf16.mxu0 0
      %622 = vmatpush2.bf16.xpose.msra.mxu0 0
      %623 = vmatprep.mubr.bf16.mxu0 0
      %624 = vmatmul.mubr.bf16.gmra.mxu0 %v586
      %v625 = vpop.f32.mrf.mxu0
      %v626 = vadd.f32 0.0, %v625
      %v627 = vpop.f32.mrf.mxu0
      %v628 = vpop.f32.mrf.mxu0
      %v629 = vpop.f32.mrf.mxu0
      %630 = vdwg.mxu0
      %v632 = vunpack.c.l.b16 %v299
      %v633 = vpack.c.b16 %v632, %v632
      %634 = vrot.lane.b32.xlu0 %v633, 124
      %v635 = vpop.permute.xlu0 %634
      %v637 = vsel %vm431, %v299, 0
      %v640 = vsel %vm431, %v635, 0
      %642 = vmatprep.subr.bf16.mxu0 0
      %643 = vmatpush1.bf16.xpose.msra.mxu0 0
      %644 = vmatprep.subr.bf16.mxu0 0
      %645 = vmatpush1.bf16.xpose.msra.mxu0 0
      %646 = vmatprep.subr.bf16.mxu0 0
      %647 = vmatpush1.bf16.xpose.msra.mxu0 0
      %648 = vmatprep.subr.bf16.mxu0 0
      %649 = vmatpush1.bf16.xpose.msra.mxu0 0
      %650 = vmatprep.subr.bf16.mxu0 0
      %651 = vmatpush1.bf16.xpose.msra.mxu0 0
      %652 = vmatprep.subr.bf16.mxu0 0
      %653 = vmatpush1.bf16.xpose.msra.mxu0 0
      %654 = vmatprep.subr.bf16.mxu0 0
      %655 = vmatpush1.bf16.xpose.msra.mxu0 0
      %656 = vmatprep.subr.bf16.mxu0 0
      %657 = vmatpush1.bf16.xpose.msra.mxu0 %v640
      %658 = vmatprep.subr.bf16.mxu0 0
      %659 = vmatpush2.bf16.xpose.msra.mxu0 0
      %660 = vmatprep.subr.bf16.mxu0 0
      %661 = vmatpush2.bf16.xpose.msra.mxu0 0
      %662 = vmatprep.subr.bf16.mxu0 0
      %663 = vmatpush2.bf16.xpose.msra.mxu0 0
      %664 = vmatprep.subr.bf16.mxu0 0
      %665 = vmatpush2.bf16.xpose.msra.mxu0 0
      %666 = vmatprep.subr.bf16.mxu0 0
      %667 = vmatpush2.bf16.xpose.msra.mxu0 0
      %668 = vmatprep.subr.bf16.mxu0 0
      %669 = vmatpush2.bf16.xpose.msra.mxu0 0
      %670 = vmatprep.subr.bf16.mxu0 0
      %671 = vmatpush2.bf16.xpose.msra.mxu0 0
      %672 = vmatprep.subr.bf16.mxu0 0
      %673 = vmatpush2.bf16.xpose.msra.mxu0 0
      %674 = vmatprep.mubr.bf16.mxu0 0
      %675 = vmatmul.mubr.bf16.gmra.mxu0 %v637
      %v676 = vpop.f32.mrf.mxu0
      %v677 = vadd.f32 0.0, %v676
      %v678 = vpop.f32.mrf.mxu0
      %v679 = vpop.f32.mrf.mxu0
      %v680 = vpop.f32.mrf.mxu0
      %681 = vdwg.mxu0
      %v683 = vunpack.c.l.b16 %v300
      %v684 = vpack.c.b16 %v683, %v683
      %685 = vrot.lane.b32.xlu0 %v684, 124
      %v686 = vpop.permute.xlu0 %685
      %v688 = vsel %vm431, %v300, 0
      %v691 = vsel %vm431, %v686, 0
      %693 = vmatprep.subr.bf16.mxu0 0
      %694 = vmatpush1.bf16.xpose.msra.mxu0 0
      %695 = vmatprep.subr.bf16.mxu0 0
      %696 = vmatpush1.bf16.xpose.msra.mxu0 0
      %697 = vmatprep.subr.bf16.mxu0 0
      %698 = vmatpush1.bf16.xpose.msra.mxu0 0
      %699 = vmatprep.subr.bf16.mxu0 0
      %700 = vmatpush1.bf16.xpose.msra.mxu0 0
      %701 = vmatprep.subr.bf16.mxu0 0
      %702 = vmatpush1.bf16.xpose.msra.mxu0 0
      %703 = vmatprep.subr.bf16.mxu0 0
      %704 = vmatpush1.bf16.xpose.msra.mxu0 0
      %705 = vmatprep.subr.bf16.mxu0 0
      %706 = vmatpush1.bf16.xpose.msra.mxu0 0
      %707 = vmatprep.subr.bf16.mxu0 0
      %708 = vmatpush1.bf16.xpose.msra.mxu0 %v691
      %709 = vmatprep.subr.bf16.mxu0 0
      %710 = vmatpush2.bf16.xpose.msra.mxu0 0
      %711 = vmatprep.subr.bf16.mxu0 0
      %712 = vmatpush2.bf16.xpose.msra.mxu0 0
      %713 = vmatprep.subr.bf16.mxu0 0
      %714 = vmatpush2.bf16.xpose.msra.mxu0 0
      %715 = vmatprep.subr.bf16.mxu0 0
      %716 = vmatpush2.bf16.xpose.msra.mxu0 0
      %717 = vmatprep.subr.bf16.mxu0 0
      %718 = vmatpush2.bf16.xpose.msra.mxu0 0
      %719 = vmatprep.subr.bf16.mxu0 0
      %720 = vmatpush2.bf16.xpose.msra.mxu0 0
      %721 = vmatprep.subr.bf16.mxu0 0
      %722 = vmatpush2.bf16.xpose.msra.mxu0 0
      %723 = vmatprep.subr.bf16.mxu0 0
      %724 = vmatpush2.bf16.xpose.msra.mxu0 0
      %725 = vmatprep.mubr.bf16.mxu0 0
      %726 = vmatmul.mubr.bf16.gmra.mxu0 %v688
      %v727 = vpop.f32.mrf.mxu0
      %v728 = vadd.f32 0.0, %v727
      %v729 = vpop.f32.mrf.mxu0
      %v730 = vpop.f32.mrf.mxu0
      %v731 = vpop.f32.mrf.mxu0
      %732 = vdwg.mxu0
      %v734 = vunpack.c.l.b16 %v301
      %v735 = vpack.c.b16 %v734, %v734
      %736 = vrot.lane.b32.xlu0 %v735, 124
      %v737 = vpop.permute.xlu0 %736
      %v739 = vsel %vm431, %v301, 0
      %v742 = vsel %vm431, %v737, 0
      %744 = vmatprep.subr.bf16.mxu0 0
      %745 = vmatpush1.bf16.xpose.msra.mxu0 0
      %746 = vmatprep.subr.bf16.mxu0 0
      %747 = vmatpush1.bf16.xpose.msra.mxu0 0
      %748 = vmatprep.subr.bf16.mxu0 0
      %749 = vmatpush1.bf16.xpose.msra.mxu0 0
      %750 = vmatprep.subr.bf16.mxu0 0
      %751 = vmatpush1.bf16.xpose.msra.mxu0 0
      %752 = vmatprep.subr.bf16.mxu0 0
      %753 = vmatpush1.bf16.xpose.msra.mxu0 0
      %754 = vmatprep.subr.bf16.mxu0 0
      %755 = vmatpush1.bf16.xpose.msra.mxu0 0
      %756 = vmatprep.subr.bf16.mxu0 0
      %757 = vmatpush1.bf16.xpose.msra.mxu0 0
      %758 = vmatprep.subr.bf16.mxu0 0
      %759 = vmatpush1.bf16.xpose.msra.mxu0 %v742
      %760 = vmatprep.subr.bf16.mxu0 0
      %761 = vmatpush2.bf16.xpose.msra.mxu0 0
      %762 = vmatprep.subr.bf16.mxu0 0
      %763 = vmatpush2.bf16.xpose.msra.mxu0 0
      %764 = vmatprep.subr.bf16.mxu0 0
      %765 = vmatpush2.bf16.xpose.msra.mxu0 0
      %766 = vmatprep.subr.bf16.mxu0 0
      %767 = vmatpush2.bf16.xpose.msra.mxu0 0
      %768 = vmatprep.subr.bf16.mxu0 0
      %769 = vmatpush2.bf16.xpose.msra.mxu0 0
      %770 = vmatprep.subr.bf16.mxu0 0
      %771 = vmatpush2.bf16.xpose.msra.mxu0 0
      %772 = vmatprep.subr.bf16.mxu0 0
      %773 = vmatpush2.bf16.xpose.msra.mxu0 0
      %774 = vmatprep.subr.bf16.mxu0 0
      %775 = vmatpush2.bf16.xpose.msra.mxu0 0
      %776 = vmatprep.mubr.bf16.mxu0 0
      %777 = vmatmul.mubr.bf16.gmra.mxu0 %v739
      %v778 = vpop.f32.mrf.mxu0
      %v779 = vadd.f32 0.0, %v778
      %v780 = vpop.f32.mrf.mxu0
      %v781 = vpop.f32.mrf.mxu0
      %v782 = vpop.f32.mrf.mxu0
      %783 = vdwg.mxu0
      %v785 = vunpack.c.l.b16 %v302
      %v786 = vpack.c.b16 %v785, %v785
      %787 = vrot.lane.b32.xlu0 %v786, 124
      %v788 = vpop.permute.xlu0 %787
      %v790 = vsel %vm431, %v302, 0
      %v793 = vsel %vm431, %v788, 0
      %795 = vmatprep.subr.bf16.mxu0 0
      %796 = vmatpush1.bf16.xpose.msra.mxu0 0
      %797 = vmatprep.subr.bf16.mxu0 0
      %798 = vmatpush1.bf16.xpose.msra.mxu0 0
      %799 = vmatprep.subr.bf16.mxu0 0
      %800 = vmatpush1.bf16.xpose.msra.mxu0 0
      %801 = vmatprep.subr.bf16.mxu0 0
      %802 = vmatpush1.bf16.xpose.msra.mxu0 0
      %803 = vmatprep.subr.bf16.mxu0 0
      %804 = vmatpush1.bf16.xpose.msra.mxu0 0
      %805 = vmatprep.subr.bf16.mxu0 0
      %806 = vmatpush1.bf16.xpose.msra.mxu0 0
      %807 = vmatprep.subr.bf16.mxu0 0
      %808 = vmatpush1.bf16.xpose.msra.mxu0 0
      %809 = vmatprep.subr.bf16.mxu0 0
      %810 = vmatpush1.bf16.xpose.msra.mxu0 %v793
      %811 = vmatprep.subr.bf16.mxu0 0
      %812 = vmatpush2.bf16.xpose.msra.mxu0 0
      %813 = vmatprep.subr.bf16.mxu0 0
      %814 = vmatpush2.bf16.xpose.msra.mxu0 0
      %815 = vmatprep.subr.bf16.mxu0 0
      %816 = vmatpush2.bf16.xpose.msra.mxu0 0
      %817 = vmatprep.subr.bf16.mxu0 0
      %818 = vmatpush2.bf16.xpose.msra.mxu0 0
      %819 = vmatprep.subr.bf16.mxu0 0
      %820 = vmatpush2.bf16.xpose.msra.mxu0 0
      %821 = vmatprep.subr.bf16.mxu0 0
      %822 = vmatpush2.bf16.xpose.msra.mxu0 0
      %823 = vmatprep.subr.bf16.mxu0 0
      %824 = vmatpush2.bf16.xpose.msra.mxu0 0
      %825 = vmatprep.subr.bf16.mxu0 0
      %826 = vmatpush2.bf16.xpose.msra.mxu0 0
      %827 = vmatprep.mubr.bf16.mxu0 0
      %828 = vmatmul.mubr.bf16.gmra.mxu0 %v790
      %v829 = vpop.f32.mrf.mxu0
      %v830 = vadd.f32 0.0, %v829
      %v831 = vpop.f32.mrf.mxu0
      %v832 = vpop.f32.mrf.mxu0
      %v833 = vpop.f32.mrf.mxu0
      %834 = vdwg.mxu0
      %vm835 = vcmask 64512
      %v836 = vsel %vm835, %v473, -inf
      %837 = vmax.xlane.f32.xlu0 %v836
      %v838 = vpop.xlane.xlu0 %837
      %v839 = vsel %vm835, %v524, -inf
      %840 = vmax.xlane.f32.xlu0 %v839
      %v841 = vpop.xlane.xlu0 %840
      %v842 = vsel %vm835, %v575, -inf
      %843 = vmax.xlane.f32.xlu0 %v842
      %v844 = vpop.xlane.xlu0 %843
      %v845 = vsel %vm835, %v626, -inf
      %846 = vmax.xlane.f32.xlu0 %v845
      %v847 = vpop.xlane.xlu0 %846
      %v848 = vsel %vm835, %v677, -inf
      %849 = vmax.xlane.f32.xlu0 %v848
      %v850 = vpop.xlane.xlu0 %849
      %v851 = vsel %vm835, %v728, -inf
      %852 = vmax.xlane.f32.xlu0 %v851
      %v853 = vpop.xlane.xlu0 %852
      %v854 = vsel %vm835, %v779, -inf
      %855 = vmax.xlane.f32.xlu0 %v854
      %v856 = vpop.xlane.xlu0 %855
      %v857 = vsel %vm835, %v830, -inf
      %858 = vmax.xlane.f32.xlu0 %v857
      %v859 = vpop.xlane.xlu0 %858
      %v860 = vmax.f32 %v318, %v838
      %v861 = vmax.f32 %v325, %v841
      %v862 = vmax.f32 %v332, %v844
      %v863 = vmax.f32 %v339, %v847
      %v864 = vmax.f32 %v346, %v850
      %v865 = vmax.f32 %v353, %v853
      %v866 = vmax.f32 %v360, %v856
      %v867 = vmax.f32 %v367, %v859
      %v868 = vsub.f32 %v318, %v860
      %v869 = vsub.f32 %v325, %v861
      %v870 = vsub.f32 %v332, %v862
      %v871 = vsub.f32 %v339, %v863
      %v872 = vsub.f32 %v346, %v864
      %v873 = vsub.f32 %v353, %v865
      %v874 = vsub.f32 %v360, %v866
      %v875 = vsub.f32 %v367, %v867
      %v876 = vmul.f32 %v868, 1.442695
      %v877 = vpow.pop %v876
      %v878 = vmul.f32 %v869, 1.442695
      %v879 = vpow.pop %v878
      %v880 = vmul.f32 %v870, 1.442695
      %v881 = vpow.pop %v880
      %v882 = vmul.f32 %v871, 1.442695
      %v883 = vpow.pop %v882
      %v884 = vmul.f32 %v872, 1.442695
      %v885 = vpow.pop %v884
      %v886 = vmul.f32 %v873, 1.442695
      %v887 = vpow.pop %v886
      %v888 = vmul.f32 %v874, 1.442695
      %v889 = vpow.pop %v888
      %v890 = vmul.f32 %v875, 1.442695
      %v891 = vpow.pop %v890
      %v892 = vsub.f32 %v473, %v860
      %v893 = vsub.f32 %v524, %v861
      %v894 = vsub.f32 %v575, %v862
      %v895 = vsub.f32 %v626, %v863
      %v896 = vsub.f32 %v677, %v864
      %v897 = vsub.f32 %v728, %v865
      %v898 = vsub.f32 %v779, %v866
      %v899 = vsub.f32 %v830, %v867
      %v900 = vmul.f32 %v892, 1.442695
      %v901 = vpow.pop %v900
      %v902 = vmul.f32 %v893, 1.442695
      %v903 = vpow.pop %v902
      %v904 = vmul.f32 %v894, 1.442695
      %v905 = vpow.pop %v904
      %v906 = vmul.f32 %v895, 1.442695
      %v907 = vpow.pop %v906
      %v908 = vmul.f32 %v896, 1.442695
      %v909 = vpow.pop %v908
      %v910 = vmul.f32 %v897, 1.442695
      %v911 = vpow.pop %v910
      %v912 = vmul.f32 %v898, 1.442695
      %v913 = vpow.pop %v912
      %v914 = vmul.f32 %v899, 1.442695
      %v915 = vpow.pop %v914
      %v916 = vmul.f32 %v376, %v877
      %v917 = vmul.f32 %v383, %v879
      %v918 = vmul.f32 %v390, %v881
      %v919 = vmul.f32 %v397, %v883
      %v920 = vmul.f32 %v404, %v885
      %v921 = vmul.f32 %v411, %v887
      %v922 = vmul.f32 %v418, %v889
      %v923 = vmul.f32 %v425, %v891
      %v924 = vsel %vm835, %v901, 0.0
      %925 = vadd.xlane.f32.xlu0 %v924
      %v926 = vpop.xlane.xlu0 %925
      %v927 = vsel %vm835, %v903, 0.0
      %928 = vadd.xlane.f32.xlu0 %v927
      %v929 = vpop.xlane.xlu0 %928
      %v930 = vsel %vm835, %v905, 0.0
      %931 = vadd.xlane.f32.xlu0 %v930
      %v932 = vpop.xlane.xlu0 %931
      %v933 = vsel %vm835, %v907, 0.0
      %934 = vadd.xlane.f32.xlu0 %v933
      %v935 = vpop.xlane.xlu0 %934
      %v936 = vsel %vm835, %v909, 0.0
      %937 = vadd.xlane.f32.xlu0 %v936
      %v938 = vpop.xlane.xlu0 %937
      %v939 = vsel %vm835, %v911, 0.0
      %940 = vadd.xlane.f32.xlu0 %v939
      %v941 = vpop.xlane.xlu0 %940
      %v942 = vsel %vm835, %v913, 0.0
      %943 = vadd.xlane.f32.xlu0 %v942
      %v944 = vpop.xlane.xlu0 %943
      %v945 = vsel %vm835, %v915, 0.0
      %946 = vadd.xlane.f32.xlu0 %v945
      %v947 = vpop.xlane.xlu0 %946
      %v948 = vadd.f32 %v916, %v926
      %v949 = vadd.f32 %v917, %v929
      %v950 = vadd.f32 %v918, %v932
      %v951 = vadd.f32 %v919, %v935
      %v952 = vadd.f32 %v920, %v938
      %v953 = vadd.f32 %v921, %v941
      %v954 = vadd.f32 %v922, %v944
      %v955 = vadd.f32 %v923, %v947
      %v956 = vrcp.pop %v948
      %v957 = vrcp.pop %v949
      %v958 = vrcp.pop %v950
      %v959 = vrcp.pop %v951
      %v960 = vrcp.pop %v952
      %v961 = vrcp.pop %v953
      %v962 = vrcp.pop %v954
      %v963 = vrcp.pop %v955
      %v964 = vmul.f32 %v901, %v956
      %v965 = vmul.f32 %v903, %v957
      %v966 = vmul.f32 %v905, %v958
      %v967 = vmul.f32 %v907, %v959
      %v968 = vmul.f32 %v909, %v960
      %v969 = vmul.f32 %v911, %v961
      %v970 = vmul.f32 %v913, %v962
      %v971 = vmul.f32 %v915, %v963
      %v972 = vmul.f32 %v877, %v956
      %v973 = vmul.f32 %v879, %v957
      %v974 = vmul.f32 %v881, %v958
      %v975 = vmul.f32 %v883, %v959
      %v976 = vmul.f32 %v885, %v960
      %v977 = vmul.f32 %v887, %v961
      %v978 = vmul.f32 %v889, %v962
      %v979 = vmul.f32 %v891, %v963
      %v980 = vmul.f32 %v303, %v972
      %v981 = vmul.f32 %v304, %v973
      %v982 = vmul.f32 %v305, %v974
      %v983 = vmul.f32 %v306, %v975
      %v984 = vmul.f32 %v307, %v976
      %v985 = vmul.f32 %v308, %v977
      %v986 = vmul.f32 %v309, %v978
      %v987 = vmul.f32 %v310, %v979
      %v988 = vpack.c.bf16 %v964, %v964
      %v989 = vpack.c.bf16 %v965, %v965
      %v990 = vpack.c.bf16 %v966, %v966
      %v991 = vpack.c.bf16 %v967, %v967
      %v992 = vpack.c.bf16 %v968, %v968
      %v993 = vpack.c.bf16 %v969, %v969
      %v994 = vpack.c.bf16 %v970, %v970
      %v995 = vpack.c.bf16 %v971, %v971
      %996 = vrot.lane.b32.xlu0 %v428, 120
      %v997 = vpop.permute.xlu0 %996
      %v999 = vsel %vm835, %v988, 0
      %vm1001 = vcmask 1043456
      %v1003 = vsel %vm1001, %v997, 0
      %1005 = vmatprep.subr.bf16.mxu0 0
      %1006 = vmatpush1.bf16.msra.mxu0 0
      %1007 = vmatprep.subr.bf16.mxu0 0
      %1008 = vmatpush1.bf16.msra.mxu0 0
      %1009 = vmatprep.subr.bf16.mxu0 0
      %1010 = vmatpush1.bf16.msra.mxu0 0
      %1011 = vmatprep.subr.bf16.mxu0 0
      %1012 = vmatpush1.bf16.msra.mxu0 0
      %1013 = vmatprep.subr.bf16.mxu0 0
      %1014 = vmatpush1.bf16.msra.mxu0 0
      %1015 = vmatprep.subr.bf16.mxu0 0
      %1016 = vmatpush1.bf16.msra.mxu0 0
      %1017 = vmatprep.subr.bf16.mxu0 0
      %1018 = vmatpush1.bf16.msra.mxu0 0
      %1019 = vmatprep.subr.bf16.mxu0 0
      %1020 = vmatpush1.bf16.msra.mxu0 %v1003
      %1021 = vmatprep.subr.bf16.mxu0 0
      %1022 = vmatpush2.bf16.msra.mxu0 0
      %1023 = vmatprep.subr.bf16.mxu0 0
      %1024 = vmatpush2.bf16.msra.mxu0 0
      %1025 = vmatprep.subr.bf16.mxu0 0
      %1026 = vmatpush2.bf16.msra.mxu0 0
      %1027 = vmatprep.subr.bf16.mxu0 0
      %1028 = vmatpush2.bf16.msra.mxu0 0
      %1029 = vmatprep.subr.bf16.mxu0 0
      %1030 = vmatpush2.bf16.msra.mxu0 0
      %1031 = vmatprep.subr.bf16.mxu0 0
      %1032 = vmatpush2.bf16.msra.mxu0 0
      %1033 = vmatprep.subr.bf16.mxu0 0
      %1034 = vmatpush2.bf16.msra.mxu0 0
      %1035 = vmatprep.subr.bf16.mxu0 0
      %1036 = vmatpush2.bf16.msra.mxu0 0
      %1037 = vmatprep.mubr.bf16.mxu0 0
      %1038 = vmatmul.mubr.bf16.gmra.mxu0 %v999
      %v1039 = vpop.f32.mrf.mxu0
      %v1040 = vadd.f32 0.0, %v1039
      %v1041 = vpop.f32.mrf.mxu0
      %v1042 = vpop.f32.mrf.mxu0
      %v1043 = vpop.f32.mrf.mxu0
      %1044 = vdwg.mxu0
      %1045 = vrot.lane.b32.xlu0 %v480, 120
      %v1046 = vpop.permute.xlu0 %1045
      %v1048 = vsel %vm835, %v989, 0
      %v1051 = vsel %vm1001, %v1046, 0
      %1053 = vmatprep.subr.bf16.mxu0 0
      %1054 = vmatpush1.bf16.msra.mxu0 0
      %1055 = vmatprep.subr.bf16.mxu0 0
      %1056 = vmatpush1.bf16.msra.mxu0 0
      %1057 = vmatprep.subr.bf16.mxu0 0
      %1058 = vmatpush1.bf16.msra.mxu0 0
      %1059 = vmatprep.subr.bf16.mxu0 0
      %1060 = vmatpush1.bf16.msra.mxu0 0
      %1061 = vmatprep.subr.bf16.mxu0 0
      %1062 = vmatpush1.bf16.msra.mxu0 0
      %1063 = vmatprep.subr.bf16.mxu0 0
      %1064 = vmatpush1.bf16.msra.mxu0 0
      %1065 = vmatprep.subr.bf16.mxu0 0
      %1066 = vmatpush1.bf16.msra.mxu0 0
      %1067 = vmatprep.subr.bf16.mxu0 0
      %1068 = vmatpush1.bf16.msra.mxu0 %v1051
      %1069 = vmatprep.subr.bf16.mxu0 0
      %1070 = vmatpush2.bf16.msra.mxu0 0
      %1071 = vmatprep.subr.bf16.mxu0 0
      %1072 = vmatpush2.bf16.msra.mxu0 0
      %1073 = vmatprep.subr.bf16.mxu0 0
      %1074 = vmatpush2.bf16.msra.mxu0 0
      %1075 = vmatprep.subr.bf16.mxu0 0
      %1076 = vmatpush2.bf16.msra.mxu0 0
      %1077 = vmatprep.subr.bf16.mxu0 0
      %1078 = vmatpush2.bf16.msra.mxu0 0
      %1079 = vmatprep.subr.bf16.mxu0 0
      %1080 = vmatpush2.bf16.msra.mxu0 0
      %1081 = vmatprep.subr.bf16.mxu0 0
      %1082 = vmatpush2.bf16.msra.mxu0 0
      %1083 = vmatprep.subr.bf16.mxu0 0
      %1084 = vmatpush2.bf16.msra.mxu0 0
      %1085 = vmatprep.mubr.bf16.mxu0 0
      %1086 = vmatmul.mubr.bf16.gmra.mxu0 %v1048
      %v1087 = vpop.f32.mrf.mxu0
      %v1088 = vadd.f32 0.0, %v1087
      %v1089 = vpop.f32.mrf.mxu0
      %v1090 = vpop.f32.mrf.mxu0
      %v1091 = vpop.f32.mrf.mxu0
      %1092 = vdwg.mxu0
      %1093 = vrot.lane.b32.xlu0 %v531, 120
      %v1094 = vpop.permute.xlu0 %1093
      %v1096 = vsel %vm835, %v990, 0
      %v1099 = vsel %vm1001, %v1094, 0
      %1101 = vmatprep.subr.bf16.mxu0 0
      %1102 = vmatpush1.bf16.msra.mxu0 0
      %1103 = vmatprep.subr.bf16.mxu0 0
      %1104 = vmatpush1.bf16.msra.mxu0 0
      %1105 = vmatprep.subr.bf16.mxu0 0
      %1106 = vmatpush1.bf16.msra.mxu0 0
      %1107 = vmatprep.subr.bf16.mxu0 0
      %1108 = vmatpush1.bf16.msra.mxu0 0
      %1109 = vmatprep.subr.bf16.mxu0 0
      %1110 = vmatpush1.bf16.msra.mxu0 0
      %1111 = vmatprep.subr.bf16.mxu0 0
      %1112 = vmatpush1.bf16.msra.mxu0 0
      %1113 = vmatprep.subr.bf16.mxu0 0
      %1114 = vmatpush1.bf16.msra.mxu0 0
      %1115 = vmatprep.subr.bf16.mxu0 0
      %1116 = vmatpush1.bf16.msra.mxu0 %v1099
      %1117 = vmatprep.subr.bf16.mxu0 0
      %1118 = vmatpush2.bf16.msra.mxu0 0
      %1119 = vmatprep.subr.bf16.mxu0 0
      %1120 = vmatpush2.bf16.msra.mxu0 0
      %1121 = vmatprep.subr.bf16.mxu0 0
      %1122 = vmatpush2.bf16.msra.mxu0 0
      %1123 = vmatprep.subr.bf16.mxu0 0
      %1124 = vmatpush2.bf16.msra.mxu0 0
      %1125 = vmatprep.subr.bf16.mxu0 0
      %1126 = vmatpush2.bf16.msra.mxu0 0
      %1127 = vmatprep.subr.bf16.mxu0 0
      %1128 = vmatpush2.bf16.msra.mxu0 0
      %1129 = vmatprep.subr.bf16.mxu0 0
      %1130 = vmatpush2.bf16.msra.mxu0 0
      %1131 = vmatprep.subr.bf16.mxu0 0
      %1132 = vmatpush2.bf16.msra.mxu0 0
      %1133 = vmatprep.mubr.bf16.mxu0 0
      %1134 = vmatmul.mubr.bf16.gmra.mxu0 %v1096
      %v1135 = vpop.f32.mrf.mxu0
      %v1136 = vadd.f32 0.0, %v1135
      %v1137 = vpop.f32.mrf.mxu0
      %v1138 = vpop.f32.mrf.mxu0
      %v1139 = vpop.f32.mrf.mxu0
      %1140 = vdwg.mxu0
      %1141 = vrot.lane.b32.xlu0 %v582, 120
      %v1142 = vpop.permute.xlu0 %1141
      %v1144 = vsel %vm835, %v991, 0
      %v1147 = vsel %vm1001, %v1142, 0
      %1149 = vmatprep.subr.bf16.mxu0 0
      %1150 = vmatpush1.bf16.msra.mxu0 0
      %1151 = vmatprep.subr.bf16.mxu0 0
      %1152 = vmatpush1.bf16.msra.mxu0 0
      %1153 = vmatprep.subr.bf16.mxu0 0
      %1154 = vmatpush1.bf16.msra.mxu0 0
      %1155 = vmatprep.subr.bf16.mxu0 0
      %1156 = vmatpush1.bf16.msra.mxu0 0
      %1157 = vmatprep.subr.bf16.mxu0 0
      %1158 = vmatpush1.bf16.msra.mxu0 0
      %1159 = vmatprep.subr.bf16.mxu0 0
      %1160 = vmatpush1.bf16.msra.mxu0 0
      %1161 = vmatprep.subr.bf16.mxu0 0
      %1162 = vmatpush1.bf16.msra.mxu0 0
      %1163 = vmatprep.subr.bf16.mxu0 0
      %1164 = vmatpush1.bf16.msra.mxu0 %v1147
      %1165 = vmatprep.subr.bf16.mxu0 0
      %1166 = vmatpush2.bf16.msra.mxu0 0
      %1167 = vmatprep.subr.bf16.mxu0 0
      %1168 = vmatpush2.bf16.msra.mxu0 0
      %1169 = vmatprep.subr.bf16.mxu0 0
      %1170 = vmatpush2.bf16.msra.mxu0 0
      %1171 = vmatprep.subr.bf16.mxu0 0
      %1172 = vmatpush2.bf16.msra.mxu0 0
      %1173 = vmatprep.subr.bf16.mxu0 0
      %1174 = vmatpush2.bf16.msra.mxu0 0
      %1175 = vmatprep.subr.bf16.mxu0 0
      %1176 = vmatpush2.bf16.msra.mxu0 0
      %1177 = vmatprep.subr.bf16.mxu0 0
      %1178 = vmatpush2.bf16.msra.mxu0 0
      %1179 = vmatprep.subr.bf16.mxu0 0
      %1180 = vmatpush2.bf16.msra.mxu0 0
      %1181 = vmatprep.mubr.bf16.mxu0 0
      %1182 = vmatmul.mubr.bf16.gmra.mxu0 %v1144
      %v1183 = vpop.f32.mrf.mxu0
      %v1184 = vadd.f32 0.0, %v1183
      %v1185 = vpop.f32.mrf.mxu0
      %v1186 = vpop.f32.mrf.mxu0
      %v1187 = vpop.f32.mrf.mxu0
      %1188 = vdwg.mxu0
      %1189 = vrot.lane.b32.xlu0 %v633, 120
      %v1190 = vpop.permute.xlu0 %1189
      %v1192 = vsel %vm835, %v992, 0
      %v1195 = vsel %vm1001, %v1190, 0
      %1197 = vmatprep.subr.bf16.mxu0 0
      %1198 = vmatpush1.bf16.msra.mxu0 0
      %1199 = vmatprep.subr.bf16.mxu0 0
      %1200 = vmatpush1.bf16.msra.mxu0 0
      %1201 = vmatprep.subr.bf16.mxu0 0
      %1202 = vmatpush1.bf16.msra.mxu0 0
      %1203 = vmatprep.subr.bf16.mxu0 0
      %1204 = vmatpush1.bf16.msra.mxu0 0
      %1205 = vmatprep.subr.bf16.mxu0 0
      %1206 = vmatpush1.bf16.msra.mxu0 0
      %1207 = vmatprep.subr.bf16.mxu0 0
      %1208 = vmatpush1.bf16.msra.mxu0 0
      %1209 = vmatprep.subr.bf16.mxu0 0
      %1210 = vmatpush1.bf16.msra.mxu0 0
      %1211 = vmatprep.subr.bf16.mxu0 0
      %1212 = vmatpush1.bf16.msra.mxu0 %v1195
      %1213 = vmatprep.subr.bf16.mxu0 0
      %1214 = vmatpush2.bf16.msra.mxu0 0
      %1215 = vmatprep.subr.bf16.mxu0 0
      %1216 = vmatpush2.bf16.msra.mxu0 0
      %1217 = vmatprep.subr.bf16.mxu0 0
      %1218 = vmatpush2.bf16.msra.mxu0 0
      %1219 = vmatprep.subr.bf16.mxu0 0
      %1220 = vmatpush2.bf16.msra.mxu0 0
      %1221 = vmatprep.subr.bf16.mxu0 0
      %1222 = vmatpush2.bf16.msra.mxu0 0
      %1223 = vmatprep.subr.bf16.mxu0 0
      %1224 = vmatpush2.bf16.msra.mxu0 0
      %1225 = vmatprep.subr.bf16.mxu0 0
      %1226 = vmatpush2.bf16.msra.mxu0 0
      %1227 = vmatprep.subr.bf16.mxu0 0
      %1228 = vmatpush2.bf16.msra.mxu0 0
      %1229 = vmatprep.mubr.bf16.mxu0 0
      %1230 = vmatmul.mubr.bf16.gmra.mxu0 %v1192
      %v1231 = vpop.f32.mrf.mxu0
      %v1232 = vadd.f32 0.0, %v1231
      %v1233 = vpop.f32.mrf.mxu0
      %v1234 = vpop.f32.mrf.mxu0
      %v1235 = vpop.f32.mrf.mxu0
      %1236 = vdwg.mxu0
      %1237 = vrot.lane.b32.xlu0 %v684, 120
      %v1238 = vpop.permute.xlu0 %1237
      %v1240 = vsel %vm835, %v993, 0
      %v1243 = vsel %vm1001, %v1238, 0
      %1245 = vmatprep.subr.bf16.mxu0 0
      %1246 = vmatpush1.bf16.msra.mxu0 0
      %1247 = vmatprep.subr.bf16.mxu0 0
      %1248 = vmatpush1.bf16.msra.mxu0 0
      %1249 = vmatprep.subr.bf16.mxu0 0
      %1250 = vmatpush1.bf16.msra.mxu0 0
      %1251 = vmatprep.subr.bf16.mxu0 0
      %1252 = vmatpush1.bf16.msra.mxu0 0
      %1253 = vmatprep.subr.bf16.mxu0 0
      %1254 = vmatpush1.bf16.msra.mxu0 0
      %1255 = vmatprep.subr.bf16.mxu0 0
      %1256 = vmatpush1.bf16.msra.mxu0 0
      %1257 = vmatprep.subr.bf16.mxu0 0
      %1258 = vmatpush1.bf16.msra.mxu0 0
      %1259 = vmatprep.subr.bf16.mxu0 0
      %1260 = vmatpush1.bf16.msra.mxu0 %v1243
      %1261 = vmatprep.subr.bf16.mxu0 0
      %1262 = vmatpush2.bf16.msra.mxu0 0
      %1263 = vmatprep.subr.bf16.mxu0 0
      %1264 = vmatpush2.bf16.msra.mxu0 0
      %1265 = vmatprep.subr.bf16.mxu0 0
      %1266 = vmatpush2.bf16.msra.mxu0 0
      %1267 = vmatprep.subr.bf16.mxu0 0
      %1268 = vmatpush2.bf16.msra.mxu0 0
      %1269 = vmatprep.subr.bf16.mxu0 0
      %1270 = vmatpush2.bf16.msra.mxu0 0
      %1271 = vmatprep.subr.bf16.mxu0 0
      %1272 = vmatpush2.bf16.msra.mxu0 0
      %1273 = vmatprep.subr.bf16.mxu0 0
      %1274 = vmatpush2.bf16.msra.mxu0 0
      %1275 = vmatprep.subr.bf16.mxu0 0
      %1276 = vmatpush2.bf16.msra.mxu0 0
      %1277 = vmatprep.mubr.bf16.mxu0 0
      %1278 = vmatmul.mubr.bf16.gmra.mxu0 %v1240
      %v1279 = vpop.f32.mrf.mxu0
      %v1280 = vadd.f32 0.0, %v1279
      %v1281 = vpop.f32.mrf.mxu0
      %v1282 = vpop.f32.mrf.mxu0
      %v1283 = vpop.f32.mrf.mxu0
      %1284 = vdwg.mxu0
      %1285 = vrot.lane.b32.xlu0 %v735, 120
      %v1286 = vpop.permute.xlu0 %1285
      %v1288 = vsel %vm835, %v994, 0
      %v1291 = vsel %vm1001, %v1286, 0
      %1293 = vmatprep.subr.bf16.mxu0 0
      %1294 = vmatpush1.bf16.msra.mxu0 0
      %1295 = vmatprep.subr.bf16.mxu0 0
      %1296 = vmatpush1.bf16.msra.mxu0 0
      %1297 = vmatprep.subr.bf16.mxu0 0
      %1298 = vmatpush1.bf16.msra.mxu0 0
      %1299 = vmatprep.subr.bf16.mxu0 0
      %1300 = vmatpush1.bf16.msra.mxu0 0
      %1301 = vmatprep.subr.bf16.mxu0 0
      %1302 = vmatpush1.bf16.msra.mxu0 0
      %1303 = vmatprep.subr.bf16.mxu0 0
      %1304 = vmatpush1.bf16.msra.mxu0 0
      %1305 = vmatprep.subr.bf16.mxu0 0
      %1306 = vmatpush1.bf16.msra.mxu0 0
      %1307 = vmatprep.subr.bf16.mxu0 0
      %1308 = vmatpush1.bf16.msra.mxu0 %v1291
      %1309 = vmatprep.subr.bf16.mxu0 0
      %1310 = vmatpush2.bf16.msra.mxu0 0
      %1311 = vmatprep.subr.bf16.mxu0 0
      %1312 = vmatpush2.bf16.msra.mxu0 0
      %1313 = vmatprep.subr.bf16.mxu0 0
      %1314 = vmatpush2.bf16.msra.mxu0 0
      %1315 = vmatprep.subr.bf16.mxu0 0
      %1316 = vmatpush2.bf16.msra.mxu0 0
      %1317 = vmatprep.subr.bf16.mxu0 0
      %1318 = vmatpush2.bf16.msra.mxu0 0
      %1319 = vmatprep.subr.bf16.mxu0 0
      %1320 = vmatpush2.bf16.msra.mxu0 0
      %1321 = vmatprep.subr.bf16.mxu0 0
      %1322 = vmatpush2.bf16.msra.mxu0 0
      %1323 = vmatprep.subr.bf16.mxu0 0
      %1324 = vmatpush2.bf16.msra.mxu0 0
      %1325 = vmatprep.mubr.bf16.mxu0 0
      %1326 = vmatmul.mubr.bf16.gmra.mxu0 %v1288
      %v1327 = vpop.f32.mrf.mxu0
      %v1328 = vadd.f32 0.0, %v1327
      %v1329 = vpop.f32.mrf.mxu0
      %v1330 = vpop.f32.mrf.mxu0
      %v1331 = vpop.f32.mrf.mxu0
      %1332 = vdwg.mxu0
      %1333 = vrot.lane.b32.xlu0 %v786, 120
      %v1334 = vpop.permute.xlu0 %1333
      %v1336 = vsel %vm835, %v995, 0
      %v1339 = vsel %vm1001, %v1334, 0
      %1341 = vmatprep.subr.bf16.mxu0 0
      %1342 = vmatpush1.bf16.msra.mxu0 0
      %1343 = vmatprep.subr.bf16.mxu0 0
      %1344 = vmatpush1.bf16.msra.mxu0 0
      %1345 = vmatprep.subr.bf16.mxu0 0
      %1346 = vmatpush1.bf16.msra.mxu0 0
      %1347 = vmatprep.subr.bf16.mxu0 0
      %1348 = vmatpush1.bf16.msra.mxu0 0
      %1349 = vmatprep.subr.bf16.mxu0 0
      %1350 = vmatpush1.bf16.msra.mxu0 0
      %1351 = vmatprep.subr.bf16.mxu0 0
      %1352 = vmatpush1.bf16.msra.mxu0 0
      %1353 = vmatprep.subr.bf16.mxu0 0
      %1354 = vmatpush1.bf16.msra.mxu0 0
      %1355 = vmatprep.subr.bf16.mxu0 0
      %1356 = vmatpush1.bf16.msra.mxu0 %v1339
      %1357 = vmatprep.subr.bf16.mxu0 0
      %1358 = vmatpush2.bf16.msra.mxu0 0
      %1359 = vmatprep.subr.bf16.mxu0 0
      %1360 = vmatpush2.bf16.msra.mxu0 0
      %1361 = vmatprep.subr.bf16.mxu0 0
      %1362 = vmatpush2.bf16.msra.mxu0 0
      %1363 = vmatprep.subr.bf16.mxu0 0
      %1364 = vmatpush2.bf16.msra.mxu0 0
      %1365 = vmatprep.subr.bf16.mxu0 0
      %1366 = vmatpush2.bf16.msra.mxu0 0
      %1367 = vmatprep.subr.bf16.mxu0 0
      %1368 = vmatpush2.bf16.msra.mxu0 0
      %1369 = vmatprep.subr.bf16.mxu0 0
      %1370 = vmatpush2.bf16.msra.mxu0 0
      %1371 = vmatprep.subr.bf16.mxu0 0
      %1372 = vmatpush2.bf16.msra.mxu0 0
      %1373 = vmatprep.mubr.bf16.mxu0 0
      %1374 = vmatmul.mubr.bf16.gmra.mxu0 %v1336
      %v1375 = vpop.f32.mrf.mxu0
      %v1376 = vadd.f32 0.0, %v1375
      %v1377 = vpop.f32.mrf.mxu0
      %v1378 = vpop.f32.mrf.mxu0
      %v1379 = vpop.f32.mrf.mxu0
      %1380 = vdwg.mxu0
      %v1381 = vadd.f32 %v980, %v1040
      %v1382 = vadd.f32 %v981, %v1088
      %v1383 = vadd.f32 %v982, %v1136
      %v1384 = vadd.f32 %v983, %v1184
      %v1385 = vadd.f32 %v984, %v1232
      %v1386 = vadd.f32 %v985, %v1280
      %v1387 = vadd.f32 %v986, %v1328
      %v1388 = vadd.f32 %v987, %v1376
      %s1389 = sld [smem:[#allocation2]]
      %v1390 = vstv %s1389
      %v1391 = vmul.f32 %v1390, %v1381
      %v1392 = vmul.f32 %v1390, %v1382
      %v1393 = vmul.f32 %v1390, %v1383
      %v1394 = vmul.f32 %v1390, %v1384
      %v1395 = vmul.f32 %v1390, %v1385
      %v1396 = vmul.f32 %v1390, %v1386
      %v1397 = vmul.f32 %v1390, %v1387
      %v1398 = vmul.f32 %v1390, %v1388
      %v1399 = vadd.f32 %v287, %v1391
      %v1400 = vadd.f32 %v288, %v1392
      %v1401 = vadd.f32 %v289, %v1393
      %v1402 = vadd.f32 %v290, %v1394
      %v1403 = vadd.f32 %v291, %v1395
      %v1404 = vadd.f32 %v292, %v1396
      %v1405 = vadd.f32 %v293, %v1397
      %v1406 = vadd.f32 %v294, %v1398
      %vm1407 = vcmask 261120
      %v1408 = vsel %vm1407, %v1399, 0.0
      %1409 = vadd.xlane.f32.xlu0 %v1408
      %v1410 = vpop.xlane.xlu0 %1409
      %v1411 = vsel %vm1407, %v1400, 0.0
      %1412 = vadd.xlane.f32.xlu0 %v1411
      %v1413 = vpop.xlane.xlu0 %1412
      %v1414 = vsel %vm1407, %v1401, 0.0
      %1415 = vadd.xlane.f32.xlu0 %v1414
      %v1416 = vpop.xlane.xlu0 %1415
      %v1417 = vsel %vm1407, %v1402, 0.0
      %1418 = vadd.xlane.f32.xlu0 %v1417
      %v1419 = vpop.xlane.xlu0 %1418
      %v1420 = vsel %vm1407, %v1403, 0.0
      %1421 = vadd.xlane.f32.xlu0 %v1420
      %v1422 = vpop.xlane.xlu0 %1421
      %v1423 = vsel %vm1407, %v1404, 0.0
      %1424 = vadd.xlane.f32.xlu0 %v1423
      %v1425 = vpop.xlane.xlu0 %1424
      %v1426 = vsel %vm1407, %v1405, 0.0
      %1427 = vadd.xlane.f32.xlu0 %v1426
      %v1428 = vpop.xlane.xlu0 %1427
      %v1429 = vsel %vm1407, %v1406, 0.0
      %1430 = vadd.xlane.f32.xlu0 %v1429
      %v1431 = vpop.xlane.xlu0 %1430
      %v1432 = vadd.f32 %v1410, %v1413
      %v1433 = vadd.f32 %v1432, %v1416
      %v1434 = vadd.f32 %v1433, %v1419
      %v1435 = vadd.f32 %v1434, %v1422
      %v1436 = vadd.f32 %v1435, %v1425
      %v1437 = vadd.f32 %v1436, %v1428
      %v1438 = vadd.f32 %v1437, %v1431
      %v1439 = vrot.slane %v1438, 4
      %v1440 = vadd.f32 %v1438, %v1439
      %v1441 = vrot.slane %v1440, 2
      %v1442 = vadd.f32 %v1440, %v1441
      %v1443 = vrot.slane %v1442, 1
      %v1444 = vadd.f32 %v1442, %v1443
      %v1445 = vrcp.pop 2048.0
      %v1446 = vmul.f32 %v1444, %v1445
      %v1447 = vsub.f32 %v1399, %v1446
      %v1448 = vsub.f32 %v1400, %v1446
      %v1449 = vsub.f32 %v1401, %v1446
      %v1450 = vsub.f32 %v1402, %v1446
      %v1451 = vsub.f32 %v1403, %v1446
      %v1452 = vsub.f32 %v1404, %v1446
      %v1453 = vsub.f32 %v1405, %v1446
      %v1454 = vsub.f32 %v1406, %v1446
      %v1455 = vmul.f32 %v1447, %v1447
      %v1456 = vmul.f32 %v1448, %v1448
      %v1457 = vmul.f32 %v1449, %v1449
      %v1458 = vmul.f32 %v1450, %v1450
      %v1459 = vmul.f32 %v1451, %v1451
      %v1460 = vmul.f32 %v1452, %v1452
      %v1461 = vmul.f32 %v1453, %v1453
      %v1462 = vmul.f32 %v1454, %v1454
      %v1463 = vsel %vm1407, %v1455, 0.0
      %1464 = vadd.xlane.f32.xlu0 %v1463
      %v1465 = vpop.xlane.xlu0 %1464
      %v1466 = vsel %vm1407, %v1456, 0.0
      %1467 = vadd.xlane.f32.xlu0 %v1466
      %v1468 = vpop.xlane.xlu0 %1467
      %v1469 = vsel %vm1407, %v1457, 0.0
      %1470 = vadd.xlane.f32.xlu0 %v1469
      %v1471 = vpop.xlane.xlu0 %1470
      %v1472 = vsel %vm1407, %v1458, 0.0
      %1473 = vadd.xlane.f32.xlu0 %v1472
      %v1474 = vpop.xlane.xlu0 %1473
      %v1475 = vsel %vm1407, %v1459, 0.0
      %1476 = vadd.xlane.f32.xlu0 %v1475
      %v1477 = vpop.xlane.xlu0 %1476
      %v1478 = vsel %vm1407, %v1460, 0.0
      %1479 = vadd.xlane.f32.xlu0 %v1478
      %v1480 = vpop.xlane.xlu0 %1479
      %v1481 = vsel %vm1407, %v1461, 0.0
      %1482 = vadd.xlane.f32.xlu0 %v1481
      %v1483 = vpop.xlane.xlu0 %1482
      %v1484 = vsel %vm1407, %v1462, 0.0
      %1485 = vadd.xlane.f32.xlu0 %v1484
      %v1486 = vpop.xlane.xlu0 %1485
      %v1487 = vadd.f32 %v1465, %v1468
      %v1488 = vadd.f32 %v1487, %v1471
      %v1489 = vadd.f32 %v1488, %v1474
      %v1490 = vadd.f32 %v1489, %v1477
      %v1491 = vadd.f32 %v1490, %v1480
      %v1492 = vadd.f32 %v1491, %v1483
      %v1493 = vadd.f32 %v1492, %v1486
      %v1494 = vrot.slane %v1493, 4
      %v1495 = vadd.f32 %v1493, %v1494
      %v1496 = vrot.slane %v1495, 2
      %v1497 = vadd.f32 %v1495, %v1496
      %v1498 = vrot.slane %v1497, 1
      %v1499 = vadd.f32 %v1497, %v1498
      %v1500 = vmul.f32 %v1499, %v1445
      %v1501 = vadd.f32 %v1500, 1e-05
      %v1502 = vrsqrt.pop %v1501
      %v1503 = vmul.f32 %v1447, %v1502
      %v1504 = vmul.f32 %v1448, %v1502
      %v1505 = vmul.f32 %v1449, %v1502
      %v1506 = vmul.f32 %v1450, %v1502
      %v1507 = vmul.f32 %v1451, %v1502
      %v1508 = vmul.f32 %v1452, %v1502
      %v1509 = vmul.f32 %v1453, %v1502
      %v1510 = vmul.f32 %v1454, %v1502
      %1511 = vst.msk [vmem:[%s285] sm:$0xff] %vm1407, %v1503
      %1512 = vst.msk [vmem:[%s285 + $0x8] sm:$0xff] %vm1407, %v1504
      %1513 = vst.msk [vmem:[%s285 + $0x10] sm:$0xff] %vm1407, %v1505
      %1514 = vst.msk [vmem:[%s285 + $0x18] sm:$0xff] %vm1407, %v1506
      %1515 = vst.msk [vmem:[%s285 + $0x20] sm:$0xff] %vm1407, %v1507
      %1516 = vst.msk [vmem:[%s285 + $0x28] sm:$0xff] %vm1407, %v1508
      %1517 = vst.msk [vmem:[%s285 + $0x30] sm:$0xff] %vm1407, %v1509
      %1518 = vst.msk [vmem:[%s285 + $0x38] sm:$0xff] %vm1407, %v1510
      %p1519 = scmp.lt.s32.totalorder %s17, 1
      %s1520 = scalar_select %p1519, %s17, 1
      %s1521 = smul.addr %s1520, 8
      %s1522 = smul.addr %s1521, 8
      %s1523 = scalar_lea.vmem %s5, %s1522
      // Predicated region
      $region41: #{stage_attention_forward.25} parent=39 // pred_check
        %p1524 = pneg %p160
      $region42: #{stage_attention_forward.25} parent=39 // pred_check_branch
        %1526 = sbr.rel (%p1524) target = $region44
      $region43: #{stage_attention_forward.25} parent=39 // pred_region
        _
      $region44: #{stage_attention_forward.25} parent=39 // pred_fallthru
        _
    $region40: #{stage_attention_forward.25} parent=5 // pred_fallthru
      _
    %p1527 = scmp.le.s32.totalorder 2, %s12
    // Predicated region
    $region45: #{stage_attention_forward.25} parent=5 // pred_check
      %p1528 = pneg %p1527
    $region46: #{stage_attention_forward.25} parent=5 // pred_check_branch
      %1530 = sbr.rel (%p1528) target = $region48
    $region47: #{stage_attention_forward.25} parent=5 // pred_region
      %s1531 = ssub.s32 %s12, 2
      // Predicated region
      $region49: #{stage_attention_forward.25} parent=47 // pred_check
        %p1532 = pneg %p166
      $region50: #{stage_attention_forward.25} parent=47 // pred_check_branch
        %1534 = sbr.rel (%p1532) target = $region52
      $region51: #{stage_attention_forward.25} parent=47 // pred_region
        %p1535 = scmp.lt.s32.totalorder %s18, 1
        %s1536 = scalar_select %p1535, %s18, 1
        %s1537 = smul.addr %s1536, 8
        %s1538 = smul.addr %s1537, 8
        %s1539 = scalar_lea.vmem %s5, %s1538
      $region52: #{stage_attention_forward.25} parent=47 // pred_fallthru
        _
    $region48: #{stage_attention_forward.25} parent=5 // pred_fallthru
      _
  $region6: #{stage_attention_forward.25} parent=0 // loop_footer
    %s16 = sadd.s32 1, %s12
  $region7: #{stage_attention_forward.25} parent=0 // loop_footer_branch
    %11 = sbr.rel target = $region3
  $region8: #{stage_attention_forward.25} parent=0 // loop_exit
    _

// kernel: stage_attention_forward.27
$region0: #{stage_attention_forward.27}
  #allocation0 [shape = 'u32[]', space=smem, size = 0x4, offset = 0x4, fixed_abs, tag = 'smem constant byte address 0x4 - core index']
  #allocation1 [shape = 'u32[144,128]{1,0:T(1,128)}', space=vmem, size = 0x12000, scoped, tag = 'internal scratch']
  #allocation2 [shape = 'f32[2,14,14]{2,1,0:T(8,128)}', space=vmem, size = 0x4000, scoped, tag = 'scratch operand']
  %s0 = inlined_call_operand.vmem [shape: f32[2,8,8,32], index: 0, kind: input, shape index: {}]
  %s1 = inlined_call_operand.vmem [shape: f32[2,8,8,32], index: 1, kind: input, shape index: {}]
  %s2 = inlined_call_operand.vmem [shape: f32[2,8,8,32], index: 2, kind: input, shape index: {}]
  %s3 = inlined_call_operand.vmem [shape: f32[2,8,8,32], index: 3, kind: input, shape index: {}]
  %s4 = inlined_call_operand.vmem [shape: f32[32,2], index: 4, kind: input, shape index: {}]
  %s5 = inlined_call_operand.vmem [shape: f32[2,32], index: 5, kind: input, shape index: {}]
  %s6 = inlined_call_operand.vmem [shape: f32[3], index: 6, kind: input, shape index: {}]
  %s7 = inlined_call_operand.vmem [shape: f32[98], index: 7, kind: input, shape index: {}]
  %s8 = inlined_call_operand.hbm [shape: f32[2,8,8,32], index: 8, kind: output, shape index: {}]
  %s9 = sld [smem:[#allocation0]]
  $region73: #{stage_attention_forward.27} parent=0
    _
  %s11 = ssub.s32 1, %s9
  %s12 = scalar_select 0, %s11, %s9
  $region1: #{stage_attention_forward.27} parent=0
    #allocation3 [shape = 'u8[512]{0}', space=smem, size = 0x200, scoped, tag = 'input window, operand 6, single buffered']
    #allocation4 [shape = 's32[2]{0}', space=sflag, size = 0x8, scoped, tag = 'scoped memory for stage_attention_forward.27']
    #allocation5 [shape = 's32[2]{0}', space=sflag, size = 0x8, scoped, tag = 'scoped memory for stage_attention_forward.27']
    #allocation6 [shape = 'u8[512]{0}', space=smem, size = 0x200, scoped, tag = 'input window, operand 7, single buffered']
    #allocation7 [shape = 's32[1]{0}', space=sflag, size = 0x4, scoped, tag = 'scoped memory for stage_attention_forward.27']
    #allocation8 [shape = 'u8[65536]{0}', space=vmem, size = 0x10000, scoped, tag = 'output window, operand 0']
    %13 = vsyncpa [#allocation5], 0
    %14 = vsyncpa [#allocation7], 0
    %15 = vsyncpa [#allocation4], 0
    %s16 = scalar_lea.sflag [#allocation4], 1
    %17 = vsyncpa %s16, 0
    loop: start=0, step=1, limit=4
    $region2: #{stage_attention_forward.27} parent=1 // loop_pre_header
      _
    $region3: #{stage_attention_forward.27} parent=1 // loop_header
      %s19 = sphi 0, %s23
      %p20 = scmp.ge.s32.totalorder %s19, 4
      %s29 = sphi 0, %s31
      %s32 = sphi 0, %s29
      %s33 = sphi 0, %s32
      %s49 = sphi 0, %s33
      %s55 = sphi 0, %s57
      %s58 = sphi 0, %s55
      %s59 = sphi 0, %s58
      %s75 = sphi 0, %s59
      %s81 = sphi 0, %s83
      %s84 = sphi 0, %s81
      %s85 = sphi 0, %s84
      %s101 = sphi 0, %s85
      %s107 = sphi 0, %s109
      %s110 = sphi 0, %s107
      %s111 = sphi 0, %s110
      %s127 = sphi 0, %s111
      %s131 = sphi 0, %s131
      %s133 = sphi 0, %s131
      %s134 = sphi 0, %s133
      %s148 = sphi 0, %s134
      %s152 = sphi 0, %s152
      %s154 = sphi 0, %s152
      %s155 = sphi 0, %s154
      %s169 = sphi 0, %s155
      %s173 = sphi 0, %s173
      %s175 = sphi 0, %s173
      %s176 = sphi 0, %s175
      %s190 = sphi 0, %s176
      %s194 = sphi 0, %s194
      %s196 = sphi 0, %s194
      %s197 = sphi 0, %s196
      %s211 = sphi 0, %s197
      %s217 = sphi 0, %s219
      %s220 = sphi 0, %s217
      %s221 = sphi 0, %s220
      %s237 = sphi 0, %s221
    $region4: #{stage_attention_forward.27} parent=1 // loop_header_branch
      %22 = sbr.rel (%p20) target = $region8
    $region5: #{stage_attention_forward.27} parent=1 // loop_body
      %s24 = ssub.s32 %s19, 1
      %s25 = ssub.s32 %s19, 2
      %s26 = sadd.s32 %s19, 1
      %s27 = ssub.s32 %s19, %s26
      %p28 = scmp.eq.s32.totalorder %s27, 0
      %s30 = sadd.s32 %s29, 1
      %s31 = scalar_select %p28, %s29, %s30
      %p34 = pneg %p28
      %p35 = scmp.eq.s32.totalorder %s19, 1
      %p36 = por %p34, %p35
      %p37 = scmp.ne.s32.totalorder %s29, %s32
      %p38 = scmp.eq.s32.totalorder %s19, 0
      %p39 = por %p37, %p38
      %p40 = scmp.ne.s32.totalorder %s29, %s32
      %p41 = scmp.eq.s32.totalorder %s24, 1
      %p42 = por %p40, %p41
      %p43 = scmp.ne.s32.totalorder %s32, %s33
      %p44 = scmp.eq.s32.totalorder %s24, 0
      %p45 = por %p43, %p44
      %p46 = scmp.ne.s32.totalorder %s32, %s33
      %p47 = scmp.eq.s32.totalorder %s25, 1
      %p48 = por %p46, %p47
      %p50 = scmp.ne.s32.totalorder %s33, %s49
      %p51 = scmp.eq.s32.totalorder %s25, 0
      %p52 = por %p50, %p51
      %s53 = ssub.s32 %s19, %s26
      %p54 = scmp.eq.s32.totalorder %s53, 0
      %s56 = sadd.s32 %s55, 1
      %s57 = scalar_select %p54, %s55, %s56
      %p60 = pneg %p54
      %p61 = scmp.eq.s32.totalorder %s19, 1
      %p62 = por %p60, %p61
      %p63 = scmp.ne.s32.totalorder %s55, %s58
      %p64 = scmp.eq.s32.totalorder %s19, 0
      %p65 = por %p63, %p64
      %p66 = scmp.ne.s32.totalorder %s55, %s58
      %p67 = scmp.eq.s32.totalorder %s24, 1
      %p68 = por %p66, %p67
      %p69 = scmp.ne.s32.totalorder %s58, %s59
      %p70 = scmp.eq.s32.totalorder %s24, 0
      %p71 = por %p69, %p70
      %p72 = scmp.ne.s32.totalorder %s58, %s59
      %p73 = scmp.eq.s32.totalorder %s25, 1
      %p74 = por %p72, %p73
      %p76 = scmp.ne.s32.totalorder %s59, %s75
      %p77 = scmp.eq.s32.totalorder %s25, 0
      %p78 = por %p76, %p77
      %s79 = ssub.s32 %s19, %s26
      %p80 = scmp.eq.s32.totalorder %s79, 0
      %s82 = sadd.s32 %s81, 1
      %s83 = scalar_select %p80, %s81, %s82
      %p86 = pneg %p80
      %p87 = scmp.eq.s32.totalorder %s19, 1
      %p88 = por %p86, %p87
      %p89 = scmp.ne.s32.totalorder %s81, %s84
      %p90 = scmp.eq.s32.totalorder %s19, 0
      %p91 = por %p89, %p90
      %p92 = scmp.ne.s32.totalorder %s81, %s84
      %p93 = scmp.eq.s32.totalorder %s24, 1
      %p94 = por %p92, %p93
      %p95 = scmp.ne.s32.totalorder %s84, %s85
      %p96 = scmp.eq.s32.totalorder %s24, 0
      %p97 = por %p95, %p96
      %p98 = scmp.ne.s32.totalorder %s84, %s85
      %p99 = scmp.eq.s32.totalorder %s25, 1
      %p100 = por %p98, %p99
      %p102 = scmp.ne.s32.totalorder %s85, %s101
      %p103 = scmp.eq.s32.totalorder %s25, 0
      %p104 = por %p102, %p103
      %s105 = ssub.s32 %s19, %s26
      %p106 = scmp.eq.s32.totalorder %s105, 0
      %s108 = sadd.s32 %s107, 1
      %s109 = scalar_select %p106, %s107, %s108
      %p112 = pneg %p106
      %p113 = scmp.eq.s32.totalorder %s19, 1
      %p114 = por %p112, %p113
      %p115 = scmp.ne.s32.totalorder %s107, %s110
      %p116 = scmp.eq.s32.totalorder %s19, 0
      %p117 = por %p115, %p116
      %p118 = scmp.ne.s32.totalorder %s107, %s110
      %p119 = scmp.eq.s32.totalorder %s24, 1
      %p120 = por %p118, %p119
      %p121 = scmp.ne.s32.totalorder %s110, %s111
      %p122 = scmp.eq.s32.totalorder %s24, 0
      %p123 = por %p121, %p122
      %p124 = scmp.ne.s32.totalorder %s110, %s111
      %p125 = scmp.eq.s32.totalorder %s25, 1
      %p126 = por %p124, %p125
      %p128 = scmp.ne.s32.totalorder %s111, %s127
      %p129 = scmp.eq.s32.totalorder %s25, 0
      %p130 = por %p128, %p129
      %s132 = sadd.s32 %s131, 1
      %p135 = scmp.eq.s32.totalorder %s19, 1
      %p136 = scmp.ne.s32.totalorder %s131, %s133
      %p137 = scmp.eq.s32.totalorder %s19, 0
      %p138 = por %p136, %p137
      %p139 = scmp.ne.s32.totalorder %s131, %s133
      %p140 = scmp.eq.s32.totalorder %s24, 1
      %p141 = por %p139, %p140
      %p142 = scmp.ne.s32.totalorder %s133, %s134
      %p143 = scmp.eq.s32.totalorder %s24, 0
      %p144 = por %p142, %p143
      %p145 = scmp.ne.s32.totalorder %s133, %s134
      %p146 = scmp.eq.s32.totalorder %s25, 1
      %p147 = por %p145, %p146
      %p149 = scmp.ne.s32.totalorder %s134, %s148
      %p150 = scmp.eq.s32.totalorder %s25, 0
      %p151 = por %p149, %p150
      %s153 = sadd.s32 %s152, 1
      %p156 = scmp.eq.s32.totalorder %s19, 1
      %p157 = scmp.ne.s32.totalorder %s152, %s154
      %p158 = scmp.eq.s32.totalorder %s19, 0
      %p159 = por %p157, %p158
      %p160 = scmp.ne.s32.totalorder %s152, %s154
      %p161 = scmp.eq.s32.totalorder %s24, 1
      %p162 = por %p160, %p161
      %p163 = scmp.ne.s32.totalorder %s154, %s155
      %p164 = scmp.eq.s32.totalorder %s24, 0
      %p165 = por %p163, %p164
      %p166 = scmp.ne.s32.totalorder %s154, %s155
      %p167 = scmp.eq.s32.totalorder %s25, 1
      %p168 = por %p166, %p167
      %p170 = scmp.ne.s32.totalorder %s155, %s169
      %p171 = scmp.eq.s32.totalorder %s25, 0
      %p172 = por %p170, %p171
      %s174 = sadd.s32 %s173, 1
      %p177 = scmp.eq.s32.totalorder %s19, 1
      %p178 = scmp.ne.s32.totalorder %s173, %s175
      %p179 = scmp.eq.s32.totalorder %s19, 0
      %p180 = por %p178, %p179
      %p181 = scmp.ne.s32.totalorder %s173, %s175
      %p182 = scmp.eq.s32.totalorder %s24, 1
      %p183 = por %p181, %p182
      %p184 = scmp.ne.s32.totalorder %s175, %s176
      %p185 = scmp.eq.s32.totalorder %s24, 0
      %p186 = por %p184, %p185
      %p187 = scmp.ne.s32.totalorder %s175, %s176
      %p188 = scmp.eq.s32.totalorder %s25, 1
      %p189 = por %p187, %p188
      %p191 = scmp.ne.s32.totalorder %s176, %s190
      %p192 = scmp.eq.s32.totalorder %s25, 0
      %p193 = por %p191, %p192
      %s195 = sadd.s32 %s194, 1
      %p198 = scmp.eq.s32.totalorder %s19, 1
      %p199 = scmp.ne.s32.totalorder %s194, %s196
      %p200 = scmp.eq.s32.totalorder %s19, 0
      %p201 = por %p199, %p200
      %p202 = scmp.ne.s32.totalorder %s194, %s196
      %p203 = scmp.eq.s32.totalorder %s24, 1
      %p204 = por %p202, %p203
      %p205 = scmp.ne.s32.totalorder %s196, %s197
      %p206 = scmp.eq.s32.totalorder %s24, 0
      %p207 = por %p205, %p206
      %p208 = scmp.ne.s32.totalorder %s196, %s197
      %p209 = scmp.eq.s32.totalorder %s25, 1
      %p210 = por %p208, %p209
      %p212 = scmp.ne.s32.totalorder %s197, %s211
      %p213 = scmp.eq.s32.totalorder %s25, 0
      %p214 = por %p212, %p213
      %s215 = ssub.s32 %s19, %s26
      %p216 = scmp.eq.s32.totalorder %s215, 0
      %s218 = sadd.s32 %s217, 1
      %s219 = scalar_select %p216, %s217, %s218
      %p222 = pneg %p216
      %p223 = scmp.eq.s32.totalorder %s19, 1
      %p224 = por %p222, %p223
      %p225 = scmp.ne.s32.totalorder %s217, %s220
      %p226 = scmp.eq.s32.totalorder %s19, 0
      %p227 = por %p225, %p226
      %p228 = scmp.ne.s32.totalorder %s217, %s220
      %p229 = scmp.eq.s32.totalorder %s24, 1
      %p230 = por %p228, %p229
      %p231 = scmp.ne.s32.totalorder %s220, %s221
      %p232 = scmp.eq.s32.totalorder %s24, 0
      %p233 = por %p231, %p232
      %p234 = scmp.ne.s32.totalorder %s220, %s221
      %p235 = scmp.eq.s32.totalorder %s25, 1
      %p236 = por %p234, %p235
      %p238 = scmp.ne.s32.totalorder %s221, %s237
      %p239 = scmp.eq.s32.totalorder %s25, 0
      %p240 = por %p238, %p239
      %p241 = scmp.le.s32.totalorder 1, %s19
      %p242 = scmp.lt.s32.totalorder %s19, 3
      %p243 = pnand %p241, %p242
      %p244 = pneg %p243
      // Predicated region
      $region9: #{stage_attention_forward.27} parent=5 // pred_check
        _
      $region10: #{stage_attention_forward.27} parent=5 // pred_check_branch
        %246 = sbr.rel (%p243) target = $region12
      $region11: #{stage_attention_forward.27} parent=5 // pred_region
        %s247 = ssub.s32 %s19, 1
        // Predicated region
        $region13: #{stage_attention_forward.27} parent=11 // pred_check
          %p248 = pneg %p144
        $region14: #{stage_attention_forward.27} parent=11 // pred_check_branch
          %250 = sbr.rel (%p248) target = $region16
        $region15: #{stage_attention_forward.27} parent=11 // pred_region
          _
        $region16: #{stage_attention_forward.27} parent=11 // pred_fallthru
          _
        // Predicated region
        $region17: #{stage_attention_forward.27} parent=11 // pred_check
          %p251 = pneg %p165
        $region18: #{stage_attention_forward.27} parent=11 // pred_check_branch
          %253 = sbr.rel (%p251) target = $region20
        $region19: #{stage_attention_forward.27} parent=11 // pred_region
          _
        $region20: #{stage_attention_forward.27} parent=11 // pred_fallthru
          _
        // Predicated region
        $region21: #{stage_attention_forward.27} parent=11 // pred_check
          %p254 = pneg %p186
        $region22: #{stage_attention_forward.27} parent=11 // pred_check_branch
          %256 = sbr.rel (%p254) target = $region24
        $region23: #{stage_attention_forward.27} parent=11 // pred_region
          %s258 = ssub.s32 16, 16
          %259 = vsyncadd [#allocation5], %s258
          %s261 = sshll.u32 %s6, 4
          %s262 = int_to_ptr.vmem [resolvable:$true] %s261
          %264 = dma.vmem_to_smem %s262, 16, [#allocation3], [#allocation5]
        $region24: #{stage_attention_forward.27} parent=11 // pred_fallthru
          _
        // Predicated region
        $region25: #{stage_attention_forward.27} parent=11 // pred_check
          %p265 = pneg %p207
        $region26: #{stage_attention_forward.27} parent=11 // pred_check_branch
          %267 = sbr.rel (%p265) target = $region28
        $region27: #{stage_attention_forward.27} parent=11 // pred_region
          %s269 = ssub.s32 16, 16
          %270 = vsyncadd [#allocation7], %s269
          %s272 = sshll.u32 %s7, 4
          %s273 = int_to_ptr.vmem [resolvable:$true] %s272
          %275 = dma.vmem_to_smem %s273, 16, [#allocation6], [#allocation7]
        $region28: #{stage_attention_forward.27} parent=11 // pred_fallthru
          _
      $region12: #{stage_attention_forward.27} parent=5 // pred_fallthru
        _
      %p276 = scmp.lt.s32.totalorder %s19, 2
      // Predicated region
      $region29: #{stage_attention_forward.27} parent=5 // pred_check
        %p277 = pneg %p276
      $region30: #{stage_attention_forward.27} parent=5 // pred_check_branch
        %279 = sbr.rel (%p277) target = $region32
      $region31: #{stage_attention_forward.27} parent=5 // pred_region
        // Predicated region
        $region33: #{stage_attention_forward.27} parent=31 // pred_check
          %p280 = pneg %p39
        $region34: #{stage_attention_forward.27} parent=31 // pred_check_branch
          %282 = sbr.rel (%p280) target = $region36
        $region35: #{stage_attention_forward.27} parent=31 // pred_region
          %p283 = scmp.lt.s32.totalorder %s19, 1
          %s284 = scalar_select %p283, %s19, 1
          %s285 = smul.addr %s284, 8
          %s286 = smul.addr %s285, 8
          %s287 = scalar_lea.vmem %s0, %s286
        $region36: #{stage_attention_forward.27} parent=31 // pred_fallthru
          _
        // Predicated region
        $region37: #{stage_attention_forward.27} parent=31 // pred_check
          %p288 = pneg %p65
        $region38: #{stage_attention_forward.27} parent=31 // pred_check_branch
          %290 = sbr.rel (%p288) target = $region40
        $region39: #{stage_attention_forward.27} parent=31 // pred_region
          %p291 = scmp.lt.s32.totalorder %s19, 1
          %s292 = scalar_select %p291, %s19, 1
          %s293 = smul.addr %s292, 8
          %s294 = smul.addr %s293, 8
          %s295 = scalar_lea.vmem %s1, %s294
        $region40: #{stage_attention_forward.27} parent=31 // pred_fallthru
          _
        // Predicated region
        $region41: #{stage_attention_forward.27} parent=31 // pred_check
          %p296 = pneg %p91
        $region42: #{stage_attention_forward.27} parent=31 // pred_check_branch
          %298 = sbr.rel (%p296) target = $region44
        $region43: #{stage_attention_forward.27} parent=31 // pred_region
          %p299 = scmp.lt.s32.totalorder %s19, 1
          %s300 = scalar_select %p299, %s19, 1
          %s301 = smul.addr %s300, 8
          %s302 = smul.addr %s301, 8
          %s303 = scalar_lea.vmem %s2, %s302
        $region44: #{stage_attention_forward.27} parent=31 // pred_fallthru
          _
        // Predicated region
        $region45: #{stage_attention_forward.27} parent=31 // pred_check
          %p304 = pneg %p117
        $region46: #{stage_attention_forward.27} parent=31 // pred_check_branch
          %306 = sbr.rel (%p304) target = $region48
        $region47: #{stage_attention_forward.27} parent=31 // pred_region
          %p307 = scmp.lt.s32.totalorder %s19, 1
          %s308 = scalar_select %p307, %s19, 1
          %s309 = smul.addr %s308, 8
          %s310 = smul.addr %s309, 8
          %s311 = scalar_lea.vmem %s3, %s310
        $region48: #{stage_attention_forward.27} parent=31 // pred_fallthru
          _
      $region32: #{stage_attention_forward.27} parent=5 // pred_fallthru
        _
      %p312 = scmp.le.s32.totalorder 1, %s19
      %p313 = scmp.lt.s32.totalorder %s19, 3
      %p314 = pnand %p312, %p313
      %p315 = pneg %p314
      // Predicated region
      $region49: #{stage_attention_forward.27} parent=5 // pred_check
        _
      $region50: #{stage_attention_forward.27} parent=5 // pred_check_branch
        %317 = sbr.rel (%p314) target = $region52
      $region51: #{stage_attention_forward.27} parent=5 // pred_region
        %s318 = ssub.s32 %s19, 1
        // Predicated region
        $region53: #{stage_attention_forward.27} parent=51 // pred_check
          %p319 = pneg %p186
        $region54: #{stage_attention_forward.27} parent=51 // pred_check_branch
          %321 = sbr.rel (%p319) target = $region56
        $region55: #{stage_attention_forward.27} parent=51 // pred_region
          %322 = dma.done [#allocation5], 16
        $region56: #{stage_attention_forward.27} parent=51 // pred_fallthru
          _
        // Predicated region
        $region57: #{stage_attention_forward.27} parent=51 // pred_check
          %p323 = pneg %p207
        $region58: #{stage_attention_forward.27} parent=51 // pred_check_branch
          %325 = sbr.rel (%p323) target = $region60
        $region59: #{stage_attention_forward.27} parent=51 // pred_region
          %326 = dma.done [#allocation7], 16
        $region60: #{stage_attention_forward.27} parent=51 // pred_fallthru
          _
        %327 = sfence
        %p328 = scmp.lt.s32.totalorder %s24, 1
        %s329 = scalar_select %p328, %s24, 1
        %s330 = smul.addr %s329, 8
        %s331 = smul.addr %s330, 8
        %s332 = scalar_lea.vmem %s0, %s331
        %p333 = pneg %p45
        %p334 = pneg %p42
        %p335 = scmp.lt.s32.totalorder %s24, 1
        %s336 = scalar_select %p335, %s24, 1
        %s337 = smul.addr %s336, 8
        %s338 = smul.addr %s337, 8
        %s339 = scalar_lea.vmem %s1, %s338
        %p340 = pneg %p71
        %p341 = pneg %p68
        %p342 = scmp.lt.s32.totalorder %s24, 1
        %s343 = scalar_select %p342, %s24, 1
        %s344 = smul.addr %s343, 8
        %s345 = smul.addr %s344, 8
        %s346 = scalar_lea.vmem %s2, %s345
        %p347 = pneg %p97
        %p348 = pneg %p94
        %p349 = scmp.lt.s32.totalorder %s24, 1
        %s350 = scalar_select %p349, %s24, 1
        %s351 = smul.addr %s350, 8
        %s352 = smul.addr %s351, 8
        %s353 = scalar_lea.vmem %s3, %s352
        %p354 = pneg %p123
        %p355 = pneg %p120
        %p356 = pneg %p144
        %p357 = pneg %p141
        %p358 = pneg %p165
        %p359 = pneg %p162
        %p360 = pneg %p186
        %p361 = pneg %p183
        %p362 = pneg %p207
        %p363 = pneg %p204
        %p364 = pneg %p233
        %p365 = pneg %p230
        %s366 = sand.u32 %s220, 1
        %s367 = scalar_lea.sflag [#allocation4], %s366
        %s368 = sand.u32 %s220, 1
        %s369 = smul.addr %s368, 64
        %s370 = scalar_lea.vmem [#allocation8], %s369
        %p371 = scmp.lt.s32.totalorder %s24, 1
        %s372 = scalar_select %p371, %s24, 1
        %s373 = smul.addr %s372, 8
        %s374 = smul.addr %s373, 8
        %s375 = scalar_lea.vmem %s0, %s374
        %p376 = scmp.lt.s32.totalorder %s24, 1
        %s377 = scalar_select %p376, %s24, 1
        %s378 = smul.addr %s377, 8
        %s379 = smul.addr %s378, 8
        %s380 = scalar_lea.vmem %s1, %s379
        %p381 = scmp.lt.s32.totalorder %s24, 1
        %s382 = scalar_select %p381, %s24, 1
        %s383 = smul.addr %s382, 8
        %s384 = smul.addr %s383, 8
        %s385 = scalar_lea.vmem %s2, %s384
        %p386 = scmp.lt.s32.totalorder %s24, 1
        %s387 = scalar_select %p386, %s24, 1
        %s388 = smul.addr %s387, 8
        %s389 = smul.addr %s388, 8
        %s390 = scalar_lea.vmem %s3, %s389
        %v392 = vld [vmem:[%s375] sm:$0xff]
        %v393 = vld [vmem:[%s375 + $0x8] sm:$0xff]
        %v394 = vld [vmem:[%s375 + $0x10] sm:$0xff]
        %v395 = vld [vmem:[%s375 + $0x18] sm:$0xff]
        %v396 = vld [vmem:[%s375 + $0x20] sm:$0xff]
        %v397 = vld [vmem:[%s375 + $0x28] sm:$0xff]
        %v398 = vld [vmem:[%s375 + $0x30] sm:$0xff]
        %v399 = vld [vmem:[%s375 + $0x38] sm:$0xff]
        %v400 = vmul.f32 %v392, 2.0
        %v401 = vmul.f32 %v393, 2.0
        %v402 = vmul.f32 %v394, 2.0
        %v403 = vmul.f32 %v395, 2.0
        %v404 = vmul.f32 %v396, 2.0
        %v405 = vmul.f32 %v397, 2.0
        %v406 = vmul.f32 %v398, 2.0
        %v407 = vmul.f32 %v399, 2.0
        %s408 = sld [smem:[#allocation3]]
        %v409 = vld [vmem:[%s380] sm:$0xff]
        %v410 = vld [vmem:[%s380 + $0x8] sm:$0xff]
        %v411 = vld [vmem:[%s380 + $0x10] sm:$0xff]
        %v412 = vld [vmem:[%s380 + $0x18] sm:$0xff]
        %v413 = vld [vmem:[%s380 + $0x20] sm:$0xff]
        %v414 = vld [vmem:[%s380 + $0x28] sm:$0xff]
        %v415 = vld [vmem:[%s380 + $0x30] sm:$0xff]
        %v416 = vld [vmem:[%s380 + $0x38] sm:$0xff]
        %v417 = vstv %s408
        %v418 = vmul.f32 %v417, %v409
        %v419 = vmul.f32 %v417, %v410
        %v420 = vmul.f32 %v417, %v411
        %v421 = vmul.f32 %v417, %v412
        %v422 = vmul.f32 %v417, %v413
        %v423 = vmul.f32 %v417, %v414
        %v424 = vmul.f32 %v417, %v415
        %v425 = vmul.f32 %v417, %v416
        %v426 = vadd.f32 %v400, %v418
        %v427 = vadd.f32 %v401, %v419
        %v428 = vadd.f32 %v402, %v420
        %v429 = vadd.f32 %v403, %v421
        %v430 = vadd.f32 %v404, %v422
        %v431 = vadd.f32 %v405, %v423
        %v432 = vadd.f32 %v406, %v424
        %v433 = vadd.f32 %v407, %v425
        %s434 = sld [smem:[#allocation3 + $0x1]]
        %v435 = vld [vmem:[%s385] sm:$0xff]
        %v436 = vld [vmem:[%s385 + $0x8] sm:$0xff]
        %v437 = vld [vmem:[%s385 + $0x10] sm:$0xff]
        %v438 = vld [vmem:[%s385 + $0x18] sm:$0xff]
        %v439 = vld [vmem:[%s385 + $0x20] sm:$0xff]
        %v440 = vld [vmem:[%s385 + $0x28] sm:$0xff]
        %v441 = vld [vmem:[%s385 + $0x30] sm:$0xff]
        %v442 = vld [vmem:[%s385 + $0x38] sm:$0xff]
        %v443 = vstv %s434
        %v444 = vmul.f32 %v443, %v435
        %v445 = vmul.f32 %v443, %v436
        %v446 = vmul.f32 %v443, %v437
        %v447 = vmul.f32 %v443, %v438
        %v448 = vmul.f32 %v443, %v439
        %v449 = vmul.f32 %v443, %v440
        %v450 = vmul.f32 %v443, %v441
        %v451 = vmul.f32 %v443, %v442
        %v452 = vadd.f32 %v426, %v444
        %v453 = vadd.f32 %v427, %v445
        %v454 = vadd.f32 %v428, %v446
        %v455 = vadd.f32 %v429, %v447
        %v456 = vadd.f32 %v430, %v448
        %v457 = vadd.f32 %v431, %v449
        %v458 = vadd.f32 %v432, %v450
        %v459 = vadd.f32 %v433, %v451
        %s460 = sld [smem:[#allocation3 + $0x2]]
        %v461 = vld [vmem:[%s390] sm:$0xff]
        %v462 = vld [vmem:[%s390 + $0x8] sm:$0xff]
        %v463 = vld [vmem:[%s390 + $0x10] sm:$0xff]
        %v464 = vld [vmem:[%s390 + $0x18] sm:$0xff]
        %v465 = vld [vmem:[%s390 + $0x20] sm:$0xff]
        %v466 = vld [vmem:[%s390 + $0x28] sm:$0xff]
        %v467 = vld [vmem:[%s390 + $0x30] sm:$0xff]
        %v468 = vld [vmem:[%s390 + $0x38] sm:$0xff]
        %v469 = vstv %s460
        %v470 = vmul.f32 %v469, %v461
        %v471 = vmul.f32 %v469, %v462
        %v472 = vmul.f32 %v469, %v463
        %v473 = vmul.f32 %v469, %v464
        %v474 = vmul.f32 %v469, %v465
        %v475 = vmul.f32 %v469, %v466
        %v476 = vmul.f32 %v469, %v467
        %v477 = vmul.f32 %v469, %v468
        %v478 = vadd.f32 %v452, %v470
        %v479 = vadd.f32 %v453, %v471
        %v480 = vadd.f32 %v454, %v472
        %v481 = vadd.f32 %v455, %v473
        %v482 = vadd.f32 %v456, %v474
        %v483 = vadd.f32 %v457, %v475
        %v484 = vadd.f32 %v458, %v476
        %v485 = vadd.f32 %v459, %v477
        %vm486 = vcmask 261120
        %v487 = vsel %vm486, %v478, 0.0
        %v488 = vsel %vm486, %v479, 0.0
        %v489 = vadd.f32 %v487, %v488
        %v490 = vsel %vm486, %v480, 0.0
        %v491 = vadd.f32 %v489, %v490
        %v492 = vsel %vm486, %v481, 0.0
        %v493 = vadd.f32 %v491, %v492
        %v494 = vsel %vm486, %v482, 0.0
        %v495 = vadd.f32 %v493, %v494
        %v496 = vsel %vm486, %v483, 0.0
        %v497 = vadd.f32 %v495, %v496
        %v498 = vsel %vm486, %v484, 0.0
        %v499 = vadd.f32 %v497, %v498
        %v500 = vsel %vm486, %v485, 0.0
        %v501 = vadd.f32 %v499, %v500
        %v502 = vrot.slane %v501, 4
        %v503 = vadd.f32 %v501, %v502
        %v504 = vrot.slane %v503, 2
        %v505 = vadd.f32 %v503, %v504
        %v506 = vrot.slane %v505, 1
        %v507 = vadd.f32 %v505, %v506
        %v508 = vrcp.pop 64.0
        %v509 = vmul.f32 %v507, %v508
        %v510 = vsel %vm486, %v478, -inf
        %v511 = vsel %vm486, %v479, -inf
        %v512 = vsel %vm486, %v480, -inf
        %v513 = vsel %vm486, %v481, -inf
        %v514 = vsel %vm486, %v482, -inf
        %v515 = vmax.f32 %v510, %v514
        %v516 = vsel %vm486, %v483, -inf
        %v517 = vmax.f32 %v511, %v516
        %v518 = vsel %vm486, %v484, -inf
        %v519 = vmax.f32 %v512, %v518
        %v520 = vsel %vm486, %v485, -inf
        %v521 = vmax.f32 %v513, %v520
        %v522 = vmax.f32 %v515, %v517
        %v523 = vmax.f32 %v519, %v521
        %v524 = vmax.f32 %v522, %v523
        %v525 = vrot.slane %v524, 4
        %v526 = vmax.f32 %v524, %v525
        %v527 = vrot.slane %v526, 2
        %v528 = vmax.f32 %v526, %v527
        %v529 = vrot.slane %v528, 1
        %v530 = vmax.f32 %v528, %v529
        %v531 = vld [vmem:[%s4] sm:$0xff]
        %v532 = vld [vmem:[%s4 + $0x8] sm:$0xff]
        %v533 = vld [vmem:[%s4 + $0x10] sm:$0xff]
        %v534 = vld [vmem:[%s4 + $0x18] sm:$0xff]
        %v535 = vpack.c.bf16 %v509, %v509
        %v536 = vpack.c.bf16 %v532, %v531
        %v537 = vpack.c.bf16 %v534, %v533
        %v539 = vsel %vm486, %v535, 0
        %541 = vmatprep.subr.bf16.mxu0 0
        %542 = vmatpush1.bf16.msra.mxu0 0
        %543 = vmatprep.subr.bf16.mxu0 0
        %544 = vmatpush1.bf16.msra.mxu0 0
        %545 = vmatprep.subr.bf16.mxu0 0
        %546 = vmatpush1.bf16.msra.mxu0 0
        %547 = vmatprep.subr.bf16.mxu0 0
        %548 = vmatpush1.bf16.msra.mxu0 0
        %549 = vmatprep.subr.bf16.mxu0 0
        %550 = vmatpush1.bf16.msra.mxu0 0
        %551 = vmatprep.subr.bf16.mxu0 0
        %552 = vmatpush1.bf16.msra.mxu0 0
        %553 = vmatprep.subr.bf16.mxu0 0
        %554 = vmatpush1.bf16.msra.mxu0 %v537
        %555 = vmatprep.subr.bf16.mxu0 0
        %556 = vmatpush1.bf16.msra.mxu0 %v536
        %557 = vmatprep.subr.bf16.mxu0 0
        %558 = vmatpush2.bf16.msra.mxu0 0
        %559 = vmatprep.subr.bf16.mxu0 0
        %560 = vmatpush2.bf16.msra.mxu0 0
        %561 = vmatprep.subr.bf16.mxu0 0
        %562 = vmatpush2.bf16.msra.mxu0 0
        %563 = vmatprep.subr.bf16.mxu0 0
        %564 = vmatpush2.bf16.msra.mxu0 0
        %565 = vmatprep.subr.bf16.mxu0 0
        %566 = vmatpush2.bf16.msra.mxu0 0
        %567 = vmatprep.subr.bf16.mxu0 0
        %568 = vmatpush2.bf16.msra.mxu0 0
        %569 = vmatprep.subr.bf16.mxu0 0
        %570 = vmatpush2.bf16.msra.mxu0 0
        %571 = vmatprep.subr.bf16.mxu0 0
        %572 = vmatpush2.bf16.msra.mxu0 0
        %573 = vmatprep.mubr.bf16.mxu0 0
        %574 = vmatmul.mubr.bf16.gmra.mxu0 %v539
        %v575 = vpop.f32.mrf.mxu0
        %v576 = vadd.f32 0.0, %v575
        %v577 = vpop.f32.mrf.mxu0
        %v578 = vpop.f32.mrf.mxu0
        %v579 = vpop.f32.mrf.mxu0
        %580 = vdwg.mxu0
        %v581 = vmax.f32 %v576, 0.0
        %v582 = vld [vmem:[%s5] sm:$0x3]
        %v583 = vpack.c.bf16 %v581, %v581
        %v584 = vpack.c.bf16 %v582, %v582
        %v585 = vpack.c.bf16 %v530, %v530
        %v587 = vsel %vm486, %v585, 0
        %589 = vmatprep.subr.bf16.mxu0 0
        %590 = vmatpush1.bf16.msra.mxu0 0
        %591 = vmatprep.subr.bf16.mxu0 0
        %592 = vmatpush1.bf16.msra.mxu0 0
        %593 = vmatprep.subr.bf16.mxu0 0
        %594 = vmatpush1.bf16.msra.mxu0 0
        %595 = vmatprep.subr.bf16.mxu0 0
        %596 = vmatpush1.bf16.msra.mxu0 0
        %597 = vmatprep.subr.bf16.mxu0 0
        %598 = vmatpush1.bf16.msra.mxu0 0
        %599 = vmatprep.subr.bf16.mxu0 0
        %600 = vmatpush1.bf16.msra.mxu0 0
        %601 = vmatprep.subr.bf16.mxu0 0
        %602 = vmatpush1.bf16.msra.mxu0 %v537
        %603 = vmatprep.subr.bf16.mxu0 0
        %604 = vmatpush1.bf16.msra.mxu0 %v536
        %605 = vmatprep.subr.bf16.mxu0 0
        %606 = vmatpush2.bf16.msra.mxu0 0
        %607 = vmatprep.subr.bf16.mxu0 0
        %608 = vmatpush2.bf16.msra.mxu0 0
        %609 = vmatprep.subr.bf16.mxu0 0
        %610 = vmatpush2.bf16.msra.mxu0 0
        %611 = vmatprep.subr.bf16.mxu0 0
        %612 = vmatpush2.bf16.msra.mxu0 0
        %613 = vmatprep.subr.bf16.mxu0 0
        %614 = vmatpush2.bf16.msra.mxu0 0
        %615 = vmatprep.subr.bf16.mxu0 0
        %616 = vmatpush2.bf16.msra.mxu0 0
        %617 = vmatprep.subr.bf16.mxu0 0
        %618 = vmatpush2.bf16.msra.mxu0 0
        %619 = vmatprep.subr.bf16.mxu0 0
        %620 = vmatpush2.bf16.msra.mxu0 0
        %621 = vmatprep.mubr.bf16.mxu0 0
        %622 = vmatmul.mubr.bf16.gmra.mxu0 %v587
        %v623 = vpop.f32.mrf.mxu0
        %v624 = vadd.f32 0.0, %v623
        %v625 = vpop.f32.mrf.mxu0
        %v626 = vpop.f32.mrf.mxu0
        %v627 = vpop.f32.mrf.mxu0
        %628 = vdwg.mxu0
        %v629 = vmax.f32 %v624, 0.0
        %v630 = vpack.c.bf16 %v629, %v629
        %vm631 = vcmask 15360
        %v633 = vsel %vm631, %v630, 0
        %vm635 = vcmask 1040384
        %v637 = vsel %vm635, %v584, 0
        %639 = vmatprep.subr.bf16.mxu0 0
        %640 = vmatpush1.bf16.msra.mxu0 0
        %641 = vmatprep.subr.bf16.mxu0 0
        %642 = vmatpush1.bf16.msra.mxu0 0
        %643 = vmatprep.subr.bf16.mxu0 0
        %644 = vmatpush1.bf16.msra.mxu0 0
        %645 = vmatprep.subr.bf16.mxu0 0
        %646 = vmatpush1.bf16.msra.mxu0 0
        %647 = vmatprep.subr.bf16.mxu0 0
        %648 = vmatpush1.bf16.msra.mxu0 0
        %649 = vmatprep.subr.bf16.mxu0 0
        %650 = vmatpush1.bf16.msra.mxu0 0
        %651 = vmatprep.subr.bf16.mxu0 0
        %652 = vmatpush1.bf16.msra.mxu0 0
        %653 = vmatprep.subr.bf16.mxu0 0
        %654 = vmatpush1.bf16.msra.mxu0 %v637
        %655 = vmatprep.subr.bf16.mxu0 0
        %656 = vmatpush2.bf16.msra.mxu0 0
        %657 = vmatprep.subr.bf16.mxu0 0
        %658 = vmatpush2.bf16.msra.mxu0 0
        %659 = vmatprep.subr.bf16.mxu0 0
        %660 = vmatpush2.bf16.msra.mxu0 0
        %661 = vmatprep.subr.bf16.mxu0 0
        %662 = vmatpush2.bf16.msra.mxu0 0
        %663 = vmatprep.subr.bf16.mxu0 0
        %664 = vmatpush2.bf16.msra.mxu0 0
        %665 = vmatprep.subr.bf16.mxu0 0
        %666 = vmatpush2.bf16.msra.mxu0 0
        %667 = vmatprep.subr.bf16.mxu0 0
        %668 = vmatpush2.bf16.msra.mxu0 0
        %669 = vmatprep.subr.bf16.mxu0 0
        %670 = vmatpush2.bf16.msra.mxu0 0
        %671 = vmatprep.mubr.bf16.mxu0 0
        %672 = vmatmul.mubr.bf16.gmra.mxu0 %v633
        %v673 = vpop.f32.mrf.mxu0
        %v674 = vadd.f32 0.0, %v673
        %v675 = vpop.f32.mrf.mxu0
        %v676 = vpop.f32.mrf.mxu0
        %v677 = vpop.f32.mrf.mxu0
        %678 = vdwg.mxu0
        %v680 = vsel %vm631, %v583, 0
        %682 = vmatprep.subr.bf16.mxu0 0
        %683 = vmatpush1.bf16.msra.mxu0 0
        %684 = vmatprep.subr.bf16.mxu0 0
        %685 = vmatpush1.bf16.msra.mxu0 0
        %686 = vmatprep.subr.bf16.mxu0 0
        %687 = vmatpush1.bf16.msra.mxu0 0
        %688 = vmatprep.subr.bf16.mxu0 0
        %689 = vmatpush1.bf16.msra.mxu0 0
        %690 = vmatprep.subr.bf16.mxu0 0
        %691 = vmatpush1.bf16.msra.mxu0 0
        %692 = vmatprep.subr.bf16.mxu0 0
        %693 = vmatpush1.bf16.msra.mxu0 0
        %694 = vmatprep.subr.bf16.mxu0 0
        %695 = vmatpush1.bf16.msra.mxu0 0
        %696 = vmatprep.subr.bf16.mxu0 0
        %697 = vmatpush1.bf16.msra.mxu0 %v637
        %698 = vmatprep.subr.bf16.mxu0 0
        %699 = vmatpush2.bf16.msra.mxu0 0
        %700 = vmatprep.subr.bf16.mxu0 0
        %701 = vmatpush2.bf16.msra.mxu0 0
        %702 = vmatprep.subr.bf16.mxu0 0
        %703 = vmatpush2.bf16.msra.mxu0 0
        %704 = vmatprep.subr.bf16.mxu0 0
        %705 = vmatpush2.bf16.msra.mxu0 0
        %706 = vmatprep.subr.bf16.mxu0 0
        %707 = vmatpush2.bf16.msra.mxu0 0
        %708 = vmatprep.subr.bf16.mxu0 0
        %709 = vmatpush2.bf16.msra.mxu0 0
        %710 = vmatprep.subr.bf16.mxu0 0
        %711 = vmatpush2.bf16.msra.mxu0 0
        %712 = vmatprep.subr.bf16.mxu0 0
        %713 = vmatpush2.bf16.msra.mxu0 0
        %714 = vmatprep.mubr.bf16.mxu0 0
        %715 = vmatmul.mubr.bf16.gmra.mxu0 %v680
        %v716 = vpop.f32.mrf.mxu0
        %v717 = vadd.f32 %v674, %v716
        %v718 = vpop.f32.mrf.mxu0
        %v719 = vpop.f32.mrf.mxu0
        %v720 = vpop.f32.mrf.mxu0
        %721 = vdwg.mxu0
        %v722 = vsub.f32 0.0, %v717
        %v723 = vmul.f32 %v722, 1.442695
        %v724 = vpow.pop %v723
        %v725 = vadd.f32 %v724, 1.0
        %v726 = vrcp.pop %v725
        %v727 = vmul.f32 1.0, %v726
        %v728 = vlaneseq
        %v729 = vshrl.u32 %v728, 7
        %v730 = vsub.s32 0, %v729
        %v731 = vrot.slane %v727, %v730
        %v732 = vmul.f32 %v478, %v731
        %v733 = vmul.f32 %v479, %v731
        %v734 = vmul.f32 %v480, %v731
        %v735 = vmul.f32 %v481, %v731
        %v736 = vmul.f32 %v482, %v731
        %v737 = vmul.f32 %v483, %v731
        %v738 = vmul.f32 %v484, %v731
        %v739 = vmul.f32 %v485, %v731
        %v740 = vsel %vm486, %v732, 0.0
        %741 = vadd.xlane.f32.xlu0 %v740
        %v742 = vpop.xlane.xlu0 %741
        %v743 = vsel %vm486, %v733, 0.0
        %744 = vadd.xlane.f32.xlu0 %v743
        %v745 = vpop.xlane.xlu0 %744
        %v746 = vsel %vm486, %v734, 0.0
        %747 = vadd.xlane.f32.xlu0 %v746
        %v748 = vpop.xlane.xlu0 %747
        %v749 = vsel %vm486, %v735, 0.0
        %750 = vadd.xlane.f32.xlu0 %v749
        %v751 = vpop.xlane.xlu0 %750
        %v752 = vsel %vm486, %v736, 0.0
        %753 = vadd.xlane.f32.xlu0 %v752
        %v754 = vpop.xlane.xlu0 %753
        %v755 = vsel %vm486, %v737, 0.0
        %756 = vadd.xlane.f32.xlu0 %v755
        %v757 = vpop.xlane.xlu0 %756
        %v758 = vsel %vm486, %v738, 0.0
        %759 = vadd.xlane.f32.xlu0 %v758
        %v760 = vpop.xlane.xlu0 %759
        %v761 = vsel %vm486, %v739, 0.0
        %762 = vadd.xlane.f32.xlu0 %v761
        %v763 = vpop.xlane.xlu0 %762
        %v764 = vrcp.pop 32.0
        %v765 = vmul.f32 %v742, %v764
        %v766 = vmul.f32 %v745, %v764
        %v767 = vmul.f32 %v748, %v764
        %v768 = vmul.f32 %v751, %v764
        %v769 = vmul.f32 %v754, %v764
        %v770 = vmul.f32 %v757, %v764
        %v771 = vmul.f32 %v760, %v764
        %v772 = vmul.f32 %v763, %v764
        %v773 = vsel %vm486, %v732, -inf
        %774 = vmax.xlane.f32.xlu0 %v773
        %v775 = vpop.xlane.xlu0 %774
        %v776 = vsel %vm486, %v733, -inf
        %777 = vmax.xlane.f32.xlu0 %v776
        %v778 = vpop.xlane.xlu0 %777
        %v779 = vsel %vm486, %v734, -inf
        %780 = vmax.xlane.f32.xlu0 %v779
        %v781 = vpop.xlane.xlu0 %780
        %v782 = vsel %vm486, %v735, -inf
        %783 = vmax.xlane.f32.xlu0 %v782
        %v784 = vpop.xlane.xlu0 %783
        %v785 = vsel %vm486, %v736, -inf
        %786 = vmax.xlane.f32.xlu0 %v785
        %v787 = vpop.xlane.xlu0 %786
        %v788 = vsel %vm486, %v737, -inf
        %789 = vmax.xlane.f32.xlu0 %v788
        %v790 = vpop.xlane.xlu0 %789
        %v791 = vsel %vm486, %v738, -inf
        %792 = vmax.xlane.f32.xlu0 %v791
        %v793 = vpop.xlane.xlu0 %792
        %v794 = vsel %vm486, %v739, -inf
        %795 = vmax.xlane.f32.xlu0 %v794
        %v796 = vpop.xlane.xlu0 %795
        %vm797 = vcmask 113664
        %798 = vst.msk [vmem:[#allocation2] sm:$0xff] %vm797, 0.0
        %vm799 = vcmask 111616
        %800 = vst.msk [vmem:[#allocation2 + $0x8] sm:$0x3f] %vm799, 0.0
        %801 = vst.msk [vmem:[#allocation2 + $0x10] sm:$0xff] %vm797, 0.0
        %802 = vst.msk [vmem:[#allocation2 + $0x18] sm:$0x3f] %vm799, 0.0
        %v811 = vlaneseq
        %v812 = vand.u32 %v811, 127
        %v813 = vadd.s32 %v812, 4294967293
        %v814 = vlaneseq
        %v815 = vshrl.u32 %v814, 7
        %v816 = vsub.s32 %v813, %v815
        %v817 = vrot.slane %v765, %v816
        %v818 = vlaneseq
        %v819 = vshrl.u32 %v818, 7
        %v820 = vsub.s32 %v813, %v819
        %v821 = vrot.slane %v766, %v820
        %v822 = vlaneseq
        %v823 = vshrl.u32 %v822, 7
        %v824 = vsub.s32 %v813, %v823
        %v825 = vrot.slane %v767, %v824
        %v826 = vlaneseq
        %v827 = vshrl.u32 %v826, 7
        %v828 = vsub.s32 %v813, %v827
        %v829 = vrot.slane %v768, %v828
        %v830 = vlaneseq
        %v831 = vshrl.u32 %v830, 7
        %v832 = vsub.s32 %v813, %v831
        %v833 = vrot.slane %v769, %v832
        %v834 = vlaneseq
        %v835 = vshrl.u32 %v834, 7
        %v836 = vsub.s32 %v813, %v835
        %v837 = vrot.slane %v770, %v836
        %v838 = vlaneseq
        %v839 = vshrl.u32 %v838, 7
        %v840 = vsub.s32 %v813, %v839
        %v841 = vrot.slane %v771, %v840
        %v842 = vlaneseq
        %v843 = vshrl.u32 %v842, 7
        %v844 = vsub.s32 %v813, %v843
        %v845 = vrot.slane %v772, %v844
        %vm846 = vcmask 1041409
        %v847 = vsel %vm846, %v821, %v817
        %vm848 = vcmask 1042434
        %v849 = vsel %vm848, %v825, %v847
        %vm850 = vcmask 1043459
        %v851 = vsel %vm850, %v829, %v849
        %vm852 = vcmask 1044484
        %v853 = vsel %vm852, %v833, %v851
        %vm854 = vcmask 1045509
        %v855 = vsel %vm854, %v837, %v853
        %vm856 = vcmask 1046534
        %v857 = vsel %vm856, %v841, %v855
        %vm858 = vcmask 1047559
        %v859 = vsel %vm858, %v845, %v857
        %vm861 = vcmask 89112
        %862 = vst.msk [vmem:[#allocation2 + $0x3] sm:$0xff] %vm861, %v859
        %v871 = vlaneseq
        %v872 = vshrl.u32 %v871, 7
        %v873 = vsub.s32 %v813, %v872
        %v874 = vrot.slane %v775, %v873
        %v875 = vlaneseq
        %v876 = vshrl.u32 %v875, 7
        %v877 = vsub.s32 %v813, %v876
        %v878 = vrot.slane %v778, %v877
        %v879 = vlaneseq
        %v880 = vshrl.u32 %v879, 7
        %v881 = vsub.s32 %v813, %v880
        %v882 = vrot.slane %v781, %v881
        %v883 = vlaneseq
        %v884 = vshrl.u32 %v883, 7
        %v885 = vsub.s32 %v813, %v884
        %v886 = vrot.slane %v784, %v885
        %v887 = vlaneseq
        %v888 = vshrl.u32 %v887, 7
        %v889 = vsub.s32 %v813, %v888
        %v890 = vrot.slane %v787, %v889
        %v891 = vlaneseq
        %v892 = vshrl.u32 %v891, 7
        %v893 = vsub.s32 %v813, %v892
        %v894 = vrot.slane %v790, %v893
        %v895 = vlaneseq
        %v896 = vshrl.u32 %v895, 7
        %v897 = vsub.s32 %v813, %v896
        %v898 = vrot.slane %v793, %v897
        %v899 = vlaneseq
        %v900 = vshrl.u32 %v899, 7
        %v901 = vsub.s32 %v813, %v900
        %v902 = vrot.slane %v796, %v901
        %v903 = vsel %vm846, %v878, %v874
        %v904 = vsel %vm848, %v882, %v903
        %v905 = vsel %vm850, %v886, %v904
        %v906 = vsel %vm852, %v890, %v905
        %v907 = vsel %vm854, %v894, %v906
        %v908 = vsel %vm856, %v898, %v907
        %v909 = vsel %vm858, %v902, %v908
        %s911 = scalar_lea.vmem [#allocation2], 16
        %912 = vst.msk [vmem:[%s911 + $0x3] sm:$0xff] %vm861, %v909
        %v913 = vld [vmem:[#allocation2] sm:$0xff]
        %s914 = sld [smem:[#allocation6]]
        %v915 = vstv %s914
        %v916 = vmul.f32 %v915, %v913
        %v917 = vadd.f32 %v916, 0.0
        %s918 = sld [smem:[#allocation6 + $0x1]]
        %v919 = vstv %s918
        %v920 = vmul.f32 %v919, %v913
        %v921 = vadd.f32 %v920, 0.0
        %s922 = sld [smem:[#allocation6 + $0x2]]
        %v923 = vstv %s922
        %v924 = vmul.f32 %v923, %v913
        %v925 = vadd.f32 %v924, 0.0
        %s926 = sld [smem:[#allocation6 + $0x3]]
        %v927 = vstv %s926
        %v928 = vmul.f32 %v927, %v913
        %v929 = vadd.f32 %v928, 0.0
        %s930 = sld [smem:[#allocation6 + $0x4]]
        %v931 = vstv %s930
        %v932 = vmul.f32 %v931, %v913
        %934 = vrot.lane.b32.xlu0 %v932, 124
        %v935 = vpop.permute.xlu0 %934
        %v937 = vadd.f32 %v917, %v935
        %s938 = sld [smem:[#allocation6 + $0x5]]
        %v939 = vstv %s938
        %v940 = vmul.f32 %v939, %v913
        %942 = vrot.lane.b32.xlu0 %v940, 124
        %v943 = vpop.permute.xlu0 %942
        %v945 = vadd.f32 %v921, %v943
        %s946 = sld [smem:[#allocation6 + $0x6]]
        %v947 = vstv %s946
        %v948 = vmul.f32 %v947, %v913
        %950 = vrot.lane.b32.xlu0 %v948, 124
        %v951 = vpop.permute.xlu0 %950
        %v953 = vadd.f32 %v925, %v951
        %v954 = vld [vmem:[#allocation2 + $0x1] sm:$0xff]
        %s955 = sld [smem:[#allocation6 + $0x7]]
        %v956 = vstv %s955
        %v957 = vmul.f32 %v956, %v954
        %959 = vrot.lane.b32.xlu0 %v957, 3
        %v960 = vpop.permute.xlu0 %959
        %v962 = vadd.f32 %v929, %v960
        %s963 = sld [smem:[#allocation6 + $0x8]]
        %v964 = vstv %s963
        %v965 = vmul.f32 %v964, %v954
        %967 = vrot.lane.b32.xlu0 %v965, 127
        %v968 = vpop.permute.xlu0 %967
        %v970 = vadd.f32 %v937, %v968
        %s971 = sld [smem:[#allocation6 + $0x9]]
        %v972 = vstv %s971
        %v973 = vmul.f32 %v972, %v954
        %975 = vrot.lane.b32.xlu0 %v973, 127
        %v976 = vpop.permute.xlu0 %975
        %v978 = vadd.f32 %v945, %v976
        %s979 = sld [smem:[#allocation6 + $0xa]]
        %v980 = vstv %s979
        %v981 = vmul.f32 %v980, %v954
        %983 = vrot.lane.b32.xlu0 %v981, 127
        %v984 = vpop.permute.xlu0 %983
        %v986 = vadd.f32 %v953, %v984
        %s987 = sld [smem:[#allocation6 + $0xb]]
        %v988 = vstv %s987
        %v989 = vmul.f32 %v988, %v954
        %991 = vrot.lane.b32.xlu0 %v989, 127
        %v992 = vpop.permute.xlu0 %991
        %v994 = vadd.f32 %v962, %v992
        %s995 = sld [smem:[#allocation6 + $0xc]]
        %v996 = vstv %s995
        %v997 = vmul.f32 %v996, %v954
        %999 = vrot.lane.b32.xlu0 %v997, 123
        %v1000 = vpop.permute.xlu0 %999
        %v1002 = vadd.f32 %v970, %v1000
        %s1003 = sld [smem:[#allocation6 + $0xd]]
        %v1004 = vstv %s1003
        %v1005 = vmul.f32 %v1004, %v954
        %1007 = vrot.lane.b32.xlu0 %v1005, 123
        %v1008 = vpop.permute.xlu0 %1007
        %v1010 = vadd.f32 %v978, %v1008
        %v1011 = vld [vmem:[#allocation2 + $0x2] sm:$0xff]
        %s1012 = sld [smem:[#allocation6 + $0xe]]
        %v1013 = vstv %s1012
        %v1014 = vmul.f32 %v1013, %v1011
        %1016 = vrot.lane.b32.xlu0 %v1014, 2
        %v1017 = vpop.permute.xlu0 %1016
        %v1019 = vadd.f32 %v986, %v1017
        %s1020 = sld [smem:[#allocation6 + $0xf]]
        %v1021 = vstv %s1020
        %v1022 = vmul.f32 %v1021, %v1011
        %1024 = vrot.lane.b32.xlu0 %v1022, 2
        %v1025 = vpop.permute.xlu0 %1024
        %v1027 = vadd.f32 %v994, %v1025
        %s1028 = sld [smem:[#allocation6 + $0x10]]
        %v1029 = vstv %s1028
        %v1030 = vmul.f32 %v1029, %v1011
        %1032 = vrot.lane.b32.xlu0 %v1030, 126
        %v1033 = vpop.permute.xlu0 %1032
        %v1035 = vadd.f32 %v1002, %v1033
        %s1036 = sld [smem:[#allocation6 + $0x11]]
        %v1037 = vstv %s1036
        %v1038 = vmul.f32 %v1037, %v1011
        %1040 = vrot.lane.b32.xlu0 %v1038, 126
        %v1041 = vpop.permute.xlu0 %1040
        %v1043 = vadd.f32 %v1010, %v1041
        %s1044 = sld [smem:[#allocation6 + $0x12]]
        %v1045 = vstv %s1044
        %v1046 = vmul.f32 %v1045, %v1011
        %1048 = vrot.lane.b32.xlu0 %v1046, 126
        %v1049 = vpop.permute.xlu0 %1048
        %v1051 = vadd.f32 %v1019, %v1049
        %s1052 = sld [smem:[#allocation6 + $0x13]]
        %v1053 = vstv %s1052
        %v1054 = vmul.f32 %v1053, %v1011
        %1056 = vrot.lane.b32.xlu0 %v1054, 126
        %v1057 = vpop.permute.xlu0 %1056
        %v1059 = vadd.f32 %v1027, %v1057
        %s1060 = sld [smem:[#allocation6 + $0x14]]
        %v1061 = vstv %s1060
        %v1062 = vmul.f32 %v1061, %v1011
        %1064 = vrot.lane.b32.xlu0 %v1062, 122
        %v1065 = vpop.permute.xlu0 %1064
        %v1067 = vadd.f32 %v1035, %v1065
        %v1068 = vld [vmem:[#allocation2 + $0x3] sm:$0xff]
        %s1069 = sld [smem:[#allocation6 + $0x15]]
        %v1070 = vstv %s1069
        %v1071 = vmul.f32 %v1070, %v1068
        %1073 = vrot.lane.b32.xlu0 %v1071, 1
        %v1074 = vpop.permute.xlu0 %1073
        %v1076 = vadd.f32 %v1043, %v1074
        %s1077 = sld [smem:[#allocation6 + $0x16]]
        %v1078 = vstv %s1077
        %v1079 = vmul.f32 %v1078, %v1068
        %1081 = vrot.lane.b32.xlu0 %v1079, 1
        %v1082 = vpop.permute.xlu0 %1081
        %v1084 = vadd.f32 %v1051, %v1082
        %s1085 = sld [smem:[#allocation6 + $0x17]]
        %v1086 = vstv %s1085
        %v1087 = vmul.f32 %v1086, %v1068
        %1089 = vrot.lane.b32.xlu0 %v1087, 1
        %v1090 = vpop.permute.xlu0 %1089
        %v1092 = vadd.f32 %v1059, %v1090
        %s1093 = sld [smem:[#allocation6 + $0x18]]
        %v1094 = vstv %s1093
        %v1095 = vmul.f32 %v1094, %v1068
        %1097 = vrot.lane.b32.xlu0 %v1095, 125
        %v1098 = vpop.permute.xlu0 %1097
        %v1100 = vadd.f32 %v1067, %v1098
        %s1101 = sld [smem:[#allocation6 + $0x19]]
        %v1102 = vstv %s1101
        %v1103 = vmul.f32 %v1102, %v1068
        %1105 = vrot.lane.b32.xlu0 %v1103, 125
        %v1106 = vpop.permute.xlu0 %1105
        %v1108 = vadd.f32 %v1076, %v1106
        %s1109 = sld [smem:[#allocation6 + $0x1a]]
        %v1110 = vstv %s1109
        %v1111 = vmul.f32 %v1110, %v1068
        %1113 = vrot.lane.b32.xlu0 %v1111, 125
        %v1114 = vpop.permute.xlu0 %1113
        %v1116 = vadd.f32 %v1084, %v1114
        %s1117 = sld [smem:[#allocation6 + $0x1b]]
        %v1118 = vstv %s1117
        %v1119 = vmul.f32 %v1118, %v1068
        %1121 = vrot.lane.b32.xlu0 %v1119, 125
        %v1122 = vpop.permute.xlu0 %1121
        %v1124 = vadd.f32 %v1092, %v1122
        %v1125 = vld [vmem:[#allocation2 + $0x4] sm:$0xff]
        %s1126 = sld [smem:[#allocation6 + $0x1c]]
        %v1127 = vstv %s1126
        %v1128 = vmul.f32 %v1127, %v1125
        %v1129 = vadd.f32 %v1100, %v1128
        %s1130 = sld [smem:[#allocation6 + $0x1d]]
        %v1131 = vstv %s1130
        %v1132 = vmul.f32 %v1131, %v1125
        %v1133 = vadd.f32 %v1108, %v1132
        %s1134 = sld [smem:[#allocation6 + $0x1e]]
        %v1135 = vstv %s1134
        %v1136 = vmul.f32 %v1135, %v1125
        %v1137 = vadd.f32 %v1116, %v1136
        %s1138 = sld [smem:[#allocation6 + $0x1f]]
        %v1139 = vstv %s1138
        %v1140 = vmul.f32 %v1139, %v1125
        %v1141 = vadd.f32 %v1124, %v1140
        %s1142 = sld [smem:[#allocation6 + $0x20]]
        %v1143 = vstv %s1142
        %v1144 = vmul.f32 %v1143, %v1125
        %1146 = vrot.lane.b32.xlu0 %v1144, 124
        %v1147 = vpop.permute.xlu0 %1146
        %v1149 = vadd.f32 %v1129, %v1147
        %s1150 = sld [smem:[#allocation6 + $0x21]]
        %v1151 = vstv %s1150
        %v1152 = vmul.f32 %v1151, %v1125
        %1154 = vrot.lane.b32.xlu0 %v1152, 124
        %v1155 = vpop.permute.xlu0 %1154
        %v1157 = vadd.f32 %v1133, %v1155
        %s1158 = sld [smem:[#allocation6 + $0x22]]
        %v1159 = vstv %s1158
        %v1160 = vmul.f32 %v1159, %v1125
        %1162 = vrot.lane.b32.xlu0 %v1160, 124
        %v1163 = vpop.permute.xlu0 %1162
        %v1165 = vadd.f32 %v1137, %v1163
        %v1166 = vld [vmem:[#allocation2 + $0x5] sm:$0xff]
        %s1167 = sld [smem:[#allocation6 + $0x23]]
        %v1168 = vstv %s1167
        %v1169 = vmul.f32 %v1168, %v1166
        %1171 = vrot.lane.b32.xlu0 %v1169, 3
        %v1172 = vpop.permute.xlu0 %1171
        %v1174 = vadd.f32 %v1141, %v1172
        %s1175 = sld [smem:[#allocation6 + $0x24]]
        %v1176 = vstv %s1175
        %v1177 = vmul.f32 %v1176, %v1166
        %1179 = vrot.lane.b32.xlu0 %v1177, 127
        %v1180 = vpop.permute.xlu0 %1179
        %v1182 = vadd.f32 %v1149, %v1180
        %s1183 = sld [smem:[#allocation6 + $0x25]]
        %v1184 = vstv %s1183
        %v1185 = vmul.f32 %v1184, %v1166
        %1187 = vrot.lane.b32.xlu0 %v1185, 127
        %v1188 = vpop.permute.xlu0 %1187
        %v1190 = vadd.f32 %v1157, %v1188
        %s1191 = sld [smem:[#allocation6 + $0x26]]
        %v1192 = vstv %s1191
        %v1193 = vmul.f32 %v1192, %v1166
        %1195 = vrot.lane.b32.xlu0 %v1193, 127
        %v1196 = vpop.permute.xlu0 %1195
        %v1198 = vadd.f32 %v1165, %v1196
        %s1199 = sld [smem:[#allocation6 + $0x27]]
        %v1200 = vstv %s1199
        %v1201 = vmul.f32 %v1200, %v1166
        %1203 = vrot.lane.b32.xlu0 %v1201, 127
        %v1204 = vpop.permute.xlu0 %1203
        %v1206 = vadd.f32 %v1174, %v1204
        %s1207 = sld [smem:[#allocation6 + $0x28]]
        %v1208 = vstv %s1207
        %v1209 = vmul.f32 %v1208, %v1166
        %1211 = vrot.lane.b32.xlu0 %v1209, 123
        %v1212 = vpop.permute.xlu0 %1211
        %v1214 = vadd.f32 %v1182, %v1212
        %s1215 = sld [smem:[#allocation6 + $0x29]]
        %v1216 = vstv %s1215
        %v1217 = vmul.f32 %v1216, %v1166
        %1219 = vrot.lane.b32.xlu0 %v1217, 123
        %v1220 = vpop.permute.xlu0 %1219
        %v1222 = vadd.f32 %v1190, %v1220
        %v1223 = vld [vmem:[#allocation2 + $0x6] sm:$0xff]
        %s1224 = sld [smem:[#allocation6 + $0x2a]]
        %v1225 = vstv %s1224
        %v1226 = vmul.f32 %v1225, %v1223
        %1228 = vrot.lane.b32.xlu0 %v1226, 2
        %v1229 = vpop.permute.xlu0 %1228
        %v1231 = vadd.f32 %v1198, %v1229
        %s1232 = sld [smem:[#allocation6 + $0x2b]]
        %v1233 = vstv %s1232
        %v1234 = vmul.f32 %v1233, %v1223
        %1236 = vrot.lane.b32.xlu0 %v1234, 2
        %v1237 = vpop.permute.xlu0 %1236
        %v1239 = vadd.f32 %v1206, %v1237
        %s1240 = sld [smem:[#allocation6 + $0x2c]]
        %v1241 = vstv %s1240
        %v1242 = vmul.f32 %v1241, %v1223
        %1244 = vrot.lane.b32.xlu0 %v1242, 126
        %v1245 = vpop.permute.xlu0 %1244
        %v1247 = vadd.f32 %v1214, %v1245
        %s1248 = sld [smem:[#allocation6 + $0x2d]]
        %v1249 = vstv %s1248
        %v1250 = vmul.f32 %v1249, %v1223
        %1252 = vrot.lane.b32.xlu0 %v1250, 126
        %v1253 = vpop.permute.xlu0 %1252
        %v1255 = vadd.f32 %v1222, %v1253
        %s1256 = sld [smem:[#allocation6 + $0x2e]]
        %v1257 = vstv %s1256
        %v1258 = vmul.f32 %v1257, %v1223
        %1260 = vrot.lane.b32.xlu0 %v1258, 126
        %v1261 = vpop.permute.xlu0 %1260
        %v1263 = vadd.f32 %v1231, %v1261
        %s1264 = sld [smem:[#allocation6 + $0x2f]]
        %v1265 = vstv %s1264
        %v1266 = vmul.f32 %v1265, %v1223
        %1268 = vrot.lane.b32.xlu0 %v1266, 126
        %v1269 = vpop.permute.xlu0 %1268
        %v1271 = vadd.f32 %v1239, %v1269
        %s1272 = sld [smem:[#allocation6 + $0x30]]
        %v1273 = vstv %s1272
        %v1274 = vmul.f32 %v1273, %v1223
        %1276 = vrot.lane.b32.xlu0 %v1274, 122
        %v1277 = vpop.permute.xlu0 %1276
        %v1279 = vadd.f32 %v1247, %v1277
        %v1280 = vld [vmem:[%s911] sm:$0xff]
        %s1281 = sld [smem:[#allocation6 + $0x31]]
        %v1282 = vstv %s1281
        %v1283 = vmul.f32 %v1282, %v1280
        %1285 = vrot.lane.b32.xlu0 %v1283, 1
        %v1286 = vpop.permute.xlu0 %1285
        %v1288 = vadd.f32 %v1255, %v1286
        %s1289 = sld [smem:[#allocation6 + $0x32]]
        %v1290 = vstv %s1289
        %v1291 = vmul.f32 %v1290, %v1280
        %1293 = vrot.lane.b32.xlu0 %v1291, 1
        %v1294 = vpop.permute.xlu0 %1293
        %v1296 = vadd.f32 %v1263, %v1294
        %s1297 = sld [smem:[#allocation6 + $0x33]]
        %v1298 = vstv %s1297
        %v1299 = vmul.f32 %v1298, %v1280
        %1301 = vrot.lane.b32.xlu0 %v1299, 1
        %v1302 = vpop.permute.xlu0 %1301
        %v1304 = vadd.f32 %v1271, %v1302
        %s1305 = sld [smem:[#allocation6 + $0x34]]
        %v1306 = vstv %s1305
        %v1307 = vmul.f32 %v1306, %v1280
        %1309 = vrot.lane.b32.xlu0 %v1307, 125
        %v1310 = vpop.permute.xlu0 %1309
        %v1312 = vadd.f32 %v1279, %v1310
        %s1313 = sld [smem:[#allocation6 + $0x35]]
        %v1314 = vstv %s1313
        %v1315 = vmul.f32 %v1314, %v1280
        %1317 = vrot.lane.b32.xlu0 %v1315, 125
        %v1318 = vpop.permute.xlu0 %1317
        %v1320 = vadd.f32 %v1288, %v1318
        %s1321 = sld [smem:[#allocation6 + $0x36]]
        %v1322 = vstv %s1321
        %v1323 = vmul.f32 %v1322, %v1280
        %1325 = vrot.lane.b32.xlu0 %v1323, 125
        %v1326 = vpop.permute.xlu0 %1325
        %v1328 = vadd.f32 %v1296, %v1326
        %s1329 = sld [smem:[#allocation6 + $0x37]]
        %v1330 = vstv %s1329
        %v1331 = vmul.f32 %v1330, %v1280
        %1333 = vrot.lane.b32.xlu0 %v1331, 125
        %v1334 = vpop.permute.xlu0 %1333
        %v1336 = vadd.f32 %v1304, %v1334
        %v1337 = vld [vmem:[%s911 + $0x1] sm:$0xff]
        %s1338 = sld [smem:[#allocation6 + $0x38]]
        %v1339 = vstv %s1338
        %v1340 = vmul.f32 %v1339, %v1337
        %v1341 = vadd.f32 %v1312, %v1340
        %s1342 = sld [smem:[#allocation6 + $0x39]]
        %v1343 = vstv %s1342
        %v1344 = vmul.f32 %v1343, %v1337
        %v1345 = vadd.f32 %v1320, %v1344
        %s1346 = sld [smem:[#allocation6 + $0x3a]]
        %v1347 = vstv %s1346
        %v1348 = vmul.f32 %v1347, %v1337
        %v1349 = vadd.f32 %v1328, %v1348
        %s1350 = sld [smem:[#allocation6 + $0x3b]]
        %v1351 = vstv %s1350
        %v1352 = vmul.f32 %v1351, %v1337
        %v1353 = vadd.f32 %v1336, %v1352
        %s1354 = sld [smem:[#allocation6 + $0x3c]]
        %v1355 = vstv %s1354
        %v1356 = vmul.f32 %v1355, %v1337
        %1358 = vrot.lane.b32.xlu0 %v1356, 124
        %v1359 = vpop.permute.xlu0 %1358
        %v1361 = vadd.f32 %v1341, %v1359
        %s1362 = sld [smem:[#allocation6 + $0x3d]]
        %v1363 = vstv %s1362
        %v1364 = vmul.f32 %v1363, %v1337
        %1366 = vrot.lane.b32.xlu0 %v1364, 124
        %v1367 = vpop.permute.xlu0 %1366
        %v1369 = vadd.f32 %v1345, %v1367
        %s1370 = sld [smem:[#allocation6 + $0x3e]]
        %v1371 = vstv %s1370
        %v1372 = vmul.f32 %v1371, %v1337
        %1374 = vrot.lane.b32.xlu0 %v1372, 124
        %v1375 = vpop.permute.xlu0 %1374
        %v1377 = vadd.f32 %v1349, %v1375
        %v1378 = vld [vmem:[%s911 + $0x2] sm:$0xff]
        %s1379 = sld [smem:[#allocation6 + $0x3f]]
        %v1380 = vstv %s1379
        %v1381 = vmul.f32 %v1380, %v1378
        %1383 = vrot.lane.b32.xlu0 %v1381, 3
        %v1384 = vpop.permute.xlu0 %1383
        %v1386 = vadd.f32 %v1353, %v1384
        %s1387 = sld [smem:[#allocation6 + $0x40]]
        %v1388 = vstv %s1387
        %v1389 = vmul.f32 %v1388, %v1378
        %1391 = vrot.lane.b32.xlu0 %v1389, 127
        %v1392 = vpop.permute.xlu0 %1391
        %v1394 = vadd.f32 %v1361, %v1392
        %s1395 = sld [smem:[#allocation6 + $0x41]]
        %v1396 = vstv %s1395
        %v1397 = vmul.f32 %v1396, %v1378
        %1399 = vrot.lane.b32.xlu0 %v1397, 127
        %v1400 = vpop.permute.xlu0 %1399
        %v1402 = vadd.f32 %v1369, %v1400
        %s1403 = sld [smem:[#allocation6 + $0x42]]
        %v1404 = vstv %s1403
        %v1405 = vmul.f32 %v1404, %v1378
        %1407 = vrot.lane.b32.xlu0 %v1405, 127
        %v1408 = vpop.permute.xlu0 %1407
        %v1410 = vadd.f32 %v1377, %v1408
        %s1411 = sld [smem:[#allocation6 + $0x43]]
        %v1412 = vstv %s1411
        %v1413 = vmul.f32 %v1412, %v1378
        %1415 = vrot.lane.b32.xlu0 %v1413, 127
        %v1416 = vpop.permute.xlu0 %1415
        %v1418 = vadd.f32 %v1386, %v1416
        %s1419 = sld [smem:[#allocation6 + $0x44]]
        %v1420 = vstv %s1419
        %v1421 = vmul.f32 %v1420, %v1378
        %1423 = vrot.lane.b32.xlu0 %v1421, 123
        %v1424 = vpop.permute.xlu0 %1423
        %v1426 = vadd.f32 %v1394, %v1424
        %s1427 = sld [smem:[#allocation6 + $0x45]]
        %v1428 = vstv %s1427
        %v1429 = vmul.f32 %v1428, %v1378
        %1431 = vrot.lane.b32.xlu0 %v1429, 123
        %v1432 = vpop.permute.xlu0 %1431
        %v1434 = vadd.f32 %v1402, %v1432
        %v1435 = vld [vmem:[%s911 + $0x3] sm:$0xff]
        %s1436 = sld [smem:[#allocation6 + $0x46]]
        %v1437 = vstv %s1436
        %v1438 = vmul.f32 %v1437, %v1435
        %1440 = vrot.lane.b32.xlu0 %v1438, 2
        %v1441 = vpop.permute.xlu0 %1440
        %v1443 = vadd.f32 %v1410, %v1441
        %s1444 = sld [smem:[#allocation6 + $0x47]]
        %v1445 = vstv %s1444
        %v1446 = vmul.f32 %v1445, %v1435
        %1448 = vrot.lane.b32.xlu0 %v1446, 2
        %v1449 = vpop.permute.xlu0 %1448
        %v1451 = vadd.f32 %v1418, %v1449
        %s1452 = sld [smem:[#allocation6 + $0x48]]
        %v1453 = vstv %s1452
        %v1454 = vmul.f32 %v1453, %v1435
        %1456 = vrot.lane.b32.xlu0 %v1454, 126
        %v1457 = vpop.permute.xlu0 %1456
        %v1459 = vadd.f32 %v1426, %v1457
        %s1460 = sld [smem:[#allocation6 + $0x49]]
        %v1461 = vstv %s1460
        %v1462 = vmul.f32 %v1461, %v1435
        %1464 = vrot.lane.b32.xlu0 %v1462, 126
        %v1465 = vpop.permute.xlu0 %1464
        %v1467 = vadd.f32 %v1434, %v1465
        %s1468 = sld [smem:[#allocation6 + $0x4a]]
        %v1469 = vstv %s1468
        %v1470 = vmul.f32 %v1469, %v1435
        %1472 = vrot.lane.b32.xlu0 %v1470, 126
        %v1473 = vpop.permute.xlu0 %1472
        %v1475 = vadd.f32 %v1443, %v1473
        %s1476 = sld [smem:[#allocation6 + $0x4b]]
        %v1477 = vstv %s1476
        %v1478 = vmul.f32 %v1477, %v1435
        %1480 = vrot.lane.b32.xlu0 %v1478, 126
        %v1481 = vpop.permute.xlu0 %1480
        %v1483 = vadd.f32 %v1451, %v1481
        %s1484 = sld [smem:[#allocation6 + $0x4c]]
        %v1485 = vstv %s1484
        %v1486 = vmul.f32 %v1485, %v1435
        %1488 = vrot.lane.b32.xlu0 %v1486, 122
        %v1489 = vpop.permute.xlu0 %1488
        %v1491 = vadd.f32 %v1459, %v1489
        %v1492 = vld [vmem:[%s911 + $0x4] sm:$0xff]
        %s1493 = sld [smem:[#allocation6 + $0x4d]]
        %v1494 = vstv %s1493
        %v1495 = vmul.f32 %v1494, %v1492
        %1497 = vrot.lane.b32.xlu0 %v1495, 1
        %v1498 = vpop.permute.xlu0 %1497
        %v1500 = vadd.f32 %v1467, %v1498
        %s1501 = sld [smem:[#allocation6 + $0x4e]]
        %v1502 = vstv %s1501
        %v1503 = vmul.f32 %v1502, %v1492
        %1505 = vrot.lane.b32.xlu0 %v1503, 1
        %v1506 = vpop.permute.xlu0 %1505
        %v1508 = vadd.f32 %v1475, %v1506
        %s1509 = sld [smem:[#allocation6 + $0x4f]]
        %v1510 = vstv %s1509
        %v1511 = vmul.f32 %v1510, %v1492
        %1513 = vrot.lane.b32.xlu0 %v1511, 1
        %v1514 = vpop.permute.xlu0 %1513
        %v1516 = vadd.f32 %v1483, %v1514
        %s1517 = sld [smem:[#allocation6 + $0x50]]
        %v1518 = vstv %s1517
        %v1519 = vmul.f32 %v1518, %v1492
        %1521 = vrot.lane.b32.xlu0 %v1519, 125
        %v1522 = vpop.permute.xlu0 %1521
        %v1524 = vadd.f32 %v1491, %v1522
        %s1525 = sld [smem:[#allocation6 + $0x51]]
        %v1526 = vstv %s1525
        %v1527 = vmul.f32 %v1526, %v1492
        %1529 = vrot.lane.b32.xlu0 %v1527, 125
        %v1530 = vpop.permute.xlu0 %1529
        %v1532 = vadd.f32 %v1500, %v1530
        %s1533 = sld [smem:[#allocation6 + $0x52]]
        %v1534 = vstv %s1533
        %v1535 = vmul.f32 %v1534, %v1492
        %1537 = vrot.lane.b32.xlu0 %v1535, 125
        %v1538 = vpop.permute.xlu0 %1537
        %v1540 = vadd.f32 %v1508, %v1538
        %s1541 = sld [smem:[#allocation6 + $0x53]]
        %v1542 = vstv %s1541
        %v1543 = vmul.f32 %v1542, %v1492
        %1545 = vrot.lane.b32.xlu0 %v1543, 125
        %v1546 = vpop.permute.xlu0 %1545
        %v1548 = vadd.f32 %v1516, %v1546
        %v1549 = vld [vmem:[%s911 + $0x5] sm:$0xff]
        %s1550 = sld [smem:[#allocation6 + $0x54]]
        %v1551 = vstv %s1550
        %v1552 = vmul.f32 %v1551, %v1549
        %v1553 = vadd.f32 %v1524, %v1552
        %s1554 = sld [smem:[#allocation6 + $0x55]]
        %v1555 = vstv %s1554
        %v1556 = vmul.f32 %v1555, %v1549
        %v1557 = vadd.f32 %v1532, %v1556
        %s1558 = sld [smem:[#allocation6 + $0x56]]
        %v1559 = vstv %s1558
        %v1560 = vmul.f32 %v1559, %v1549
        %v1561 = vadd.f32 %v1540, %v1560
        %s1562 = sld [smem:[#allocation6 + $0x57]]
        %v1563 = vstv %s1562
        %v1564 = vmul.f32 %v1563, %v1549
        %v1565 = vadd.f32 %v1548, %v1564
        %s1566 = sld [smem:[#allocation6 + $0x58]]
        %v1567 = vstv %s1566
        %v1568 = vmul.f32 %v1567, %v1549
        %1570 = vrot.lane.b32.xlu0 %v1568, 124
        %v1571 = vpop.permute.xlu0 %1570
        %v1573 = vadd.f32 %v1553, %v1571
        %s1574 = sld [smem:[#allocation6 + $0x59]]
        %v1575 = vstv %s1574
        %v1576 = vmul.f32 %v1575, %v1549
        %1578 = vrot.lane.b32.xlu0 %v1576, 124
        %v1579 = vpop.permute.xlu0 %1578
        %v1581 = vadd.f32 %v1557, %v1579
        %s1582 = sld [smem:[#allocation6 + $0x5a]]
        %v1583 = vstv %s1582
        %v1584 = vmul.f32 %v1583, %v1549
        %1586 = vrot.lane.b32.xlu0 %v1584, 124
        %v1587 = vpop.permute.xlu0 %1586
        %v1589 = vadd.f32 %v1561, %v1587
        %v1590 = vld [vmem:[%s911 + $0x6] sm:$0xff]
        %s1591 = sld [smem:[#allocation6 + $0x5b]]
        %v1592 = vstv %s1591
        %v1593 = vmul.f32 %v1592, %v1590
        %1595 = vrot.lane.b32.xlu0 %v1593, 3
        %v1596 = vpop.permute.xlu0 %1595
        %v1598 = vadd.f32 %v1565, %v1596
        %s1599 = sld [smem:[#allocation6 + $0x5c]]
        %v1600 = vstv %s1599
        %v1601 = vmul.f32 %v1600, %v1590
        %1603 = vrot.lane.b32.xlu0 %v1601, 127
        %v1604 = vpop.permute.xlu0 %1603
        %v1606 = vadd.f32 %v1573, %v1604
        %s1607 = sld [smem:[#allocation6 + $0x5d]]
        %v1608 = vstv %s1607
        %v1609 = vmul.f32 %v1608, %v1590
        %1611 = vrot.lane.b32.xlu0 %v1609, 127
        %v1612 = vpop.permute.xlu0 %1611
        %v1614 = vadd.f32 %v1581, %v1612
        %s1615 = sld [smem:[#allocation6 + $0x5e]]
        %v1616 = vstv %s1615
        %v1617 = vmul.f32 %v1616, %v1590
        %1619 = vrot.lane.b32.xlu0 %v1617, 127
        %v1620 = vpop.permute.xlu0 %1619
        %v1622 = vadd.f32 %v1589, %v1620
        %s1623 = sld [smem:[#allocation6 + $0x5f]]
        %v1624 = vstv %s1623
        %v1625 = vmul.f32 %v1624, %v1590
        %1627 = vrot.lane.b32.xlu0 %v1625, 127
        %v1628 = vpop.permute.xlu0 %1627
        %v1630 = vadd.f32 %v1598, %v1628
        %s1631 = sld [smem:[#allocation6 + $0x60]]
        %v1632 = vstv %s1631
        %v1633 = vmul.f32 %v1632, %v1590
        %1635 = vrot.lane.b32.xlu0 %v1633, 123
        %v1636 = vpop.permute.xlu0 %1635
        %v1638 = vadd.f32 %v1606, %v1636
        %s1639 = sld [smem:[#allocation6 + $0x61]]
        %v1640 = vstv %s1639
        %v1641 = vmul.f32 %v1640, %v1590
        %1643 = vrot.lane.b32.xlu0 %v1641, 123
        %v1644 = vpop.permute.xlu0 %1643
        %v1646 = vadd.f32 %v1614, %v1644
        %1648 = vrot.lane.b32.xlu0 %v1646, 127
        %v1649 = vpop.permute.xlu0 %1648
        %v1651 = vadd.f32 %v1638, %v1649
        %1653 = vrot.lane.b32.xlu0 %v1630, 127
        %v1654 = vpop.permute.xlu0 %1653
        %v1656 = vadd.f32 %v1622, %v1654
        %1658 = vrot.lane.b32.xlu0 %v1656, 126
        %v1659 = vpop.permute.xlu0 %1658
        %v1661 = vadd.f32 %v1651, %v1659
        %v1662 = vsub.f32 0.0, %v1661
        %v1663 = vmul.f32 %v1662, 1.442695
        %v1664 = vpow.pop %v1663
        %v1665 = vadd.f32 %v1664, 1.0
        %v1666 = vrcp.pop %v1665
        %v1667 = vmul.f32 1.0, %v1666
        %v1668 = vlaneseq
        %v1669 = vshrl.u32 %v1668, 7
        %v1670 = vsub.s32 0, %v1669
        %v1671 = vrot.slane %v1667, %v1670
        %1673 = vbcast.lane.b32.xlu0 %v1671, 256
        %v1674 = vpop.permute.xlu0 %1673
        %v1675 = vlaneseq
        %v1676 = vshrl.u32 %v1675, 7
        %v1677 = vsub.s32 1, %v1676
        %v1678 = vrot.slane %v1667, %v1677
        %1680 = vbcast.lane.b32.xlu0 %v1678, 256
        %v1681 = vpop.permute.xlu0 %1680
        %v1682 = vlaneseq
        %v1683 = vshrl.u32 %v1682, 7
        %v1684 = vsub.s32 2, %v1683
        %v1685 = vrot.slane %v1667, %v1684
        %1687 = vbcast.lane.b32.xlu0 %v1685, 256
        %v1688 = vpop.permute.xlu0 %1687
        %v1689 = vlaneseq
        %v1690 = vshrl.u32 %v1689, 7
        %v1691 = vsub.s32 3, %v1690
        %v1692 = vrot.slane %v1667, %v1691
        %1694 = vbcast.lane.b32.xlu0 %v1692, 256
        %v1695 = vpop.permute.xlu0 %1694
        %v1696 = vlaneseq
        %v1697 = vshrl.u32 %v1696, 7
        %v1698 = vsub.s32 4, %v1697
        %v1699 = vrot.slane %v1667, %v1698
        %1701 = vbcast.lane.b32.xlu0 %v1699, 256
        %v1702 = vpop.permute.xlu0 %1701
        %v1703 = vlaneseq
        %v1704 = vshrl.u32 %v1703, 7
        %v1705 = vsub.s32 5, %v1704
        %v1706 = vrot.slane %v1667, %v1705
        %1708 = vbcast.lane.b32.xlu0 %v1706, 256
        %v1709 = vpop.permute.xlu0 %1708
        %v1710 = vlaneseq
        %v1711 = vshrl.u32 %v1710, 7
        %v1712 = vsub.s32 6, %v1711
        %v1713 = vrot.slane %v1667, %v1712
        %1715 = vbcast.lane.b32.xlu0 %v1713, 256
        %v1716 = vpop.permute.xlu0 %1715
        %v1717 = vlaneseq
        %v1718 = vshrl.u32 %v1717, 7
        %v1719 = vsub.s32 7, %v1718
        %v1720 = vrot.slane %v1667, %v1719
        %1722 = vbcast.lane.b32.xlu0 %v1720, 256
        %v1723 = vpop.permute.xlu0 %1722
        %v1724 = vmul.f32 %v732, %v1674
        %v1725 = vmul.f32 %v733, %v1681
        %v1726 = vmul.f32 %v734, %v1688
        %v1727 = vmul.f32 %v735, %v1695
        %v1728 = vmul.f32 %v736, %v1702
        %v1729 = vmul.f32 %v737, %v1709
        %v1730 = vmul.f32 %v738, %v1716
        %v1731 = vmul.f32 %v739, %v1723
        %1732 = vst.msk [vmem:[%s370] sm:$0xff] %vm486, %v1724
        %1733 = vst.msk [vmem:[%s370 + $0x8] sm:$0xff] %vm486, %v1725
        %1734 = vst.msk [vmem:[%s370 + $0x10] sm:$0xff] %vm486, %v1726
        %1735 = vst.msk [vmem:[%s370 + $0x18] sm:$0xff] %vm486, %v1727
        %1736 = vst.msk [vmem:[%s370 + $0x20] sm:$0xff] %vm486, %v1728
        %1737 = vst.msk [vmem:[%s370 + $0x28] sm:$0xff] %vm486, %v1729
        %1738 = vst.msk [vmem:[%s370 + $0x30] sm:$0xff] %vm486, %v1730
        %1739 = vst.msk [vmem:[%s370 + $0x38] sm:$0xff] %vm486, %v1731
        %s1740 = sand.u32 %s220, 1
        %s1741 = scalar_lea.sflag [#allocation4], %s1740
        %s1742 = sand.u32 %s220, 1
        %s1743 = smul.addr %s1742, 64
        %s1744 = scalar_lea.vmem [#allocation8], %s1743
        // Predicated region
        $region61: #{stage_attention_forward.27} parent=51 // pred_check
          %p1745 = pneg %p230
        $region62: #{stage_attention_forward.27} parent=51 // pred_check_branch
          %1747 = sbr.rel (%p1745) target = $region64
        $region63: #{stage_attention_forward.27} parent=51 // pred_region
          %s1749 = ssub.s32 1024, 1024
          %1750 = vsyncadd %s1741, %s1749
          %s1751 = smul.addr %s24, 8
          %s1752 = smul.addr %s1751, 128
          %s1753 = scalar_lea.hbm %s8, %s1752
          %s1754 = sshll.u32 %s1744, 4
          %s1755 = int_to_ptr.vmem [resolvable:$true] %s1754
          %1760 = dma.vmem_to_hbm [thread:$0]  %s1755, 1024, %s1753, %s1741, 128, 128, 8
        $region64: #{stage_attention_forward.27} parent=51 // pred_fallthru
          _
      $region52: #{stage_attention_forward.27} parent=5 // pred_fallthru
        _
      %p1761 = scmp.le.s32.totalorder 2, %s19
      // Predicated region
      $region65: #{stage_attention_forward.27} parent=5 // pred_check
        %p1762 = pneg %p1761
      $region66: #{stage_attention_forward.27} parent=5 // pred_check_branch
        %1764 = sbr.rel (%p1762) target = $region68
      $region67: #{stage_attention_forward.27} parent=5 // pred_region
        %s1765 = ssub.s32 %s19, 2
        // Predicated region
        $region69: #{stage_attention_forward.27} parent=67 // pred_check
          %p1766 = pneg %p236
        $region70: #{stage_attention_forward.27} parent=67 // pred_check_branch
          %1768 = sbr.rel (%p1766) target = $region72
        $region71: #{stage_attention_forward.27} parent=67 // pred_region
          %s1769 = sand.u32 %s221, 1
          %s1770 = scalar_lea.sflag [#allocation4], %s1769
          %s1771 = sand.u32 %s221, 1
          %s1772 = smul.addr %s1771, 64
          %s1773 = scalar_lea.vmem [#allocation8], %s1772
          %1774 = dma.done %s1770, 1024
        $region72: #{stage_attention_forward.27} parent=67 // pred_fallthru
          _
      $region68: #{stage_attention_forward.27} parent=5 // pred_fallthru
        _
    $region6: #{stage_attention_forward.27} parent=1 // loop_footer
      %s23 = sadd.s32 1, %s19
    $region7: #{stage_attention_forward.27} parent=1 // loop_footer_branch
      %18 = sbr.rel target = $region3
    $region8: #{stage_attention_forward.27} parent=1 // loop_exit
      _
    %1775 = vsyncpa [#allocation4], 1
    %s1776 = scalar_lea.sflag [#allocation4], 1
    %1777 = vsyncpa %s1776, 1
    %1778 = vsyncpa [#allocation5], 1
    %s1779 = scalar_lea.sflag [#allocation5], 1
    %1780 = vsyncpa %s1779, 1
    %1781 = vsyncpa [#allocation7], 1

</llo_original>
